<compile_context>
chip_gen: v6e
topology: v6e:2x2x1
jax: 0.10.0
libtpu: 0.0.40
codegen_flags: <defaults>
</compile_context>

<pallas_src>
import jax
import jax.numpy as jnp
from jax.experimental import pallas as pl
from jax.experimental.pallas import tpu as pltpu


# ----------------------------------------------------------------------------- kernels

def _conv_pool_kernel(p_ref, w_ref, b_ref, o_ref):
    """Fused conv (as matmul) + bias + ReLU + 2x2 maxpool, lane-dense.

    p_ref: (4, K, M)  im2col patches, one slab per 2x2 pool-window quadrant,
                      M = B*Ho*Wo pooled output pixels on the lane axis.
    w_ref: (Cout, K)  conv weight, K ordered (ky, kx, cin).
    b_ref: (Cout, 1)  bias (broadcast along lanes).
    o_ref: (Cout, M)  pooled, ReLU'd output.
    """
    w = w_ref[...]
    m = jnp.dot(w, p_ref[0], preferred_element_type=jnp.float32)
    for q in range(1, p_ref.shape[0]):
        m = jnp.maximum(m, jnp.dot(w, p_ref[q], preferred_element_type=jnp.float32))
    # max_q(relu(x_q + b)) == relu(max_q(x_q) + b): bias/ReLU applied once after the max.
    o_ref[...] = jnp.maximum(m + b_ref[...], 0.0).astype(o_ref.dtype)


def _fc_head_kernel(x_ref, w1_ref, b1_ref, w2_ref, b2_ref, o_ref, acc_ref):
    """K-tiled Linear(12800,500) (bf16 operands, f32 accumulator) with ReLU,
    Dropout(eval==identity) and the final Linear(500,1) fused into the last step.

    x_ref : (CB, B, 256)   bf16 pooled conv2 activations, channel-chunked.
    w1_ref: (CB, 256, 500) bf16 chunk of wl1 stored as (50, 256, 500).
    b1_ref: (1, 500)  f32,  w2_ref: (500, 1) f32,  b2_ref: (1, 1) f32.
    o_ref : (B, 1) f32 logits.   acc_ref: (B, 500) f32 scratch.
    """
    k = pl.program_id(0)

    @pl.when(k == 0)
    def _():
        acc_ref[...] = jnp.zeros_like(acc_ref)

    # 10 small (B,256)@(256,500) MXU dots per grid step; slices along the leading
    # (non-tiled) axis are free, avoiding any in-kernel relayout of the activations.
    for cc in range(x_ref.shape[0]):
        acc_ref[...] += jnp.dot(x_ref[cc], w1_ref[cc],
                                preferred_element_type=jnp.float32)

    @pl.when(k == pl.num_programs(0) - 1)
    def _():
        f1 = jnp.maximum(acc_ref[...] + b1_ref[...], 0.0)   # ReLU; Dropout(0.2) == id (eval)
        logit = jnp.dot(f1, w2_ref[...], preferred_element_type=jnp.float32) + b2_ref[...]
        o_ref[...] = logit.astype(o_ref.dtype)


# ----------------------------------------------------------------------------- wrappers

def conv_relu_pool(pq, w, b, out_dtype):
    """pq: (4, K, M) quadrant-major patches, w: (Cout, K), b: (Cout, 1) -> (Cout, M)."""
    Q, K, M = pq.shape
    Cout = w.shape[0]
    assert M % 128 == 0
    return pl.pallas_call(
        _conv_pool_kernel,
        out_shape=jax.ShapeDtypeStruct((Cout, M), out_dtype),
        grid_spec=pltpu.PrefetchScalarGridSpec(
            num_scalar_prefetch=0,
            grid=(1,),
            in_specs=[
                pl.BlockSpec((Q, K, M), lambda i: (0, 0, 0)),
                pl.BlockSpec((Cout, K), lambda i: (0, 0)),
                pl.BlockSpec((Cout, 1), lambda i: (0, 0)),
            ],
            out_specs=pl.BlockSpec((Cout, M), lambda i: (0, 0)),
        ),
        compiler_params=pltpu.CompilerParams(
            dimension_semantics=("arbitrary",)),
    )(pq, w, b)


def fc_head(x3d, wl1, bl1, wl2, bl2, *, chunk=10):
    """x3d: (50, B, 256) bf16, wl1: (50, 256, 500) bf16 -> logits (B, 1) f32."""
    C, B, S = x3d.shape
    N = wl1.shape[-1]
    assert wl1.shape == (C, S, N) and C % chunk == 0
    return pl.pallas_call(
        _fc_head_kernel,
        out_shape=jax.ShapeDtypeStruct((B, 1), jnp.float32),
        grid_spec=pltpu.PrefetchScalarGridSpec(
            num_scalar_prefetch=0,
            grid=(C // chunk,),
            in_specs=[
                pl.BlockSpec((chunk, B, S), lambda k: (k, 0, 0)),
                pl.BlockSpec((chunk, S, N), lambda k: (k, 0, 0)),   # 2.56 MB bf16 / step
                pl.BlockSpec((1, N), lambda k: (0, 0)),
                pl.BlockSpec((N, 1), lambda k: (0, 0)),
                pl.BlockSpec((1, 1), lambda k: (0, 0)),
            ],
            out_specs=pl.BlockSpec((B, 1), lambda k: (0, 0)),
            scratch_shapes=[pltpu.VMEM((B, N), jnp.float32)],
        ),
        compiler_params=pltpu.CompilerParams(
            dimension_semantics=("arbitrary",)),
    )(x3d, wl1, bl1, wl2, bl2)


# ----------------------------------------------------------------------------- im2col glue

def _conv1_patches(x):
    """x: (B, 64, 64) -> (4, 25, B*32*32) quadrant-major im2col for the 5x5 pad-2
    conv followed by a 2x2 maxpool.  Patch row order = ky*5 + kx (Cin == 1)."""
    xp = jnp.pad(x, ((0, 0), (2, 2), (2, 2)))                      # (B, 68, 68)
    quads = []
    for qy in range(2):
        for qx in range(2):
            taps = [
                xp[:, qy + dy: qy + dy + 63: 2,
                      qx + dx: qx + dx + 63: 2].reshape(1, -1)      # (1, B*1024)
                for dy in range(5) for dx in range(5)
            ]
            quads.append(jnp.concatenate(taps, axis=0))             # (25, B*1024)
    return jnp.stack(quads, axis=0)                                 # (4, 25, B*1024)


def _conv2_patches(h1, B):
    """h1: (20, B*32*32) -> (4, 500, B*16*16) quadrant-major im2col for the second
    5x5 pad-2 conv + 2x2 maxpool.  Patch row order = (ky*5 + kx)*20 + cin."""
    h1p = jnp.pad(h1.reshape(20, B, 32, 32),
                  ((0, 0), (0, 0), (2, 2), (2, 2)))                 # (20, B, 36, 36)
    quads = []
    for qy in range(2):
        for qx in range(2):
            taps = [
                h1p[:, :, qy + dy: qy + dy + 31: 2,
                         qx + dx: qx + dx + 31: 2].reshape(1, 20, -1)  # (1, 20, B*256)
                for dy in range(5) for dx in range(5)
            ]
            quads.append(jnp.concatenate(taps, axis=0).reshape(25 * 20, -1))  # (500, B*256)
    return jnp.stack(quads, axis=0)                                 # (4, 500, B*256)


# ----------------------------------------------------------------------------- model

def init_params(key):
    """Deterministic synthetic parameters in the kernel-native layouts.

    Mapping from PyTorch FilterClassifier state_dict:
      w1  = conv1.weight (20,1,5,5)  -> reshape(20, 25)                     [k = ky*5+kx]
      w2  = conv2.weight (50,20,5,5) -> transpose(0,2,3,1).reshape(50,500)  [k = (ky*5+kx)*20+ci]
      wl1 = linear1.weight (500,12800) -> .T.reshape(50,256,500).astype(bf16)
            (row index c*256 + y*16 + x == the NCHW view(-1,12800) flatten order,
             so no activation transpose is needed in the forward path)
      wl2 = linear2.weight (1,500) -> .T (500,1);  biases reshaped to 2-D.
    """
    ks = jax.random.split(key, 8)
    f = jnp.float32
    return {
        "w1":  jax.random.normal(ks[0], (20, 25), f) * 0.08,
        "b1":  jax.random.normal(ks[1], (20, 1), f) * 0.02,
        "w2":  jax.random.normal(ks[2], (50, 500), f) * 0.04,
        "b2":  jax.random.normal(ks[3], (50, 1), f) * 0.02,
        "wl1": (jax.random.normal(ks[4], (50, 256, 500), f) * 0.01).astype(jnp.bfloat16),
        "bl1": jax.random.normal(ks[5], (1, 500), f) * 0.02,
        "wl2": jax.random.normal(ks[6], (500, 1), f) * 0.04,
        "bl2": jax.random.normal(ks[7], (1, 1), f) * 0.02,
    }


def filter_classifier_forward(x_nchw, params):
    """x_nchw: (B, 1, 64, 64) float32 -> logits (B, 1) float32."""
    B = x_nchw.shape[0]
    x = x_nchw[:, 0]                                            # Cin == 1 -> (B, 64, 64)

    # Conv1 + ReLU + MaxPool2d(2): lane-dense (20, B*32*32), pool fused in-kernel.
    p1 = _conv1_patches(x)                                      # (4, 25, B*1024), ~0.8 MB
    h1 = conv_relu_pool(p1, params["w1"], params["b1"], jnp.float32)

    # Conv2 + ReLU + MaxPool2d(2): lane-dense (50, B*16*16); bf16 output feeds the FC head.
    # TODO(synk): replace this 25x-amplified im2col (~4 MB HBM round trip at B=2) with
    # in-kernel accumulation over the 25 (ky,kx) taps on a VMEM-resident padded h1.
    p2 = _conv2_patches(h1, B)                                  # (4, 500, B*256)
    h2 = conv_relu_pool(p2, params["w2"], params["b2"], jnp.bfloat16)

    # FC head: Linear(12800,500)+ReLU (+Dropout==id) with Linear(500,1) fused in the
    # finalize step.  The NCHW flatten order is carried by wl1's (50,256,500) layout,
    # so h2 is consumed directly (pure reshape, no transpose).
    x3d = h2.reshape(50, B, 256)
    return fc_head(x3d, params["wl1"], params["bl1"], params["wl2"], params["bl2"])


# ----------------------------------------------------------------------------- main

if __name__ == "__main__":
    key = jax.random.PRNGKey(0)
    k_x, k_p = jax.random.split(key)

    # (B, C, H, W) = (2, 1, 64, 64): smallest batch consistent with the hard-coded
    # 12800-feature flatten (64/2/2 = 16, 50*16*16 = 12800).
    x = jax.random.normal(k_x, (2, 1, 64, 64), jnp.float32)
    params = init_params(k_p)

    fwd = jax.jit(filter_classifier_forward)
    logits = jax.block_until_ready(fwd(x, params))

    assert logits.shape == (2, 1) and logits.dtype == jnp.float32
    print("KERNEL_OK")
</pallas_src>

<mosaic_0001>
module attributes {stable_mosaic.version = 11 : i64} {
  func.func @_conv_pool_kernel(%arg0: i32, %arg1: memref<4x25x2048xf32, #tpu.memory_space<vmem>>, %arg2: memref<20x25xf32, #tpu.memory_space<vmem>>, %arg3: memref<20x1xf32, #tpu.memory_space<vmem>>, %arg4: memref<20x2048xf32, #tpu.memory_space<vmem>>) attributes {dimension_semantics = [#tpu.dimension_semantics<arbitrary>], iteration_bounds = array<i64: 1>, scalar_prefetch = 0 : i64, scratch_operands = 0 : i64, tpu.core_type = #tpu.core_type<tc>, window_params = [{pipeline_mode = #tpu.pipeline_mode<synchronous>, transform_indices = @transform_0, window_bounds = array<i64: 4, 25, 2048>}, {pipeline_mode = #tpu.pipeline_mode<synchronous>, transform_indices = @transform_1, window_bounds = array<i64: 20, 25>}, {pipeline_mode = #tpu.pipeline_mode<synchronous>, transform_indices = @transform_2, window_bounds = array<i64: 20, 1>}, {pipeline_mode = #tpu.pipeline_mode<synchronous>, transform_indices = @transform_3, window_bounds = array<i64: 20, 2048>}]} {
    %c0 = arith.constant 0 : index
    %c0_0 = arith.constant 0 : index
    %0 = vector.load %arg2[%c0, %c0_0] : memref<20x25xf32, #tpu.memory_space<vmem>>, vector<20x25xf32>
    %c0_1 = arith.constant 0 : index
    %c0_2 = arith.constant 0 : index
    %c0_3 = arith.constant 0 : index
    %1 = vector.load %arg1[%c0_1, %c0_2, %c0_3] : memref<4x25x2048xf32, #tpu.memory_space<vmem>>, vector<1x25x2048xf32>
    %2 = vector.shape_cast %1 : vector<1x25x2048xf32> to vector<25x2048xf32>
    %cst = arith.constant dense<0.000000e+00> : vector<20x2048xf32>
    %3 = tpu.matmul %0, %2, %cst {dimension_numbers = #tpu.dot_dimension_numbers<[1], [0], [0], [1], [0, 0, 1, 1], [], []>} : vector<20x25xf32>, vector<25x2048xf32>, vector<20x2048xf32> -> vector<20x2048xf32>
    %c1 = arith.constant 1 : index
    %c0_4 = arith.constant 0 : index
    %c0_5 = arith.constant 0 : index
    %4 = vector.load %arg1[%c1, %c0_4, %c0_5] : memref<4x25x2048xf32, #tpu.memory_space<vmem>>, vector<1x25x2048xf32>
    %5 = vector.shape_cast %4 : vector<1x25x2048xf32> to vector<25x2048xf32>
    %cst_6 = arith.constant dense<0.000000e+00> : vector<20x2048xf32>
    %6 = tpu.matmul %0, %5, %cst_6 {dimension_numbers = #tpu.dot_dimension_numbers<[1], [0], [0], [1], [0, 0, 1, 1], [], []>} : vector<20x25xf32>, vector<25x2048xf32>, vector<20x2048xf32> -> vector<20x2048xf32>
    %7 = arith.maximumf %3, %6 : vector<20x2048xf32>
    %c2 = arith.constant 2 : index
    %c0_7 = arith.constant 0 : index
    %c0_8 = arith.constant 0 : index
    %8 = vector.load %arg1[%c2, %c0_7, %c0_8] : memref<4x25x2048xf32, #tpu.memory_space<vmem>>, vector<1x25x2048xf32>
    %9 = vector.shape_cast %8 : vector<1x25x2048xf32> to vector<25x2048xf32>
    %cst_9 = arith.constant dense<0.000000e+00> : vector<20x2048xf32>
    %10 = tpu.matmul %0, %9, %cst_9 {dimension_numbers = #tpu.dot_dimension_numbers<[1], [0], [0], [1], [0, 0, 1, 1], [], []>} : vector<20x25xf32>, vector<25x2048xf32>, vector<20x2048xf32> -> vector<20x2048xf32>
    %11 = arith.maximumf %7, %10 : vector<20x2048xf32>
    %c3 = arith.constant 3 : index
    %c0_10 = arith.constant 0 : index
    %c0_11 = arith.constant 0 : index
    %12 = vector.load %arg1[%c3, %c0_10, %c0_11] : memref<4x25x2048xf32, #tpu.memory_space<vmem>>, vector<1x25x2048xf32>
    %13 = vector.shape_cast %12 : vector<1x25x2048xf32> to vector<25x2048xf32>
    %cst_12 = arith.constant dense<0.000000e+00> : vector<20x2048xf32>
    %14 = tpu.matmul %0, %13, %cst_12 {dimension_numbers = #tpu.dot_dimension_numbers<[1], [0], [0], [1], [0, 0, 1, 1], [], []>} : vector<20x25xf32>, vector<25x2048xf32>, vector<20x2048xf32> -> vector<20x2048xf32>
    %15 = arith.maximumf %11, %14 : vector<20x2048xf32>
    %c0_13 = arith.constant 0 : index
    %c0_14 = arith.constant 0 : index
    %16 = vector.load %arg3[%c0_13, %c0_14] : memref<20x1xf32, #tpu.memory_space<vmem>>, vector<20x1xf32>
    %17 = vector.broadcast %16 : vector<20x1xf32> to vector<20x2048xf32>
    %18 = arith.addf %15, %17 : vector<20x2048xf32>
    %cst_15 = arith.constant 0.000000e+00 : f32
    %19 = vector.broadcast %cst_15 : f32 to vector<20x2048xf32>
    %20 = arith.maximumf %18, %19 : vector<20x2048xf32>
    %c0_16 = arith.constant 0 : index
    %c0_17 = arith.constant 0 : index
    %21 = vector.load %arg4[%c0_16, %c0_17] : memref<20x2048xf32, #tpu.memory_space<vmem>>, vector<20x2048xf32>
    tpu.vector_store %arg4[%c0_16, %c0_17], %20 {strides = array<i32>} : memref<20x2048xf32, #tpu.memory_space<vmem>>, vector<20x2048xf32>,
    return
  }
  func.func @transform_0(%arg0: i32) -> (i32, i32, i32) {
    %c0_i32 = arith.constant 0 : i32
    %c0_i32_0 = arith.constant 0 : i32
    %c0_i32_1 = arith.constant 0 : i32
    %c0_i32_2 = arith.constant 0 : i32
    return %c0_i32, %c0_i32_0, %c0_i32_1 : i32, i32, i32
  }
  func.func @transform_1(%arg0: i32) -> (i32, i32) {
    %c0_i32 = arith.constant 0 : i32
    %c0_i32_0 = arith.constant 0 : i32
    %c0_i32_1 = arith.constant 0 : i32
    return %c0_i32, %c0_i32_0 : i32, i32
  }
  func.func @transform_2(%arg0: i32) -> (i32, i32) {
    %c0_i32 = arith.constant 0 : i32
    %c0_i32_0 = arith.constant 0 : i32
    %c0_i32_1 = arith.constant 0 : i32
    return %c0_i32, %c0_i32_0 : i32, i32
  }
  func.func @transform_3(%arg0: i32) -> (i32, i32) {
    %c0_i32 = arith.constant 0 : i32
    %c0_i32_0 = arith.constant 0 : i32
    %c0_i32_1 = arith.constant 0 : i32
    return %c0_i32, %c0_i32_0 : i32, i32
  }
}

module attributes {stable_mosaic.version = 11 : i64} {
  func.func @_conv_pool_kernel(%arg0: i32, %arg1: memref<4x500x512xf32, #tpu.memory_space<vmem>>, %arg2: memref<50x500xf32, #tpu.memory_space<vmem>>, %arg3: memref<50x1xf32, #tpu.memory_space<vmem>>, %arg4: memref<50x512xbf16, #tpu.memory_space<vmem>>) attributes {dimension_semantics = [#tpu.dimension_semantics<arbitrary>], iteration_bounds = array<i64: 1>, scalar_prefetch = 0 : i64, scratch_operands = 0 : i64, tpu.core_type = #tpu.core_type<tc>, window_params = [{pipeline_mode = #tpu.pipeline_mode<synchronous>, transform_indices = @transform_0, window_bounds = array<i64: 4, 500, 512>}, {pipeline_mode = #tpu.pipeline_mode<synchronous>, transform_indices = @transform_1, window_bounds = array<i64: 50, 500>}, {pipeline_mode = #tpu.pipeline_mode<synchronous>, transform_indices = @transform_2, window_bounds = array<i64: 50, 1>}, {pipeline_mode = #tpu.pipeline_mode<synchronous>, transform_indices = @transform_3, window_bounds = array<i64: 50, 512>}]} {
    %c0 = arith.constant 0 : index
    %c0_0 = arith.constant 0 : index
    %0 = vector.load %arg2[%c0, %c0_0] : memref<50x500xf32, #tpu.memory_space<vmem>>, vector<50x500xf32>
    %c0_1 = arith.constant 0 : index
    %c0_2 = arith.constant 0 : index
    %c0_3 = arith.constant 0 : index
    %1 = vector.load %arg1[%c0_1, %c0_2, %c0_3] : memref<4x500x512xf32, #tpu.memory_space<vmem>>, vector<1x500x512xf32>
    %2 = vector.shape_cast %1 : vector<1x500x512xf32> to vector<500x512xf32>
    %cst = arith.constant dense<0.000000e+00> : vector<50x512xf32>
    %3 = tpu.matmul %0, %2, %cst {dimension_numbers = #tpu.dot_dimension_numbers<[1], [0], [0], [1], [0, 0, 1, 1], [], []>} : vector<50x500xf32>, vector<500x512xf32>, vector<50x512xf32> -> vector<50x512xf32>
    %c1 = arith.constant 1 : index
    %c0_4 = arith.constant 0 : index
    %c0_5 = arith.constant 0 : index
    %4 = vector.load %arg1[%c1, %c0_4, %c0_5] : memref<4x500x512xf32, #tpu.memory_space<vmem>>, vector<1x500x512xf32>
    %5 = vector.shape_cast %4 : vector<1x500x512xf32> to vector<500x512xf32>
    %cst_6 = arith.constant dense<0.000000e+00> : vector<50x512xf32>
    %6 = tpu.matmul %0, %5, %cst_6 {dimension_numbers = #tpu.dot_dimension_numbers<[1], [0], [0], [1], [0, 0, 1, 1], [], []>} : vector<50x500xf32>, vector<500x512xf32>, vector<50x512xf32> -> vector<50x512xf32>
    %7 = arith.maximumf %3, %6 : vector<50x512xf32>
    %c2 = arith.constant 2 : index
    %c0_7 = arith.constant 0 : index
    %c0_8 = arith.constant 0 : index
    %8 = vector.load %arg1[%c2, %c0_7, %c0_8] : memref<4x500x512xf32, #tpu.memory_space<vmem>>, vector<1x500x512xf32>
    %9 = vector.shape_cast %8 : vector<1x500x512xf32> to vector<500x512xf32>
    %cst_9 = arith.constant dense<0.000000e+00> : vector<50x512xf32>
    %10 = tpu.matmul %0, %9, %cst_9 {dimension_numbers = #tpu.dot_dimension_numbers<[1], [0], [0], [1], [0, 0, 1, 1], [], []>} : vector<50x500xf32>, vector<500x512xf32>, vector<50x512xf32> -> vector<50x512xf32>
    %11 = arith.maximumf %7, %10 : vector<50x512xf32>
    %c3 = arith.constant 3 : index
    %c0_10 = arith.constant 0 : index
    %c0_11 = arith.constant 0 : index
    %12 = vector.load %arg1[%c3, %c0_10, %c0_11] : memref<4x500x512xf32, #tpu.memory_space<vmem>>, vector<1x500x512xf32>
    %13 = vector.shape_cast %12 : vector<1x500x512xf32> to vector<500x512xf32>
    %cst_12 = arith.constant dense<0.000000e+00> : vector<50x512xf32>
    %14 = tpu.matmul %0, %13, %cst_12 {dimension_numbers = #tpu.dot_dimension_numbers<[1], [0], [0], [1], [0, 0, 1, 1], [], []>} : vector<50x500xf32>, vector<500x512xf32>, vector<50x512xf32> -> vector<50x512xf32>
    %15 = arith.maximumf %11, %14 : vector<50x512xf32>
    %c0_13 = arith.constant 0 : index
    %c0_14 = arith.constant 0 : index
    %16 = vector.load %arg3[%c0_13, %c0_14] : memref<50x1xf32, #tpu.memory_space<vmem>>, vector<50x1xf32>
    %17 = vector.broadcast %16 : vector<50x1xf32> to vector<50x512xf32>
    %18 = arith.addf %15, %17 : vector<50x512xf32>
    %cst_15 = arith.constant 0.000000e+00 : f32
    %19 = vector.broadcast %cst_15 : f32 to vector<50x512xf32>
    %20 = arith.maximumf %18, %19 : vector<50x512xf32>
    %21 = arith.truncf %20 : vector<50x512xf32> to vector<50x512xbf16>
    %c0_16 = arith.constant 0 : index
    %c0_17 = arith.constant 0 : index
    %22 = vector.load %arg4[%c0_16, %c0_17] : memref<50x512xbf16, #tpu.memory_space<vmem>>, vector<50x512xbf16>
    tpu.vector_store %arg4[%c0_16, %c0_17], %21 {strides = array<i32>} : memref<50x512xbf16, #tpu.memory_space<vmem>>, vector<50x512xbf16>,
    return
  }
  func.func @transform_0(%arg0: i32) -> (i32, i32, i32) {
    %c0_i32 = arith.constant 0 : i32
    %c0_i32_0 = arith.constant 0 : i32
    %c0_i32_1 = arith.constant 0 : i32
    %c0_i32_2 = arith.constant 0 : i32
    return %c0_i32, %c0_i32_0, %c0_i32_1 : i32, i32, i32
  }
  func.func @transform_1(%arg0: i32) -> (i32, i32) {
    %c0_i32 = arith.constant 0 : i32
    %c0_i32_0 = arith.constant 0 : i32
    %c0_i32_1 = arith.constant 0 : i32
    return %c0_i32, %c0_i32_0 : i32, i32
  }
  func.func @transform_2(%arg0: i32) -> (i32, i32) {
    %c0_i32 = arith.constant 0 : i32
    %c0_i32_0 = arith.constant 0 : i32
    %c0_i32_1 = arith.constant 0 : i32
    return %c0_i32, %c0_i32_0 : i32, i32
  }
  func.func @transform_3(%arg0: i32) -> (i32, i32) {
    %c0_i32 = arith.constant 0 : i32
    %c0_i32_0 = arith.constant 0 : i32
    %c0_i32_1 = arith.constant 0 : i32
    return %c0_i32, %c0_i32_0 : i32, i32
  }
}

module attributes {stable_mosaic.version = 11 : i64} {
  func.func @_fc_head_kernel(%arg0: i32, %arg1: memref<10x2x256xbf16, #tpu.memory_space<vmem>>, %arg2: memref<10x256x500xbf16, #tpu.memory_space<vmem>>, %arg3: memref<1x500xf32, #tpu.memory_space<vmem>>, %arg4: memref<500x1xf32, #tpu.memory_space<vmem>>, %arg5: memref<1x1xf32, #tpu.memory_space<vmem>>, %arg6: memref<2x1xf32, #tpu.memory_space<vmem>>, %arg7: memref<2x500xf32, #tpu.memory_space<vmem>>) attributes {dimension_semantics = [#tpu.dimension_semantics<arbitrary>], iteration_bounds = array<i64: 5>, scalar_prefetch = 0 : i64, scratch_operands = 1 : i64, tpu.core_type = #tpu.core_type<tc>, window_params = [{transform_indices = @transform_0, window_bounds = array<i64: 10, 2, 256>}, {transform_indices = @transform_1, window_bounds = array<i64: 10, 256, 500>}, {pipeline_mode = #tpu.pipeline_mode<synchronous>, transform_indices = @transform_2, window_bounds = array<i64: 1, 500>}, {pipeline_mode = #tpu.pipeline_mode<synchronous>, transform_indices = @transform_3, window_bounds = array<i64: 500, 1>}, {pipeline_mode = #tpu.pipeline_mode<synchronous>, transform_indices = @transform_4, window_bounds = array<i64: 1, 1>}, {pipeline_mode = #tpu.pipeline_mode<synchronous>, transform_indices = @transform_5, window_bounds = array<i64: 2, 1>}]} {
    %c0_i32 = arith.constant 0 : i32
    %0 = arith.cmpi eq, %arg0, %c0_i32 : i32
    %1 = arith.extui %0 : i1 to i32
    %c0_i32_0 = arith.constant 0 : i32
    %2 = arith.cmpi ne, %1, %c0_i32_0 : i32
    scf.if %2 {
      %cst_101 = arith.constant 0.000000e+00 : f32
      %86 = vector.broadcast %cst_101 : f32 to vector<2x500xf32>
      %c0_102 = arith.constant 0 : index
      %c0_103 = arith.constant 0 : index
      %87 = vector.load %arg7[%c0_102, %c0_103] : memref<2x500xf32, #tpu.memory_space<vmem>>, vector<2x500xf32>
      tpu.vector_store %arg7[%c0_102, %c0_103], %86 {strides = array<i32>} : memref<2x500xf32, #tpu.memory_space<vmem>>, vector<2x500xf32>,
    } else {
    }
    %c0 = arith.constant 0 : index
    %c0_1 = arith.constant 0 : index
    %3 = vector.load %arg7[%c0, %c0_1] : memref<2x500xf32, #tpu.memory_space<vmem>>, vector<2x500xf32>
    %c0_2 = arith.constant 0 : index
    %c0_3 = arith.constant 0 : index
    %c0_4 = arith.constant 0 : index
    %4 = vector.load %arg1[%c0_2, %c0_3, %c0_4] : memref<10x2x256xbf16, #tpu.memory_space<vmem>>, vector<1x2x256xbf16>
    %5 = vector.shape_cast %4 : vector<1x2x256xbf16> to vector<2x256xbf16>
    %c0_5 = arith.constant 0 : index
    %c0_6 = arith.constant 0 : index
    %c0_7 = arith.constant 0 : index
    %6 = vector.load %arg2[%c0_5, %c0_6, %c0_7] : memref<10x256x500xbf16, #tpu.memory_space<vmem>>, vector<1x256x500xbf16>
    %7 = vector.shape_cast %6 : vector<1x256x500xbf16> to vector<256x500xbf16>
    %cst = arith.constant dense<0.000000e+00> : vector<2x500xf32>
    %8 = tpu.matmul %5, %7, %cst {dimension_numbers = #tpu.dot_dimension_numbers<[1], [0], [0], [1], [0, 0, 1, 1], [], []>} : vector<2x256xbf16>, vector<256x500xbf16>, vector<2x500xf32> -> vector<2x500xf32>
    %9 = arith.addf %3, %8 : vector<2x500xf32>
    %c0_8 = arith.constant 0 : index
    %c0_9 = arith.constant 0 : index
    %10 = vector.load %arg7[%c0_8, %c0_9] : memref<2x500xf32, #tpu.memory_space<vmem>>, vector<2x500xf32>
    tpu.vector_store %arg7[%c0_8, %c0_9], %9 {strides = array<i32>} : memref<2x500xf32, #tpu.memory_space<vmem>>, vector<2x500xf32>,
    %c0_10 = arith.constant 0 : index
    %c0_11 = arith.constant 0 : index
    %11 = vector.load %arg7[%c0_10, %c0_11] : memref<2x500xf32, #tpu.memory_space<vmem>>, vector<2x500xf32>
    %c1 = arith.constant 1 : index
    %c0_12 = arith.constant 0 : index
    %c0_13 = arith.constant 0 : index
    %12 = vector.load %arg1[%c1, %c0_12, %c0_13] : memref<10x2x256xbf16, #tpu.memory_space<vmem>>, vector<1x2x256xbf16>
    %13 = vector.shape_cast %12 : vector<1x2x256xbf16> to vector<2x256xbf16>
    %c1_14 = arith.constant 1 : index
    %c0_15 = arith.constant 0 : index
    %c0_16 = arith.constant 0 : index
    %14 = vector.load %arg2[%c1_14, %c0_15, %c0_16] : memref<10x256x500xbf16, #tpu.memory_space<vmem>>, vector<1x256x500xbf16>
    %15 = vector.shape_cast %14 : vector<1x256x500xbf16> to vector<256x500xbf16>
    %cst_17 = arith.constant dense<0.000000e+00> : vector<2x500xf32>
    %16 = tpu.matmul %13, %15, %cst_17 {dimension_numbers = #tpu.dot_dimension_numbers<[1], [0], [0], [1], [0, 0, 1, 1], [], []>} : vector<2x256xbf16>, vector<256x500xbf16>, vector<2x500xf32> -> vector<2x500xf32>
    %17 = arith.addf %11, %16 : vector<2x500xf32>
    %c0_18 = arith.constant 0 : index
    %c0_19 = arith.constant 0 : index
    %18 = vector.load %arg7[%c0_18, %c0_19] : memref<2x500xf32, #tpu.memory_space<vmem>>, vector<2x500xf32>
    tpu.vector_store %arg7[%c0_18, %c0_19], %17 {strides = array<i32>} : memref<2x500xf32, #tpu.memory_space<vmem>>, vector<2x500xf32>,
    %c0_20 = arith.constant 0 : index
    %c0_21 = arith.constant 0 : index
    %19 = vector.load %arg7[%c0_20, %c0_21] : memref<2x500xf32, #tpu.memory_space<vmem>>, vector<2x500xf32>
    %c2 = arith.constant 2 : index
    %c0_22 = arith.constant 0 : index
    %c0_23 = arith.constant 0 : index
    %20 = vector.load %arg1[%c2, %c0_22, %c0_23] : memref<10x2x256xbf16, #tpu.memory_space<vmem>>, vector<1x2x256xbf16>
    %21 = vector.shape_cast %20 : vector<1x2x256xbf16> to vector<2x256xbf16>
    %c2_24 = arith.constant 2 : index
    %c0_25 = arith.constant 0 : index
    %c0_26 = arith.constant 0 : index
    %22 = vector.load %arg2[%c2_24, %c0_25, %c0_26] : memref<10x256x500xbf16, #tpu.memory_space<vmem>>, vector<1x256x500xbf16>
    %23 = vector.shape_cast %22 : vector<1x256x500xbf16> to vector<256x500xbf16>
    %cst_27 = arith.constant dense<0.000000e+00> : vector<2x500xf32>
    %24 = tpu.matmul %21, %23, %cst_27 {dimension_numbers = #tpu.dot_dimension_numbers<[1], [0], [0], [1], [0, 0, 1, 1], [], []>} : vector<2x256xbf16>, vector<256x500xbf16>, vector<2x500xf32> -> vector<2x500xf32>
    %25 = arith.addf %19, %24 : vector<2x500xf32>
    %c0_28 = arith.constant 0 : index
    %c0_29 = arith.constant 0 : index
    %26 = vector.load %arg7[%c0_28, %c0_29] : memref<2x500xf32, #tpu.memory_space<vmem>>, vector<2x500xf32>
    tpu.vector_store %arg7[%c0_28, %c0_29], %25 {strides = array<i32>} : memref<2x500xf32, #tpu.memory_space<vmem>>, vector<2x500xf32>,
    %c0_30 = arith.constant 0 : index
    %c0_31 = arith.constant 0 : index
    %27 = vector.load %arg7[%c0_30, %c0_31] : memref<2x500xf32, #tpu.memory_space<vmem>>, vector<2x500xf32>
    %c3 = arith.constant 3 : index
    %c0_32 = arith.constant 0 : index
    %c0_33 = arith.constant 0 : index
    %28 = vector.load %arg1[%c3, %c0_32, %c0_33] : memref<10x2x256xbf16, #tpu.memory_space<vmem>>, vector<1x2x256xbf16>
    %29 = vector.shape_cast %28 : vector<1x2x256xbf16> to vector<2x256xbf16>
    %c3_34 = arith.constant 3 : index
    %c0_35 = arith.constant 0 : index
    %c0_36 = arith.constant 0 : index
    %30 = vector.load %arg2[%c3_34, %c0_35, %c0_36] : memref<10x256x500xbf16, #tpu.memory_space<vmem>>, vector<1x256x500xbf16>
    %31 = vector.shape_cast %30 : vector<1x256x500xbf16> to vector<256x500xbf16>
    %cst_37 = arith.constant dense<0.000000e+00> : vector<2x500xf32>
    %32 = tpu.matmul %29, %31, %cst_37 {dimension_numbers = #tpu.dot_dimension_numbers<[1], [0], [0], [1], [0, 0, 1, 1], [], []>} : vector<2x256xbf16>, vector<256x500xbf16>, vector<2x500xf32> -> vector<2x500xf32>
    %33 = arith.addf %27, %32 : vector<2x500xf32>
    %c0_38 = arith.constant 0 : index
    %c0_39 = arith.constant 0 : index
    %34 = vector.load %arg7[%c0_38, %c0_39] : memref<2x500xf32, #tpu.memory_space<vmem>>, vector<2x500xf32>
    tpu.vector_store %arg7[%c0_38, %c0_39], %33 {strides = array<i32>} : memref<2x500xf32, #tpu.memory_space<vmem>>, vector<2x500xf32>,
    %c0_40 = arith.constant 0 : index
    %c0_41 = arith.constant 0 : index
    %35 = vector.load %arg7[%c0_40, %c0_41] : memref<2x500xf32, #tpu.memory_space<vmem>>, vector<2x500xf32>
    %c4 = arith.constant 4 : index
    %c0_42 = arith.constant 0 : index
    %c0_43 = arith.constant 0 : index
    %36 = vector.load %arg1[%c4, %c0_42, %c0_43] : memref<10x2x256xbf16, #tpu.memory_space<vmem>>, vector<1x2x256xbf16>
    %37 = vector.shape_cast %36 : vector<1x2x256xbf16> to vector<2x256xbf16>
    %c4_44 = arith.constant 4 : index
    %c0_45 = arith.constant 0 : index
    %c0_46 = arith.constant 0 : index
    %38 = vector.load %arg2[%c4_44, %c0_45, %c0_46] : memref<10x256x500xbf16, #tpu.memory_space<vmem>>, vector<1x256x500xbf16>
    %39 = vector.shape_cast %38 : vector<1x256x500xbf16> to vector<256x500xbf16>
    %cst_47 = arith.constant dense<0.000000e+00> : vector<2x500xf32>
    %40 = tpu.matmul %37, %39, %cst_47 {dimension_numbers = #tpu.dot_dimension_numbers<[1], [0], [0], [1], [0, 0, 1, 1], [], []>} : vector<2x256xbf16>, vector<256x500xbf16>, vector<2x500xf32> -> vector<2x500xf32>
    %41 = arith.addf %35, %40 : vector<2x500xf32>
    %c0_48 = arith.constant 0 : index
    %c0_49 = arith.constant 0 : index
    %42 = vector.load %arg7[%c0_48, %c0_49] : memref<2x500xf32, #tpu.memory_space<vmem>>, vector<2x500xf32>
    tpu.vector_store %arg7[%c0_48, %c0_49], %41 {strides = array<i32>} : memref<2x500xf32, #tpu.memory_space<vmem>>, vector<2x500xf32>,
    %c0_50 = arith.constant 0 : index
    %c0_51 = arith.constant 0 : index
    %43 = vector.load %arg7[%c0_50, %c0_51] : memref<2x500xf32, #tpu.memory_space<vmem>>, vector<2x500xf32>
    %c5 = arith.constant 5 : index
    %c0_52 = arith.constant 0 : index
    %c0_53 = arith.constant 0 : index
    %44 = vector.load %arg1[%c5, %c0_52, %c0_53] : memref<10x2x256xbf16, #tpu.memory_space<vmem>>, vector<1x2x256xbf16>
    %45 = vector.shape_cast %44 : vector<1x2x256xbf16> to vector<2x256xbf16>
    %c5_54 = arith.constant 5 : index
    %c0_55 = arith.constant 0 : index
    %c0_56 = arith.constant 0 : index
    %46 = vector.load %arg2[%c5_54, %c0_55, %c0_56] : memref<10x256x500xbf16, #tpu.memory_space<vmem>>, vector<1x256x500xbf16>
    %47 = vector.shape_cast %46 : vector<1x256x500xbf16> to vector<256x500xbf16>
    %cst_57 = arith.constant dense<0.000000e+00> : vector<2x500xf32>
    %48 = tpu.matmul %45, %47, %cst_57 {dimension_numbers = #tpu.dot_dimension_numbers<[1], [0], [0], [1], [0, 0, 1, 1], [], []>} : vector<2x256xbf16>, vector<256x500xbf16>, vector<2x500xf32> -> vector<2x500xf32>
    %49 = arith.addf %43, %48 : vector<2x500xf32>
    %c0_58 = arith.constant 0 : index
    %c0_59 = arith.constant 0 : index
    %50 = vector.load %arg7[%c0_58, %c0_59] : memref<2x500xf32, #tpu.memory_space<vmem>>, vector<2x500xf32>
    tpu.vector_store %arg7[%c0_58, %c0_59], %49 {strides = array<i32>} : memref<2x500xf32, #tpu.memory_space<vmem>>, vector<2x500xf32>,
    %c0_60 = arith.constant 0 : index
    %c0_61 = arith.constant 0 : index
    %51 = vector.load %arg7[%c0_60, %c0_61] : memref<2x500xf32, #tpu.memory_space<vmem>>, vector<2x500xf32>
    %c6 = arith.constant 6 : index
    %c0_62 = arith.constant 0 : index
    %c0_63 = arith.constant 0 : index
    %52 = vector.load %arg1[%c6, %c0_62, %c0_63] : memref<10x2x256xbf16, #tpu.memory_space<vmem>>, vector<1x2x256xbf16>
    %53 = vector.shape_cast %52 : vector<1x2x256xbf16> to vector<2x256xbf16>
    %c6_64 = arith.constant 6 : index
    %c0_65 = arith.constant 0 : index
    %c0_66 = arith.constant 0 : index
    %54 = vector.load %arg2[%c6_64, %c0_65, %c0_66] : memref<10x256x500xbf16, #tpu.memory_space<vmem>>, vector<1x256x500xbf16>
    %55 = vector.shape_cast %54 : vector<1x256x500xbf16> to vector<256x500xbf16>
    %cst_67 = arith.constant dense<0.000000e+00> : vector<2x500xf32>
    %56 = tpu.matmul %53, %55, %cst_67 {dimension_numbers = #tpu.dot_dimension_numbers<[1], [0], [0], [1], [0, 0, 1, 1], [], []>} : vector<2x256xbf16>, vector<256x500xbf16>, vector<2x500xf32> -> vector<2x500xf32>
    %57 = arith.addf %51, %56 : vector<2x500xf32>
    %c0_68 = arith.constant 0 : index
    %c0_69 = arith.constant 0 : index
    %58 = vector.load %arg7[%c0_68, %c0_69] : memref<2x500xf32, #tpu.memory_space<vmem>>, vector<2x500xf32>
    tpu.vector_store %arg7[%c0_68, %c0_69], %57 {strides = array<i32>} : memref<2x500xf32, #tpu.memory_space<vmem>>, vector<2x500xf32>,
    %c0_70 = arith.constant 0 : index
    %c0_71 = arith.constant 0 : index
    %59 = vector.load %arg7[%c0_70, %c0_71] : memref<2x500xf32, #tpu.memory_space<vmem>>, vector<2x500xf32>
    %c7 = arith.constant 7 : index
    %c0_72 = arith.constant 0 : index
    %c0_73 = arith.constant 0 : index
    %60 = vector.load %arg1[%c7, %c0_72, %c0_73] : memref<10x2x256xbf16, #tpu.memory_space<vmem>>, vector<1x2x256xbf16>
    %61 = vector.shape_cast %60 : vector<1x2x256xbf16> to vector<2x256xbf16>
    %c7_74 = arith.constant 7 : index
    %c0_75 = arith.constant 0 : index
    %c0_76 = arith.constant 0 : index
    %62 = vector.load %arg2[%c7_74, %c0_75, %c0_76] : memref<10x256x500xbf16, #tpu.memory_space<vmem>>, vector<1x256x500xbf16>
    %63 = vector.shape_cast %62 : vector<1x256x500xbf16> to vector<256x500xbf16>
    %cst_77 = arith.constant dense<0.000000e+00> : vector<2x500xf32>
    %64 = tpu.matmul %61, %63, %cst_77 {dimension_numbers = #tpu.dot_dimension_numbers<[1], [0], [0], [1], [0, 0, 1, 1], [], []>} : vector<2x256xbf16>, vector<256x500xbf16>, vector<2x500xf32> -> vector<2x500xf32>
    %65 = arith.addf %59, %64 : vector<2x500xf32>
    %c0_78 = arith.constant 0 : index
    %c0_79 = arith.constant 0 : index
    %66 = vector.load %arg7[%c0_78, %c0_79] : memref<2x500xf32, #tpu.memory_space<vmem>>, vector<2x500xf32>
    tpu.vector_store %arg7[%c0_78, %c0_79], %65 {strides = array<i32>} : memref<2x500xf32, #tpu.memory_space<vmem>>, vector<2x500xf32>,
    %c0_80 = arith.constant 0 : index
    %c0_81 = arith.constant 0 : index
    %67 = vector.load %arg7[%c0_80, %c0_81] : memref<2x500xf32, #tpu.memory_space<vmem>>, vector<2x500xf32>
    %c8 = arith.constant 8 : index
    %c0_82 = arith.constant 0 : index
    %c0_83 = arith.constant 0 : index
    %68 = vector.load %arg1[%c8, %c0_82, %c0_83] : memref<10x2x256xbf16, #tpu.memory_space<vmem>>, vector<1x2x256xbf16>
    %69 = vector.shape_cast %68 : vector<1x2x256xbf16> to vector<2x256xbf16>
    %c8_84 = arith.constant 8 : index
    %c0_85 = arith.constant 0 : index
    %c0_86 = arith.constant 0 : index
    %70 = vector.load %arg2[%c8_84, %c0_85, %c0_86] : memref<10x256x500xbf16, #tpu.memory_space<vmem>>, vector<1x256x500xbf16>
    %71 = vector.shape_cast %70 : vector<1x256x500xbf16> to vector<256x500xbf16>
    %cst_87 = arith.constant dense<0.000000e+00> : vector<2x500xf32>
    %72 = tpu.matmul %69, %71, %cst_87 {dimension_numbers = #tpu.dot_dimension_numbers<[1], [0], [0], [1], [0, 0, 1, 1], [], []>} : vector<2x256xbf16>, vector<256x500xbf16>, vector<2x500xf32> -> vector<2x500xf32>
    %73 = arith.addf %67, %72 : vector<2x500xf32>
    %c0_88 = arith.constant 0 : index
    %c0_89 = arith.constant 0 : index
    %74 = vector.load %arg7[%c0_88, %c0_89] : memref<2x500xf32, #tpu.memory_space<vmem>>, vector<2x500xf32>
    tpu.vector_store %arg7[%c0_88, %c0_89], %73 {strides = array<i32>} : memref<2x500xf32, #tpu.memory_space<vmem>>, vector<2x500xf32>,
    %c0_90 = arith.constant 0 : index
    %c0_91 = arith.constant 0 : index
    %75 = vector.load %arg7[%c0_90, %c0_91] : memref<2x500xf32, #tpu.memory_space<vmem>>, vector<2x500xf32>
    %c9 = arith.constant 9 : index
    %c0_92 = arith.constant 0 : index
    %c0_93 = arith.constant 0 : index
    %76 = vector.load %arg1[%c9, %c0_92, %c0_93] : memref<10x2x256xbf16, #tpu.memory_space<vmem>>, vector<1x2x256xbf16>
    %77 = vector.shape_cast %76 : vector<1x2x256xbf16> to vector<2x256xbf16>
    %c9_94 = arith.constant 9 : index
    %c0_95 = arith.constant 0 : index
    %c0_96 = arith.constant 0 : index
    %78 = vector.load %arg2[%c9_94, %c0_95, %c0_96] : memref<10x256x500xbf16, #tpu.memory_space<vmem>>, vector<1x256x500xbf16>
    %79 = vector.shape_cast %78 : vector<1x256x500xbf16> to vector<256x500xbf16>
    %cst_97 = arith.constant dense<0.000000e+00> : vector<2x500xf32>
    %80 = tpu.matmul %77, %79, %cst_97 {dimension_numbers = #tpu.dot_dimension_numbers<[1], [0], [0], [1], [0, 0, 1, 1], [], []>} : vector<2x256xbf16>, vector<256x500xbf16>, vector<2x500xf32> -> vector<2x500xf32>
    %81 = arith.addf %75, %80 : vector<2x500xf32>
    %c0_98 = arith.constant 0 : index
    %c0_99 = arith.constant 0 : index
    %82 = vector.load %arg7[%c0_98, %c0_99] : memref<2x500xf32, #tpu.memory_space<vmem>>, vector<2x500xf32>
    tpu.vector_store %arg7[%c0_98, %c0_99], %81 {strides = array<i32>} : memref<2x500xf32, #tpu.memory_space<vmem>>, vector<2x500xf32>,
    %c4_i32 = arith.constant 4 : i32
    %83 = arith.cmpi eq, %arg0, %c4_i32 : i32
    %84 = arith.extui %83 : i1 to i32
    %c0_i32_100 = arith.constant 0 : i32
    %85 = arith.cmpi ne, %84, %c0_i32_100 : i32
    scf.if %85 {
      %c0_101 = arith.constant 0 : index
      %c0_102 = arith.constant 0 : index
      %86 = vector.load %arg7[%c0_101, %c0_102] : memref<2x500xf32, #tpu.memory_space<vmem>>, vector<2x500xf32>
      %c0_103 = arith.constant 0 : index
      %c0_104 = arith.constant 0 : index
      %87 = vector.load %arg3[%c0_103, %c0_104] : memref<1x500xf32, #tpu.memory_space<vmem>>, vector<1x500xf32>
      %88 = vector.broadcast %87 : vector<1x500xf32> to vector<2x500xf32>
      %89 = arith.addf %86, %88 : vector<2x500xf32>
      %cst_105 = arith.constant 0.000000e+00 : f32
      %90 = vector.broadcast %cst_105 : f32 to vector<2x500xf32>
      %91 = arith.maximumf %89, %90 : vector<2x500xf32>
      %c0_106 = arith.constant 0 : index
      %c0_107 = arith.constant 0 : index
      %92 = vector.load %arg4[%c0_106, %c0_107] : memref<500x1xf32, #tpu.memory_space<vmem>>, vector<500x1xf32>
      %cst_108 = arith.constant dense<0.000000e+00> : vector<2x1xf32>
      %93 = tpu.matmul %91, %92, %cst_108 {dimension_numbers = #tpu.dot_dimension_numbers<[1], [0], [0], [1], [0, 0, 1, 1], [], []>} : vector<2x500xf32>, vector<500x1xf32>, vector<2x1xf32> -> vector<2x1xf32>
      %c0_109 = arith.constant 0 : index
      %c0_110 = arith.constant 0 : index
      %94 = vector.load %arg5[%c0_109, %c0_110] : memref<1x1xf32, #tpu.memory_space<vmem>>, vector<1x1xf32>
      %95 = vector.broadcast %94 : vector<1x1xf32> to vector<2x1xf32>
      %96 = arith.addf %93, %95 : vector<2x1xf32>
      %c0_111 = arith.constant 0 : index
      %c0_112 = arith.constant 0 : index
      %97 = vector.load %arg6[%c0_111, %c0_112] : memref<2x1xf32, #tpu.memory_space<vmem>>, vector<2x1xf32>
      tpu.vector_store %arg6[%c0_111, %c0_112], %96 {strides = array<i32>} : memref<2x1xf32, #tpu.memory_space<vmem>>, vector<2x1xf32>,
    } else {
    }
    return
  }
  func.func @transform_0(%arg0: i32) -> (i32, i32, i32) {
    %c0_i32 = arith.constant 0 : i32
    %c0_i32_0 = arith.constant 0 : i32
    %c0_i32_1 = arith.constant 0 : i32
    return %arg0, %c0_i32, %c0_i32_0 : i32, i32, i32
  }
  func.func @transform_1(%arg0: i32) -> (i32, i32, i32) {
    %c0_i32 = arith.constant 0 : i32
    %c0_i32_0 = arith.constant 0 : i32
    %c0_i32_1 = arith.constant 0 : i32
    return %arg0, %c0_i32, %c0_i32_0 : i32, i32, i32
  }
  func.func @transform_2(%arg0: i32) -> (i32, i32) {
    %c0_i32 = arith.constant 0 : i32
    %c0_i32_0 = arith.constant 0 : i32
    %c0_i32_1 = arith.constant 0 : i32
    return %c0_i32, %c0_i32_0 : i32, i32
  }
  func.func @transform_3(%arg0: i32) -> (i32, i32) {
    %c0_i32 = arith.constant 0 : i32
    %c0_i32_0 = arith.constant 0 : i32
    %c0_i32_1 = arith.constant 0 : i32
    return %c0_i32, %c0_i32_0 : i32, i32
  }
  func.func @transform_4(%arg0: i32) -> (i32, i32) {
    %c0_i32 = arith.constant 0 : i32
    %c0_i32_0 = arith.constant 0 : i32
    %c0_i32_1 = arith.constant 0 : i32
    return %c0_i32, %c0_i32_0 : i32, i32
  }
  func.func @transform_5(%arg0: i32) -> (i32, i32) {
    %c0_i32 = arith.constant 0 : i32
    %c0_i32_0 = arith.constant 0 : i32
    %c0_i32_1 = arith.constant 0 : i32
    return %c0_i32, %c0_i32_0 : i32, i32
  }
}

</mosaic_0001>

<llo_original>
// kernel: filter_classifier_forward.3
$region0: #{filter_classifier_forward.3}
  #allocation0 [shape = 'u32[]', space=smem, size = 0x4, offset = 0x4, fixed_abs, tag = 'smem constant byte address 0x4 - core index']
  #allocation1 [shape = 'u32[144,128]{1,0:T(1,128)}', space=vmem, size = 0x12000, scoped, tag = 'internal scratch']
  %s0 = inlined_call_operand.vmem [shape: f32[4,25,2048], index: 0, kind: input, shape index: {}]
  %s1 = inlined_call_operand.vmem [shape: f32[20,25], index: 1, kind: input, shape index: {}]
  %s2 = inlined_call_operand.vmem [shape: f32[20,1], index: 2, kind: input, shape index: {}]
  %s3 = inlined_call_operand.vmem [shape: f32[20,2048], index: 3, kind: output, shape index: {}]
  %s4 = sld [smem:[#allocation0]]
  $region22: #{filter_classifier_forward.3} parent=0
    _
  %s6 = ssub.s32 1, %s4
  %s7 = scalar_select 0, %s6, %s4
  // Predicated region
  $region2: #{filter_classifier_forward.3} parent=0 // pred_check
    _
  $region3: #{filter_classifier_forward.3} parent=0 // pred_check_branch
    %9 = sbr.rel (0) target = $region5
  $region4: #{filter_classifier_forward.3} parent=0 // pred_region
    _
  $region5: #{filter_classifier_forward.3} parent=0 // pred_fallthru
    _
  // Predicated region
  $region6: #{filter_classifier_forward.3} parent=0 // pred_check
    _
  $region7: #{filter_classifier_forward.3} parent=0 // pred_check_branch
    %11 = sbr.rel (0) target = $region9
  $region8: #{filter_classifier_forward.3} parent=0 // pred_region
    _
  $region9: #{filter_classifier_forward.3} parent=0 // pred_fallthru
    _
  // Predicated region
  $region10: #{filter_classifier_forward.3} parent=0 // pred_check
    _
  $region11: #{filter_classifier_forward.3} parent=0 // pred_check_branch
    %13 = sbr.rel (0) target = $region13
  $region12: #{filter_classifier_forward.3} parent=0 // pred_region
    _
  $region13: #{filter_classifier_forward.3} parent=0 // pred_fallthru
    _
  %v14 = vld [vmem:[%s1] sm:$0xff]
  %v15 = vld [vmem:[%s1 + $0x8] sm:$0xff]
  %v16 = vld [vmem:[%s1 + $0x10] sm:$0xf]
  %v17 = vld [vmem:[%s0] sm:$0xff]
  %v18 = vld [vmem:[%s0 + $0x8] sm:$0xff]
  %v19 = vld [vmem:[%s0 + $0x10] sm:$0xff]
  %v20 = vld [vmem:[%s0 + $0x18] sm:$0xff]
  %v21 = vld [vmem:[%s0 + $0x20] sm:$0xff]
  %v22 = vld [vmem:[%s0 + $0x28] sm:$0xff]
  %v23 = vld [vmem:[%s0 + $0x30] sm:$0xff]
  %v24 = vld [vmem:[%s0 + $0x38] sm:$0xff]
  %v25 = vld [vmem:[%s0 + $0x40] sm:$0xff]
  %v26 = vld [vmem:[%s0 + $0x48] sm:$0xff]
  %v27 = vld [vmem:[%s0 + $0x50] sm:$0xff]
  %v28 = vld [vmem:[%s0 + $0x58] sm:$0xff]
  %v29 = vld [vmem:[%s0 + $0x60] sm:$0xff]
  %v30 = vld [vmem:[%s0 + $0x68] sm:$0xff]
  %v31 = vld [vmem:[%s0 + $0x70] sm:$0xff]
  %v32 = vld [vmem:[%s0 + $0x78] sm:$0xff]
  %v33 = vld [vmem:[%s0 + $0x80] sm:$0xff]
  %v34 = vld [vmem:[%s0 + $0x88] sm:$0xff]
  %v35 = vld [vmem:[%s0 + $0x90] sm:$0xff]
  %v36 = vld [vmem:[%s0 + $0x98] sm:$0xff]
  %v37 = vld [vmem:[%s0 + $0xa0] sm:$0xff]
  %v38 = vld [vmem:[%s0 + $0xa8] sm:$0xff]
  %v39 = vld [vmem:[%s0 + $0xb0] sm:$0xff]
  %v40 = vld [vmem:[%s0 + $0xb8] sm:$0xff]
  %v41 = vld [vmem:[%s0 + $0xc0] sm:$0xff]
  %v42 = vld [vmem:[%s0 + $0xc8] sm:$0xff]
  %v43 = vld [vmem:[%s0 + $0xd0] sm:$0xff]
  %v44 = vld [vmem:[%s0 + $0xd8] sm:$0xff]
  %v45 = vld [vmem:[%s0 + $0xe0] sm:$0xff]
  %v46 = vld [vmem:[%s0 + $0xe8] sm:$0xff]
  %v47 = vld [vmem:[%s0 + $0xf0] sm:$0xff]
  %v48 = vld [vmem:[%s0 + $0xf8] sm:$0xff]
  %v49 = vld [vmem:[%s0 + $0x100] sm:$0xff]
  %v50 = vld [vmem:[%s0 + $0x108] sm:$0xff]
  %v51 = vld [vmem:[%s0 + $0x110] sm:$0xff]
  %v52 = vld [vmem:[%s0 + $0x118] sm:$0xff]
  %v53 = vld [vmem:[%s0 + $0x120] sm:$0xff]
  %v54 = vld [vmem:[%s0 + $0x128] sm:$0xff]
  %v55 = vld [vmem:[%s0 + $0x130] sm:$0xff]
  %v56 = vld [vmem:[%s0 + $0x138] sm:$0xff]
  %v57 = vld [vmem:[%s0 + $0x140] sm:$0xff]
  %v58 = vld [vmem:[%s0 + $0x148] sm:$0xff]
  %v59 = vld [vmem:[%s0 + $0x150] sm:$0xff]
  %v60 = vld [vmem:[%s0 + $0x158] sm:$0xff]
  %v61 = vld [vmem:[%s0 + $0x160] sm:$0xff]
  %v62 = vld [vmem:[%s0 + $0x168] sm:$0xff]
  %v63 = vld [vmem:[%s0 + $0x170] sm:$0xff]
  %v64 = vld [vmem:[%s0 + $0x178] sm:$0xff]
  %v65 = vld [vmem:[%s0 + $0x180] sm:$0x1]
  %v66 = vld [vmem:[%s0 + $0x188] sm:$0x1]
  %v67 = vld [vmem:[%s0 + $0x190] sm:$0x1]
  %v68 = vld [vmem:[%s0 + $0x198] sm:$0x1]
  %v69 = vld [vmem:[%s0 + $0x1a0] sm:$0x1]
  %v70 = vld [vmem:[%s0 + $0x1a8] sm:$0x1]
  %v71 = vld [vmem:[%s0 + $0x1b0] sm:$0x1]
  %v72 = vld [vmem:[%s0 + $0x1b8] sm:$0x1]
  %v73 = vld [vmem:[%s0 + $0x1c0] sm:$0x1]
  %v74 = vld [vmem:[%s0 + $0x1c8] sm:$0x1]
  %v75 = vld [vmem:[%s0 + $0x1d0] sm:$0x1]
  %v76 = vld [vmem:[%s0 + $0x1d8] sm:$0x1]
  %v77 = vld [vmem:[%s0 + $0x1e0] sm:$0x1]
  %v78 = vld [vmem:[%s0 + $0x1e8] sm:$0x1]
  %v79 = vld [vmem:[%s0 + $0x1f0] sm:$0x1]
  %v80 = vld [vmem:[%s0 + $0x1f8] sm:$0x1]
  %vm81 = vcmask 203776
  %v83 = vsel %vm81, %v14, 0
  %v86 = vsel %vm81, %v15, 0
  %v89 = vsel %vm81, %v16, 0
  %vm91 = vcmask 1040384
  %v93 = vsel %vm91, %v65, 0
  %v96 = vsel %vm91, %v66, 0
  %v99 = vsel %vm91, %v67, 0
  %v102 = vsel %vm91, %v68, 0
  %v105 = vsel %vm91, %v69, 0
  %v108 = vsel %vm91, %v70, 0
  %v111 = vsel %vm91, %v71, 0
  %v114 = vsel %vm91, %v72, 0
  %v117 = vsel %vm91, %v73, 0
  %v120 = vsel %vm91, %v74, 0
  %v123 = vsel %vm91, %v75, 0
  %v126 = vsel %vm91, %v76, 0
  %v129 = vsel %vm91, %v77, 0
  %v132 = vsel %vm91, %v78, 0
  %v135 = vsel %vm91, %v79, 0
  %v138 = vsel %vm91, %v80, 0
  %140 = vmatprep.subr.mxu0 0.0
  %141 = vmatpush1.msra.mxu0 0.0
  %142 = vmatprep.subr.mxu0 0.0
  %143 = vmatpush1.msra.mxu0 0.0
  %144 = vmatprep.subr.mxu0 0.0
  %145 = vmatpush1.msra.mxu0 0.0
  %146 = vmatprep.subr.mxu0 0.0
  %147 = vmatpush1.msra.mxu0 0.0
  %148 = vmatprep.subr.mxu0 0.0
  %149 = vmatpush1.msra.mxu0 0.0
  %150 = vmatprep.subr.mxu0 0.0
  %151 = vmatpush1.msra.mxu0 0.0
  %152 = vmatprep.subr.mxu0 0.0
  %153 = vmatpush1.msra.mxu0 0.0
  %154 = vmatprep.subr.mxu0 0.0
  %155 = vmatpush1.msra.mxu0 0.0
  %156 = vmatprep.subr.mxu0 0.0
  %157 = vmatpush1.msra.mxu0 0.0
  %158 = vmatprep.subr.mxu0 0.0
  %159 = vmatpush1.msra.mxu0 0.0
  %160 = vmatprep.subr.mxu0 0.0
  %161 = vmatpush1.msra.mxu0 0.0
  %162 = vmatprep.subr.mxu0 0.0
  %163 = vmatpush1.msra.mxu0 0.0
  %164 = vmatprep.subr.mxu0 %v96
  %165 = vmatpush1.msra.mxu0 %v93
  %166 = vmatprep.subr.mxu0 %v50
  %167 = vmatpush1.msra.mxu0 %v49
  %168 = vmatprep.subr.mxu0 %v34
  %169 = vmatpush1.msra.mxu0 %v33
  %170 = vmatprep.subr.mxu0 %v18
  %171 = vmatpush1.msra.mxu0 %v17
  %172 = vmatprep.subr.mxu0 0.0
  %173 = vmatpush2.msra.mxu0 0.0
  %174 = vmatprep.subr.mxu0 0.0
  %175 = vmatpush2.msra.mxu0 0.0
  %176 = vmatprep.subr.mxu0 0.0
  %177 = vmatpush2.msra.mxu0 0.0
  %178 = vmatprep.subr.mxu0 0.0
  %179 = vmatpush2.msra.mxu0 0.0
  %180 = vmatprep.subr.mxu0 0.0
  %181 = vmatpush2.msra.mxu0 0.0
  %182 = vmatprep.subr.mxu0 0.0
  %183 = vmatpush2.msra.mxu0 0.0
  %184 = vmatprep.subr.mxu0 0.0
  %185 = vmatpush2.msra.mxu0 0.0
  %186 = vmatprep.subr.mxu0 0.0
  %187 = vmatpush2.msra.mxu0 0.0
  %188 = vmatprep.subr.mxu0 0.0
  %189 = vmatpush2.msra.mxu0 0.0
  %190 = vmatprep.subr.mxu0 0.0
  %191 = vmatpush2.msra.mxu0 0.0
  %192 = vmatprep.subr.mxu0 0.0
  %193 = vmatpush2.msra.mxu0 0.0
  %194 = vmatprep.subr.mxu0 0.0
  %195 = vmatpush2.msra.mxu0 0.0
  %196 = vmatprep.subr.mxu0 0.0
  %197 = vmatpush2.msra.mxu0 0.0
  %198 = vmatprep.subr.mxu0 0.0
  %199 = vmatpush2.msra.mxu0 0.0
  %200 = vmatprep.subr.mxu0 0.0
  %201 = vmatpush2.msra.mxu0 0.0
  %202 = vmatprep.subr.mxu0 0.0
  %203 = vmatpush2.msra.mxu0 0.0
  %204 = vmatprep.mubr.f32.mxu0 0.0
  %205 = vmatmul.mubr.f32.gmra.mxu0 %v83
  %v206 = vpop.f32.mrf.mxu0
  %v207 = vadd.f32 0.0, %v206
  %v208 = vpop.f32.mrf.mxu0
  %v209 = vadd.f32 0.0, %v208
  %210 = vmatprep.mubr.f32.mxu0 0.0
  %211 = vmatmul.mubr.f32.gmra.mxu0 %v86
  %v212 = vpop.f32.mrf.mxu0
  %v213 = vadd.f32 0.0, %v212
  %v214 = vpop.f32.mrf.mxu0
  %v215 = vadd.f32 0.0, %v214
  %216 = vmatprep.mubr.f32.mxu0 0.0
  %217 = vmatmul.mubr.f32.gmra.mxu0 %v89
  %v218 = vpop.f32.mrf.mxu0
  %v219 = vadd.f32 0.0, %v218
  %v220 = vpop.f32.mrf.mxu0
  %v221 = vadd.f32 0.0, %v220
  %222 = vdwg.mxu0
  %223 = vmatprep.subr.mxu0 0.0
  %224 = vmatpush1.msra.mxu0 0.0
  %225 = vmatprep.subr.mxu0 0.0
  %226 = vmatpush1.msra.mxu0 0.0
  %227 = vmatprep.subr.mxu0 0.0
  %228 = vmatpush1.msra.mxu0 0.0
  %229 = vmatprep.subr.mxu0 0.0
  %230 = vmatpush1.msra.mxu0 0.0
  %231 = vmatprep.subr.mxu0 0.0
  %232 = vmatpush1.msra.mxu0 0.0
  %233 = vmatprep.subr.mxu0 0.0
  %234 = vmatpush1.msra.mxu0 0.0
  %235 = vmatprep.subr.mxu0 0.0
  %236 = vmatpush1.msra.mxu0 0.0
  %237 = vmatprep.subr.mxu0 0.0
  %238 = vmatpush1.msra.mxu0 0.0
  %239 = vmatprep.subr.mxu0 0.0
  %240 = vmatpush1.msra.mxu0 0.0
  %241 = vmatprep.subr.mxu0 0.0
  %242 = vmatpush1.msra.mxu0 0.0
  %243 = vmatprep.subr.mxu0 0.0
  %244 = vmatpush1.msra.mxu0 0.0
  %245 = vmatprep.subr.mxu0 0.0
  %246 = vmatpush1.msra.mxu0 0.0
  %247 = vmatprep.subr.mxu0 %v102
  %248 = vmatpush1.msra.mxu0 %v99
  %249 = vmatprep.subr.mxu0 %v52
  %250 = vmatpush1.msra.mxu0 %v51
  %251 = vmatprep.subr.mxu0 %v36
  %252 = vmatpush1.msra.mxu0 %v35
  %253 = vmatprep.subr.mxu0 %v20
  %254 = vmatpush1.msra.mxu0 %v19
  %255 = vmatprep.subr.mxu0 0.0
  %256 = vmatpush2.msra.mxu0 0.0
  %257 = vmatprep.subr.mxu0 0.0
  %258 = vmatpush2.msra.mxu0 0.0
  %259 = vmatprep.subr.mxu0 0.0
  %260 = vmatpush2.msra.mxu0 0.0
  %261 = vmatprep.subr.mxu0 0.0
  %262 = vmatpush2.msra.mxu0 0.0
  %263 = vmatprep.subr.mxu0 0.0
  %264 = vmatpush2.msra.mxu0 0.0
  %265 = vmatprep.subr.mxu0 0.0
  %266 = vmatpush2.msra.mxu0 0.0
  %267 = vmatprep.subr.mxu0 0.0
  %268 = vmatpush2.msra.mxu0 0.0
  %269 = vmatprep.subr.mxu0 0.0
  %270 = vmatpush2.msra.mxu0 0.0
  %271 = vmatprep.subr.mxu0 0.0
  %272 = vmatpush2.msra.mxu0 0.0
  %273 = vmatprep.subr.mxu0 0.0
  %274 = vmatpush2.msra.mxu0 0.0
  %275 = vmatprep.subr.mxu0 0.0
  %276 = vmatpush2.msra.mxu0 0.0
  %277 = vmatprep.subr.mxu0 0.0
  %278 = vmatpush2.msra.mxu0 0.0
  %279 = vmatprep.subr.mxu0 0.0
  %280 = vmatpush2.msra.mxu0 0.0
  %281 = vmatprep.subr.mxu0 0.0
  %282 = vmatpush2.msra.mxu0 0.0
  %283 = vmatprep.subr.mxu0 0.0
  %284 = vmatpush2.msra.mxu0 0.0
  %285 = vmatprep.subr.mxu0 0.0
  %286 = vmatpush2.msra.mxu0 0.0
  %287 = vmatprep.mubr.f32.mxu0 0.0
  %288 = vmatmul.mubr.f32.gmra.mxu0 %v83
  %v289 = vpop.f32.mrf.mxu0
  %v290 = vadd.f32 0.0, %v289
  %v291 = vpop.f32.mrf.mxu0
  %v292 = vadd.f32 0.0, %v291
  %293 = vmatprep.mubr.f32.mxu0 0.0
  %294 = vmatmul.mubr.f32.gmra.mxu0 %v86
  %v295 = vpop.f32.mrf.mxu0
  %v296 = vadd.f32 0.0, %v295
  %v297 = vpop.f32.mrf.mxu0
  %v298 = vadd.f32 0.0, %v297
  %299 = vmatprep.mubr.f32.mxu0 0.0
  %300 = vmatmul.mubr.f32.gmra.mxu0 %v89
  %v301 = vpop.f32.mrf.mxu0
  %v302 = vadd.f32 0.0, %v301
  %v303 = vpop.f32.mrf.mxu0
  %v304 = vadd.f32 0.0, %v303
  %305 = vdwg.mxu0
  %306 = vmatprep.subr.mxu0 0.0
  %307 = vmatpush1.msra.mxu0 0.0
  %308 = vmatprep.subr.mxu0 0.0
  %309 = vmatpush1.msra.mxu0 0.0
  %310 = vmatprep.subr.mxu0 0.0
  %311 = vmatpush1.msra.mxu0 0.0
  %312 = vmatprep.subr.mxu0 0.0
  %313 = vmatpush1.msra.mxu0 0.0
  %314 = vmatprep.subr.mxu0 0.0
  %315 = vmatpush1.msra.mxu0 0.0
  %316 = vmatprep.subr.mxu0 0.0
  %317 = vmatpush1.msra.mxu0 0.0
  %318 = vmatprep.subr.mxu0 0.0
  %319 = vmatpush1.msra.mxu0 0.0
  %320 = vmatprep.subr.mxu0 0.0
  %321 = vmatpush1.msra.mxu0 0.0
  %322 = vmatprep.subr.mxu0 0.0
  %323 = vmatpush1.msra.mxu0 0.0
  %324 = vmatprep.subr.mxu0 0.0
  %325 = vmatpush1.msra.mxu0 0.0
  %326 = vmatprep.subr.mxu0 0.0
  %327 = vmatpush1.msra.mxu0 0.0
  %328 = vmatprep.subr.mxu0 0.0
  %329 = vmatpush1.msra.mxu0 0.0
  %330 = vmatprep.subr.mxu0 %v108
  %331 = vmatpush1.msra.mxu0 %v105
  %332 = vmatprep.subr.mxu0 %v54
  %333 = vmatpush1.msra.mxu0 %v53
  %334 = vmatprep.subr.mxu0 %v38
  %335 = vmatpush1.msra.mxu0 %v37
  %336 = vmatprep.subr.mxu0 %v22
  %337 = vmatpush1.msra.mxu0 %v21
  %338 = vmatprep.subr.mxu0 0.0
  %339 = vmatpush2.msra.mxu0 0.0
  %340 = vmatprep.subr.mxu0 0.0
  %341 = vmatpush2.msra.mxu0 0.0
  %342 = vmatprep.subr.mxu0 0.0
  %343 = vmatpush2.msra.mxu0 0.0
  %344 = vmatprep.subr.mxu0 0.0
  %345 = vmatpush2.msra.mxu0 0.0
  %346 = vmatprep.subr.mxu0 0.0
  %347 = vmatpush2.msra.mxu0 0.0
  %348 = vmatprep.subr.mxu0 0.0
  %349 = vmatpush2.msra.mxu0 0.0
  %350 = vmatprep.subr.mxu0 0.0
  %351 = vmatpush2.msra.mxu0 0.0
  %352 = vmatprep.subr.mxu0 0.0
  %353 = vmatpush2.msra.mxu0 0.0
  %354 = vmatprep.subr.mxu0 0.0
  %355 = vmatpush2.msra.mxu0 0.0
  %356 = vmatprep.subr.mxu0 0.0
  %357 = vmatpush2.msra.mxu0 0.0
  %358 = vmatprep.subr.mxu0 0.0
  %359 = vmatpush2.msra.mxu0 0.0
  %360 = vmatprep.subr.mxu0 0.0
  %361 = vmatpush2.msra.mxu0 0.0
  %362 = vmatprep.subr.mxu0 0.0
  %363 = vmatpush2.msra.mxu0 0.0
  %364 = vmatprep.subr.mxu0 0.0
  %365 = vmatpush2.msra.mxu0 0.0
  %366 = vmatprep.subr.mxu0 0.0
  %367 = vmatpush2.msra.mxu0 0.0
  %368 = vmatprep.subr.mxu0 0.0
  %369 = vmatpush2.msra.mxu0 0.0
  %370 = vmatprep.mubr.f32.mxu0 0.0
  %371 = vmatmul.mubr.f32.gmra.mxu0 %v83
  %v372 = vpop.f32.mrf.mxu0
  %v373 = vadd.f32 0.0, %v372
  %v374 = vpop.f32.mrf.mxu0
  %v375 = vadd.f32 0.0, %v374
  %376 = vmatprep.mubr.f32.mxu0 0.0
  %377 = vmatmul.mubr.f32.gmra.mxu0 %v86
  %v378 = vpop.f32.mrf.mxu0
  %v379 = vadd.f32 0.0, %v378
  %v380 = vpop.f32.mrf.mxu0
  %v381 = vadd.f32 0.0, %v380
  %382 = vmatprep.mubr.f32.mxu0 0.0
  %383 = vmatmul.mubr.f32.gmra.mxu0 %v89
  %v384 = vpop.f32.mrf.mxu0
  %v385 = vadd.f32 0.0, %v384
  %v386 = vpop.f32.mrf.mxu0
  %v387 = vadd.f32 0.0, %v386
  %388 = vdwg.mxu0
  %389 = vmatprep.subr.mxu0 0.0
  %390 = vmatpush1.msra.mxu0 0.0
  %391 = vmatprep.subr.mxu0 0.0
  %392 = vmatpush1.msra.mxu0 0.0
  %393 = vmatprep.subr.mxu0 0.0
  %394 = vmatpush1.msra.mxu0 0.0
  %395 = vmatprep.subr.mxu0 0.0
  %396 = vmatpush1.msra.mxu0 0.0
  %397 = vmatprep.subr.mxu0 0.0
  %398 = vmatpush1.msra.mxu0 0.0
  %399 = vmatprep.subr.mxu0 0.0
  %400 = vmatpush1.msra.mxu0 0.0
  %401 = vmatprep.subr.mxu0 0.0
  %402 = vmatpush1.msra.mxu0 0.0
  %403 = vmatprep.subr.mxu0 0.0
  %404 = vmatpush1.msra.mxu0 0.0
  %405 = vmatprep.subr.mxu0 0.0
  %406 = vmatpush1.msra.mxu0 0.0
  %407 = vmatprep.subr.mxu0 0.0
  %408 = vmatpush1.msra.mxu0 0.0
  %409 = vmatprep.subr.mxu0 0.0
  %410 = vmatpush1.msra.mxu0 0.0
  %411 = vmatprep.subr.mxu0 0.0
  %412 = vmatpush1.msra.mxu0 0.0
  %413 = vmatprep.subr.mxu0 %v114
  %414 = vmatpush1.msra.mxu0 %v111
  %415 = vmatprep.subr.mxu0 %v56
  %416 = vmatpush1.msra.mxu0 %v55
  %417 = vmatprep.subr.mxu0 %v40
  %418 = vmatpush1.msra.mxu0 %v39
  %419 = vmatprep.subr.mxu0 %v24
  %420 = vmatpush1.msra.mxu0 %v23
  %421 = vmatprep.subr.mxu0 0.0
  %422 = vmatpush2.msra.mxu0 0.0
  %423 = vmatprep.subr.mxu0 0.0
  %424 = vmatpush2.msra.mxu0 0.0
  %425 = vmatprep.subr.mxu0 0.0
  %426 = vmatpush2.msra.mxu0 0.0
  %427 = vmatprep.subr.mxu0 0.0
  %428 = vmatpush2.msra.mxu0 0.0
  %429 = vmatprep.subr.mxu0 0.0
  %430 = vmatpush2.msra.mxu0 0.0
  %431 = vmatprep.subr.mxu0 0.0
  %432 = vmatpush2.msra.mxu0 0.0
  %433 = vmatprep.subr.mxu0 0.0
  %434 = vmatpush2.msra.mxu0 0.0
  %435 = vmatprep.subr.mxu0 0.0
  %436 = vmatpush2.msra.mxu0 0.0
  %437 = vmatprep.subr.mxu0 0.0
  %438 = vmatpush2.msra.mxu0 0.0
  %439 = vmatprep.subr.mxu0 0.0
  %440 = vmatpush2.msra.mxu0 0.0
  %441 = vmatprep.subr.mxu0 0.0
  %442 = vmatpush2.msra.mxu0 0.0
  %443 = vmatprep.subr.mxu0 0.0
  %444 = vmatpush2.msra.mxu0 0.0
  %445 = vmatprep.subr.mxu0 0.0
  %446 = vmatpush2.msra.mxu0 0.0
  %447 = vmatprep.subr.mxu0 0.0
  %448 = vmatpush2.msra.mxu0 0.0
  %449 = vmatprep.subr.mxu0 0.0
  %450 = vmatpush2.msra.mxu0 0.0
  %451 = vmatprep.subr.mxu0 0.0
  %452 = vmatpush2.msra.mxu0 0.0
  %453 = vmatprep.mubr.f32.mxu0 0.0
  %454 = vmatmul.mubr.f32.gmra.mxu0 %v83
  %v455 = vpop.f32.mrf.mxu0
  %v456 = vadd.f32 0.0, %v455
  %v457 = vpop.f32.mrf.mxu0
  %v458 = vadd.f32 0.0, %v457
  %459 = vmatprep.mubr.f32.mxu0 0.0
  %460 = vmatmul.mubr.f32.gmra.mxu0 %v86
  %v461 = vpop.f32.mrf.mxu0
  %v462 = vadd.f32 0.0, %v461
  %v463 = vpop.f32.mrf.mxu0
  %v464 = vadd.f32 0.0, %v463
  %465 = vmatprep.mubr.f32.mxu0 0.0
  %466 = vmatmul.mubr.f32.gmra.mxu0 %v89
  %v467 = vpop.f32.mrf.mxu0
  %v468 = vadd.f32 0.0, %v467
  %v469 = vpop.f32.mrf.mxu0
  %v470 = vadd.f32 0.0, %v469
  %471 = vdwg.mxu0
  %472 = vmatprep.subr.mxu0 0.0
  %473 = vmatpush1.msra.mxu0 0.0
  %474 = vmatprep.subr.mxu0 0.0
  %475 = vmatpush1.msra.mxu0 0.0
  %476 = vmatprep.subr.mxu0 0.0
  %477 = vmatpush1.msra.mxu0 0.0
  %478 = vmatprep.subr.mxu0 0.0
  %479 = vmatpush1.msra.mxu0 0.0
  %480 = vmatprep.subr.mxu0 0.0
  %481 = vmatpush1.msra.mxu0 0.0
  %482 = vmatprep.subr.mxu0 0.0
  %483 = vmatpush1.msra.mxu0 0.0
  %484 = vmatprep.subr.mxu0 0.0
  %485 = vmatpush1.msra.mxu0 0.0
  %486 = vmatprep.subr.mxu0 0.0
  %487 = vmatpush1.msra.mxu0 0.0
  %488 = vmatprep.subr.mxu0 0.0
  %489 = vmatpush1.msra.mxu0 0.0
  %490 = vmatprep.subr.mxu0 0.0
  %491 = vmatpush1.msra.mxu0 0.0
  %492 = vmatprep.subr.mxu0 0.0
  %493 = vmatpush1.msra.mxu0 0.0
  %494 = vmatprep.subr.mxu0 0.0
  %495 = vmatpush1.msra.mxu0 0.0
  %496 = vmatprep.subr.mxu0 %v120
  %497 = vmatpush1.msra.mxu0 %v117
  %498 = vmatprep.subr.mxu0 %v58
  %499 = vmatpush1.msra.mxu0 %v57
  %500 = vmatprep.subr.mxu0 %v42
  %501 = vmatpush1.msra.mxu0 %v41
  %502 = vmatprep.subr.mxu0 %v26
  %503 = vmatpush1.msra.mxu0 %v25
  %504 = vmatprep.subr.mxu0 0.0
  %505 = vmatpush2.msra.mxu0 0.0
  %506 = vmatprep.subr.mxu0 0.0
  %507 = vmatpush2.msra.mxu0 0.0
  %508 = vmatprep.subr.mxu0 0.0
  %509 = vmatpush2.msra.mxu0 0.0
  %510 = vmatprep.subr.mxu0 0.0
  %511 = vmatpush2.msra.mxu0 0.0
  %512 = vmatprep.subr.mxu0 0.0
  %513 = vmatpush2.msra.mxu0 0.0
  %514 = vmatprep.subr.mxu0 0.0
  %515 = vmatpush2.msra.mxu0 0.0
  %516 = vmatprep.subr.mxu0 0.0
  %517 = vmatpush2.msra.mxu0 0.0
  %518 = vmatprep.subr.mxu0 0.0
  %519 = vmatpush2.msra.mxu0 0.0
  %520 = vmatprep.subr.mxu0 0.0
  %521 = vmatpush2.msra.mxu0 0.0
  %522 = vmatprep.subr.mxu0 0.0
  %523 = vmatpush2.msra.mxu0 0.0
  %524 = vmatprep.subr.mxu0 0.0
  %525 = vmatpush2.msra.mxu0 0.0
  %526 = vmatprep.subr.mxu0 0.0
  %527 = vmatpush2.msra.mxu0 0.0
  %528 = vmatprep.subr.mxu0 0.0
  %529 = vmatpush2.msra.mxu0 0.0
  %530 = vmatprep.subr.mxu0 0.0
  %531 = vmatpush2.msra.mxu0 0.0
  %532 = vmatprep.subr.mxu0 0.0
  %533 = vmatpush2.msra.mxu0 0.0
  %534 = vmatprep.subr.mxu0 0.0
  %535 = vmatpush2.msra.mxu0 0.0
  %536 = vmatprep.mubr.f32.mxu0 0.0
  %537 = vmatmul.mubr.f32.gmra.mxu0 %v83
  %v538 = vpop.f32.mrf.mxu0
  %v539 = vadd.f32 0.0, %v538
  %v540 = vpop.f32.mrf.mxu0
  %v541 = vadd.f32 0.0, %v540
  %542 = vmatprep.mubr.f32.mxu0 0.0
  %543 = vmatmul.mubr.f32.gmra.mxu0 %v86
  %v544 = vpop.f32.mrf.mxu0
  %v545 = vadd.f32 0.0, %v544
  %v546 = vpop.f32.mrf.mxu0
  %v547 = vadd.f32 0.0, %v546
  %548 = vmatprep.mubr.f32.mxu0 0.0
  %549 = vmatmul.mubr.f32.gmra.mxu0 %v89
  %v550 = vpop.f32.mrf.mxu0
  %v551 = vadd.f32 0.0, %v550
  %v552 = vpop.f32.mrf.mxu0
  %v553 = vadd.f32 0.0, %v552
  %554 = vdwg.mxu0
  %555 = vmatprep.subr.mxu0 0.0
  %556 = vmatpush1.msra.mxu0 0.0
  %557 = vmatprep.subr.mxu0 0.0
  %558 = vmatpush1.msra.mxu0 0.0
  %559 = vmatprep.subr.mxu0 0.0
  %560 = vmatpush1.msra.mxu0 0.0
  %561 = vmatprep.subr.mxu0 0.0
  %562 = vmatpush1.msra.mxu0 0.0
  %563 = vmatprep.subr.mxu0 0.0
  %564 = vmatpush1.msra.mxu0 0.0
  %565 = vmatprep.subr.mxu0 0.0
  %566 = vmatpush1.msra.mxu0 0.0
  %567 = vmatprep.subr.mxu0 0.0
  %568 = vmatpush1.msra.mxu0 0.0
  %569 = vmatprep.subr.mxu0 0.0
  %570 = vmatpush1.msra.mxu0 0.0
  %571 = vmatprep.subr.mxu0 0.0
  %572 = vmatpush1.msra.mxu0 0.0
  %573 = vmatprep.subr.mxu0 0.0
  %574 = vmatpush1.msra.mxu0 0.0
  %575 = vmatprep.subr.mxu0 0.0
  %576 = vmatpush1.msra.mxu0 0.0
  %577 = vmatprep.subr.mxu0 0.0
  %578 = vmatpush1.msra.mxu0 0.0
  %579 = vmatprep.subr.mxu0 %v126
  %580 = vmatpush1.msra.mxu0 %v123
  %581 = vmatprep.subr.mxu0 %v60
  %582 = vmatpush1.msra.mxu0 %v59
  %583 = vmatprep.subr.mxu0 %v44
  %584 = vmatpush1.msra.mxu0 %v43
  %585 = vmatprep.subr.mxu0 %v28
  %586 = vmatpush1.msra.mxu0 %v27
  %587 = vmatprep.subr.mxu0 0.0
  %588 = vmatpush2.msra.mxu0 0.0
  %589 = vmatprep.subr.mxu0 0.0
  %590 = vmatpush2.msra.mxu0 0.0
  %591 = vmatprep.subr.mxu0 0.0
  %592 = vmatpush2.msra.mxu0 0.0
  %593 = vmatprep.subr.mxu0 0.0
  %594 = vmatpush2.msra.mxu0 0.0
  %595 = vmatprep.subr.mxu0 0.0
  %596 = vmatpush2.msra.mxu0 0.0
  %597 = vmatprep.subr.mxu0 0.0
  %598 = vmatpush2.msra.mxu0 0.0
  %599 = vmatprep.subr.mxu0 0.0
  %600 = vmatpush2.msra.mxu0 0.0
  %601 = vmatprep.subr.mxu0 0.0
  %602 = vmatpush2.msra.mxu0 0.0
  %603 = vmatprep.subr.mxu0 0.0
  %604 = vmatpush2.msra.mxu0 0.0
  %605 = vmatprep.subr.mxu0 0.0
  %606 = vmatpush2.msra.mxu0 0.0
  %607 = vmatprep.subr.mxu0 0.0
  %608 = vmatpush2.msra.mxu0 0.0
  %609 = vmatprep.subr.mxu0 0.0
  %610 = vmatpush2.msra.mxu0 0.0
  %611 = vmatprep.subr.mxu0 0.0
  %612 = vmatpush2.msra.mxu0 0.0
  %613 = vmatprep.subr.mxu0 0.0
  %614 = vmatpush2.msra.mxu0 0.0
  %615 = vmatprep.subr.mxu0 0.0
  %616 = vmatpush2.msra.mxu0 0.0
  %617 = vmatprep.subr.mxu0 0.0
  %618 = vmatpush2.msra.mxu0 0.0
  %619 = vmatprep.mubr.f32.mxu0 0.0
  %620 = vmatmul.mubr.f32.gmra.mxu0 %v83
  %v621 = vpop.f32.mrf.mxu0
  %v622 = vadd.f32 0.0, %v621
  %v623 = vpop.f32.mrf.mxu0
  %v624 = vadd.f32 0.0, %v623
  %625 = vmatprep.mubr.f32.mxu0 0.0
  %626 = vmatmul.mubr.f32.gmra.mxu0 %v86
  %v627 = vpop.f32.mrf.mxu0
  %v628 = vadd.f32 0.0, %v627
  %v629 = vpop.f32.mrf.mxu0
  %v630 = vadd.f32 0.0, %v629
  %631 = vmatprep.mubr.f32.mxu0 0.0
  %632 = vmatmul.mubr.f32.gmra.mxu0 %v89
  %v633 = vpop.f32.mrf.mxu0
  %v634 = vadd.f32 0.0, %v633
  %v635 = vpop.f32.mrf.mxu0
  %v636 = vadd.f32 0.0, %v635
  %637 = vdwg.mxu0
  %638 = vmatprep.subr.mxu0 0.0
  %639 = vmatpush1.msra.mxu0 0.0
  %640 = vmatprep.subr.mxu0 0.0
  %641 = vmatpush1.msra.mxu0 0.0
  %642 = vmatprep.subr.mxu0 0.0
  %643 = vmatpush1.msra.mxu0 0.0
  %644 = vmatprep.subr.mxu0 0.0
  %645 = vmatpush1.msra.mxu0 0.0
  %646 = vmatprep.subr.mxu0 0.0
  %647 = vmatpush1.msra.mxu0 0.0
  %648 = vmatprep.subr.mxu0 0.0
  %649 = vmatpush1.msra.mxu0 0.0
  %650 = vmatprep.subr.mxu0 0.0
  %651 = vmatpush1.msra.mxu0 0.0
  %652 = vmatprep.subr.mxu0 0.0
  %653 = vmatpush1.msra.mxu0 0.0
  %654 = vmatprep.subr.mxu0 0.0
  %655 = vmatpush1.msra.mxu0 0.0
  %656 = vmatprep.subr.mxu0 0.0
  %657 = vmatpush1.msra.mxu0 0.0
  %658 = vmatprep.subr.mxu0 0.0
  %659 = vmatpush1.msra.mxu0 0.0
  %660 = vmatprep.subr.mxu0 0.0
  %661 = vmatpush1.msra.mxu0 0.0
  %662 = vmatprep.subr.mxu0 %v132
  %663 = vmatpush1.msra.mxu0 %v129
  %664 = vmatprep.subr.mxu0 %v62
  %665 = vmatpush1.msra.mxu0 %v61
  %666 = vmatprep.subr.mxu0 %v46
  %667 = vmatpush1.msra.mxu0 %v45
  %668 = vmatprep.subr.mxu0 %v30
  %669 = vmatpush1.msra.mxu0 %v29
  %670 = vmatprep.subr.mxu0 0.0
  %671 = vmatpush2.msra.mxu0 0.0
  %672 = vmatprep.subr.mxu0 0.0
  %673 = vmatpush2.msra.mxu0 0.0
  %674 = vmatprep.subr.mxu0 0.0
  %675 = vmatpush2.msra.mxu0 0.0
  %676 = vmatprep.subr.mxu0 0.0
  %677 = vmatpush2.msra.mxu0 0.0
  %678 = vmatprep.subr.mxu0 0.0
  %679 = vmatpush2.msra.mxu0 0.0
  %680 = vmatprep.subr.mxu0 0.0
  %681 = vmatpush2.msra.mxu0 0.0
  %682 = vmatprep.subr.mxu0 0.0
  %683 = vmatpush2.msra.mxu0 0.0
  %684 = vmatprep.subr.mxu0 0.0
  %685 = vmatpush2.msra.mxu0 0.0
  %686 = vmatprep.subr.mxu0 0.0
  %687 = vmatpush2.msra.mxu0 0.0
  %688 = vmatprep.subr.mxu0 0.0
  %689 = vmatpush2.msra.mxu0 0.0
  %690 = vmatprep.subr.mxu0 0.0
  %691 = vmatpush2.msra.mxu0 0.0
  %692 = vmatprep.subr.mxu0 0.0
  %693 = vmatpush2.msra.mxu0 0.0
  %694 = vmatprep.subr.mxu0 0.0
  %695 = vmatpush2.msra.mxu0 0.0
  %696 = vmatprep.subr.mxu0 0.0
  %697 = vmatpush2.msra.mxu0 0.0
  %698 = vmatprep.subr.mxu0 0.0
  %699 = vmatpush2.msra.mxu0 0.0
  %700 = vmatprep.subr.mxu0 0.0
  %701 = vmatpush2.msra.mxu0 0.0
  %702 = vmatprep.mubr.f32.mxu0 0.0
  %703 = vmatmul.mubr.f32.gmra.mxu0 %v83
  %v704 = vpop.f32.mrf.mxu0
  %v705 = vadd.f32 0.0, %v704
  %v706 = vpop.f32.mrf.mxu0
  %v707 = vadd.f32 0.0, %v706
  %708 = vmatprep.mubr.f32.mxu0 0.0
  %709 = vmatmul.mubr.f32.gmra.mxu0 %v86
  %v710 = vpop.f32.mrf.mxu0
  %v711 = vadd.f32 0.0, %v710
  %v712 = vpop.f32.mrf.mxu0
  %v713 = vadd.f32 0.0, %v712
  %714 = vmatprep.mubr.f32.mxu0 0.0
  %715 = vmatmul.mubr.f32.gmra.mxu0 %v89
  %v716 = vpop.f32.mrf.mxu0
  %v717 = vadd.f32 0.0, %v716
  %v718 = vpop.f32.mrf.mxu0
  %v719 = vadd.f32 0.0, %v718
  %720 = vdwg.mxu0
  %721 = vmatprep.subr.mxu0 0.0
  %722 = vmatpush1.msra.mxu0 0.0
  %723 = vmatprep.subr.mxu0 0.0
  %724 = vmatpush1.msra.mxu0 0.0
  %725 = vmatprep.subr.mxu0 0.0
  %726 = vmatpush1.msra.mxu0 0.0
  %727 = vmatprep.subr.mxu0 0.0
  %728 = vmatpush1.msra.mxu0 0.0
  %729 = vmatprep.subr.mxu0 0.0
  %730 = vmatpush1.msra.mxu0 0.0
  %731 = vmatprep.subr.mxu0 0.0
  %732 = vmatpush1.msra.mxu0 0.0
  %733 = vmatprep.subr.mxu0 0.0
  %734 = vmatpush1.msra.mxu0 0.0
  %735 = vmatprep.subr.mxu0 0.0
  %736 = vmatpush1.msra.mxu0 0.0
  %737 = vmatprep.subr.mxu0 0.0
  %738 = vmatpush1.msra.mxu0 0.0
  %739 = vmatprep.subr.mxu0 0.0
  %740 = vmatpush1.msra.mxu0 0.0
  %741 = vmatprep.subr.mxu0 0.0
  %742 = vmatpush1.msra.mxu0 0.0
  %743 = vmatprep.subr.mxu0 0.0
  %744 = vmatpush1.msra.mxu0 0.0
  %745 = vmatprep.subr.mxu0 %v138
  %746 = vmatpush1.msra.mxu0 %v135
  %747 = vmatprep.subr.mxu0 %v64
  %748 = vmatpush1.msra.mxu0 %v63
  %749 = vmatprep.subr.mxu0 %v48
  %750 = vmatpush1.msra.mxu0 %v47
  %751 = vmatprep.subr.mxu0 %v32
  %752 = vmatpush1.msra.mxu0 %v31
  %753 = vmatprep.subr.mxu0 0.0
  %754 = vmatpush2.msra.mxu0 0.0
  %755 = vmatprep.subr.mxu0 0.0
  %756 = vmatpush2.msra.mxu0 0.0
  %757 = vmatprep.subr.mxu0 0.0
  %758 = vmatpush2.msra.mxu0 0.0
  %759 = vmatprep.subr.mxu0 0.0
  %760 = vmatpush2.msra.mxu0 0.0
  %761 = vmatprep.subr.mxu0 0.0
  %762 = vmatpush2.msra.mxu0 0.0
  %763 = vmatprep.subr.mxu0 0.0
  %764 = vmatpush2.msra.mxu0 0.0
  %765 = vmatprep.subr.mxu0 0.0
  %766 = vmatpush2.msra.mxu0 0.0
  %767 = vmatprep.subr.mxu0 0.0
  %768 = vmatpush2.msra.mxu0 0.0
  %769 = vmatprep.subr.mxu0 0.0
  %770 = vmatpush2.msra.mxu0 0.0
  %771 = vmatprep.subr.mxu0 0.0
  %772 = vmatpush2.msra.mxu0 0.0
  %773 = vmatprep.subr.mxu0 0.0
  %774 = vmatpush2.msra.mxu0 0.0
  %775 = vmatprep.subr.mxu0 0.0
  %776 = vmatpush2.msra.mxu0 0.0
  %777 = vmatprep.subr.mxu0 0.0
  %778 = vmatpush2.msra.mxu0 0.0
  %779 = vmatprep.subr.mxu0 0.0
  %780 = vmatpush2.msra.mxu0 0.0
  %781 = vmatprep.subr.mxu0 0.0
  %782 = vmatpush2.msra.mxu0 0.0
  %783 = vmatprep.subr.mxu0 0.0
  %784 = vmatpush2.msra.mxu0 0.0
  %785 = vmatprep.mubr.f32.mxu0 0.0
  %786 = vmatmul.mubr.f32.gmra.mxu0 %v83
  %v787 = vpop.f32.mrf.mxu0
  %v788 = vadd.f32 0.0, %v787
  %v789 = vpop.f32.mrf.mxu0
  %v790 = vadd.f32 0.0, %v789
  %791 = vmatprep.mubr.f32.mxu0 0.0
  %792 = vmatmul.mubr.f32.gmra.mxu0 %v86
  %v793 = vpop.f32.mrf.mxu0
  %v794 = vadd.f32 0.0, %v793
  %v795 = vpop.f32.mrf.mxu0
  %v796 = vadd.f32 0.0, %v795
  %797 = vmatprep.mubr.f32.mxu0 0.0
  %798 = vmatmul.mubr.f32.gmra.mxu0 %v89
  %v799 = vpop.f32.mrf.mxu0
  %v800 = vadd.f32 0.0, %v799
  %v801 = vpop.f32.mrf.mxu0
  %v802 = vadd.f32 0.0, %v801
  %803 = vdwg.mxu0
  %s804 = scalar_lea.vmem %s0, 512
  %v805 = vld [vmem:[%s804] sm:$0xff]
  %v806 = vld [vmem:[%s804 + $0x8] sm:$0xff]
  %v807 = vld [vmem:[%s804 + $0x10] sm:$0xff]
  %v808 = vld [vmem:[%s804 + $0x18] sm:$0xff]
  %v809 = vld [vmem:[%s804 + $0x20] sm:$0xff]
  %v810 = vld [vmem:[%s804 + $0x28] sm:$0xff]
  %v811 = vld [vmem:[%s804 + $0x30] sm:$0xff]
  %v812 = vld [vmem:[%s804 + $0x38] sm:$0xff]
  %v813 = vld [vmem:[%s804 + $0x40] sm:$0xff]
  %v814 = vld [vmem:[%s804 + $0x48] sm:$0xff]
  %v815 = vld [vmem:[%s804 + $0x50] sm:$0xff]
  %v816 = vld [vmem:[%s804 + $0x58] sm:$0xff]
  %v817 = vld [vmem:[%s804 + $0x60] sm:$0xff]
  %v818 = vld [vmem:[%s804 + $0x68] sm:$0xff]
  %v819 = vld [vmem:[%s804 + $0x70] sm:$0xff]
  %v820 = vld [vmem:[%s804 + $0x78] sm:$0xff]
  %v821 = vld [vmem:[%s804 + $0x80] sm:$0xff]
  %v822 = vld [vmem:[%s804 + $0x88] sm:$0xff]
  %v823 = vld [vmem:[%s804 + $0x90] sm:$0xff]
  %v824 = vld [vmem:[%s804 + $0x98] sm:$0xff]
  %v825 = vld [vmem:[%s804 + $0xa0] sm:$0xff]
  %v826 = vld [vmem:[%s804 + $0xa8] sm:$0xff]
  %v827 = vld [vmem:[%s804 + $0xb0] sm:$0xff]
  %v828 = vld [vmem:[%s804 + $0xb8] sm:$0xff]
  %v829 = vld [vmem:[%s804 + $0xc0] sm:$0xff]
  %v830 = vld [vmem:[%s804 + $0xc8] sm:$0xff]
  %v831 = vld [vmem:[%s804 + $0xd0] sm:$0xff]
  %v832 = vld [vmem:[%s804 + $0xd8] sm:$0xff]
  %v833 = vld [vmem:[%s804 + $0xe0] sm:$0xff]
  %v834 = vld [vmem:[%s804 + $0xe8] sm:$0xff]
  %v835 = vld [vmem:[%s804 + $0xf0] sm:$0xff]
  %v836 = vld [vmem:[%s804 + $0xf8] sm:$0xff]
  %v837 = vld [vmem:[%s804 + $0x100] sm:$0xff]
  %v838 = vld [vmem:[%s804 + $0x108] sm:$0xff]
  %v839 = vld [vmem:[%s804 + $0x110] sm:$0xff]
  %v840 = vld [vmem:[%s804 + $0x118] sm:$0xff]
  %v841 = vld [vmem:[%s804 + $0x120] sm:$0xff]
  %v842 = vld [vmem:[%s804 + $0x128] sm:$0xff]
  %v843 = vld [vmem:[%s804 + $0x130] sm:$0xff]
  %v844 = vld [vmem:[%s804 + $0x138] sm:$0xff]
  %v845 = vld [vmem:[%s804 + $0x140] sm:$0xff]
  %v846 = vld [vmem:[%s804 + $0x148] sm:$0xff]
  %v847 = vld [vmem:[%s804 + $0x150] sm:$0xff]
  %v848 = vld [vmem:[%s804 + $0x158] sm:$0xff]
  %v849 = vld [vmem:[%s804 + $0x160] sm:$0xff]
  %v850 = vld [vmem:[%s804 + $0x168] sm:$0xff]
  %v851 = vld [vmem:[%s804 + $0x170] sm:$0xff]
  %v852 = vld [vmem:[%s804 + $0x178] sm:$0xff]
  %v853 = vld [vmem:[%s804 + $0x180] sm:$0x1]
  %v854 = vld [vmem:[%s804 + $0x188] sm:$0x1]
  %v855 = vld [vmem:[%s804 + $0x190] sm:$0x1]
  %v856 = vld [vmem:[%s804 + $0x198] sm:$0x1]
  %v857 = vld [vmem:[%s804 + $0x1a0] sm:$0x1]
  %v858 = vld [vmem:[%s804 + $0x1a8] sm:$0x1]
  %v859 = vld [vmem:[%s804 + $0x1b0] sm:$0x1]
  %v860 = vld [vmem:[%s804 + $0x1b8] sm:$0x1]
  %v861 = vld [vmem:[%s804 + $0x1c0] sm:$0x1]
  %v862 = vld [vmem:[%s804 + $0x1c8] sm:$0x1]
  %v863 = vld [vmem:[%s804 + $0x1d0] sm:$0x1]
  %v864 = vld [vmem:[%s804 + $0x1d8] sm:$0x1]
  %v865 = vld [vmem:[%s804 + $0x1e0] sm:$0x1]
  %v866 = vld [vmem:[%s804 + $0x1e8] sm:$0x1]
  %v867 = vld [vmem:[%s804 + $0x1f0] sm:$0x1]
  %v868 = vld [vmem:[%s804 + $0x1f8] sm:$0x1]
  %v870 = vsel %vm91, %v853, 0
  %v873 = vsel %vm91, %v854, 0
  %v876 = vsel %vm91, %v855, 0
  %v879 = vsel %vm91, %v856, 0
  %v882 = vsel %vm91, %v857, 0
  %v885 = vsel %vm91, %v858, 0
  %v888 = vsel %vm91, %v859, 0
  %v891 = vsel %vm91, %v860, 0
  %v894 = vsel %vm91, %v861, 0
  %v897 = vsel %vm91, %v862, 0
  %v900 = vsel %vm91, %v863, 0
  %v903 = vsel %vm91, %v864, 0
  %v906 = vsel %vm91, %v865, 0
  %v909 = vsel %vm91, %v866, 0
  %v912 = vsel %vm91, %v867, 0
  %v915 = vsel %vm91, %v868, 0
  %917 = vmatprep.subr.mxu0 0.0
  %918 = vmatpush1.msra.mxu0 0.0
  %919 = vmatprep.subr.mxu0 0.0
  %920 = vmatpush1.msra.mxu0 0.0
  %921 = vmatprep.subr.mxu0 0.0
  %922 = vmatpush1.msra.mxu0 0.0
  %923 = vmatprep.subr.mxu0 0.0
  %924 = vmatpush1.msra.mxu0 0.0
  %925 = vmatprep.subr.mxu0 0.0
  %926 = vmatpush1.msra.mxu0 0.0
  %927 = vmatprep.subr.mxu0 0.0
  %928 = vmatpush1.msra.mxu0 0.0
  %929 = vmatprep.subr.mxu0 0.0
  %930 = vmatpush1.msra.mxu0 0.0
  %931 = vmatprep.subr.mxu0 0.0
  %932 = vmatpush1.msra.mxu0 0.0
  %933 = vmatprep.subr.mxu0 0.0
  %934 = vmatpush1.msra.mxu0 0.0
  %935 = vmatprep.subr.mxu0 0.0
  %936 = vmatpush1.msra.mxu0 0.0
  %937 = vmatprep.subr.mxu0 0.0
  %938 = vmatpush1.msra.mxu0 0.0
  %939 = vmatprep.subr.mxu0 0.0
  %940 = vmatpush1.msra.mxu0 0.0
  %941 = vmatprep.subr.mxu0 %v873
  %942 = vmatpush1.msra.mxu0 %v870
  %943 = vmatprep.subr.mxu0 %v838
  %944 = vmatpush1.msra.mxu0 %v837
  %945 = vmatprep.subr.mxu0 %v822
  %946 = vmatpush1.msra.mxu0 %v821
  %947 = vmatprep.subr.mxu0 %v806
  %948 = vmatpush1.msra.mxu0 %v805
  %949 = vmatprep.subr.mxu0 0.0
  %950 = vmatpush2.msra.mxu0 0.0
  %951 = vmatprep.subr.mxu0 0.0
  %952 = vmatpush2.msra.mxu0 0.0
  %953 = vmatprep.subr.mxu0 0.0
  %954 = vmatpush2.msra.mxu0 0.0
  %955 = vmatprep.subr.mxu0 0.0
  %956 = vmatpush2.msra.mxu0 0.0
  %957 = vmatprep.subr.mxu0 0.0
  %958 = vmatpush2.msra.mxu0 0.0
  %959 = vmatprep.subr.mxu0 0.0
  %960 = vmatpush2.msra.mxu0 0.0
  %961 = vmatprep.subr.mxu0 0.0
  %962 = vmatpush2.msra.mxu0 0.0
  %963 = vmatprep.subr.mxu0 0.0
  %964 = vmatpush2.msra.mxu0 0.0
  %965 = vmatprep.subr.mxu0 0.0
  %966 = vmatpush2.msra.mxu0 0.0
  %967 = vmatprep.subr.mxu0 0.0
  %968 = vmatpush2.msra.mxu0 0.0
  %969 = vmatprep.subr.mxu0 0.0
  %970 = vmatpush2.msra.mxu0 0.0
  %971 = vmatprep.subr.mxu0 0.0
  %972 = vmatpush2.msra.mxu0 0.0
  %973 = vmatprep.subr.mxu0 0.0
  %974 = vmatpush2.msra.mxu0 0.0
  %975 = vmatprep.subr.mxu0 0.0
  %976 = vmatpush2.msra.mxu0 0.0
  %977 = vmatprep.subr.mxu0 0.0
  %978 = vmatpush2.msra.mxu0 0.0
  %979 = vmatprep.subr.mxu0 0.0
  %980 = vmatpush2.msra.mxu0 0.0
  %981 = vmatprep.mubr.f32.mxu0 0.0
  %982 = vmatmul.mubr.f32.gmra.mxu0 %v83
  %v983 = vpop.f32.mrf.mxu0
  %v984 = vadd.f32 0.0, %v983
  %v985 = vpop.f32.mrf.mxu0
  %v986 = vadd.f32 0.0, %v985
  %987 = vmatprep.mubr.f32.mxu0 0.0
  %988 = vmatmul.mubr.f32.gmra.mxu0 %v86
  %v989 = vpop.f32.mrf.mxu0
  %v990 = vadd.f32 0.0, %v989
  %v991 = vpop.f32.mrf.mxu0
  %v992 = vadd.f32 0.0, %v991
  %993 = vmatprep.mubr.f32.mxu0 0.0
  %994 = vmatmul.mubr.f32.gmra.mxu0 %v89
  %v995 = vpop.f32.mrf.mxu0
  %v996 = vadd.f32 0.0, %v995
  %v997 = vpop.f32.mrf.mxu0
  %v998 = vadd.f32 0.0, %v997
  %999 = vdwg.mxu0
  %1000 = vmatprep.subr.mxu0 0.0
  %1001 = vmatpush1.msra.mxu0 0.0
  %1002 = vmatprep.subr.mxu0 0.0
  %1003 = vmatpush1.msra.mxu0 0.0
  %1004 = vmatprep.subr.mxu0 0.0
  %1005 = vmatpush1.msra.mxu0 0.0
  %1006 = vmatprep.subr.mxu0 0.0
  %1007 = vmatpush1.msra.mxu0 0.0
  %1008 = vmatprep.subr.mxu0 0.0
  %1009 = vmatpush1.msra.mxu0 0.0
  %1010 = vmatprep.subr.mxu0 0.0
  %1011 = vmatpush1.msra.mxu0 0.0
  %1012 = vmatprep.subr.mxu0 0.0
  %1013 = vmatpush1.msra.mxu0 0.0
  %1014 = vmatprep.subr.mxu0 0.0
  %1015 = vmatpush1.msra.mxu0 0.0
  %1016 = vmatprep.subr.mxu0 0.0
  %1017 = vmatpush1.msra.mxu0 0.0
  %1018 = vmatprep.subr.mxu0 0.0
  %1019 = vmatpush1.msra.mxu0 0.0
  %1020 = vmatprep.subr.mxu0 0.0
  %1021 = vmatpush1.msra.mxu0 0.0
  %1022 = vmatprep.subr.mxu0 0.0
  %1023 = vmatpush1.msra.mxu0 0.0
  %1024 = vmatprep.subr.mxu0 %v879
  %1025 = vmatpush1.msra.mxu0 %v876
  %1026 = vmatprep.subr.mxu0 %v840
  %1027 = vmatpush1.msra.mxu0 %v839
  %1028 = vmatprep.subr.mxu0 %v824
  %1029 = vmatpush1.msra.mxu0 %v823
  %1030 = vmatprep.subr.mxu0 %v808
  %1031 = vmatpush1.msra.mxu0 %v807
  %1032 = vmatprep.subr.mxu0 0.0
  %1033 = vmatpush2.msra.mxu0 0.0
  %1034 = vmatprep.subr.mxu0 0.0
  %1035 = vmatpush2.msra.mxu0 0.0
  %1036 = vmatprep.subr.mxu0 0.0
  %1037 = vmatpush2.msra.mxu0 0.0
  %1038 = vmatprep.subr.mxu0 0.0
  %1039 = vmatpush2.msra.mxu0 0.0
  %1040 = vmatprep.subr.mxu0 0.0
  %1041 = vmatpush2.msra.mxu0 0.0
  %1042 = vmatprep.subr.mxu0 0.0
  %1043 = vmatpush2.msra.mxu0 0.0
  %1044 = vmatprep.subr.mxu0 0.0
  %1045 = vmatpush2.msra.mxu0 0.0
  %1046 = vmatprep.subr.mxu0 0.0
  %1047 = vmatpush2.msra.mxu0 0.0
  %1048 = vmatprep.subr.mxu0 0.0
  %1049 = vmatpush2.msra.mxu0 0.0
  %1050 = vmatprep.subr.mxu0 0.0
  %1051 = vmatpush2.msra.mxu0 0.0
  %1052 = vmatprep.subr.mxu0 0.0
  %1053 = vmatpush2.msra.mxu0 0.0
  %1054 = vmatprep.subr.mxu0 0.0
  %1055 = vmatpush2.msra.mxu0 0.0
  %1056 = vmatprep.subr.mxu0 0.0
  %1057 = vmatpush2.msra.mxu0 0.0
  %1058 = vmatprep.subr.mxu0 0.0
  %1059 = vmatpush2.msra.mxu0 0.0
  %1060 = vmatprep.subr.mxu0 0.0
  %1061 = vmatpush2.msra.mxu0 0.0
  %1062 = vmatprep.subr.mxu0 0.0
  %1063 = vmatpush2.msra.mxu0 0.0
  %1064 = vmatprep.mubr.f32.mxu0 0.0
  %1065 = vmatmul.mubr.f32.gmra.mxu0 %v83
  %v1066 = vpop.f32.mrf.mxu0
  %v1067 = vadd.f32 0.0, %v1066
  %v1068 = vpop.f32.mrf.mxu0
  %v1069 = vadd.f32 0.0, %v1068
  %1070 = vmatprep.mubr.f32.mxu0 0.0
  %1071 = vmatmul.mubr.f32.gmra.mxu0 %v86
  %v1072 = vpop.f32.mrf.mxu0
  %v1073 = vadd.f32 0.0, %v1072
  %v1074 = vpop.f32.mrf.mxu0
  %v1075 = vadd.f32 0.0, %v1074
  %1076 = vmatprep.mubr.f32.mxu0 0.0
  %1077 = vmatmul.mubr.f32.gmra.mxu0 %v89
  %v1078 = vpop.f32.mrf.mxu0
  %v1079 = vadd.f32 0.0, %v1078
  %v1080 = vpop.f32.mrf.mxu0
  %v1081 = vadd.f32 0.0, %v1080
  %1082 = vdwg.mxu0
  %1083 = vmatprep.subr.mxu0 0.0
  %1084 = vmatpush1.msra.mxu0 0.0
  %1085 = vmatprep.subr.mxu0 0.0
  %1086 = vmatpush1.msra.mxu0 0.0
  %1087 = vmatprep.subr.mxu0 0.0
  %1088 = vmatpush1.msra.mxu0 0.0
  %1089 = vmatprep.subr.mxu0 0.0
  %1090 = vmatpush1.msra.mxu0 0.0
  %1091 = vmatprep.subr.mxu0 0.0
  %1092 = vmatpush1.msra.mxu0 0.0
  %1093 = vmatprep.subr.mxu0 0.0
  %1094 = vmatpush1.msra.mxu0 0.0
  %1095 = vmatprep.subr.mxu0 0.0
  %1096 = vmatpush1.msra.mxu0 0.0
  %1097 = vmatprep.subr.mxu0 0.0
  %1098 = vmatpush1.msra.mxu0 0.0
  %1099 = vmatprep.subr.mxu0 0.0
  %1100 = vmatpush1.msra.mxu0 0.0
  %1101 = vmatprep.subr.mxu0 0.0
  %1102 = vmatpush1.msra.mxu0 0.0
  %1103 = vmatprep.subr.mxu0 0.0
  %1104 = vmatpush1.msra.mxu0 0.0
  %1105 = vmatprep.subr.mxu0 0.0
  %1106 = vmatpush1.msra.mxu0 0.0
  %1107 = vmatprep.subr.mxu0 %v885
  %1108 = vmatpush1.msra.mxu0 %v882
  %1109 = vmatprep.subr.mxu0 %v842
  %1110 = vmatpush1.msra.mxu0 %v841
  %1111 = vmatprep.subr.mxu0 %v826
  %1112 = vmatpush1.msra.mxu0 %v825
  %1113 = vmatprep.subr.mxu0 %v810
  %1114 = vmatpush1.msra.mxu0 %v809
  %1115 = vmatprep.subr.mxu0 0.0
  %1116 = vmatpush2.msra.mxu0 0.0
  %1117 = vmatprep.subr.mxu0 0.0
  %1118 = vmatpush2.msra.mxu0 0.0
  %1119 = vmatprep.subr.mxu0 0.0
  %1120 = vmatpush2.msra.mxu0 0.0
  %1121 = vmatprep.subr.mxu0 0.0
  %1122 = vmatpush2.msra.mxu0 0.0
  %1123 = vmatprep.subr.mxu0 0.0
  %1124 = vmatpush2.msra.mxu0 0.0
  %1125 = vmatprep.subr.mxu0 0.0
  %1126 = vmatpush2.msra.mxu0 0.0
  %1127 = vmatprep.subr.mxu0 0.0
  %1128 = vmatpush2.msra.mxu0 0.0
  %1129 = vmatprep.subr.mxu0 0.0
  %1130 = vmatpush2.msra.mxu0 0.0
  %1131 = vmatprep.subr.mxu0 0.0
  %1132 = vmatpush2.msra.mxu0 0.0
  %1133 = vmatprep.subr.mxu0 0.0
  %1134 = vmatpush2.msra.mxu0 0.0
  %1135 = vmatprep.subr.mxu0 0.0
  %1136 = vmatpush2.msra.mxu0 0.0
  %1137 = vmatprep.subr.mxu0 0.0
  %1138 = vmatpush2.msra.mxu0 0.0
  %1139 = vmatprep.subr.mxu0 0.0
  %1140 = vmatpush2.msra.mxu0 0.0
  %1141 = vmatprep.subr.mxu0 0.0
  %1142 = vmatpush2.msra.mxu0 0.0
  %1143 = vmatprep.subr.mxu0 0.0
  %1144 = vmatpush2.msra.mxu0 0.0
  %1145 = vmatprep.subr.mxu0 0.0
  %1146 = vmatpush2.msra.mxu0 0.0
  %1147 = vmatprep.mubr.f32.mxu0 0.0
  %1148 = vmatmul.mubr.f32.gmra.mxu0 %v83
  %v1149 = vpop.f32.mrf.mxu0
  %v1150 = vadd.f32 0.0, %v1149
  %v1151 = vpop.f32.mrf.mxu0
  %v1152 = vadd.f32 0.0, %v1151
  %1153 = vmatprep.mubr.f32.mxu0 0.0
  %1154 = vmatmul.mubr.f32.gmra.mxu0 %v86
  %v1155 = vpop.f32.mrf.mxu0
  %v1156 = vadd.f32 0.0, %v1155
  %v1157 = vpop.f32.mrf.mxu0
  %v1158 = vadd.f32 0.0, %v1157
  %1159 = vmatprep.mubr.f32.mxu0 0.0
  %1160 = vmatmul.mubr.f32.gmra.mxu0 %v89
  %v1161 = vpop.f32.mrf.mxu0
  %v1162 = vadd.f32 0.0, %v1161
  %v1163 = vpop.f32.mrf.mxu0
  %v1164 = vadd.f32 0.0, %v1163
  %1165 = vdwg.mxu0
  %1166 = vmatprep.subr.mxu0 0.0
  %1167 = vmatpush1.msra.mxu0 0.0
  %1168 = vmatprep.subr.mxu0 0.0
  %1169 = vmatpush1.msra.mxu0 0.0
  %1170 = vmatprep.subr.mxu0 0.0
  %1171 = vmatpush1.msra.mxu0 0.0
  %1172 = vmatprep.subr.mxu0 0.0
  %1173 = vmatpush1.msra.mxu0 0.0
  %1174 = vmatprep.subr.mxu0 0.0
  %1175 = vmatpush1.msra.mxu0 0.0
  %1176 = vmatprep.subr.mxu0 0.0
  %1177 = vmatpush1.msra.mxu0 0.0
  %1178 = vmatprep.subr.mxu0 0.0
  %1179 = vmatpush1.msra.mxu0 0.0
  %1180 = vmatprep.subr.mxu0 0.0
  %1181 = vmatpush1.msra.mxu0 0.0
  %1182 = vmatprep.subr.mxu0 0.0
  %1183 = vmatpush1.msra.mxu0 0.0
  %1184 = vmatprep.subr.mxu0 0.0
  %1185 = vmatpush1.msra.mxu0 0.0
  %1186 = vmatprep.subr.mxu0 0.0
  %1187 = vmatpush1.msra.mxu0 0.0
  %1188 = vmatprep.subr.mxu0 0.0
  %1189 = vmatpush1.msra.mxu0 0.0
  %1190 = vmatprep.subr.mxu0 %v891
  %1191 = vmatpush1.msra.mxu0 %v888
  %1192 = vmatprep.subr.mxu0 %v844
  %1193 = vmatpush1.msra.mxu0 %v843
  %1194 = vmatprep.subr.mxu0 %v828
  %1195 = vmatpush1.msra.mxu0 %v827
  %1196 = vmatprep.subr.mxu0 %v812
  %1197 = vmatpush1.msra.mxu0 %v811
  %1198 = vmatprep.subr.mxu0 0.0
  %1199 = vmatpush2.msra.mxu0 0.0
  %1200 = vmatprep.subr.mxu0 0.0
  %1201 = vmatpush2.msra.mxu0 0.0
  %1202 = vmatprep.subr.mxu0 0.0
  %1203 = vmatpush2.msra.mxu0 0.0
  %1204 = vmatprep.subr.mxu0 0.0
  %1205 = vmatpush2.msra.mxu0 0.0
  %1206 = vmatprep.subr.mxu0 0.0
  %1207 = vmatpush2.msra.mxu0 0.0
  %1208 = vmatprep.subr.mxu0 0.0
  %1209 = vmatpush2.msra.mxu0 0.0
  %1210 = vmatprep.subr.mxu0 0.0
  %1211 = vmatpush2.msra.mxu0 0.0
  %1212 = vmatprep.subr.mxu0 0.0
  %1213 = vmatpush2.msra.mxu0 0.0
  %1214 = vmatprep.subr.mxu0 0.0
  %1215 = vmatpush2.msra.mxu0 0.0
  %1216 = vmatprep.subr.mxu0 0.0
  %1217 = vmatpush2.msra.mxu0 0.0
  %1218 = vmatprep.subr.mxu0 0.0
  %1219 = vmatpush2.msra.mxu0 0.0
  %1220 = vmatprep.subr.mxu0 0.0
  %1221 = vmatpush2.msra.mxu0 0.0
  %1222 = vmatprep.subr.mxu0 0.0
  %1223 = vmatpush2.msra.mxu0 0.0
  %1224 = vmatprep.subr.mxu0 0.0
  %1225 = vmatpush2.msra.mxu0 0.0
  %1226 = vmatprep.subr.mxu0 0.0
  %1227 = vmatpush2.msra.mxu0 0.0
  %1228 = vmatprep.subr.mxu0 0.0
  %1229 = vmatpush2.msra.mxu0 0.0
  %1230 = vmatprep.mubr.f32.mxu0 0.0
  %1231 = vmatmul.mubr.f32.gmra.mxu0 %v83
  %v1232 = vpop.f32.mrf.mxu0
  %v1233 = vadd.f32 0.0, %v1232
  %v1234 = vpop.f32.mrf.mxu0
  %v1235 = vadd.f32 0.0, %v1234
  %1236 = vmatprep.mubr.f32.mxu0 0.0
  %1237 = vmatmul.mubr.f32.gmra.mxu0 %v86
  %v1238 = vpop.f32.mrf.mxu0
  %v1239 = vadd.f32 0.0, %v1238
  %v1240 = vpop.f32.mrf.mxu0
  %v1241 = vadd.f32 0.0, %v1240
  %1242 = vmatprep.mubr.f32.mxu0 0.0
  %1243 = vmatmul.mubr.f32.gmra.mxu0 %v89
  %v1244 = vpop.f32.mrf.mxu0
  %v1245 = vadd.f32 0.0, %v1244
  %v1246 = vpop.f32.mrf.mxu0
  %v1247 = vadd.f32 0.0, %v1246
  %1248 = vdwg.mxu0
  %1249 = vmatprep.subr.mxu0 0.0
  %1250 = vmatpush1.msra.mxu0 0.0
  %1251 = vmatprep.subr.mxu0 0.0
  %1252 = vmatpush1.msra.mxu0 0.0
  %1253 = vmatprep.subr.mxu0 0.0
  %1254 = vmatpush1.msra.mxu0 0.0
  %1255 = vmatprep.subr.mxu0 0.0
  %1256 = vmatpush1.msra.mxu0 0.0
  %1257 = vmatprep.subr.mxu0 0.0
  %1258 = vmatpush1.msra.mxu0 0.0
  %1259 = vmatprep.subr.mxu0 0.0
  %1260 = vmatpush1.msra.mxu0 0.0
  %1261 = vmatprep.subr.mxu0 0.0
  %1262 = vmatpush1.msra.mxu0 0.0
  %1263 = vmatprep.subr.mxu0 0.0
  %1264 = vmatpush1.msra.mxu0 0.0
  %1265 = vmatprep.subr.mxu0 0.0
  %1266 = vmatpush1.msra.mxu0 0.0
  %1267 = vmatprep.subr.mxu0 0.0
  %1268 = vmatpush1.msra.mxu0 0.0
  %1269 = vmatprep.subr.mxu0 0.0
  %1270 = vmatpush1.msra.mxu0 0.0
  %1271 = vmatprep.subr.mxu0 0.0
  %1272 = vmatpush1.msra.mxu0 0.0
  %1273 = vmatprep.subr.mxu0 %v897
  %1274 = vmatpush1.msra.mxu0 %v894
  %1275 = vmatprep.subr.mxu0 %v846
  %1276 = vmatpush1.msra.mxu0 %v845
  %1277 = vmatprep.subr.mxu0 %v830
  %1278 = vmatpush1.msra.mxu0 %v829
  %1279 = vmatprep.subr.mxu0 %v814
  %1280 = vmatpush1.msra.mxu0 %v813
  %1281 = vmatprep.subr.mxu0 0.0
  %1282 = vmatpush2.msra.mxu0 0.0
  %1283 = vmatprep.subr.mxu0 0.0
  %1284 = vmatpush2.msra.mxu0 0.0
  %1285 = vmatprep.subr.mxu0 0.0
  %1286 = vmatpush2.msra.mxu0 0.0
  %1287 = vmatprep.subr.mxu0 0.0
  %1288 = vmatpush2.msra.mxu0 0.0
  %1289 = vmatprep.subr.mxu0 0.0
  %1290 = vmatpush2.msra.mxu0 0.0
  %1291 = vmatprep.subr.mxu0 0.0
  %1292 = vmatpush2.msra.mxu0 0.0
  %1293 = vmatprep.subr.mxu0 0.0
  %1294 = vmatpush2.msra.mxu0 0.0
  %1295 = vmatprep.subr.mxu0 0.0
  %1296 = vmatpush2.msra.mxu0 0.0
  %1297 = vmatprep.subr.mxu0 0.0
  %1298 = vmatpush2.msra.mxu0 0.0
  %1299 = vmatprep.subr.mxu0 0.0
  %1300 = vmatpush2.msra.mxu0 0.0
  %1301 = vmatprep.subr.mxu0 0.0
  %1302 = vmatpush2.msra.mxu0 0.0
  %1303 = vmatprep.subr.mxu0 0.0
  %1304 = vmatpush2.msra.mxu0 0.0
  %1305 = vmatprep.subr.mxu0 0.0
  %1306 = vmatpush2.msra.mxu0 0.0
  %1307 = vmatprep.subr.mxu0 0.0
  %1308 = vmatpush2.msra.mxu0 0.0
  %1309 = vmatprep.subr.mxu0 0.0
  %1310 = vmatpush2.msra.mxu0 0.0
  %1311 = vmatprep.subr.mxu0 0.0
  %1312 = vmatpush2.msra.mxu0 0.0
  %1313 = vmatprep.mubr.f32.mxu0 0.0
  %1314 = vmatmul.mubr.f32.gmra.mxu0 %v83
  %v1315 = vpop.f32.mrf.mxu0
  %v1316 = vadd.f32 0.0, %v1315
  %v1317 = vpop.f32.mrf.mxu0
  %v1318 = vadd.f32 0.0, %v1317
  %1319 = vmatprep.mubr.f32.mxu0 0.0
  %1320 = vmatmul.mubr.f32.gmra.mxu0 %v86
  %v1321 = vpop.f32.mrf.mxu0
  %v1322 = vadd.f32 0.0, %v1321
  %v1323 = vpop.f32.mrf.mxu0
  %v1324 = vadd.f32 0.0, %v1323
  %1325 = vmatprep.mubr.f32.mxu0 0.0
  %1326 = vmatmul.mubr.f32.gmra.mxu0 %v89
  %v1327 = vpop.f32.mrf.mxu0
  %v1328 = vadd.f32 0.0, %v1327
  %v1329 = vpop.f32.mrf.mxu0
  %v1330 = vadd.f32 0.0, %v1329
  %1331 = vdwg.mxu0
  %1332 = vmatprep.subr.mxu0 0.0
  %1333 = vmatpush1.msra.mxu0 0.0
  %1334 = vmatprep.subr.mxu0 0.0
  %1335 = vmatpush1.msra.mxu0 0.0
  %1336 = vmatprep.subr.mxu0 0.0
  %1337 = vmatpush1.msra.mxu0 0.0
  %1338 = vmatprep.subr.mxu0 0.0
  %1339 = vmatpush1.msra.mxu0 0.0
  %1340 = vmatprep.subr.mxu0 0.0
  %1341 = vmatpush1.msra.mxu0 0.0
  %1342 = vmatprep.subr.mxu0 0.0
  %1343 = vmatpush1.msra.mxu0 0.0
  %1344 = vmatprep.subr.mxu0 0.0
  %1345 = vmatpush1.msra.mxu0 0.0
  %1346 = vmatprep.subr.mxu0 0.0
  %1347 = vmatpush1.msra.mxu0 0.0
  %1348 = vmatprep.subr.mxu0 0.0
  %1349 = vmatpush1.msra.mxu0 0.0
  %1350 = vmatprep.subr.mxu0 0.0
  %1351 = vmatpush1.msra.mxu0 0.0
  %1352 = vmatprep.subr.mxu0 0.0
  %1353 = vmatpush1.msra.mxu0 0.0
  %1354 = vmatprep.subr.mxu0 0.0
  %1355 = vmatpush1.msra.mxu0 0.0
  %1356 = vmatprep.subr.mxu0 %v903
  %1357 = vmatpush1.msra.mxu0 %v900
  %1358 = vmatprep.subr.mxu0 %v848
  %1359 = vmatpush1.msra.mxu0 %v847
  %1360 = vmatprep.subr.mxu0 %v832
  %1361 = vmatpush1.msra.mxu0 %v831
  %1362 = vmatprep.subr.mxu0 %v816
  %1363 = vmatpush1.msra.mxu0 %v815
  %1364 = vmatprep.subr.mxu0 0.0
  %1365 = vmatpush2.msra.mxu0 0.0
  %1366 = vmatprep.subr.mxu0 0.0
  %1367 = vmatpush2.msra.mxu0 0.0
  %1368 = vmatprep.subr.mxu0 0.0
  %1369 = vmatpush2.msra.mxu0 0.0
  %1370 = vmatprep.subr.mxu0 0.0
  %1371 = vmatpush2.msra.mxu0 0.0
  %1372 = vmatprep.subr.mxu0 0.0
  %1373 = vmatpush2.msra.mxu0 0.0
  %1374 = vmatprep.subr.mxu0 0.0
  %1375 = vmatpush2.msra.mxu0 0.0
  %1376 = vmatprep.subr.mxu0 0.0
  %1377 = vmatpush2.msra.mxu0 0.0
  %1378 = vmatprep.subr.mxu0 0.0
  %1379 = vmatpush2.msra.mxu0 0.0
  %1380 = vmatprep.subr.mxu0 0.0
  %1381 = vmatpush2.msra.mxu0 0.0
  %1382 = vmatprep.subr.mxu0 0.0
  %1383 = vmatpush2.msra.mxu0 0.0
  %1384 = vmatprep.subr.mxu0 0.0
  %1385 = vmatpush2.msra.mxu0 0.0
  %1386 = vmatprep.subr.mxu0 0.0
  %1387 = vmatpush2.msra.mxu0 0.0
  %1388 = vmatprep.subr.mxu0 0.0
  %1389 = vmatpush2.msra.mxu0 0.0
  %1390 = vmatprep.subr.mxu0 0.0
  %1391 = vmatpush2.msra.mxu0 0.0
  %1392 = vmatprep.subr.mxu0 0.0
  %1393 = vmatpush2.msra.mxu0 0.0
  %1394 = vmatprep.subr.mxu0 0.0
  %1395 = vmatpush2.msra.mxu0 0.0
  %1396 = vmatprep.mubr.f32.mxu0 0.0
  %1397 = vmatmul.mubr.f32.gmra.mxu0 %v83
  %v1398 = vpop.f32.mrf.mxu0
  %v1399 = vadd.f32 0.0, %v1398
  %v1400 = vpop.f32.mrf.mxu0
  %v1401 = vadd.f32 0.0, %v1400
  %1402 = vmatprep.mubr.f32.mxu0 0.0
  %1403 = vmatmul.mubr.f32.gmra.mxu0 %v86
  %v1404 = vpop.f32.mrf.mxu0
  %v1405 = vadd.f32 0.0, %v1404
  %v1406 = vpop.f32.mrf.mxu0
  %v1407 = vadd.f32 0.0, %v1406
  %1408 = vmatprep.mubr.f32.mxu0 0.0
  %1409 = vmatmul.mubr.f32.gmra.mxu0 %v89
  %v1410 = vpop.f32.mrf.mxu0
  %v1411 = vadd.f32 0.0, %v1410
  %v1412 = vpop.f32.mrf.mxu0
  %v1413 = vadd.f32 0.0, %v1412
  %1414 = vdwg.mxu0
  %1415 = vmatprep.subr.mxu0 0.0
  %1416 = vmatpush1.msra.mxu0 0.0
  %1417 = vmatprep.subr.mxu0 0.0
  %1418 = vmatpush1.msra.mxu0 0.0
  %1419 = vmatprep.subr.mxu0 0.0
  %1420 = vmatpush1.msra.mxu0 0.0
  %1421 = vmatprep.subr.mxu0 0.0
  %1422 = vmatpush1.msra.mxu0 0.0
  %1423 = vmatprep.subr.mxu0 0.0
  %1424 = vmatpush1.msra.mxu0 0.0
  %1425 = vmatprep.subr.mxu0 0.0
  %1426 = vmatpush1.msra.mxu0 0.0
  %1427 = vmatprep.subr.mxu0 0.0
  %1428 = vmatpush1.msra.mxu0 0.0
  %1429 = vmatprep.subr.mxu0 0.0
  %1430 = vmatpush1.msra.mxu0 0.0
  %1431 = vmatprep.subr.mxu0 0.0
  %1432 = vmatpush1.msra.mxu0 0.0
  %1433 = vmatprep.subr.mxu0 0.0
  %1434 = vmatpush1.msra.mxu0 0.0
  %1435 = vmatprep.subr.mxu0 0.0
  %1436 = vmatpush1.msra.mxu0 0.0
  %1437 = vmatprep.subr.mxu0 0.0
  %1438 = vmatpush1.msra.mxu0 0.0
  %1439 = vmatprep.subr.mxu0 %v909
  %1440 = vmatpush1.msra.mxu0 %v906
  %1441 = vmatprep.subr.mxu0 %v850
  %1442 = vmatpush1.msra.mxu0 %v849
  %1443 = vmatprep.subr.mxu0 %v834
  %1444 = vmatpush1.msra.mxu0 %v833
  %1445 = vmatprep.subr.mxu0 %v818
  %1446 = vmatpush1.msra.mxu0 %v817
  %1447 = vmatprep.subr.mxu0 0.0
  %1448 = vmatpush2.msra.mxu0 0.0
  %1449 = vmatprep.subr.mxu0 0.0
  %1450 = vmatpush2.msra.mxu0 0.0
  %1451 = vmatprep.subr.mxu0 0.0
  %1452 = vmatpush2.msra.mxu0 0.0
  %1453 = vmatprep.subr.mxu0 0.0
  %1454 = vmatpush2.msra.mxu0 0.0
  %1455 = vmatprep.subr.mxu0 0.0
  %1456 = vmatpush2.msra.mxu0 0.0
  %1457 = vmatprep.subr.mxu0 0.0
  %1458 = vmatpush2.msra.mxu0 0.0
  %1459 = vmatprep.subr.mxu0 0.0
  %1460 = vmatpush2.msra.mxu0 0.0
  %1461 = vmatprep.subr.mxu0 0.0
  %1462 = vmatpush2.msra.mxu0 0.0
  %1463 = vmatprep.subr.mxu0 0.0
  %1464 = vmatpush2.msra.mxu0 0.0
  %1465 = vmatprep.subr.mxu0 0.0
  %1466 = vmatpush2.msra.mxu0 0.0
  %1467 = vmatprep.subr.mxu0 0.0
  %1468 = vmatpush2.msra.mxu0 0.0
  %1469 = vmatprep.subr.mxu0 0.0
  %1470 = vmatpush2.msra.mxu0 0.0
  %1471 = vmatprep.subr.mxu0 0.0
  %1472 = vmatpush2.msra.mxu0 0.0
  %1473 = vmatprep.subr.mxu0 0.0
  %1474 = vmatpush2.msra.mxu0 0.0
  %1475 = vmatprep.subr.mxu0 0.0
  %1476 = vmatpush2.msra.mxu0 0.0
  %1477 = vmatprep.subr.mxu0 0.0
  %1478 = vmatpush2.msra.mxu0 0.0
  %1479 = vmatprep.mubr.f32.mxu0 0.0
  %1480 = vmatmul.mubr.f32.gmra.mxu0 %v83
  %v1481 = vpop.f32.mrf.mxu0
  %v1482 = vadd.f32 0.0, %v1481
  %v1483 = vpop.f32.mrf.mxu0
  %v1484 = vadd.f32 0.0, %v1483
  %1485 = vmatprep.mubr.f32.mxu0 0.0
  %1486 = vmatmul.mubr.f32.gmra.mxu0 %v86
  %v1487 = vpop.f32.mrf.mxu0
  %v1488 = vadd.f32 0.0, %v1487
  %v1489 = vpop.f32.mrf.mxu0
  %v1490 = vadd.f32 0.0, %v1489
  %1491 = vmatprep.mubr.f32.mxu0 0.0
  %1492 = vmatmul.mubr.f32.gmra.mxu0 %v89
  %v1493 = vpop.f32.mrf.mxu0
  %v1494 = vadd.f32 0.0, %v1493
  %v1495 = vpop.f32.mrf.mxu0
  %v1496 = vadd.f32 0.0, %v1495
  %1497 = vdwg.mxu0
  %1498 = vmatprep.subr.mxu0 0.0
  %1499 = vmatpush1.msra.mxu0 0.0
  %1500 = vmatprep.subr.mxu0 0.0
  %1501 = vmatpush1.msra.mxu0 0.0
  %1502 = vmatprep.subr.mxu0 0.0
  %1503 = vmatpush1.msra.mxu0 0.0
  %1504 = vmatprep.subr.mxu0 0.0
  %1505 = vmatpush1.msra.mxu0 0.0
  %1506 = vmatprep.subr.mxu0 0.0
  %1507 = vmatpush1.msra.mxu0 0.0
  %1508 = vmatprep.subr.mxu0 0.0
  %1509 = vmatpush1.msra.mxu0 0.0
  %1510 = vmatprep.subr.mxu0 0.0
  %1511 = vmatpush1.msra.mxu0 0.0
  %1512 = vmatprep.subr.mxu0 0.0
  %1513 = vmatpush1.msra.mxu0 0.0
  %1514 = vmatprep.subr.mxu0 0.0
  %1515 = vmatpush1.msra.mxu0 0.0
  %1516 = vmatprep.subr.mxu0 0.0
  %1517 = vmatpush1.msra.mxu0 0.0
  %1518 = vmatprep.subr.mxu0 0.0
  %1519 = vmatpush1.msra.mxu0 0.0
  %1520 = vmatprep.subr.mxu0 0.0
  %1521 = vmatpush1.msra.mxu0 0.0
  %1522 = vmatprep.subr.mxu0 %v915
  %1523 = vmatpush1.msra.mxu0 %v912
  %1524 = vmatprep.subr.mxu0 %v852
  %1525 = vmatpush1.msra.mxu0 %v851
  %1526 = vmatprep.subr.mxu0 %v836
  %1527 = vmatpush1.msra.mxu0 %v835
  %1528 = vmatprep.subr.mxu0 %v820
  %1529 = vmatpush1.msra.mxu0 %v819
  %1530 = vmatprep.subr.mxu0 0.0
  %1531 = vmatpush2.msra.mxu0 0.0
  %1532 = vmatprep.subr.mxu0 0.0
  %1533 = vmatpush2.msra.mxu0 0.0
  %1534 = vmatprep.subr.mxu0 0.0
  %1535 = vmatpush2.msra.mxu0 0.0
  %1536 = vmatprep.subr.mxu0 0.0
  %1537 = vmatpush2.msra.mxu0 0.0
  %1538 = vmatprep.subr.mxu0 0.0
  %1539 = vmatpush2.msra.mxu0 0.0
  %1540 = vmatprep.subr.mxu0 0.0
  %1541 = vmatpush2.msra.mxu0 0.0
  %1542 = vmatprep.subr.mxu0 0.0
  %1543 = vmatpush2.msra.mxu0 0.0
  %1544 = vmatprep.subr.mxu0 0.0
  %1545 = vmatpush2.msra.mxu0 0.0
  %1546 = vmatprep.subr.mxu0 0.0
  %1547 = vmatpush2.msra.mxu0 0.0
  %1548 = vmatprep.subr.mxu0 0.0
  %1549 = vmatpush2.msra.mxu0 0.0
  %1550 = vmatprep.subr.mxu0 0.0
  %1551 = vmatpush2.msra.mxu0 0.0
  %1552 = vmatprep.subr.mxu0 0.0
  %1553 = vmatpush2.msra.mxu0 0.0
  %1554 = vmatprep.subr.mxu0 0.0
  %1555 = vmatpush2.msra.mxu0 0.0
  %1556 = vmatprep.subr.mxu0 0.0
  %1557 = vmatpush2.msra.mxu0 0.0
  %1558 = vmatprep.subr.mxu0 0.0
  %1559 = vmatpush2.msra.mxu0 0.0
  %1560 = vmatprep.subr.mxu0 0.0
  %1561 = vmatpush2.msra.mxu0 0.0
  %1562 = vmatprep.mubr.f32.mxu0 0.0
  %1563 = vmatmul.mubr.f32.gmra.mxu0 %v83
  %v1564 = vpop.f32.mrf.mxu0
  %v1565 = vadd.f32 0.0, %v1564
  %v1566 = vpop.f32.mrf.mxu0
  %v1567 = vadd.f32 0.0, %v1566
  %1568 = vmatprep.mubr.f32.mxu0 0.0
  %1569 = vmatmul.mubr.f32.gmra.mxu0 %v86
  %v1570 = vpop.f32.mrf.mxu0
  %v1571 = vadd.f32 0.0, %v1570
  %v1572 = vpop.f32.mrf.mxu0
  %v1573 = vadd.f32 0.0, %v1572
  %1574 = vmatprep.mubr.f32.mxu0 0.0
  %1575 = vmatmul.mubr.f32.gmra.mxu0 %v89
  %v1576 = vpop.f32.mrf.mxu0
  %v1577 = vadd.f32 0.0, %v1576
  %v1578 = vpop.f32.mrf.mxu0
  %v1579 = vadd.f32 0.0, %v1578
  %1580 = vdwg.mxu0
  %v1581 = vmax.f32 %v207, %v984
  %v1582 = vmax.f32 %v209, %v986
  %v1583 = vmax.f32 %v290, %v1067
  %v1584 = vmax.f32 %v292, %v1069
  %v1585 = vmax.f32 %v373, %v1150
  %v1586 = vmax.f32 %v375, %v1152
  %v1587 = vmax.f32 %v456, %v1233
  %v1588 = vmax.f32 %v458, %v1235
  %v1589 = vmax.f32 %v539, %v1316
  %v1590 = vmax.f32 %v541, %v1318
  %v1591 = vmax.f32 %v622, %v1399
  %v1592 = vmax.f32 %v624, %v1401
  %v1593 = vmax.f32 %v705, %v1482
  %v1594 = vmax.f32 %v707, %v1484
  %v1595 = vmax.f32 %v788, %v1565
  %v1596 = vmax.f32 %v790, %v1567
  %v1597 = vmax.f32 %v213, %v990
  %v1598 = vmax.f32 %v215, %v992
  %v1599 = vmax.f32 %v296, %v1073
  %v1600 = vmax.f32 %v298, %v1075
  %v1601 = vmax.f32 %v379, %v1156
  %v1602 = vmax.f32 %v381, %v1158
  %v1603 = vmax.f32 %v462, %v1239
  %v1604 = vmax.f32 %v464, %v1241
  %v1605 = vmax.f32 %v545, %v1322
  %v1606 = vmax.f32 %v547, %v1324
  %v1607 = vmax.f32 %v628, %v1405
  %v1608 = vmax.f32 %v630, %v1407
  %v1609 = vmax.f32 %v711, %v1488
  %v1610 = vmax.f32 %v713, %v1490
  %v1611 = vmax.f32 %v794, %v1571
  %v1612 = vmax.f32 %v796, %v1573
  %v1613 = vmax.f32 %v219, %v996
  %v1614 = vmax.f32 %v221, %v998
  %v1615 = vmax.f32 %v302, %v1079
  %v1616 = vmax.f32 %v304, %v1081
  %v1617 = vmax.f32 %v385, %v1162
  %v1618 = vmax.f32 %v387, %v1164
  %v1619 = vmax.f32 %v468, %v1245
  %v1620 = vmax.f32 %v470, %v1247
  %v1621 = vmax.f32 %v551, %v1328
  %v1622 = vmax.f32 %v553, %v1330
  %v1623 = vmax.f32 %v634, %v1411
  %v1624 = vmax.f32 %v636, %v1413
  %v1625 = vmax.f32 %v717, %v1494
  %v1626 = vmax.f32 %v719, %v1496
  %v1627 = vmax.f32 %v800, %v1577
  %v1628 = vmax.f32 %v802, %v1579
  %s1629 = scalar_lea.vmem %s0, 1024
  %v1630 = vld [vmem:[%s1629] sm:$0xff]
  %v1631 = vld [vmem:[%s1629 + $0x8] sm:$0xff]
  %v1632 = vld [vmem:[%s1629 + $0x10] sm:$0xff]
  %v1633 = vld [vmem:[%s1629 + $0x18] sm:$0xff]
  %v1634 = vld [vmem:[%s1629 + $0x20] sm:$0xff]
  %v1635 = vld [vmem:[%s1629 + $0x28] sm:$0xff]
  %v1636 = vld [vmem:[%s1629 + $0x30] sm:$0xff]
  %v1637 = vld [vmem:[%s1629 + $0x38] sm:$0xff]
  %v1638 = vld [vmem:[%s1629 + $0x40] sm:$0xff]
  %v1639 = vld [vmem:[%s1629 + $0x48] sm:$0xff]
  %v1640 = vld [vmem:[%s1629 + $0x50] sm:$0xff]
  %v1641 = vld [vmem:[%s1629 + $0x58] sm:$0xff]
  %v1642 = vld [vmem:[%s1629 + $0x60] sm:$0xff]
  %v1643 = vld [vmem:[%s1629 + $0x68] sm:$0xff]
  %v1644 = vld [vmem:[%s1629 + $0x70] sm:$0xff]
  %v1645 = vld [vmem:[%s1629 + $0x78] sm:$0xff]
  %v1646 = vld [vmem:[%s1629 + $0x80] sm:$0xff]
  %v1647 = vld [vmem:[%s1629 + $0x88] sm:$0xff]
  %v1648 = vld [vmem:[%s1629 + $0x90] sm:$0xff]
  %v1649 = vld [vmem:[%s1629 + $0x98] sm:$0xff]
  %v1650 = vld [vmem:[%s1629 + $0xa0] sm:$0xff]
  %v1651 = vld [vmem:[%s1629 + $0xa8] sm:$0xff]
  %v1652 = vld [vmem:[%s1629 + $0xb0] sm:$0xff]
  %v1653 = vld [vmem:[%s1629 + $0xb8] sm:$0xff]
  %v1654 = vld [vmem:[%s1629 + $0xc0] sm:$0xff]
  %v1655 = vld [vmem:[%s1629 + $0xc8] sm:$0xff]
  %v1656 = vld [vmem:[%s1629 + $0xd0] sm:$0xff]
  %v1657 = vld [vmem:[%s1629 + $0xd8] sm:$0xff]
  %v1658 = vld [vmem:[%s1629 + $0xe0] sm:$0xff]
  %v1659 = vld [vmem:[%s1629 + $0xe8] sm:$0xff]
  %v1660 = vld [vmem:[%s1629 + $0xf0] sm:$0xff]
  %v1661 = vld [vmem:[%s1629 + $0xf8] sm:$0xff]
  %v1662 = vld [vmem:[%s1629 + $0x100] sm:$0xff]
  %v1663 = vld [vmem:[%s1629 + $0x108] sm:$0xff]
  %v1664 = vld [vmem:[%s1629 + $0x110] sm:$0xff]
  %v1665 = vld [vmem:[%s1629 + $0x118] sm:$0xff]
  %v1666 = vld [vmem:[%s1629 + $0x120] sm:$0xff]
  %v1667 = vld [vmem:[%s1629 + $0x128] sm:$0xff]
  %v1668 = vld [vmem:[%s1629 + $0x130] sm:$0xff]
  %v1669 = vld [vmem:[%s1629 + $0x138] sm:$0xff]
  %v1670 = vld [vmem:[%s1629 + $0x140] sm:$0xff]
  %v1671 = vld [vmem:[%s1629 + $0x148] sm:$0xff]
  %v1672 = vld [vmem:[%s1629 + $0x150] sm:$0xff]
  %v1673 = vld [vmem:[%s1629 + $0x158] sm:$0xff]
  %v1674 = vld [vmem:[%s1629 + $0x160] sm:$0xff]
  %v1675 = vld [vmem:[%s1629 + $0x168] sm:$0xff]
  %v1676 = vld [vmem:[%s1629 + $0x170] sm:$0xff]
  %v1677 = vld [vmem:[%s1629 + $0x178] sm:$0xff]
  %v1678 = vld [vmem:[%s1629 + $0x180] sm:$0x1]
  %v1679 = vld [vmem:[%s1629 + $0x188] sm:$0x1]
  %v1680 = vld [vmem:[%s1629 + $0x190] sm:$0x1]
  %v1681 = vld [vmem:[%s1629 + $0x198] sm:$0x1]
  %v1682 = vld [vmem:[%s1629 + $0x1a0] sm:$0x1]
  %v1683 = vld [vmem:[%s1629 + $0x1a8] sm:$0x1]
  %v1684 = vld [vmem:[%s1629 + $0x1b0] sm:$0x1]
  %v1685 = vld [vmem:[%s1629 + $0x1b8] sm:$0x1]
  %v1686 = vld [vmem:[%s1629 + $0x1c0] sm:$0x1]
  %v1687 = vld [vmem:[%s1629 + $0x1c8] sm:$0x1]
  %v1688 = vld [vmem:[%s1629 + $0x1d0] sm:$0x1]
  %v1689 = vld [vmem:[%s1629 + $0x1d8] sm:$0x1]
  %v1690 = vld [vmem:[%s1629 + $0x1e0] sm:$0x1]
  %v1691 = vld [vmem:[%s1629 + $0x1e8] sm:$0x1]
  %v1692 = vld [vmem:[%s1629 + $0x1f0] sm:$0x1]
  %v1693 = vld [vmem:[%s1629 + $0x1f8] sm:$0x1]
  %v1695 = vsel %vm91, %v1678, 0
  %v1698 = vsel %vm91, %v1679, 0
  %v1701 = vsel %vm91, %v1680, 0
  %v1704 = vsel %vm91, %v1681, 0
  %v1707 = vsel %vm91, %v1682, 0
  %v1710 = vsel %vm91, %v1683, 0
  %v1713 = vsel %vm91, %v1684, 0
  %v1716 = vsel %vm91, %v1685, 0
  %v1719 = vsel %vm91, %v1686, 0
  %v1722 = vsel %vm91, %v1687, 0
  %v1725 = vsel %vm91, %v1688, 0
  %v1728 = vsel %vm91, %v1689, 0
  %v1731 = vsel %vm91, %v1690, 0
  %v1734 = vsel %vm91, %v1691, 0
  %v1737 = vsel %vm91, %v1692, 0
  %v1740 = vsel %vm91, %v1693, 0
  %1742 = vmatprep.subr.mxu0 0.0
  %1743 = vmatpush1.msra.mxu0 0.0
  %1744 = vmatprep.subr.mxu0 0.0
  %1745 = vmatpush1.msra.mxu0 0.0
  %1746 = vmatprep.subr.mxu0 0.0
  %1747 = vmatpush1.msra.mxu0 0.0
  %1748 = vmatprep.subr.mxu0 0.0
  %1749 = vmatpush1.msra.mxu0 0.0
  %1750 = vmatprep.subr.mxu0 0.0
  %1751 = vmatpush1.msra.mxu0 0.0
  %1752 = vmatprep.subr.mxu0 0.0
  %1753 = vmatpush1.msra.mxu0 0.0
  %1754 = vmatprep.subr.mxu0 0.0
  %1755 = vmatpush1.msra.mxu0 0.0
  %1756 = vmatprep.subr.mxu0 0.0
  %1757 = vmatpush1.msra.mxu0 0.0
  %1758 = vmatprep.subr.mxu0 0.0
  %1759 = vmatpush1.msra.mxu0 0.0
  %1760 = vmatprep.subr.mxu0 0.0
  %1761 = vmatpush1.msra.mxu0 0.0
  %1762 = vmatprep.subr.mxu0 0.0
  %1763 = vmatpush1.msra.mxu0 0.0
  %1764 = vmatprep.subr.mxu0 0.0
  %1765 = vmatpush1.msra.mxu0 0.0
  %1766 = vmatprep.subr.mxu0 %v1698
  %1767 = vmatpush1.msra.mxu0 %v1695
  %1768 = vmatprep.subr.mxu0 %v1663
  %1769 = vmatpush1.msra.mxu0 %v1662
  %1770 = vmatprep.subr.mxu0 %v1647
  %1771 = vmatpush1.msra.mxu0 %v1646
  %1772 = vmatprep.subr.mxu0 %v1631
  %1773 = vmatpush1.msra.mxu0 %v1630
  %1774 = vmatprep.subr.mxu0 0.0
  %1775 = vmatpush2.msra.mxu0 0.0
  %1776 = vmatprep.subr.mxu0 0.0
  %1777 = vmatpush2.msra.mxu0 0.0
  %1778 = vmatprep.subr.mxu0 0.0
  %1779 = vmatpush2.msra.mxu0 0.0
  %1780 = vmatprep.subr.mxu0 0.0
  %1781 = vmatpush2.msra.mxu0 0.0
  %1782 = vmatprep.subr.mxu0 0.0
  %1783 = vmatpush2.msra.mxu0 0.0
  %1784 = vmatprep.subr.mxu0 0.0
  %1785 = vmatpush2.msra.mxu0 0.0
  %1786 = vmatprep.subr.mxu0 0.0
  %1787 = vmatpush2.msra.mxu0 0.0
  %1788 = vmatprep.subr.mxu0 0.0
  %1789 = vmatpush2.msra.mxu0 0.0
  %1790 = vmatprep.subr.mxu0 0.0
  %1791 = vmatpush2.msra.mxu0 0.0
  %1792 = vmatprep.subr.mxu0 0.0
  %1793 = vmatpush2.msra.mxu0 0.0
  %1794 = vmatprep.subr.mxu0 0.0
  %1795 = vmatpush2.msra.mxu0 0.0
  %1796 = vmatprep.subr.mxu0 0.0
  %1797 = vmatpush2.msra.mxu0 0.0
  %1798 = vmatprep.subr.mxu0 0.0
  %1799 = vmatpush2.msra.mxu0 0.0
  %1800 = vmatprep.subr.mxu0 0.0
  %1801 = vmatpush2.msra.mxu0 0.0
  %1802 = vmatprep.subr.mxu0 0.0
  %1803 = vmatpush2.msra.mxu0 0.0
  %1804 = vmatprep.subr.mxu0 0.0
  %1805 = vmatpush2.msra.mxu0 0.0
  %1806 = vmatprep.mubr.f32.mxu0 0.0
  %1807 = vmatmul.mubr.f32.gmra.mxu0 %v83
  %v1808 = vpop.f32.mrf.mxu0
  %v1809 = vadd.f32 0.0, %v1808
  %v1810 = vpop.f32.mrf.mxu0
  %v1811 = vadd.f32 0.0, %v1810
  %1812 = vmatprep.mubr.f32.mxu0 0.0
  %1813 = vmatmul.mubr.f32.gmra.mxu0 %v86
  %v1814 = vpop.f32.mrf.mxu0
  %v1815 = vadd.f32 0.0, %v1814
  %v1816 = vpop.f32.mrf.mxu0
  %v1817 = vadd.f32 0.0, %v1816
  %1818 = vmatprep.mubr.f32.mxu0 0.0
  %1819 = vmatmul.mubr.f32.gmra.mxu0 %v89
  %v1820 = vpop.f32.mrf.mxu0
  %v1821 = vadd.f32 0.0, %v1820
  %v1822 = vpop.f32.mrf.mxu0
  %v1823 = vadd.f32 0.0, %v1822
  %1824 = vdwg.mxu0
  %1825 = vmatprep.subr.mxu0 0.0
  %1826 = vmatpush1.msra.mxu0 0.0
  %1827 = vmatprep.subr.mxu0 0.0
  %1828 = vmatpush1.msra.mxu0 0.0
  %1829 = vmatprep.subr.mxu0 0.0
  %1830 = vmatpush1.msra.mxu0 0.0
  %1831 = vmatprep.subr.mxu0 0.0
  %1832 = vmatpush1.msra.mxu0 0.0
  %1833 = vmatprep.subr.mxu0 0.0
  %1834 = vmatpush1.msra.mxu0 0.0
  %1835 = vmatprep.subr.mxu0 0.0
  %1836 = vmatpush1.msra.mxu0 0.0
  %1837 = vmatprep.subr.mxu0 0.0
  %1838 = vmatpush1.msra.mxu0 0.0
  %1839 = vmatprep.subr.mxu0 0.0
  %1840 = vmatpush1.msra.mxu0 0.0
  %1841 = vmatprep.subr.mxu0 0.0
  %1842 = vmatpush1.msra.mxu0 0.0
  %1843 = vmatprep.subr.mxu0 0.0
  %1844 = vmatpush1.msra.mxu0 0.0
  %1845 = vmatprep.subr.mxu0 0.0
  %1846 = vmatpush1.msra.mxu0 0.0
  %1847 = vmatprep.subr.mxu0 0.0
  %1848 = vmatpush1.msra.mxu0 0.0
  %1849 = vmatprep.subr.mxu0 %v1704
  %1850 = vmatpush1.msra.mxu0 %v1701
  %1851 = vmatprep.subr.mxu0 %v1665
  %1852 = vmatpush1.msra.mxu0 %v1664
  %1853 = vmatprep.subr.mxu0 %v1649
  %1854 = vmatpush1.msra.mxu0 %v1648
  %1855 = vmatprep.subr.mxu0 %v1633
  %1856 = vmatpush1.msra.mxu0 %v1632
  %1857 = vmatprep.subr.mxu0 0.0
  %1858 = vmatpush2.msra.mxu0 0.0
  %1859 = vmatprep.subr.mxu0 0.0
  %1860 = vmatpush2.msra.mxu0 0.0
  %1861 = vmatprep.subr.mxu0 0.0
  %1862 = vmatpush2.msra.mxu0 0.0
  %1863 = vmatprep.subr.mxu0 0.0
  %1864 = vmatpush2.msra.mxu0 0.0
  %1865 = vmatprep.subr.mxu0 0.0
  %1866 = vmatpush2.msra.mxu0 0.0
  %1867 = vmatprep.subr.mxu0 0.0
  %1868 = vmatpush2.msra.mxu0 0.0
  %1869 = vmatprep.subr.mxu0 0.0
  %1870 = vmatpush2.msra.mxu0 0.0
  %1871 = vmatprep.subr.mxu0 0.0
  %1872 = vmatpush2.msra.mxu0 0.0
  %1873 = vmatprep.subr.mxu0 0.0
  %1874 = vmatpush2.msra.mxu0 0.0
  %1875 = vmatprep.subr.mxu0 0.0
  %1876 = vmatpush2.msra.mxu0 0.0
  %1877 = vmatprep.subr.mxu0 0.0
  %1878 = vmatpush2.msra.mxu0 0.0
  %1879 = vmatprep.subr.mxu0 0.0
  %1880 = vmatpush2.msra.mxu0 0.0
  %1881 = vmatprep.subr.mxu0 0.0
  %1882 = vmatpush2.msra.mxu0 0.0
  %1883 = vmatprep.subr.mxu0 0.0
  %1884 = vmatpush2.msra.mxu0 0.0
  %1885 = vmatprep.subr.mxu0 0.0
  %1886 = vmatpush2.msra.mxu0 0.0
  %1887 = vmatprep.subr.mxu0 0.0
  %1888 = vmatpush2.msra.mxu0 0.0
  %1889 = vmatprep.mubr.f32.mxu0 0.0
  %1890 = vmatmul.mubr.f32.gmra.mxu0 %v83
  %v1891 = vpop.f32.mrf.mxu0
  %v1892 = vadd.f32 0.0, %v1891
  %v1893 = vpop.f32.mrf.mxu0
  %v1894 = vadd.f32 0.0, %v1893
  %1895 = vmatprep.mubr.f32.mxu0 0.0
  %1896 = vmatmul.mubr.f32.gmra.mxu0 %v86
  %v1897 = vpop.f32.mrf.mxu0
  %v1898 = vadd.f32 0.0, %v1897
  %v1899 = vpop.f32.mrf.mxu0
  %v1900 = vadd.f32 0.0, %v1899
  %1901 = vmatprep.mubr.f32.mxu0 0.0
  %1902 = vmatmul.mubr.f32.gmra.mxu0 %v89
  %v1903 = vpop.f32.mrf.mxu0
  %v1904 = vadd.f32 0.0, %v1903
  %v1905 = vpop.f32.mrf.mxu0
  %v1906 = vadd.f32 0.0, %v1905
  %1907 = vdwg.mxu0
  %1908 = vmatprep.subr.mxu0 0.0
  %1909 = vmatpush1.msra.mxu0 0.0
  %1910 = vmatprep.subr.mxu0 0.0
  %1911 = vmatpush1.msra.mxu0 0.0
  %1912 = vmatprep.subr.mxu0 0.0
  %1913 = vmatpush1.msra.mxu0 0.0
  %1914 = vmatprep.subr.mxu0 0.0
  %1915 = vmatpush1.msra.mxu0 0.0
  %1916 = vmatprep.subr.mxu0 0.0
  %1917 = vmatpush1.msra.mxu0 0.0
  %1918 = vmatprep.subr.mxu0 0.0
  %1919 = vmatpush1.msra.mxu0 0.0
  %1920 = vmatprep.subr.mxu0 0.0
  %1921 = vmatpush1.msra.mxu0 0.0
  %1922 = vmatprep.subr.mxu0 0.0
  %1923 = vmatpush1.msra.mxu0 0.0
  %1924 = vmatprep.subr.mxu0 0.0
  %1925 = vmatpush1.msra.mxu0 0.0
  %1926 = vmatprep.subr.mxu0 0.0
  %1927 = vmatpush1.msra.mxu0 0.0
  %1928 = vmatprep.subr.mxu0 0.0
  %1929 = vmatpush1.msra.mxu0 0.0
  %1930 = vmatprep.subr.mxu0 0.0
  %1931 = vmatpush1.msra.mxu0 0.0
  %1932 = vmatprep.subr.mxu0 %v1710
  %1933 = vmatpush1.msra.mxu0 %v1707
  %1934 = vmatprep.subr.mxu0 %v1667
  %1935 = vmatpush1.msra.mxu0 %v1666
  %1936 = vmatprep.subr.mxu0 %v1651
  %1937 = vmatpush1.msra.mxu0 %v1650
  %1938 = vmatprep.subr.mxu0 %v1635
  %1939 = vmatpush1.msra.mxu0 %v1634
  %1940 = vmatprep.subr.mxu0 0.0
  %1941 = vmatpush2.msra.mxu0 0.0
  %1942 = vmatprep.subr.mxu0 0.0
  %1943 = vmatpush2.msra.mxu0 0.0
  %1944 = vmatprep.subr.mxu0 0.0
  %1945 = vmatpush2.msra.mxu0 0.0
  %1946 = vmatprep.subr.mxu0 0.0
  %1947 = vmatpush2.msra.mxu0 0.0
  %1948 = vmatprep.subr.mxu0 0.0
  %1949 = vmatpush2.msra.mxu0 0.0
  %1950 = vmatprep.subr.mxu0 0.0
  %1951 = vmatpush2.msra.mxu0 0.0
  %1952 = vmatprep.subr.mxu0 0.0
  %1953 = vmatpush2.msra.mxu0 0.0
  %1954 = vmatprep.subr.mxu0 0.0
  %1955 = vmatpush2.msra.mxu0 0.0
  %1956 = vmatprep.subr.mxu0 0.0
  %1957 = vmatpush2.msra.mxu0 0.0
  %1958 = vmatprep.subr.mxu0 0.0
  %1959 = vmatpush2.msra.mxu0 0.0
  %1960 = vmatprep.subr.mxu0 0.0
  %1961 = vmatpush2.msra.mxu0 0.0
  %1962 = vmatprep.subr.mxu0 0.0
  %1963 = vmatpush2.msra.mxu0 0.0
  %1964 = vmatprep.subr.mxu0 0.0
  %1965 = vmatpush2.msra.mxu0 0.0
  %1966 = vmatprep.subr.mxu0 0.0
  %1967 = vmatpush2.msra.mxu0 0.0
  %1968 = vmatprep.subr.mxu0 0.0
  %1969 = vmatpush2.msra.mxu0 0.0
  %1970 = vmatprep.subr.mxu0 0.0
  %1971 = vmatpush2.msra.mxu0 0.0
  %1972 = vmatprep.mubr.f32.mxu0 0.0
  %1973 = vmatmul.mubr.f32.gmra.mxu0 %v83
  %v1974 = vpop.f32.mrf.mxu0
  %v1975 = vadd.f32 0.0, %v1974
  %v1976 = vpop.f32.mrf.mxu0
  %v1977 = vadd.f32 0.0, %v1976
  %1978 = vmatprep.mubr.f32.mxu0 0.0
  %1979 = vmatmul.mubr.f32.gmra.mxu0 %v86
  %v1980 = vpop.f32.mrf.mxu0
  %v1981 = vadd.f32 0.0, %v1980
  %v1982 = vpop.f32.mrf.mxu0
  %v1983 = vadd.f32 0.0, %v1982
  %1984 = vmatprep.mubr.f32.mxu0 0.0
  %1985 = vmatmul.mubr.f32.gmra.mxu0 %v89
  %v1986 = vpop.f32.mrf.mxu0
  %v1987 = vadd.f32 0.0, %v1986
  %v1988 = vpop.f32.mrf.mxu0
  %v1989 = vadd.f32 0.0, %v1988
  %1990 = vdwg.mxu0
  %1991 = vmatprep.subr.mxu0 0.0
  %1992 = vmatpush1.msra.mxu0 0.0
  %1993 = vmatprep.subr.mxu0 0.0
  %1994 = vmatpush1.msra.mxu0 0.0
  %1995 = vmatprep.subr.mxu0 0.0
  %1996 = vmatpush1.msra.mxu0 0.0
  %1997 = vmatprep.subr.mxu0 0.0
  %1998 = vmatpush1.msra.mxu0 0.0
  %1999 = vmatprep.subr.mxu0 0.0
  %2000 = vmatpush1.msra.mxu0 0.0
  %2001 = vmatprep.subr.mxu0 0.0
  %2002 = vmatpush1.msra.mxu0 0.0
  %2003 = vmatprep.subr.mxu0 0.0
  %2004 = vmatpush1.msra.mxu0 0.0
  %2005 = vmatprep.subr.mxu0 0.0
  %2006 = vmatpush1.msra.mxu0 0.0
  %2007 = vmatprep.subr.mxu0 0.0
  %2008 = vmatpush1.msra.mxu0 0.0
  %2009 = vmatprep.subr.mxu0 0.0
  %2010 = vmatpush1.msra.mxu0 0.0
  %2011 = vmatprep.subr.mxu0 0.0
  %2012 = vmatpush1.msra.mxu0 0.0
  %2013 = vmatprep.subr.mxu0 0.0
  %2014 = vmatpush1.msra.mxu0 0.0
  %2015 = vmatprep.subr.mxu0 %v1716
  %2016 = vmatpush1.msra.mxu0 %v1713
  %2017 = vmatprep.subr.mxu0 %v1669
  %2018 = vmatpush1.msra.mxu0 %v1668
  %2019 = vmatprep.subr.mxu0 %v1653
  %2020 = vmatpush1.msra.mxu0 %v1652
  %2021 = vmatprep.subr.mxu0 %v1637
  %2022 = vmatpush1.msra.mxu0 %v1636
  %2023 = vmatprep.subr.mxu0 0.0
  %2024 = vmatpush2.msra.mxu0 0.0
  %2025 = vmatprep.subr.mxu0 0.0
  %2026 = vmatpush2.msra.mxu0 0.0
  %2027 = vmatprep.subr.mxu0 0.0
  %2028 = vmatpush2.msra.mxu0 0.0
  %2029 = vmatprep.subr.mxu0 0.0
  %2030 = vmatpush2.msra.mxu0 0.0
  %2031 = vmatprep.subr.mxu0 0.0
  %2032 = vmatpush2.msra.mxu0 0.0
  %2033 = vmatprep.subr.mxu0 0.0
  %2034 = vmatpush2.msra.mxu0 0.0
  %2035 = vmatprep.subr.mxu0 0.0
  %2036 = vmatpush2.msra.mxu0 0.0
  %2037 = vmatprep.subr.mxu0 0.0
  %2038 = vmatpush2.msra.mxu0 0.0
  %2039 = vmatprep.subr.mxu0 0.0
  %2040 = vmatpush2.msra.mxu0 0.0
  %2041 = vmatprep.subr.mxu0 0.0
  %2042 = vmatpush2.msra.mxu0 0.0
  %2043 = vmatprep.subr.mxu0 0.0
  %2044 = vmatpush2.msra.mxu0 0.0
  %2045 = vmatprep.subr.mxu0 0.0
  %2046 = vmatpush2.msra.mxu0 0.0
  %2047 = vmatprep.subr.mxu0 0.0
  %2048 = vmatpush2.msra.mxu0 0.0
  %2049 = vmatprep.subr.mxu0 0.0
  %2050 = vmatpush2.msra.mxu0 0.0
  %2051 = vmatprep.subr.mxu0 0.0
  %2052 = vmatpush2.msra.mxu0 0.0
  %2053 = vmatprep.subr.mxu0 0.0
  %2054 = vmatpush2.msra.mxu0 0.0
  %2055 = vmatprep.mubr.f32.mxu0 0.0
  %2056 = vmatmul.mubr.f32.gmra.mxu0 %v83
  %v2057 = vpop.f32.mrf.mxu0
  %v2058 = vadd.f32 0.0, %v2057
  %v2059 = vpop.f32.mrf.mxu0
  %v2060 = vadd.f32 0.0, %v2059
  %2061 = vmatprep.mubr.f32.mxu0 0.0
  %2062 = vmatmul.mubr.f32.gmra.mxu0 %v86
  %v2063 = vpop.f32.mrf.mxu0
  %v2064 = vadd.f32 0.0, %v2063
  %v2065 = vpop.f32.mrf.mxu0
  %v2066 = vadd.f32 0.0, %v2065
  %2067 = vmatprep.mubr.f32.mxu0 0.0
  %2068 = vmatmul.mubr.f32.gmra.mxu0 %v89
  %v2069 = vpop.f32.mrf.mxu0
  %v2070 = vadd.f32 0.0, %v2069
  %v2071 = vpop.f32.mrf.mxu0
  %v2072 = vadd.f32 0.0, %v2071
  %2073 = vdwg.mxu0
  %2074 = vmatprep.subr.mxu0 0.0
  %2075 = vmatpush1.msra.mxu0 0.0
  %2076 = vmatprep.subr.mxu0 0.0
  %2077 = vmatpush1.msra.mxu0 0.0
  %2078 = vmatprep.subr.mxu0 0.0
  %2079 = vmatpush1.msra.mxu0 0.0
  %2080 = vmatprep.subr.mxu0 0.0
  %2081 = vmatpush1.msra.mxu0 0.0
  %2082 = vmatprep.subr.mxu0 0.0
  %2083 = vmatpush1.msra.mxu0 0.0
  %2084 = vmatprep.subr.mxu0 0.0
  %2085 = vmatpush1.msra.mxu0 0.0
  %2086 = vmatprep.subr.mxu0 0.0
  %2087 = vmatpush1.msra.mxu0 0.0
  %2088 = vmatprep.subr.mxu0 0.0
  %2089 = vmatpush1.msra.mxu0 0.0
  %2090 = vmatprep.subr.mxu0 0.0
  %2091 = vmatpush1.msra.mxu0 0.0
  %2092 = vmatprep.subr.mxu0 0.0
  %2093 = vmatpush1.msra.mxu0 0.0
  %2094 = vmatprep.subr.mxu0 0.0
  %2095 = vmatpush1.msra.mxu0 0.0
  %2096 = vmatprep.subr.mxu0 0.0
  %2097 = vmatpush1.msra.mxu0 0.0
  %2098 = vmatprep.subr.mxu0 %v1722
  %2099 = vmatpush1.msra.mxu0 %v1719
  %2100 = vmatprep.subr.mxu0 %v1671
  %2101 = vmatpush1.msra.mxu0 %v1670
  %2102 = vmatprep.subr.mxu0 %v1655
  %2103 = vmatpush1.msra.mxu0 %v1654
  %2104 = vmatprep.subr.mxu0 %v1639
  %2105 = vmatpush1.msra.mxu0 %v1638
  %2106 = vmatprep.subr.mxu0 0.0
  %2107 = vmatpush2.msra.mxu0 0.0
  %2108 = vmatprep.subr.mxu0 0.0
  %2109 = vmatpush2.msra.mxu0 0.0
  %2110 = vmatprep.subr.mxu0 0.0
  %2111 = vmatpush2.msra.mxu0 0.0
  %2112 = vmatprep.subr.mxu0 0.0
  %2113 = vmatpush2.msra.mxu0 0.0
  %2114 = vmatprep.subr.mxu0 0.0
  %2115 = vmatpush2.msra.mxu0 0.0
  %2116 = vmatprep.subr.mxu0 0.0
  %2117 = vmatpush2.msra.mxu0 0.0
  %2118 = vmatprep.subr.mxu0 0.0
  %2119 = vmatpush2.msra.mxu0 0.0
  %2120 = vmatprep.subr.mxu0 0.0
  %2121 = vmatpush2.msra.mxu0 0.0
  %2122 = vmatprep.subr.mxu0 0.0
  %2123 = vmatpush2.msra.mxu0 0.0
  %2124 = vmatprep.subr.mxu0 0.0
  %2125 = vmatpush2.msra.mxu0 0.0
  %2126 = vmatprep.subr.mxu0 0.0
  %2127 = vmatpush2.msra.mxu0 0.0
  %2128 = vmatprep.subr.mxu0 0.0
  %2129 = vmatpush2.msra.mxu0 0.0
  %2130 = vmatprep.subr.mxu0 0.0
  %2131 = vmatpush2.msra.mxu0 0.0
  %2132 = vmatprep.subr.mxu0 0.0
  %2133 = vmatpush2.msra.mxu0 0.0
  %2134 = vmatprep.subr.mxu0 0.0
  %2135 = vmatpush2.msra.mxu0 0.0
  %2136 = vmatprep.subr.mxu0 0.0
  %2137 = vmatpush2.msra.mxu0 0.0
  %2138 = vmatprep.mubr.f32.mxu0 0.0
  %2139 = vmatmul.mubr.f32.gmra.mxu0 %v83
  %v2140 = vpop.f32.mrf.mxu0
  %v2141 = vadd.f32 0.0, %v2140
  %v2142 = vpop.f32.mrf.mxu0
  %v2143 = vadd.f32 0.0, %v2142
  %2144 = vmatprep.mubr.f32.mxu0 0.0
  %2145 = vmatmul.mubr.f32.gmra.mxu0 %v86
  %v2146 = vpop.f32.mrf.mxu0
  %v2147 = vadd.f32 0.0, %v2146
  %v2148 = vpop.f32.mrf.mxu0
  %v2149 = vadd.f32 0.0, %v2148
  %2150 = vmatprep.mubr.f32.mxu0 0.0
  %2151 = vmatmul.mubr.f32.gmra.mxu0 %v89
  %v2152 = vpop.f32.mrf.mxu0
  %v2153 = vadd.f32 0.0, %v2152
  %v2154 = vpop.f32.mrf.mxu0
  %v2155 = vadd.f32 0.0, %v2154
  %2156 = vdwg.mxu0
  %2157 = vmatprep.subr.mxu0 0.0
  %2158 = vmatpush1.msra.mxu0 0.0
  %2159 = vmatprep.subr.mxu0 0.0
  %2160 = vmatpush1.msra.mxu0 0.0
  %2161 = vmatprep.subr.mxu0 0.0
  %2162 = vmatpush1.msra.mxu0 0.0
  %2163 = vmatprep.subr.mxu0 0.0
  %2164 = vmatpush1.msra.mxu0 0.0
  %2165 = vmatprep.subr.mxu0 0.0
  %2166 = vmatpush1.msra.mxu0 0.0
  %2167 = vmatprep.subr.mxu0 0.0
  %2168 = vmatpush1.msra.mxu0 0.0
  %2169 = vmatprep.subr.mxu0 0.0
  %2170 = vmatpush1.msra.mxu0 0.0
  %2171 = vmatprep.subr.mxu0 0.0
  %2172 = vmatpush1.msra.mxu0 0.0
  %2173 = vmatprep.subr.mxu0 0.0
  %2174 = vmatpush1.msra.mxu0 0.0
  %2175 = vmatprep.subr.mxu0 0.0
  %2176 = vmatpush1.msra.mxu0 0.0
  %2177 = vmatprep.subr.mxu0 0.0
  %2178 = vmatpush1.msra.mxu0 0.0
  %2179 = vmatprep.subr.mxu0 0.0
  %2180 = vmatpush1.msra.mxu0 0.0
  %2181 = vmatprep.subr.mxu0 %v1728
  %2182 = vmatpush1.msra.mxu0 %v1725
  %2183 = vmatprep.subr.mxu0 %v1673
  %2184 = vmatpush1.msra.mxu0 %v1672
  %2185 = vmatprep.subr.mxu0 %v1657
  %2186 = vmatpush1.msra.mxu0 %v1656
  %2187 = vmatprep.subr.mxu0 %v1641
  %2188 = vmatpush1.msra.mxu0 %v1640
  %2189 = vmatprep.subr.mxu0 0.0
  %2190 = vmatpush2.msra.mxu0 0.0
  %2191 = vmatprep.subr.mxu0 0.0
  %2192 = vmatpush2.msra.mxu0 0.0
  %2193 = vmatprep.subr.mxu0 0.0
  %2194 = vmatpush2.msra.mxu0 0.0
  %2195 = vmatprep.subr.mxu0 0.0
  %2196 = vmatpush2.msra.mxu0 0.0
  %2197 = vmatprep.subr.mxu0 0.0
  %2198 = vmatpush2.msra.mxu0 0.0
  %2199 = vmatprep.subr.mxu0 0.0
  %2200 = vmatpush2.msra.mxu0 0.0
  %2201 = vmatprep.subr.mxu0 0.0
  %2202 = vmatpush2.msra.mxu0 0.0
  %2203 = vmatprep.subr.mxu0 0.0
  %2204 = vmatpush2.msra.mxu0 0.0
  %2205 = vmatprep.subr.mxu0 0.0
  %2206 = vmatpush2.msra.mxu0 0.0
  %2207 = vmatprep.subr.mxu0 0.0
  %2208 = vmatpush2.msra.mxu0 0.0
  %2209 = vmatprep.subr.mxu0 0.0
  %2210 = vmatpush2.msra.mxu0 0.0
  %2211 = vmatprep.subr.mxu0 0.0
  %2212 = vmatpush2.msra.mxu0 0.0
  %2213 = vmatprep.subr.mxu0 0.0
  %2214 = vmatpush2.msra.mxu0 0.0
  %2215 = vmatprep.subr.mxu0 0.0
  %2216 = vmatpush2.msra.mxu0 0.0
  %2217 = vmatprep.subr.mxu0 0.0
  %2218 = vmatpush2.msra.mxu0 0.0
  %2219 = vmatprep.subr.mxu0 0.0
  %2220 = vmatpush2.msra.mxu0 0.0
  %2221 = vmatprep.mubr.f32.mxu0 0.0
  %2222 = vmatmul.mubr.f32.gmra.mxu0 %v83
  %v2223 = vpop.f32.mrf.mxu0
  %v2224 = vadd.f32 0.0, %v2223
  %v2225 = vpop.f32.mrf.mxu0
  %v2226 = vadd.f32 0.0, %v2225
  %2227 = vmatprep.mubr.f32.mxu0 0.0
  %2228 = vmatmul.mubr.f32.gmra.mxu0 %v86
  %v2229 = vpop.f32.mrf.mxu0
  %v2230 = vadd.f32 0.0, %v2229
  %v2231 = vpop.f32.mrf.mxu0
  %v2232 = vadd.f32 0.0, %v2231
  %2233 = vmatprep.mubr.f32.mxu0 0.0
  %2234 = vmatmul.mubr.f32.gmra.mxu0 %v89
  %v2235 = vpop.f32.mrf.mxu0
  %v2236 = vadd.f32 0.0, %v2235
  %v2237 = vpop.f32.mrf.mxu0
  %v2238 = vadd.f32 0.0, %v2237
  %2239 = vdwg.mxu0
  %2240 = vmatprep.subr.mxu0 0.0
  %2241 = vmatpush1.msra.mxu0 0.0
  %2242 = vmatprep.subr.mxu0 0.0
  %2243 = vmatpush1.msra.mxu0 0.0
  %2244 = vmatprep.subr.mxu0 0.0
  %2245 = vmatpush1.msra.mxu0 0.0
  %2246 = vmatprep.subr.mxu0 0.0
  %2247 = vmatpush1.msra.mxu0 0.0
  %2248 = vmatprep.subr.mxu0 0.0
  %2249 = vmatpush1.msra.mxu0 0.0
  %2250 = vmatprep.subr.mxu0 0.0
  %2251 = vmatpush1.msra.mxu0 0.0
  %2252 = vmatprep.subr.mxu0 0.0
  %2253 = vmatpush1.msra.mxu0 0.0
  %2254 = vmatprep.subr.mxu0 0.0
  %2255 = vmatpush1.msra.mxu0 0.0
  %2256 = vmatprep.subr.mxu0 0.0
  %2257 = vmatpush1.msra.mxu0 0.0
  %2258 = vmatprep.subr.mxu0 0.0
  %2259 = vmatpush1.msra.mxu0 0.0
  %2260 = vmatprep.subr.mxu0 0.0
  %2261 = vmatpush1.msra.mxu0 0.0
  %2262 = vmatprep.subr.mxu0 0.0
  %2263 = vmatpush1.msra.mxu0 0.0
  %2264 = vmatprep.subr.mxu0 %v1734
  %2265 = vmatpush1.msra.mxu0 %v1731
  %2266 = vmatprep.subr.mxu0 %v1675
  %2267 = vmatpush1.msra.mxu0 %v1674
  %2268 = vmatprep.subr.mxu0 %v1659
  %2269 = vmatpush1.msra.mxu0 %v1658
  %2270 = vmatprep.subr.mxu0 %v1643
  %2271 = vmatpush1.msra.mxu0 %v1642
  %2272 = vmatprep.subr.mxu0 0.0
  %2273 = vmatpush2.msra.mxu0 0.0
  %2274 = vmatprep.subr.mxu0 0.0
  %2275 = vmatpush2.msra.mxu0 0.0
  %2276 = vmatprep.subr.mxu0 0.0
  %2277 = vmatpush2.msra.mxu0 0.0
  %2278 = vmatprep.subr.mxu0 0.0
  %2279 = vmatpush2.msra.mxu0 0.0
  %2280 = vmatprep.subr.mxu0 0.0
  %2281 = vmatpush2.msra.mxu0 0.0
  %2282 = vmatprep.subr.mxu0 0.0
  %2283 = vmatpush2.msra.mxu0 0.0
  %2284 = vmatprep.subr.mxu0 0.0
  %2285 = vmatpush2.msra.mxu0 0.0
  %2286 = vmatprep.subr.mxu0 0.0
  %2287 = vmatpush2.msra.mxu0 0.0
  %2288 = vmatprep.subr.mxu0 0.0
  %2289 = vmatpush2.msra.mxu0 0.0
  %2290 = vmatprep.subr.mxu0 0.0
  %2291 = vmatpush2.msra.mxu0 0.0
  %2292 = vmatprep.subr.mxu0 0.0
  %2293 = vmatpush2.msra.mxu0 0.0
  %2294 = vmatprep.subr.mxu0 0.0
  %2295 = vmatpush2.msra.mxu0 0.0
  %2296 = vmatprep.subr.mxu0 0.0
  %2297 = vmatpush2.msra.mxu0 0.0
  %2298 = vmatprep.subr.mxu0 0.0
  %2299 = vmatpush2.msra.mxu0 0.0
  %2300 = vmatprep.subr.mxu0 0.0
  %2301 = vmatpush2.msra.mxu0 0.0
  %2302 = vmatprep.subr.mxu0 0.0
  %2303 = vmatpush2.msra.mxu0 0.0
  %2304 = vmatprep.mubr.f32.mxu0 0.0
  %2305 = vmatmul.mubr.f32.gmra.mxu0 %v83
  %v2306 = vpop.f32.mrf.mxu0
  %v2307 = vadd.f32 0.0, %v2306
  %v2308 = vpop.f32.mrf.mxu0
  %v2309 = vadd.f32 0.0, %v2308
  %2310 = vmatprep.mubr.f32.mxu0 0.0
  %2311 = vmatmul.mubr.f32.gmra.mxu0 %v86
  %v2312 = vpop.f32.mrf.mxu0
  %v2313 = vadd.f32 0.0, %v2312
  %v2314 = vpop.f32.mrf.mxu0
  %v2315 = vadd.f32 0.0, %v2314
  %2316 = vmatprep.mubr.f32.mxu0 0.0
  %2317 = vmatmul.mubr.f32.gmra.mxu0 %v89
  %v2318 = vpop.f32.mrf.mxu0
  %v2319 = vadd.f32 0.0, %v2318
  %v2320 = vpop.f32.mrf.mxu0
  %v2321 = vadd.f32 0.0, %v2320
  %2322 = vdwg.mxu0
  %2323 = vmatprep.subr.mxu0 0.0
  %2324 = vmatpush1.msra.mxu0 0.0
  %2325 = vmatprep.subr.mxu0 0.0
  %2326 = vmatpush1.msra.mxu0 0.0
  %2327 = vmatprep.subr.mxu0 0.0
  %2328 = vmatpush1.msra.mxu0 0.0
  %2329 = vmatprep.subr.mxu0 0.0
  %2330 = vmatpush1.msra.mxu0 0.0
  %2331 = vmatprep.subr.mxu0 0.0
  %2332 = vmatpush1.msra.mxu0 0.0
  %2333 = vmatprep.subr.mxu0 0.0
  %2334 = vmatpush1.msra.mxu0 0.0
  %2335 = vmatprep.subr.mxu0 0.0
  %2336 = vmatpush1.msra.mxu0 0.0
  %2337 = vmatprep.subr.mxu0 0.0
  %2338 = vmatpush1.msra.mxu0 0.0
  %2339 = vmatprep.subr.mxu0 0.0
  %2340 = vmatpush1.msra.mxu0 0.0
  %2341 = vmatprep.subr.mxu0 0.0
  %2342 = vmatpush1.msra.mxu0 0.0
  %2343 = vmatprep.subr.mxu0 0.0
  %2344 = vmatpush1.msra.mxu0 0.0
  %2345 = vmatprep.subr.mxu0 0.0
  %2346 = vmatpush1.msra.mxu0 0.0
  %2347 = vmatprep.subr.mxu0 %v1740
  %2348 = vmatpush1.msra.mxu0 %v1737
  %2349 = vmatprep.subr.mxu0 %v1677
  %2350 = vmatpush1.msra.mxu0 %v1676
  %2351 = vmatprep.subr.mxu0 %v1661
  %2352 = vmatpush1.msra.mxu0 %v1660
  %2353 = vmatprep.subr.mxu0 %v1645
  %2354 = vmatpush1.msra.mxu0 %v1644
  %2355 = vmatprep.subr.mxu0 0.0
  %2356 = vmatpush2.msra.mxu0 0.0
  %2357 = vmatprep.subr.mxu0 0.0
  %2358 = vmatpush2.msra.mxu0 0.0
  %2359 = vmatprep.subr.mxu0 0.0
  %2360 = vmatpush2.msra.mxu0 0.0
  %2361 = vmatprep.subr.mxu0 0.0
  %2362 = vmatpush2.msra.mxu0 0.0
  %2363 = vmatprep.subr.mxu0 0.0
  %2364 = vmatpush2.msra.mxu0 0.0
  %2365 = vmatprep.subr.mxu0 0.0
  %2366 = vmatpush2.msra.mxu0 0.0
  %2367 = vmatprep.subr.mxu0 0.0
  %2368 = vmatpush2.msra.mxu0 0.0
  %2369 = vmatprep.subr.mxu0 0.0
  %2370 = vmatpush2.msra.mxu0 0.0
  %2371 = vmatprep.subr.mxu0 0.0
  %2372 = vmatpush2.msra.mxu0 0.0
  %2373 = vmatprep.subr.mxu0 0.0
  %2374 = vmatpush2.msra.mxu0 0.0
  %2375 = vmatprep.subr.mxu0 0.0
  %2376 = vmatpush2.msra.mxu0 0.0
  %2377 = vmatprep.subr.mxu0 0.0
  %2378 = vmatpush2.msra.mxu0 0.0
  %2379 = vmatprep.subr.mxu0 0.0
  %2380 = vmatpush2.msra.mxu0 0.0
  %2381 = vmatprep.subr.mxu0 0.0
  %2382 = vmatpush2.msra.mxu0 0.0
  %2383 = vmatprep.subr.mxu0 0.0
  %2384 = vmatpush2.msra.mxu0 0.0
  %2385 = vmatprep.subr.mxu0 0.0
  %2386 = vmatpush2.msra.mxu0 0.0
  %2387 = vmatprep.mubr.f32.mxu0 0.0
  %2388 = vmatmul.mubr.f32.gmra.mxu0 %v83
  %v2389 = vpop.f32.mrf.mxu0
  %v2390 = vadd.f32 0.0, %v2389
  %v2391 = vpop.f32.mrf.mxu0
  %v2392 = vadd.f32 0.0, %v2391
  %2393 = vmatprep.mubr.f32.mxu0 0.0
  %2394 = vmatmul.mubr.f32.gmra.mxu0 %v86
  %v2395 = vpop.f32.mrf.mxu0
  %v2396 = vadd.f32 0.0, %v2395
  %v2397 = vpop.f32.mrf.mxu0
  %v2398 = vadd.f32 0.0, %v2397
  %2399 = vmatprep.mubr.f32.mxu0 0.0
  %2400 = vmatmul.mubr.f32.gmra.mxu0 %v89
  %v2401 = vpop.f32.mrf.mxu0
  %v2402 = vadd.f32 0.0, %v2401
  %v2403 = vpop.f32.mrf.mxu0
  %v2404 = vadd.f32 0.0, %v2403
  %2405 = vdwg.mxu0
  %v2406 = vmax.f32 %v1581, %v1809
  %v2407 = vmax.f32 %v1582, %v1811
  %v2408 = vmax.f32 %v1583, %v1892
  %v2409 = vmax.f32 %v1584, %v1894
  %v2410 = vmax.f32 %v1585, %v1975
  %v2411 = vmax.f32 %v1586, %v1977
  %v2412 = vmax.f32 %v1587, %v2058
  %v2413 = vmax.f32 %v1588, %v2060
  %v2414 = vmax.f32 %v1589, %v2141
  %v2415 = vmax.f32 %v1590, %v2143
  %v2416 = vmax.f32 %v1591, %v2224
  %v2417 = vmax.f32 %v1592, %v2226
  %v2418 = vmax.f32 %v1593, %v2307
  %v2419 = vmax.f32 %v1594, %v2309
  %v2420 = vmax.f32 %v1595, %v2390
  %v2421 = vmax.f32 %v1596, %v2392
  %v2422 = vmax.f32 %v1597, %v1815
  %v2423 = vmax.f32 %v1598, %v1817
  %v2424 = vmax.f32 %v1599, %v1898
  %v2425 = vmax.f32 %v1600, %v1900
  %v2426 = vmax.f32 %v1601, %v1981
  %v2427 = vmax.f32 %v1602, %v1983
  %v2428 = vmax.f32 %v1603, %v2064
  %v2429 = vmax.f32 %v1604, %v2066
  %v2430 = vmax.f32 %v1605, %v2147
  %v2431 = vmax.f32 %v1606, %v2149
  %v2432 = vmax.f32 %v1607, %v2230
  %v2433 = vmax.f32 %v1608, %v2232
  %v2434 = vmax.f32 %v1609, %v2313
  %v2435 = vmax.f32 %v1610, %v2315
  %v2436 = vmax.f32 %v1611, %v2396
  %v2437 = vmax.f32 %v1612, %v2398
  %v2438 = vmax.f32 %v1613, %v1821
  %v2439 = vmax.f32 %v1614, %v1823
  %v2440 = vmax.f32 %v1615, %v1904
  %v2441 = vmax.f32 %v1616, %v1906
  %v2442 = vmax.f32 %v1617, %v1987
  %v2443 = vmax.f32 %v1618, %v1989
  %v2444 = vmax.f32 %v1619, %v2070
  %v2445 = vmax.f32 %v1620, %v2072
  %v2446 = vmax.f32 %v1621, %v2153
  %v2447 = vmax.f32 %v1622, %v2155
  %v2448 = vmax.f32 %v1623, %v2236
  %v2449 = vmax.f32 %v1624, %v2238
  %v2450 = vmax.f32 %v1625, %v2319
  %v2451 = vmax.f32 %v1626, %v2321
  %v2452 = vmax.f32 %v1627, %v2402
  %v2453 = vmax.f32 %v1628, %v2404
  %s2454 = scalar_lea.vmem %s0, 1536
  %v2455 = vld [vmem:[%s2454] sm:$0xff]
  %v2456 = vld [vmem:[%s2454 + $0x8] sm:$0xff]
  %v2457 = vld [vmem:[%s2454 + $0x10] sm:$0xff]
  %v2458 = vld [vmem:[%s2454 + $0x18] sm:$0xff]
  %v2459 = vld [vmem:[%s2454 + $0x20] sm:$0xff]
  %v2460 = vld [vmem:[%s2454 + $0x28] sm:$0xff]
  %v2461 = vld [vmem:[%s2454 + $0x30] sm:$0xff]
  %v2462 = vld [vmem:[%s2454 + $0x38] sm:$0xff]
  %v2463 = vld [vmem:[%s2454 + $0x40] sm:$0xff]
  %v2464 = vld [vmem:[%s2454 + $0x48] sm:$0xff]
  %v2465 = vld [vmem:[%s2454 + $0x50] sm:$0xff]
  %v2466 = vld [vmem:[%s2454 + $0x58] sm:$0xff]
  %v2467 = vld [vmem:[%s2454 + $0x60] sm:$0xff]
  %v2468 = vld [vmem:[%s2454 + $0x68] sm:$0xff]
  %v2469 = vld [vmem:[%s2454 + $0x70] sm:$0xff]
  %v2470 = vld [vmem:[%s2454 + $0x78] sm:$0xff]
  %v2471 = vld [vmem:[%s2454 + $0x80] sm:$0xff]
  %v2472 = vld [vmem:[%s2454 + $0x88] sm:$0xff]
  %v2473 = vld [vmem:[%s2454 + $0x90] sm:$0xff]
  %v2474 = vld [vmem:[%s2454 + $0x98] sm:$0xff]
  %v2475 = vld [vmem:[%s2454 + $0xa0] sm:$0xff]
  %v2476 = vld [vmem:[%s2454 + $0xa8] sm:$0xff]
  %v2477 = vld [vmem:[%s2454 + $0xb0] sm:$0xff]
  %v2478 = vld [vmem:[%s2454 + $0xb8] sm:$0xff]
  %v2479 = vld [vmem:[%s2454 + $0xc0] sm:$0xff]
  %v2480 = vld [vmem:[%s2454 + $0xc8] sm:$0xff]
  %v2481 = vld [vmem:[%s2454 + $0xd0] sm:$0xff]
  %v2482 = vld [vmem:[%s2454 + $0xd8] sm:$0xff]
  %v2483 = vld [vmem:[%s2454 + $0xe0] sm:$0xff]
  %v2484 = vld [vmem:[%s2454 + $0xe8] sm:$0xff]
  %v2485 = vld [vmem:[%s2454 + $0xf0] sm:$0xff]
  %v2486 = vld [vmem:[%s2454 + $0xf8] sm:$0xff]
  %v2487 = vld [vmem:[%s2454 + $0x100] sm:$0xff]
  %v2488 = vld [vmem:[%s2454 + $0x108] sm:$0xff]
  %v2489 = vld [vmem:[%s2454 + $0x110] sm:$0xff]
  %v2490 = vld [vmem:[%s2454 + $0x118] sm:$0xff]
  %v2491 = vld [vmem:[%s2454 + $0x120] sm:$0xff]
  %v2492 = vld [vmem:[%s2454 + $0x128] sm:$0xff]
  %v2493 = vld [vmem:[%s2454 + $0x130] sm:$0xff]
  %v2494 = vld [vmem:[%s2454 + $0x138] sm:$0xff]
  %v2495 = vld [vmem:[%s2454 + $0x140] sm:$0xff]
  %v2496 = vld [vmem:[%s2454 + $0x148] sm:$0xff]
  %v2497 = vld [vmem:[%s2454 + $0x150] sm:$0xff]
  %v2498 = vld [vmem:[%s2454 + $0x158] sm:$0xff]
  %v2499 = vld [vmem:[%s2454 + $0x160] sm:$0xff]
  %v2500 = vld [vmem:[%s2454 + $0x168] sm:$0xff]
  %v2501 = vld [vmem:[%s2454 + $0x170] sm:$0xff]
  %v2502 = vld [vmem:[%s2454 + $0x178] sm:$0xff]
  %v2503 = vld [vmem:[%s2454 + $0x180] sm:$0x1]
  %v2504 = vld [vmem:[%s2454 + $0x188] sm:$0x1]
  %v2505 = vld [vmem:[%s2454 + $0x190] sm:$0x1]
  %v2506 = vld [vmem:[%s2454 + $0x198] sm:$0x1]
  %v2507 = vld [vmem:[%s2454 + $0x1a0] sm:$0x1]
  %v2508 = vld [vmem:[%s2454 + $0x1a8] sm:$0x1]
  %v2509 = vld [vmem:[%s2454 + $0x1b0] sm:$0x1]
  %v2510 = vld [vmem:[%s2454 + $0x1b8] sm:$0x1]
  %v2511 = vld [vmem:[%s2454 + $0x1c0] sm:$0x1]
  %v2512 = vld [vmem:[%s2454 + $0x1c8] sm:$0x1]
  %v2513 = vld [vmem:[%s2454 + $0x1d0] sm:$0x1]
  %v2514 = vld [vmem:[%s2454 + $0x1d8] sm:$0x1]
  %v2515 = vld [vmem:[%s2454 + $0x1e0] sm:$0x1]
  %v2516 = vld [vmem:[%s2454 + $0x1e8] sm:$0x1]
  %v2517 = vld [vmem:[%s2454 + $0x1f0] sm:$0x1]
  %v2518 = vld [vmem:[%s2454 + $0x1f8] sm:$0x1]
  %v2520 = vsel %vm91, %v2503, 0
  %v2523 = vsel %vm91, %v2504, 0
  %v2526 = vsel %vm91, %v2505, 0
  %v2529 = vsel %vm91, %v2506, 0
  %v2532 = vsel %vm91, %v2507, 0
  %v2535 = vsel %vm91, %v2508, 0
  %v2538 = vsel %vm91, %v2509, 0
  %v2541 = vsel %vm91, %v2510, 0
  %v2544 = vsel %vm91, %v2511, 0
  %v2547 = vsel %vm91, %v2512, 0
  %v2550 = vsel %vm91, %v2513, 0
  %v2553 = vsel %vm91, %v2514, 0
  %v2556 = vsel %vm91, %v2515, 0
  %v2559 = vsel %vm91, %v2516, 0
  %v2562 = vsel %vm91, %v2517, 0
  %v2565 = vsel %vm91, %v2518, 0
  %2567 = vmatprep.subr.mxu0 0.0
  %2568 = vmatpush1.msra.mxu0 0.0
  %2569 = vmatprep.subr.mxu0 0.0
  %2570 = vmatpush1.msra.mxu0 0.0
  %2571 = vmatprep.subr.mxu0 0.0
  %2572 = vmatpush1.msra.mxu0 0.0
  %2573 = vmatprep.subr.mxu0 0.0
  %2574 = vmatpush1.msra.mxu0 0.0
  %2575 = vmatprep.subr.mxu0 0.0
  %2576 = vmatpush1.msra.mxu0 0.0
  %2577 = vmatprep.subr.mxu0 0.0
  %2578 = vmatpush1.msra.mxu0 0.0
  %2579 = vmatprep.subr.mxu0 0.0
  %2580 = vmatpush1.msra.mxu0 0.0
  %2581 = vmatprep.subr.mxu0 0.0
  %2582 = vmatpush1.msra.mxu0 0.0
  %2583 = vmatprep.subr.mxu0 0.0
  %2584 = vmatpush1.msra.mxu0 0.0
  %2585 = vmatprep.subr.mxu0 0.0
  %2586 = vmatpush1.msra.mxu0 0.0
  %2587 = vmatprep.subr.mxu0 0.0
  %2588 = vmatpush1.msra.mxu0 0.0
  %2589 = vmatprep.subr.mxu0 0.0
  %2590 = vmatpush1.msra.mxu0 0.0
  %2591 = vmatprep.subr.mxu0 %v2523
  %2592 = vmatpush1.msra.mxu0 %v2520
  %2593 = vmatprep.subr.mxu0 %v2488
  %2594 = vmatpush1.msra.mxu0 %v2487
  %2595 = vmatprep.subr.mxu0 %v2472
  %2596 = vmatpush1.msra.mxu0 %v2471
  %2597 = vmatprep.subr.mxu0 %v2456
  %2598 = vmatpush1.msra.mxu0 %v2455
  %2599 = vmatprep.subr.mxu0 0.0
  %2600 = vmatpush2.msra.mxu0 0.0
  %2601 = vmatprep.subr.mxu0 0.0
  %2602 = vmatpush2.msra.mxu0 0.0
  %2603 = vmatprep.subr.mxu0 0.0
  %2604 = vmatpush2.msra.mxu0 0.0
  %2605 = vmatprep.subr.mxu0 0.0
  %2606 = vmatpush2.msra.mxu0 0.0
  %2607 = vmatprep.subr.mxu0 0.0
  %2608 = vmatpush2.msra.mxu0 0.0
  %2609 = vmatprep.subr.mxu0 0.0
  %2610 = vmatpush2.msra.mxu0 0.0
  %2611 = vmatprep.subr.mxu0 0.0
  %2612 = vmatpush2.msra.mxu0 0.0
  %2613 = vmatprep.subr.mxu0 0.0
  %2614 = vmatpush2.msra.mxu0 0.0
  %2615 = vmatprep.subr.mxu0 0.0
  %2616 = vmatpush2.msra.mxu0 0.0
  %2617 = vmatprep.subr.mxu0 0.0
  %2618 = vmatpush2.msra.mxu0 0.0
  %2619 = vmatprep.subr.mxu0 0.0
  %2620 = vmatpush2.msra.mxu0 0.0
  %2621 = vmatprep.subr.mxu0 0.0
  %2622 = vmatpush2.msra.mxu0 0.0
  %2623 = vmatprep.subr.mxu0 0.0
  %2624 = vmatpush2.msra.mxu0 0.0
  %2625 = vmatprep.subr.mxu0 0.0
  %2626 = vmatpush2.msra.mxu0 0.0
  %2627 = vmatprep.subr.mxu0 0.0
  %2628 = vmatpush2.msra.mxu0 0.0
  %2629 = vmatprep.subr.mxu0 0.0
  %2630 = vmatpush2.msra.mxu0 0.0
  %2631 = vmatprep.mubr.f32.mxu0 0.0
  %2632 = vmatmul.mubr.f32.gmra.mxu0 %v83
  %v2633 = vpop.f32.mrf.mxu0
  %v2634 = vadd.f32 0.0, %v2633
  %v2635 = vpop.f32.mrf.mxu0
  %v2636 = vadd.f32 0.0, %v2635
  %2637 = vmatprep.mubr.f32.mxu0 0.0
  %2638 = vmatmul.mubr.f32.gmra.mxu0 %v86
  %v2639 = vpop.f32.mrf.mxu0
  %v2640 = vadd.f32 0.0, %v2639
  %v2641 = vpop.f32.mrf.mxu0
  %v2642 = vadd.f32 0.0, %v2641
  %2643 = vmatprep.mubr.f32.mxu0 0.0
  %2644 = vmatmul.mubr.f32.gmra.mxu0 %v89
  %v2645 = vpop.f32.mrf.mxu0
  %v2646 = vadd.f32 0.0, %v2645
  %v2647 = vpop.f32.mrf.mxu0
  %v2648 = vadd.f32 0.0, %v2647
  %2649 = vdwg.mxu0
  %2650 = vmatprep.subr.mxu0 0.0
  %2651 = vmatpush1.msra.mxu0 0.0
  %2652 = vmatprep.subr.mxu0 0.0
  %2653 = vmatpush1.msra.mxu0 0.0
  %2654 = vmatprep.subr.mxu0 0.0
  %2655 = vmatpush1.msra.mxu0 0.0
  %2656 = vmatprep.subr.mxu0 0.0
  %2657 = vmatpush1.msra.mxu0 0.0
  %2658 = vmatprep.subr.mxu0 0.0
  %2659 = vmatpush1.msra.mxu0 0.0
  %2660 = vmatprep.subr.mxu0 0.0
  %2661 = vmatpush1.msra.mxu0 0.0
  %2662 = vmatprep.subr.mxu0 0.0
  %2663 = vmatpush1.msra.mxu0 0.0
  %2664 = vmatprep.subr.mxu0 0.0
  %2665 = vmatpush1.msra.mxu0 0.0
  %2666 = vmatprep.subr.mxu0 0.0
  %2667 = vmatpush1.msra.mxu0 0.0
  %2668 = vmatprep.subr.mxu0 0.0
  %2669 = vmatpush1.msra.mxu0 0.0
  %2670 = vmatprep.subr.mxu0 0.0
  %2671 = vmatpush1.msra.mxu0 0.0
  %2672 = vmatprep.subr.mxu0 0.0
  %2673 = vmatpush1.msra.mxu0 0.0
  %2674 = vmatprep.subr.mxu0 %v2529
  %2675 = vmatpush1.msra.mxu0 %v2526
  %2676 = vmatprep.subr.mxu0 %v2490
  %2677 = vmatpush1.msra.mxu0 %v2489
  %2678 = vmatprep.subr.mxu0 %v2474
  %2679 = vmatpush1.msra.mxu0 %v2473
  %2680 = vmatprep.subr.mxu0 %v2458
  %2681 = vmatpush1.msra.mxu0 %v2457
  %2682 = vmatprep.subr.mxu0 0.0
  %2683 = vmatpush2.msra.mxu0 0.0
  %2684 = vmatprep.subr.mxu0 0.0
  %2685 = vmatpush2.msra.mxu0 0.0
  %2686 = vmatprep.subr.mxu0 0.0
  %2687 = vmatpush2.msra.mxu0 0.0
  %2688 = vmatprep.subr.mxu0 0.0
  %2689 = vmatpush2.msra.mxu0 0.0
  %2690 = vmatprep.subr.mxu0 0.0
  %2691 = vmatpush2.msra.mxu0 0.0
  %2692 = vmatprep.subr.mxu0 0.0
  %2693 = vmatpush2.msra.mxu0 0.0
  %2694 = vmatprep.subr.mxu0 0.0
  %2695 = vmatpush2.msra.mxu0 0.0
  %2696 = vmatprep.subr.mxu0 0.0
  %2697 = vmatpush2.msra.mxu0 0.0
  %2698 = vmatprep.subr.mxu0 0.0
  %2699 = vmatpush2.msra.mxu0 0.0
  %2700 = vmatprep.subr.mxu0 0.0
  %2701 = vmatpush2.msra.mxu0 0.0
  %2702 = vmatprep.subr.mxu0 0.0
  %2703 = vmatpush2.msra.mxu0 0.0
  %2704 = vmatprep.subr.mxu0 0.0
  %2705 = vmatpush2.msra.mxu0 0.0
  %2706 = vmatprep.subr.mxu0 0.0
  %2707 = vmatpush2.msra.mxu0 0.0
  %2708 = vmatprep.subr.mxu0 0.0
  %2709 = vmatpush2.msra.mxu0 0.0
  %2710 = vmatprep.subr.mxu0 0.0
  %2711 = vmatpush2.msra.mxu0 0.0
  %2712 = vmatprep.subr.mxu0 0.0
  %2713 = vmatpush2.msra.mxu0 0.0
  %2714 = vmatprep.mubr.f32.mxu0 0.0
  %2715 = vmatmul.mubr.f32.gmra.mxu0 %v83
  %v2716 = vpop.f32.mrf.mxu0
  %v2717 = vadd.f32 0.0, %v2716
  %v2718 = vpop.f32.mrf.mxu0
  %v2719 = vadd.f32 0.0, %v2718
  %2720 = vmatprep.mubr.f32.mxu0 0.0
  %2721 = vmatmul.mubr.f32.gmra.mxu0 %v86
  %v2722 = vpop.f32.mrf.mxu0
  %v2723 = vadd.f32 0.0, %v2722
  %v2724 = vpop.f32.mrf.mxu0
  %v2725 = vadd.f32 0.0, %v2724
  %2726 = vmatprep.mubr.f32.mxu0 0.0
  %2727 = vmatmul.mubr.f32.gmra.mxu0 %v89
  %v2728 = vpop.f32.mrf.mxu0
  %v2729 = vadd.f32 0.0, %v2728
  %v2730 = vpop.f32.mrf.mxu0
  %v2731 = vadd.f32 0.0, %v2730
  %2732 = vdwg.mxu0
  %2733 = vmatprep.subr.mxu0 0.0
  %2734 = vmatpush1.msra.mxu0 0.0
  %2735 = vmatprep.subr.mxu0 0.0
  %2736 = vmatpush1.msra.mxu0 0.0
  %2737 = vmatprep.subr.mxu0 0.0
  %2738 = vmatpush1.msra.mxu0 0.0
  %2739 = vmatprep.subr.mxu0 0.0
  %2740 = vmatpush1.msra.mxu0 0.0
  %2741 = vmatprep.subr.mxu0 0.0
  %2742 = vmatpush1.msra.mxu0 0.0
  %2743 = vmatprep.subr.mxu0 0.0
  %2744 = vmatpush1.msra.mxu0 0.0
  %2745 = vmatprep.subr.mxu0 0.0
  %2746 = vmatpush1.msra.mxu0 0.0
  %2747 = vmatprep.subr.mxu0 0.0
  %2748 = vmatpush1.msra.mxu0 0.0
  %2749 = vmatprep.subr.mxu0 0.0
  %2750 = vmatpush1.msra.mxu0 0.0
  %2751 = vmatprep.subr.mxu0 0.0
  %2752 = vmatpush1.msra.mxu0 0.0
  %2753 = vmatprep.subr.mxu0 0.0
  %2754 = vmatpush1.msra.mxu0 0.0
  %2755 = vmatprep.subr.mxu0 0.0
  %2756 = vmatpush1.msra.mxu0 0.0
  %2757 = vmatprep.subr.mxu0 %v2535
  %2758 = vmatpush1.msra.mxu0 %v2532
  %2759 = vmatprep.subr.mxu0 %v2492
  %2760 = vmatpush1.msra.mxu0 %v2491
  %2761 = vmatprep.subr.mxu0 %v2476
  %2762 = vmatpush1.msra.mxu0 %v2475
  %2763 = vmatprep.subr.mxu0 %v2460
  %2764 = vmatpush1.msra.mxu0 %v2459
  %2765 = vmatprep.subr.mxu0 0.0
  %2766 = vmatpush2.msra.mxu0 0.0
  %2767 = vmatprep.subr.mxu0 0.0
  %2768 = vmatpush2.msra.mxu0 0.0
  %2769 = vmatprep.subr.mxu0 0.0
  %2770 = vmatpush2.msra.mxu0 0.0
  %2771 = vmatprep.subr.mxu0 0.0
  %2772 = vmatpush2.msra.mxu0 0.0
  %2773 = vmatprep.subr.mxu0 0.0
  %2774 = vmatpush2.msra.mxu0 0.0
  %2775 = vmatprep.subr.mxu0 0.0
  %2776 = vmatpush2.msra.mxu0 0.0
  %2777 = vmatprep.subr.mxu0 0.0
  %2778 = vmatpush2.msra.mxu0 0.0
  %2779 = vmatprep.subr.mxu0 0.0
  %2780 = vmatpush2.msra.mxu0 0.0
  %2781 = vmatprep.subr.mxu0 0.0
  %2782 = vmatpush2.msra.mxu0 0.0
  %2783 = vmatprep.subr.mxu0 0.0
  %2784 = vmatpush2.msra.mxu0 0.0
  %2785 = vmatprep.subr.mxu0 0.0
  %2786 = vmatpush2.msra.mxu0 0.0
  %2787 = vmatprep.subr.mxu0 0.0
  %2788 = vmatpush2.msra.mxu0 0.0
  %2789 = vmatprep.subr.mxu0 0.0
  %2790 = vmatpush2.msra.mxu0 0.0
  %2791 = vmatprep.subr.mxu0 0.0
  %2792 = vmatpush2.msra.mxu0 0.0
  %2793 = vmatprep.subr.mxu0 0.0
  %2794 = vmatpush2.msra.mxu0 0.0
  %2795 = vmatprep.subr.mxu0 0.0
  %2796 = vmatpush2.msra.mxu0 0.0
  %2797 = vmatprep.mubr.f32.mxu0 0.0
  %2798 = vmatmul.mubr.f32.gmra.mxu0 %v83
  %v2799 = vpop.f32.mrf.mxu0
  %v2800 = vadd.f32 0.0, %v2799
  %v2801 = vpop.f32.mrf.mxu0
  %v2802 = vadd.f32 0.0, %v2801
  %2803 = vmatprep.mubr.f32.mxu0 0.0
  %2804 = vmatmul.mubr.f32.gmra.mxu0 %v86
  %v2805 = vpop.f32.mrf.mxu0
  %v2806 = vadd.f32 0.0, %v2805
  %v2807 = vpop.f32.mrf.mxu0
  %v2808 = vadd.f32 0.0, %v2807
  %2809 = vmatprep.mubr.f32.mxu0 0.0
  %2810 = vmatmul.mubr.f32.gmra.mxu0 %v89
  %v2811 = vpop.f32.mrf.mxu0
  %v2812 = vadd.f32 0.0, %v2811
  %v2813 = vpop.f32.mrf.mxu0
  %v2814 = vadd.f32 0.0, %v2813
  %2815 = vdwg.mxu0
  %2816 = vmatprep.subr.mxu0 0.0
  %2817 = vmatpush1.msra.mxu0 0.0
  %2818 = vmatprep.subr.mxu0 0.0
  %2819 = vmatpush1.msra.mxu0 0.0
  %2820 = vmatprep.subr.mxu0 0.0
  %2821 = vmatpush1.msra.mxu0 0.0
  %2822 = vmatprep.subr.mxu0 0.0
  %2823 = vmatpush1.msra.mxu0 0.0
  %2824 = vmatprep.subr.mxu0 0.0
  %2825 = vmatpush1.msra.mxu0 0.0
  %2826 = vmatprep.subr.mxu0 0.0
  %2827 = vmatpush1.msra.mxu0 0.0
  %2828 = vmatprep.subr.mxu0 0.0
  %2829 = vmatpush1.msra.mxu0 0.0
  %2830 = vmatprep.subr.mxu0 0.0
  %2831 = vmatpush1.msra.mxu0 0.0
  %2832 = vmatprep.subr.mxu0 0.0
  %2833 = vmatpush1.msra.mxu0 0.0
  %2834 = vmatprep.subr.mxu0 0.0
  %2835 = vmatpush1.msra.mxu0 0.0
  %2836 = vmatprep.subr.mxu0 0.0
  %2837 = vmatpush1.msra.mxu0 0.0
  %2838 = vmatprep.subr.mxu0 0.0
  %2839 = vmatpush1.msra.mxu0 0.0
  %2840 = vmatprep.subr.mxu0 %v2541
  %2841 = vmatpush1.msra.mxu0 %v2538
  %2842 = vmatprep.subr.mxu0 %v2494
  %2843 = vmatpush1.msra.mxu0 %v2493
  %2844 = vmatprep.subr.mxu0 %v2478
  %2845 = vmatpush1.msra.mxu0 %v2477
  %2846 = vmatprep.subr.mxu0 %v2462
  %2847 = vmatpush1.msra.mxu0 %v2461
  %2848 = vmatprep.subr.mxu0 0.0
  %2849 = vmatpush2.msra.mxu0 0.0
  %2850 = vmatprep.subr.mxu0 0.0
  %2851 = vmatpush2.msra.mxu0 0.0
  %2852 = vmatprep.subr.mxu0 0.0
  %2853 = vmatpush2.msra.mxu0 0.0
  %2854 = vmatprep.subr.mxu0 0.0
  %2855 = vmatpush2.msra.mxu0 0.0
  %2856 = vmatprep.subr.mxu0 0.0
  %2857 = vmatpush2.msra.mxu0 0.0
  %2858 = vmatprep.subr.mxu0 0.0
  %2859 = vmatpush2.msra.mxu0 0.0
  %2860 = vmatprep.subr.mxu0 0.0
  %2861 = vmatpush2.msra.mxu0 0.0
  %2862 = vmatprep.subr.mxu0 0.0
  %2863 = vmatpush2.msra.mxu0 0.0
  %2864 = vmatprep.subr.mxu0 0.0
  %2865 = vmatpush2.msra.mxu0 0.0
  %2866 = vmatprep.subr.mxu0 0.0
  %2867 = vmatpush2.msra.mxu0 0.0
  %2868 = vmatprep.subr.mxu0 0.0
  %2869 = vmatpush2.msra.mxu0 0.0
  %2870 = vmatprep.subr.mxu0 0.0
  %2871 = vmatpush2.msra.mxu0 0.0
  %2872 = vmatprep.subr.mxu0 0.0
  %2873 = vmatpush2.msra.mxu0 0.0
  %2874 = vmatprep.subr.mxu0 0.0
  %2875 = vmatpush2.msra.mxu0 0.0
  %2876 = vmatprep.subr.mxu0 0.0
  %2877 = vmatpush2.msra.mxu0 0.0
  %2878 = vmatprep.subr.mxu0 0.0
  %2879 = vmatpush2.msra.mxu0 0.0
  %2880 = vmatprep.mubr.f32.mxu0 0.0
  %2881 = vmatmul.mubr.f32.gmra.mxu0 %v83
  %v2882 = vpop.f32.mrf.mxu0
  %v2883 = vadd.f32 0.0, %v2882
  %v2884 = vpop.f32.mrf.mxu0
  %v2885 = vadd.f32 0.0, %v2884
  %2886 = vmatprep.mubr.f32.mxu0 0.0
  %2887 = vmatmul.mubr.f32.gmra.mxu0 %v86
  %v2888 = vpop.f32.mrf.mxu0
  %v2889 = vadd.f32 0.0, %v2888
  %v2890 = vpop.f32.mrf.mxu0
  %v2891 = vadd.f32 0.0, %v2890
  %2892 = vmatprep.mubr.f32.mxu0 0.0
  %2893 = vmatmul.mubr.f32.gmra.mxu0 %v89
  %v2894 = vpop.f32.mrf.mxu0
  %v2895 = vadd.f32 0.0, %v2894
  %v2896 = vpop.f32.mrf.mxu0
  %v2897 = vadd.f32 0.0, %v2896
  %2898 = vdwg.mxu0
  %2899 = vmatprep.subr.mxu0 0.0
  %2900 = vmatpush1.msra.mxu0 0.0
  %2901 = vmatprep.subr.mxu0 0.0
  %2902 = vmatpush1.msra.mxu0 0.0
  %2903 = vmatprep.subr.mxu0 0.0
  %2904 = vmatpush1.msra.mxu0 0.0
  %2905 = vmatprep.subr.mxu0 0.0
  %2906 = vmatpush1.msra.mxu0 0.0
  %2907 = vmatprep.subr.mxu0 0.0
  %2908 = vmatpush1.msra.mxu0 0.0
  %2909 = vmatprep.subr.mxu0 0.0
  %2910 = vmatpush1.msra.mxu0 0.0
  %2911 = vmatprep.subr.mxu0 0.0
  %2912 = vmatpush1.msra.mxu0 0.0
  %2913 = vmatprep.subr.mxu0 0.0
  %2914 = vmatpush1.msra.mxu0 0.0
  %2915 = vmatprep.subr.mxu0 0.0
  %2916 = vmatpush1.msra.mxu0 0.0
  %2917 = vmatprep.subr.mxu0 0.0
  %2918 = vmatpush1.msra.mxu0 0.0
  %2919 = vmatprep.subr.mxu0 0.0
  %2920 = vmatpush1.msra.mxu0 0.0
  %2921 = vmatprep.subr.mxu0 0.0
  %2922 = vmatpush1.msra.mxu0 0.0
  %2923 = vmatprep.subr.mxu0 %v2547
  %2924 = vmatpush1.msra.mxu0 %v2544
  %2925 = vmatprep.subr.mxu0 %v2496
  %2926 = vmatpush1.msra.mxu0 %v2495
  %2927 = vmatprep.subr.mxu0 %v2480
  %2928 = vmatpush1.msra.mxu0 %v2479
  %2929 = vmatprep.subr.mxu0 %v2464
  %2930 = vmatpush1.msra.mxu0 %v2463
  %2931 = vmatprep.subr.mxu0 0.0
  %2932 = vmatpush2.msra.mxu0 0.0
  %2933 = vmatprep.subr.mxu0 0.0
  %2934 = vmatpush2.msra.mxu0 0.0
  %2935 = vmatprep.subr.mxu0 0.0
  %2936 = vmatpush2.msra.mxu0 0.0
  %2937 = vmatprep.subr.mxu0 0.0
  %2938 = vmatpush2.msra.mxu0 0.0
  %2939 = vmatprep.subr.mxu0 0.0
  %2940 = vmatpush2.msra.mxu0 0.0
  %2941 = vmatprep.subr.mxu0 0.0
  %2942 = vmatpush2.msra.mxu0 0.0
  %2943 = vmatprep.subr.mxu0 0.0
  %2944 = vmatpush2.msra.mxu0 0.0
  %2945 = vmatprep.subr.mxu0 0.0
  %2946 = vmatpush2.msra.mxu0 0.0
  %2947 = vmatprep.subr.mxu0 0.0
  %2948 = vmatpush2.msra.mxu0 0.0
  %2949 = vmatprep.subr.mxu0 0.0
  %2950 = vmatpush2.msra.mxu0 0.0
  %2951 = vmatprep.subr.mxu0 0.0
  %2952 = vmatpush2.msra.mxu0 0.0
  %2953 = vmatprep.subr.mxu0 0.0
  %2954 = vmatpush2.msra.mxu0 0.0
  %2955 = vmatprep.subr.mxu0 0.0
  %2956 = vmatpush2.msra.mxu0 0.0
  %2957 = vmatprep.subr.mxu0 0.0
  %2958 = vmatpush2.msra.mxu0 0.0
  %2959 = vmatprep.subr.mxu0 0.0
  %2960 = vmatpush2.msra.mxu0 0.0
  %2961 = vmatprep.subr.mxu0 0.0
  %2962 = vmatpush2.msra.mxu0 0.0
  %2963 = vmatprep.mubr.f32.mxu0 0.0
  %2964 = vmatmul.mubr.f32.gmra.mxu0 %v83
  %v2965 = vpop.f32.mrf.mxu0
  %v2966 = vadd.f32 0.0, %v2965
  %v2967 = vpop.f32.mrf.mxu0
  %v2968 = vadd.f32 0.0, %v2967
  %2969 = vmatprep.mubr.f32.mxu0 0.0
  %2970 = vmatmul.mubr.f32.gmra.mxu0 %v86
  %v2971 = vpop.f32.mrf.mxu0
  %v2972 = vadd.f32 0.0, %v2971
  %v2973 = vpop.f32.mrf.mxu0
  %v2974 = vadd.f32 0.0, %v2973
  %2975 = vmatprep.mubr.f32.mxu0 0.0
  %2976 = vmatmul.mubr.f32.gmra.mxu0 %v89
  %v2977 = vpop.f32.mrf.mxu0
  %v2978 = vadd.f32 0.0, %v2977
  %v2979 = vpop.f32.mrf.mxu0
  %v2980 = vadd.f32 0.0, %v2979
  %2981 = vdwg.mxu0
  %2982 = vmatprep.subr.mxu0 0.0
  %2983 = vmatpush1.msra.mxu0 0.0
  %2984 = vmatprep.subr.mxu0 0.0
  %2985 = vmatpush1.msra.mxu0 0.0
  %2986 = vmatprep.subr.mxu0 0.0
  %2987 = vmatpush1.msra.mxu0 0.0
  %2988 = vmatprep.subr.mxu0 0.0
  %2989 = vmatpush1.msra.mxu0 0.0
  %2990 = vmatprep.subr.mxu0 0.0
  %2991 = vmatpush1.msra.mxu0 0.0
  %2992 = vmatprep.subr.mxu0 0.0
  %2993 = vmatpush1.msra.mxu0 0.0
  %2994 = vmatprep.subr.mxu0 0.0
  %2995 = vmatpush1.msra.mxu0 0.0
  %2996 = vmatprep.subr.mxu0 0.0
  %2997 = vmatpush1.msra.mxu0 0.0
  %2998 = vmatprep.subr.mxu0 0.0
  %2999 = vmatpush1.msra.mxu0 0.0
  %3000 = vmatprep.subr.mxu0 0.0
  %3001 = vmatpush1.msra.mxu0 0.0
  %3002 = vmatprep.subr.mxu0 0.0
  %3003 = vmatpush1.msra.mxu0 0.0
  %3004 = vmatprep.subr.mxu0 0.0
  %3005 = vmatpush1.msra.mxu0 0.0
  %3006 = vmatprep.subr.mxu0 %v2553
  %3007 = vmatpush1.msra.mxu0 %v2550
  %3008 = vmatprep.subr.mxu0 %v2498
  %3009 = vmatpush1.msra.mxu0 %v2497
  %3010 = vmatprep.subr.mxu0 %v2482
  %3011 = vmatpush1.msra.mxu0 %v2481
  %3012 = vmatprep.subr.mxu0 %v2466
  %3013 = vmatpush1.msra.mxu0 %v2465
  %3014 = vmatprep.subr.mxu0 0.0
  %3015 = vmatpush2.msra.mxu0 0.0
  %3016 = vmatprep.subr.mxu0 0.0
  %3017 = vmatpush2.msra.mxu0 0.0
  %3018 = vmatprep.subr.mxu0 0.0
  %3019 = vmatpush2.msra.mxu0 0.0
  %3020 = vmatprep.subr.mxu0 0.0
  %3021 = vmatpush2.msra.mxu0 0.0
  %3022 = vmatprep.subr.mxu0 0.0
  %3023 = vmatpush2.msra.mxu0 0.0
  %3024 = vmatprep.subr.mxu0 0.0
  %3025 = vmatpush2.msra.mxu0 0.0
  %3026 = vmatprep.subr.mxu0 0.0
  %3027 = vmatpush2.msra.mxu0 0.0
  %3028 = vmatprep.subr.mxu0 0.0
  %3029 = vmatpush2.msra.mxu0 0.0
  %3030 = vmatprep.subr.mxu0 0.0
  %3031 = vmatpush2.msra.mxu0 0.0
  %3032 = vmatprep.subr.mxu0 0.0
  %3033 = vmatpush2.msra.mxu0 0.0
  %3034 = vmatprep.subr.mxu0 0.0
  %3035 = vmatpush2.msra.mxu0 0.0
  %3036 = vmatprep.subr.mxu0 0.0
  %3037 = vmatpush2.msra.mxu0 0.0
  %3038 = vmatprep.subr.mxu0 0.0
  %3039 = vmatpush2.msra.mxu0 0.0
  %3040 = vmatprep.subr.mxu0 0.0
  %3041 = vmatpush2.msra.mxu0 0.0
  %3042 = vmatprep.subr.mxu0 0.0
  %3043 = vmatpush2.msra.mxu0 0.0
  %3044 = vmatprep.subr.mxu0 0.0
  %3045 = vmatpush2.msra.mxu0 0.0
  %3046 = vmatprep.mubr.f32.mxu0 0.0
  %3047 = vmatmul.mubr.f32.gmra.mxu0 %v83
  %v3048 = vpop.f32.mrf.mxu0
  %v3049 = vadd.f32 0.0, %v3048
  %v3050 = vpop.f32.mrf.mxu0
  %v3051 = vadd.f32 0.0, %v3050
  %3052 = vmatprep.mubr.f32.mxu0 0.0
  %3053 = vmatmul.mubr.f32.gmra.mxu0 %v86
  %v3054 = vpop.f32.mrf.mxu0
  %v3055 = vadd.f32 0.0, %v3054
  %v3056 = vpop.f32.mrf.mxu0
  %v3057 = vadd.f32 0.0, %v3056
  %3058 = vmatprep.mubr.f32.mxu0 0.0
  %3059 = vmatmul.mubr.f32.gmra.mxu0 %v89
  %v3060 = vpop.f32.mrf.mxu0
  %v3061 = vadd.f32 0.0, %v3060
  %v3062 = vpop.f32.mrf.mxu0
  %v3063 = vadd.f32 0.0, %v3062
  %3064 = vdwg.mxu0
  %3065 = vmatprep.subr.mxu0 0.0
  %3066 = vmatpush1.msra.mxu0 0.0
  %3067 = vmatprep.subr.mxu0 0.0
  %3068 = vmatpush1.msra.mxu0 0.0
  %3069 = vmatprep.subr.mxu0 0.0
  %3070 = vmatpush1.msra.mxu0 0.0
  %3071 = vmatprep.subr.mxu0 0.0
  %3072 = vmatpush1.msra.mxu0 0.0
  %3073 = vmatprep.subr.mxu0 0.0
  %3074 = vmatpush1.msra.mxu0 0.0
  %3075 = vmatprep.subr.mxu0 0.0
  %3076 = vmatpush1.msra.mxu0 0.0
  %3077 = vmatprep.subr.mxu0 0.0
  %3078 = vmatpush1.msra.mxu0 0.0
  %3079 = vmatprep.subr.mxu0 0.0
  %3080 = vmatpush1.msra.mxu0 0.0
  %3081 = vmatprep.subr.mxu0 0.0
  %3082 = vmatpush1.msra.mxu0 0.0
  %3083 = vmatprep.subr.mxu0 0.0
  %3084 = vmatpush1.msra.mxu0 0.0
  %3085 = vmatprep.subr.mxu0 0.0
  %3086 = vmatpush1.msra.mxu0 0.0
  %3087 = vmatprep.subr.mxu0 0.0
  %3088 = vmatpush1.msra.mxu0 0.0
  %3089 = vmatprep.subr.mxu0 %v2559
  %3090 = vmatpush1.msra.mxu0 %v2556
  %3091 = vmatprep.subr.mxu0 %v2500
  %3092 = vmatpush1.msra.mxu0 %v2499
  %3093 = vmatprep.subr.mxu0 %v2484
  %3094 = vmatpush1.msra.mxu0 %v2483
  %3095 = vmatprep.subr.mxu0 %v2468
  %3096 = vmatpush1.msra.mxu0 %v2467
  %3097 = vmatprep.subr.mxu0 0.0
  %3098 = vmatpush2.msra.mxu0 0.0
  %3099 = vmatprep.subr.mxu0 0.0
  %3100 = vmatpush2.msra.mxu0 0.0
  %3101 = vmatprep.subr.mxu0 0.0
  %3102 = vmatpush2.msra.mxu0 0.0
  %3103 = vmatprep.subr.mxu0 0.0
  %3104 = vmatpush2.msra.mxu0 0.0
  %3105 = vmatprep.subr.mxu0 0.0
  %3106 = vmatpush2.msra.mxu0 0.0
  %3107 = vmatprep.subr.mxu0 0.0
  %3108 = vmatpush2.msra.mxu0 0.0
  %3109 = vmatprep.subr.mxu0 0.0
  %3110 = vmatpush2.msra.mxu0 0.0
  %3111 = vmatprep.subr.mxu0 0.0
  %3112 = vmatpush2.msra.mxu0 0.0
  %3113 = vmatprep.subr.mxu0 0.0
  %3114 = vmatpush2.msra.mxu0 0.0
  %3115 = vmatprep.subr.mxu0 0.0
  %3116 = vmatpush2.msra.mxu0 0.0
  %3117 = vmatprep.subr.mxu0 0.0
  %3118 = vmatpush2.msra.mxu0 0.0
  %3119 = vmatprep.subr.mxu0 0.0
  %3120 = vmatpush2.msra.mxu0 0.0
  %3121 = vmatprep.subr.mxu0 0.0
  %3122 = vmatpush2.msra.mxu0 0.0
  %3123 = vmatprep.subr.mxu0 0.0
  %3124 = vmatpush2.msra.mxu0 0.0
  %3125 = vmatprep.subr.mxu0 0.0
  %3126 = vmatpush2.msra.mxu0 0.0
  %3127 = vmatprep.subr.mxu0 0.0
  %3128 = vmatpush2.msra.mxu0 0.0
  %3129 = vmatprep.mubr.f32.mxu0 0.0
  %3130 = vmatmul.mubr.f32.gmra.mxu0 %v83
  %v3131 = vpop.f32.mrf.mxu0
  %v3132 = vadd.f32 0.0, %v3131
  %v3133 = vpop.f32.mrf.mxu0
  %v3134 = vadd.f32 0.0, %v3133
  %3135 = vmatprep.mubr.f32.mxu0 0.0
  %3136 = vmatmul.mubr.f32.gmra.mxu0 %v86
  %v3137 = vpop.f32.mrf.mxu0
  %v3138 = vadd.f32 0.0, %v3137
  %v3139 = vpop.f32.mrf.mxu0
  %v3140 = vadd.f32 0.0, %v3139
  %3141 = vmatprep.mubr.f32.mxu0 0.0
  %3142 = vmatmul.mubr.f32.gmra.mxu0 %v89
  %v3143 = vpop.f32.mrf.mxu0
  %v3144 = vadd.f32 0.0, %v3143
  %v3145 = vpop.f32.mrf.mxu0
  %v3146 = vadd.f32 0.0, %v3145
  %3147 = vdwg.mxu0
  %3148 = vmatprep.subr.mxu0 0.0
  %3149 = vmatpush1.msra.mxu0 0.0
  %3150 = vmatprep.subr.mxu0 0.0
  %3151 = vmatpush1.msra.mxu0 0.0
  %3152 = vmatprep.subr.mxu0 0.0
  %3153 = vmatpush1.msra.mxu0 0.0
  %3154 = vmatprep.subr.mxu0 0.0
  %3155 = vmatpush1.msra.mxu0 0.0
  %3156 = vmatprep.subr.mxu0 0.0
  %3157 = vmatpush1.msra.mxu0 0.0
  %3158 = vmatprep.subr.mxu0 0.0
  %3159 = vmatpush1.msra.mxu0 0.0
  %3160 = vmatprep.subr.mxu0 0.0
  %3161 = vmatpush1.msra.mxu0 0.0
  %3162 = vmatprep.subr.mxu0 0.0
  %3163 = vmatpush1.msra.mxu0 0.0
  %3164 = vmatprep.subr.mxu0 0.0
  %3165 = vmatpush1.msra.mxu0 0.0
  %3166 = vmatprep.subr.mxu0 0.0
  %3167 = vmatpush1.msra.mxu0 0.0
  %3168 = vmatprep.subr.mxu0 0.0
  %3169 = vmatpush1.msra.mxu0 0.0
  %3170 = vmatprep.subr.mxu0 0.0
  %3171 = vmatpush1.msra.mxu0 0.0
  %3172 = vmatprep.subr.mxu0 %v2565
  %3173 = vmatpush1.msra.mxu0 %v2562
  %3174 = vmatprep.subr.mxu0 %v2502
  %3175 = vmatpush1.msra.mxu0 %v2501
  %3176 = vmatprep.subr.mxu0 %v2486
  %3177 = vmatpush1.msra.mxu0 %v2485
  %3178 = vmatprep.subr.mxu0 %v2470
  %3179 = vmatpush1.msra.mxu0 %v2469
  %3180 = vmatprep.subr.mxu0 0.0
  %3181 = vmatpush2.msra.mxu0 0.0
  %3182 = vmatprep.subr.mxu0 0.0
  %3183 = vmatpush2.msra.mxu0 0.0
  %3184 = vmatprep.subr.mxu0 0.0
  %3185 = vmatpush2.msra.mxu0 0.0
  %3186 = vmatprep.subr.mxu0 0.0
  %3187 = vmatpush2.msra.mxu0 0.0
  %3188 = vmatprep.subr.mxu0 0.0
  %3189 = vmatpush2.msra.mxu0 0.0
  %3190 = vmatprep.subr.mxu0 0.0
  %3191 = vmatpush2.msra.mxu0 0.0
  %3192 = vmatprep.subr.mxu0 0.0
  %3193 = vmatpush2.msra.mxu0 0.0
  %3194 = vmatprep.subr.mxu0 0.0
  %3195 = vmatpush2.msra.mxu0 0.0
  %3196 = vmatprep.subr.mxu0 0.0
  %3197 = vmatpush2.msra.mxu0 0.0
  %3198 = vmatprep.subr.mxu0 0.0
  %3199 = vmatpush2.msra.mxu0 0.0
  %3200 = vmatprep.subr.mxu0 0.0
  %3201 = vmatpush2.msra.mxu0 0.0
  %3202 = vmatprep.subr.mxu0 0.0
  %3203 = vmatpush2.msra.mxu0 0.0
  %3204 = vmatprep.subr.mxu0 0.0
  %3205 = vmatpush2.msra.mxu0 0.0
  %3206 = vmatprep.subr.mxu0 0.0
  %3207 = vmatpush2.msra.mxu0 0.0
  %3208 = vmatprep.subr.mxu0 0.0
  %3209 = vmatpush2.msra.mxu0 0.0
  %3210 = vmatprep.subr.mxu0 0.0
  %3211 = vmatpush2.msra.mxu0 0.0
  %3212 = vmatprep.mubr.f32.mxu0 0.0
  %3213 = vmatmul.mubr.f32.gmra.mxu0 %v83
  %v3214 = vpop.f32.mrf.mxu0
  %v3215 = vadd.f32 0.0, %v3214
  %v3216 = vpop.f32.mrf.mxu0
  %v3217 = vadd.f32 0.0, %v3216
  %3218 = vmatprep.mubr.f32.mxu0 0.0
  %3219 = vmatmul.mubr.f32.gmra.mxu0 %v86
  %v3220 = vpop.f32.mrf.mxu0
  %v3221 = vadd.f32 0.0, %v3220
  %v3222 = vpop.f32.mrf.mxu0
  %v3223 = vadd.f32 0.0, %v3222
  %3224 = vmatprep.mubr.f32.mxu0 0.0
  %3225 = vmatmul.mubr.f32.gmra.mxu0 %v89
  %v3226 = vpop.f32.mrf.mxu0
  %v3227 = vadd.f32 0.0, %v3226
  %v3228 = vpop.f32.mrf.mxu0
  %v3229 = vadd.f32 0.0, %v3228
  %3230 = vdwg.mxu0
  %v3231 = vmax.f32 %v2406, %v2634
  %v3232 = vmax.f32 %v2407, %v2636
  %v3233 = vmax.f32 %v2408, %v2717
  %v3234 = vmax.f32 %v2409, %v2719
  %v3235 = vmax.f32 %v2410, %v2800
  %v3236 = vmax.f32 %v2411, %v2802
  %v3237 = vmax.f32 %v2412, %v2883
  %v3238 = vmax.f32 %v2413, %v2885
  %v3239 = vmax.f32 %v2414, %v2966
  %v3240 = vmax.f32 %v2415, %v2968
  %v3241 = vmax.f32 %v2416, %v3049
  %v3242 = vmax.f32 %v2417, %v3051
  %v3243 = vmax.f32 %v2418, %v3132
  %v3244 = vmax.f32 %v2419, %v3134
  %v3245 = vmax.f32 %v2420, %v3215
  %v3246 = vmax.f32 %v2421, %v3217
  %v3247 = vmax.f32 %v2422, %v2640
  %v3248 = vmax.f32 %v2423, %v2642
  %v3249 = vmax.f32 %v2424, %v2723
  %v3250 = vmax.f32 %v2425, %v2725
  %v3251 = vmax.f32 %v2426, %v2806
  %v3252 = vmax.f32 %v2427, %v2808
  %v3253 = vmax.f32 %v2428, %v2889
  %v3254 = vmax.f32 %v2429, %v2891
  %v3255 = vmax.f32 %v2430, %v2972
  %v3256 = vmax.f32 %v2431, %v2974
  %v3257 = vmax.f32 %v2432, %v3055
  %v3258 = vmax.f32 %v2433, %v3057
  %v3259 = vmax.f32 %v2434, %v3138
  %v3260 = vmax.f32 %v2435, %v3140
  %v3261 = vmax.f32 %v2436, %v3221
  %v3262 = vmax.f32 %v2437, %v3223
  %v3263 = vmax.f32 %v2438, %v2646
  %v3264 = vmax.f32 %v2439, %v2648
  %v3265 = vmax.f32 %v2440, %v2729
  %v3266 = vmax.f32 %v2441, %v2731
  %v3267 = vmax.f32 %v2442, %v2812
  %v3268 = vmax.f32 %v2443, %v2814
  %v3269 = vmax.f32 %v2444, %v2895
  %v3270 = vmax.f32 %v2445, %v2897
  %v3271 = vmax.f32 %v2446, %v2978
  %v3272 = vmax.f32 %v2447, %v2980
  %v3273 = vmax.f32 %v2448, %v3061
  %v3274 = vmax.f32 %v2449, %v3063
  %v3275 = vmax.f32 %v2450, %v3144
  %v3276 = vmax.f32 %v2451, %v3146
  %v3277 = vmax.f32 %v2452, %v3227
  %v3278 = vmax.f32 %v2453, %v3229
  %v3279 = vld [vmem:[%s2] sm:$0xff]
  %v3280 = vld [vmem:[%s2 + $0x8] sm:$0xff]
  %v3281 = vld [vmem:[%s2 + $0x10] sm:$0xf]
  %3283 = vset.pattern.permute.xlu0 0
  %3284 = vperm.xlu0 %3283, %v3279
  %v3285 = vpop.permute.xlu0 %3284
  %3288 = vset.pattern.permute.xlu0 0
  %3289 = vperm.xlu0 %3288, %v3280
  %v3290 = vpop.permute.xlu0 %3289
  %3293 = vset.pattern.permute.xlu0 0
  %3294 = vperm.xlu0 %3293, %v3281
  %v3295 = vpop.permute.xlu0 %3294
  %v3297 = vadd.f32 %v3231, %v3285
  %v3298 = vadd.f32 %v3232, %v3285
  %v3299 = vadd.f32 %v3233, %v3285
  %v3300 = vadd.f32 %v3234, %v3285
  %v3301 = vadd.f32 %v3235, %v3285
  %v3302 = vadd.f32 %v3236, %v3285
  %v3303 = vadd.f32 %v3237, %v3285
  %v3304 = vadd.f32 %v3238, %v3285
  %v3305 = vadd.f32 %v3239, %v3285
  %v3306 = vadd.f32 %v3240, %v3285
  %v3307 = vadd.f32 %v3241, %v3285
  %v3308 = vadd.f32 %v3242, %v3285
  %v3309 = vadd.f32 %v3243, %v3285
  %v3310 = vadd.f32 %v3244, %v3285
  %v3311 = vadd.f32 %v3245, %v3285
  %v3312 = vadd.f32 %v3246, %v3285
  %v3313 = vadd.f32 %v3247, %v3290
  %v3314 = vadd.f32 %v3248, %v3290
  %v3315 = vadd.f32 %v3249, %v3290
  %v3316 = vadd.f32 %v3250, %v3290
  %v3317 = vadd.f32 %v3251, %v3290
  %v3318 = vadd.f32 %v3252, %v3290
  %v3319 = vadd.f32 %v3253, %v3290
  %v3320 = vadd.f32 %v3254, %v3290
  %v3321 = vadd.f32 %v3255, %v3290
  %v3322 = vadd.f32 %v3256, %v3290
  %v3323 = vadd.f32 %v3257, %v3290
  %v3324 = vadd.f32 %v3258, %v3290
  %v3325 = vadd.f32 %v3259, %v3290
  %v3326 = vadd.f32 %v3260, %v3290
  %v3327 = vadd.f32 %v3261, %v3290
  %v3328 = vadd.f32 %v3262, %v3290
  %v3329 = vadd.f32 %v3263, %v3295
  %v3330 = vadd.f32 %v3264, %v3295
  %v3331 = vadd.f32 %v3265, %v3295
  %v3332 = vadd.f32 %v3266, %v3295
  %v3333 = vadd.f32 %v3267, %v3295
  %v3334 = vadd.f32 %v3268, %v3295
  %v3335 = vadd.f32 %v3269, %v3295
  %v3336 = vadd.f32 %v3270, %v3295
  %v3337 = vadd.f32 %v3271, %v3295
  %v3338 = vadd.f32 %v3272, %v3295
  %v3339 = vadd.f32 %v3273, %v3295
  %v3340 = vadd.f32 %v3274, %v3295
  %v3341 = vadd.f32 %v3275, %v3295
  %v3342 = vadd.f32 %v3276, %v3295
  %v3343 = vadd.f32 %v3277, %v3295
  %v3344 = vadd.f32 %v3278, %v3295
  %v3345 = vmax.f32 %v3297, 0.0
  %v3346 = vmax.f32 %v3298, 0.0
  %v3347 = vmax.f32 %v3299, 0.0
  %v3348 = vmax.f32 %v3300, 0.0
  %v3349 = vmax.f32 %v3301, 0.0
  %v3350 = vmax.f32 %v3302, 0.0
  %v3351 = vmax.f32 %v3303, 0.0
  %v3352 = vmax.f32 %v3304, 0.0
  %v3353 = vmax.f32 %v3305, 0.0
  %v3354 = vmax.f32 %v3306, 0.0
  %v3355 = vmax.f32 %v3307, 0.0
  %v3356 = vmax.f32 %v3308, 0.0
  %v3357 = vmax.f32 %v3309, 0.0
  %v3358 = vmax.f32 %v3310, 0.0
  %v3359 = vmax.f32 %v3311, 0.0
  %v3360 = vmax.f32 %v3312, 0.0
  %v3361 = vmax.f32 %v3313, 0.0
  %v3362 = vmax.f32 %v3314, 0.0
  %v3363 = vmax.f32 %v3315, 0.0
  %v3364 = vmax.f32 %v3316, 0.0
  %v3365 = vmax.f32 %v3317, 0.0
  %v3366 = vmax.f32 %v3318, 0.0
  %v3367 = vmax.f32 %v3319, 0.0
  %v3368 = vmax.f32 %v3320, 0.0
  %v3369 = vmax.f32 %v3321, 0.0
  %v3370 = vmax.f32 %v3322, 0.0
  %v3371 = vmax.f32 %v3323, 0.0
  %v3372 = vmax.f32 %v3324, 0.0
  %v3373 = vmax.f32 %v3325, 0.0
  %v3374 = vmax.f32 %v3326, 0.0
  %v3375 = vmax.f32 %v3327, 0.0
  %v3376 = vmax.f32 %v3328, 0.0
  %v3377 = vmax.f32 %v3329, 0.0
  %v3378 = vmax.f32 %v3330, 0.0
  %v3379 = vmax.f32 %v3331, 0.0
  %v3380 = vmax.f32 %v3332, 0.0
  %v3381 = vmax.f32 %v3333, 0.0
  %v3382 = vmax.f32 %v3334, 0.0
  %v3383 = vmax.f32 %v3335, 0.0
  %v3384 = vmax.f32 %v3336, 0.0
  %v3385 = vmax.f32 %v3337, 0.0
  %v3386 = vmax.f32 %v3338, 0.0
  %v3387 = vmax.f32 %v3339, 0.0
  %v3388 = vmax.f32 %v3340, 0.0
  %v3389 = vmax.f32 %v3341, 0.0
  %v3390 = vmax.f32 %v3342, 0.0
  %v3391 = vmax.f32 %v3343, 0.0
  %v3392 = vmax.f32 %v3344, 0.0
  %3393 = vst [vmem:[%s3] sm:$0xff] %v3345
  %3394 = vst [vmem:[%s3 + $0x8] sm:$0xff] %v3346
  %3395 = vst [vmem:[%s3 + $0x10] sm:$0xff] %v3347
  %3396 = vst [vmem:[%s3 + $0x18] sm:$0xff] %v3348
  %3397 = vst [vmem:[%s3 + $0x20] sm:$0xff] %v3349
  %3398 = vst [vmem:[%s3 + $0x28] sm:$0xff] %v3350
  %3399 = vst [vmem:[%s3 + $0x30] sm:$0xff] %v3351
  %3400 = vst [vmem:[%s3 + $0x38] sm:$0xff] %v3352
  %3401 = vst [vmem:[%s3 + $0x40] sm:$0xff] %v3353
  %3402 = vst [vmem:[%s3 + $0x48] sm:$0xff] %v3354
  %3403 = vst [vmem:[%s3 + $0x50] sm:$0xff] %v3355
  %3404 = vst [vmem:[%s3 + $0x58] sm:$0xff] %v3356
  %3405 = vst [vmem:[%s3 + $0x60] sm:$0xff] %v3357
  %3406 = vst [vmem:[%s3 + $0x68] sm:$0xff] %v3358
  %3407 = vst [vmem:[%s3 + $0x70] sm:$0xff] %v3359
  %3408 = vst [vmem:[%s3 + $0x78] sm:$0xff] %v3360
  %3409 = vst [vmem:[%s3 + $0x80] sm:$0xff] %v3361
  %3410 = vst [vmem:[%s3 + $0x88] sm:$0xff] %v3362
  %3411 = vst [vmem:[%s3 + $0x90] sm:$0xff] %v3363
  %3412 = vst [vmem:[%s3 + $0x98] sm:$0xff] %v3364
  %3413 = vst [vmem:[%s3 + $0xa0] sm:$0xff] %v3365
  %3414 = vst [vmem:[%s3 + $0xa8] sm:$0xff] %v3366
  %3415 = vst [vmem:[%s3 + $0xb0] sm:$0xff] %v3367
  %3416 = vst [vmem:[%s3 + $0xb8] sm:$0xff] %v3368
  %3417 = vst [vmem:[%s3 + $0xc0] sm:$0xff] %v3369
  %3418 = vst [vmem:[%s3 + $0xc8] sm:$0xff] %v3370
  %3419 = vst [vmem:[%s3 + $0xd0] sm:$0xff] %v3371
  %3420 = vst [vmem:[%s3 + $0xd8] sm:$0xff] %v3372
  %3421 = vst [vmem:[%s3 + $0xe0] sm:$0xff] %v3373
  %3422 = vst [vmem:[%s3 + $0xe8] sm:$0xff] %v3374
  %3423 = vst [vmem:[%s3 + $0xf0] sm:$0xff] %v3375
  %3424 = vst [vmem:[%s3 + $0xf8] sm:$0xff] %v3376
  %3425 = vst [vmem:[%s3 + $0x100] sm:$0xf] %v3377
  %3426 = vst [vmem:[%s3 + $0x108] sm:$0xf] %v3378
  %3427 = vst [vmem:[%s3 + $0x110] sm:$0xf] %v3379
  %3428 = vst [vmem:[%s3 + $0x118] sm:$0xf] %v3380
  %3429 = vst [vmem:[%s3 + $0x120] sm:$0xf] %v3381
  %3430 = vst [vmem:[%s3 + $0x128] sm:$0xf] %v3382
  %3431 = vst [vmem:[%s3 + $0x130] sm:$0xf] %v3383
  %3432 = vst [vmem:[%s3 + $0x138] sm:$0xf] %v3384
  %3433 = vst [vmem:[%s3 + $0x140] sm:$0xf] %v3385
  %3434 = vst [vmem:[%s3 + $0x148] sm:$0xf] %v3386
  %3435 = vst [vmem:[%s3 + $0x150] sm:$0xf] %v3387
  %3436 = vst [vmem:[%s3 + $0x158] sm:$0xf] %v3388
  %3437 = vst [vmem:[%s3 + $0x160] sm:$0xf] %v3389
  %3438 = vst [vmem:[%s3 + $0x168] sm:$0xf] %v3390
  %3439 = vst [vmem:[%s3 + $0x170] sm:$0xf] %v3391
  %3440 = vst [vmem:[%s3 + $0x178] sm:$0xf] %v3392
  // Predicated region
  $region14: #{filter_classifier_forward.3} parent=0 // pred_check
    _
  $region15: #{filter_classifier_forward.3} parent=0 // pred_check_branch
    %3442 = sbr.rel (0) target = $region17
  $region16: #{filter_classifier_forward.3} parent=0 // pred_region
    _
  $region17: #{filter_classifier_forward.3} parent=0 // pred_fallthru
    _
  // Predicated region
  $region18: #{filter_classifier_forward.3} parent=0 // pred_check
    _
  $region19: #{filter_classifier_forward.3} parent=0 // pred_check_branch
    %3444 = sbr.rel (0) target = $region21
  $region20: #{filter_classifier_forward.3} parent=0 // pred_region
    _
  $region21: #{filter_classifier_forward.3} parent=0 // pred_fallthru
    _

// kernel: filter_classifier_forward.4
$region0: #{filter_classifier_forward.4}
  #allocation0 [shape = 'u32[]', space=smem, size = 0x4, offset = 0x4, fixed_abs, tag = 'smem constant byte address 0x4 - core index']
  #allocation1 [shape = 'u32[144,128]{1,0:T(1,128)}', space=vmem, size = 0x12000, scoped, tag = 'internal scratch']
  %s0 = inlined_call_operand.vmem [shape: f32[4,500,512], index: 0, kind: input, shape index: {}]
  %s1 = inlined_call_operand.vmem [shape: f32[50,500], index: 1, kind: input, shape index: {}]
  %s2 = inlined_call_operand.vmem [shape: f32[50,1], index: 2, kind: input, shape index: {}]
  %s3 = inlined_call_operand.vmem [shape: bf16[50,512], index: 3, kind: output, shape index: {}]
  %s4 = sld [smem:[#allocation0]]
  $region22: #{filter_classifier_forward.4} parent=0
    _
  %s6 = ssub.s32 1, %s4
  %s7 = scalar_select 0, %s6, %s4
  // Predicated region
  $region2: #{filter_classifier_forward.4} parent=0 // pred_check
    _
  $region3: #{filter_classifier_forward.4} parent=0 // pred_check_branch
    %9 = sbr.rel (0) target = $region5
  $region4: #{filter_classifier_forward.4} parent=0 // pred_region
    _
  $region5: #{filter_classifier_forward.4} parent=0 // pred_fallthru
    _
  // Predicated region
  $region6: #{filter_classifier_forward.4} parent=0 // pred_check
    _
  $region7: #{filter_classifier_forward.4} parent=0 // pred_check_branch
    %11 = sbr.rel (0) target = $region9
  $region8: #{filter_classifier_forward.4} parent=0 // pred_region
    _
  $region9: #{filter_classifier_forward.4} parent=0 // pred_fallthru
    _
  // Predicated region
  $region10: #{filter_classifier_forward.4} parent=0 // pred_check
    _
  $region11: #{filter_classifier_forward.4} parent=0 // pred_check_branch
    %13 = sbr.rel (0) target = $region13
  $region12: #{filter_classifier_forward.4} parent=0 // pred_region
    _
  $region13: #{filter_classifier_forward.4} parent=0 // pred_fallthru
    _
  %v14 = vld [vmem:[%s1] sm:$0xff]
  %v15 = vld [vmem:[%s1 + $0x8] sm:$0xff]
  %v16 = vld [vmem:[%s1 + $0x10] sm:$0xff]
  %v17 = vld [vmem:[%s1 + $0x18] sm:$0xff]
  %v18 = vld [vmem:[%s1 + $0x20] sm:$0xff]
  %v19 = vld [vmem:[%s1 + $0x28] sm:$0xff]
  %v20 = vld [vmem:[%s1 + $0x30] sm:$0xff]
  %v21 = vld [vmem:[%s1 + $0x38] sm:$0xff]
  %v22 = vld [vmem:[%s1 + $0x40] sm:$0xff]
  %v23 = vld [vmem:[%s1 + $0x48] sm:$0xff]
  %v24 = vld [vmem:[%s1 + $0x50] sm:$0xff]
  %v25 = vld [vmem:[%s1 + $0x58] sm:$0xff]
  %v26 = vld [vmem:[%s1 + $0x60] sm:$0xff]
  %v27 = vld [vmem:[%s1 + $0x68] sm:$0xff]
  %v28 = vld [vmem:[%s1 + $0x70] sm:$0xff]
  %v29 = vld [vmem:[%s1 + $0x78] sm:$0xff]
  %v30 = vld [vmem:[%s1 + $0x80] sm:$0xff]
  %v31 = vld [vmem:[%s1 + $0x88] sm:$0xff]
  %v32 = vld [vmem:[%s1 + $0x90] sm:$0xff]
  %v33 = vld [vmem:[%s1 + $0x98] sm:$0xff]
  %v34 = vld [vmem:[%s1 + $0xa0] sm:$0xff]
  %v35 = vld [vmem:[%s1 + $0xa8] sm:$0xff]
  %v36 = vld [vmem:[%s1 + $0xb0] sm:$0xff]
  %v37 = vld [vmem:[%s1 + $0xb8] sm:$0xff]
  %v38 = vld [vmem:[%s1 + $0xc0] sm:$0x3]
  %v39 = vld [vmem:[%s1 + $0xc8] sm:$0x3]
  %v40 = vld [vmem:[%s1 + $0xd0] sm:$0x3]
  %v41 = vld [vmem:[%s1 + $0xd8] sm:$0x3]
  %v42 = vld [vmem:[%s0] sm:$0xff]
  %v43 = vld [vmem:[%s0 + $0x8] sm:$0xff]
  %v44 = vld [vmem:[%s0 + $0x10] sm:$0xff]
  %v45 = vld [vmem:[%s0 + $0x18] sm:$0xff]
  %v46 = vld [vmem:[%s0 + $0x20] sm:$0xff]
  %v47 = vld [vmem:[%s0 + $0x28] sm:$0xff]
  %v48 = vld [vmem:[%s0 + $0x30] sm:$0xff]
  %v49 = vld [vmem:[%s0 + $0x38] sm:$0xff]
  %v50 = vld [vmem:[%s0 + $0x40] sm:$0xff]
  %v51 = vld [vmem:[%s0 + $0x48] sm:$0xff]
  %v52 = vld [vmem:[%s0 + $0x50] sm:$0xff]
  %v53 = vld [vmem:[%s0 + $0x58] sm:$0xff]
  %v54 = vld [vmem:[%s0 + $0x60] sm:$0xff]
  %v55 = vld [vmem:[%s0 + $0x68] sm:$0xff]
  %v56 = vld [vmem:[%s0 + $0x70] sm:$0xff]
  %v57 = vld [vmem:[%s0 + $0x78] sm:$0xff]
  %v58 = vld [vmem:[%s0 + $0x80] sm:$0xff]
  %v59 = vld [vmem:[%s0 + $0x88] sm:$0xff]
  %v60 = vld [vmem:[%s0 + $0x90] sm:$0xff]
  %v61 = vld [vmem:[%s0 + $0x98] sm:$0xff]
  %v62 = vld [vmem:[%s0 + $0xa0] sm:$0xff]
  %v63 = vld [vmem:[%s0 + $0xa8] sm:$0xff]
  %v64 = vld [vmem:[%s0 + $0xb0] sm:$0xff]
  %v65 = vld [vmem:[%s0 + $0xb8] sm:$0xff]
  %v66 = vld [vmem:[%s0 + $0xc0] sm:$0xff]
  %v67 = vld [vmem:[%s0 + $0xc8] sm:$0xff]
  %v68 = vld [vmem:[%s0 + $0xd0] sm:$0xff]
  %v69 = vld [vmem:[%s0 + $0xd8] sm:$0xff]
  %v70 = vld [vmem:[%s0 + $0xe0] sm:$0xff]
  %v71 = vld [vmem:[%s0 + $0xe8] sm:$0xff]
  %v72 = vld [vmem:[%s0 + $0xf0] sm:$0xff]
  %v73 = vld [vmem:[%s0 + $0xf8] sm:$0xff]
  %v74 = vld [vmem:[%s0 + $0x100] sm:$0xff]
  %v75 = vld [vmem:[%s0 + $0x108] sm:$0xff]
  %v76 = vld [vmem:[%s0 + $0x110] sm:$0xff]
  %v77 = vld [vmem:[%s0 + $0x118] sm:$0xff]
  %v78 = vld [vmem:[%s0 + $0x120] sm:$0xff]
  %v79 = vld [vmem:[%s0 + $0x128] sm:$0xff]
  %v80 = vld [vmem:[%s0 + $0x130] sm:$0xff]
  %v81 = vld [vmem:[%s0 + $0x138] sm:$0xff]
  %v82 = vld [vmem:[%s0 + $0x140] sm:$0xff]
  %v83 = vld [vmem:[%s0 + $0x148] sm:$0xff]
  %v84 = vld [vmem:[%s0 + $0x150] sm:$0xff]
  %v85 = vld [vmem:[%s0 + $0x158] sm:$0xff]
  %v86 = vld [vmem:[%s0 + $0x160] sm:$0xff]
  %v87 = vld [vmem:[%s0 + $0x168] sm:$0xff]
  %v88 = vld [vmem:[%s0 + $0x170] sm:$0xff]
  %v89 = vld [vmem:[%s0 + $0x178] sm:$0xff]
  %v90 = vld [vmem:[%s0 + $0x180] sm:$0xff]
  %v91 = vld [vmem:[%s0 + $0x188] sm:$0xff]
  %v92 = vld [vmem:[%s0 + $0x190] sm:$0xff]
  %v93 = vld [vmem:[%s0 + $0x198] sm:$0xff]
  %v94 = vld [vmem:[%s0 + $0x1a0] sm:$0xff]
  %v95 = vld [vmem:[%s0 + $0x1a8] sm:$0xff]
  %v96 = vld [vmem:[%s0 + $0x1b0] sm:$0xff]
  %v97 = vld [vmem:[%s0 + $0x1b8] sm:$0xff]
  %v98 = vld [vmem:[%s0 + $0x1c0] sm:$0xff]
  %v99 = vld [vmem:[%s0 + $0x1c8] sm:$0xff]
  %v100 = vld [vmem:[%s0 + $0x1d0] sm:$0xff]
  %v101 = vld [vmem:[%s0 + $0x1d8] sm:$0xff]
  %v102 = vld [vmem:[%s0 + $0x1e0] sm:$0xff]
  %v103 = vld [vmem:[%s0 + $0x1e8] sm:$0xff]
  %v104 = vld [vmem:[%s0 + $0x1f0] sm:$0xff]
  %v105 = vld [vmem:[%s0 + $0x1f8] sm:$0xff]
  %v106 = vld [vmem:[%s0 + $0x200] sm:$0xff]
  %v107 = vld [vmem:[%s0 + $0x208] sm:$0xff]
  %v108 = vld [vmem:[%s0 + $0x210] sm:$0xff]
  %v109 = vld [vmem:[%s0 + $0x218] sm:$0xff]
  %v110 = vld [vmem:[%s0 + $0x220] sm:$0xff]
  %v111 = vld [vmem:[%s0 + $0x228] sm:$0xff]
  %v112 = vld [vmem:[%s0 + $0x230] sm:$0xff]
  %v113 = vld [vmem:[%s0 + $0x238] sm:$0xff]
  %v114 = vld [vmem:[%s0 + $0x240] sm:$0xff]
  %v115 = vld [vmem:[%s0 + $0x248] sm:$0xff]
  %v116 = vld [vmem:[%s0 + $0x250] sm:$0xff]
  %v117 = vld [vmem:[%s0 + $0x258] sm:$0xff]
  %v118 = vld [vmem:[%s0 + $0x260] sm:$0xff]
  %v119 = vld [vmem:[%s0 + $0x268] sm:$0xff]
  %v120 = vld [vmem:[%s0 + $0x270] sm:$0xff]
  %v121 = vld [vmem:[%s0 + $0x278] sm:$0xff]
  %v122 = vld [vmem:[%s0 + $0x280] sm:$0xff]
  %v123 = vld [vmem:[%s0 + $0x288] sm:$0xff]
  %v124 = vld [vmem:[%s0 + $0x290] sm:$0xff]
  %v125 = vld [vmem:[%s0 + $0x298] sm:$0xff]
  %v126 = vld [vmem:[%s0 + $0x2a0] sm:$0xff]
  %v127 = vld [vmem:[%s0 + $0x2a8] sm:$0xff]
  %v128 = vld [vmem:[%s0 + $0x2b0] sm:$0xff]
  %v129 = vld [vmem:[%s0 + $0x2b8] sm:$0xff]
  %v130 = vld [vmem:[%s0 + $0x2c0] sm:$0xff]
  %v131 = vld [vmem:[%s0 + $0x2c8] sm:$0xff]
  %v132 = vld [vmem:[%s0 + $0x2d0] sm:$0xff]
  %v133 = vld [vmem:[%s0 + $0x2d8] sm:$0xff]
  %v134 = vld [vmem:[%s0 + $0x2e0] sm:$0xff]
  %v135 = vld [vmem:[%s0 + $0x2e8] sm:$0xff]
  %v136 = vld [vmem:[%s0 + $0x2f0] sm:$0xff]
  %v137 = vld [vmem:[%s0 + $0x2f8] sm:$0xff]
  %v138 = vld [vmem:[%s0 + $0x300] sm:$0xff]
  %v139 = vld [vmem:[%s0 + $0x308] sm:$0xff]
  %v140 = vld [vmem:[%s0 + $0x310] sm:$0xff]
  %v141 = vld [vmem:[%s0 + $0x318] sm:$0xff]
  %v142 = vld [vmem:[%s0 + $0x320] sm:$0xff]
  %v143 = vld [vmem:[%s0 + $0x328] sm:$0xff]
  %v144 = vld [vmem:[%s0 + $0x330] sm:$0xff]
  %v145 = vld [vmem:[%s0 + $0x338] sm:$0xff]
  %v146 = vld [vmem:[%s0 + $0x340] sm:$0xff]
  %v147 = vld [vmem:[%s0 + $0x348] sm:$0xff]
  %v148 = vld [vmem:[%s0 + $0x350] sm:$0xff]
  %v149 = vld [vmem:[%s0 + $0x358] sm:$0xff]
  %v150 = vld [vmem:[%s0 + $0x360] sm:$0xff]
  %v151 = vld [vmem:[%s0 + $0x368] sm:$0xff]
  %v152 = vld [vmem:[%s0 + $0x370] sm:$0xff]
  %v153 = vld [vmem:[%s0 + $0x378] sm:$0xff]
  %v154 = vld [vmem:[%s0 + $0x380] sm:$0xff]
  %v155 = vld [vmem:[%s0 + $0x388] sm:$0xff]
  %v156 = vld [vmem:[%s0 + $0x390] sm:$0xff]
  %v157 = vld [vmem:[%s0 + $0x398] sm:$0xff]
  %v158 = vld [vmem:[%s0 + $0x3a0] sm:$0xff]
  %v159 = vld [vmem:[%s0 + $0x3a8] sm:$0xff]
  %v160 = vld [vmem:[%s0 + $0x3b0] sm:$0xff]
  %v161 = vld [vmem:[%s0 + $0x3b8] sm:$0xff]
  %v162 = vld [vmem:[%s0 + $0x3c0] sm:$0xff]
  %v163 = vld [vmem:[%s0 + $0x3c8] sm:$0xff]
  %v164 = vld [vmem:[%s0 + $0x3d0] sm:$0xff]
  %v165 = vld [vmem:[%s0 + $0x3d8] sm:$0xff]
  %v166 = vld [vmem:[%s0 + $0x3e0] sm:$0xff]
  %v167 = vld [vmem:[%s0 + $0x3e8] sm:$0xff]
  %v168 = vld [vmem:[%s0 + $0x3f0] sm:$0xff]
  %v169 = vld [vmem:[%s0 + $0x3f8] sm:$0xff]
  %v170 = vld [vmem:[%s0 + $0x400] sm:$0xff]
  %v171 = vld [vmem:[%s0 + $0x408] sm:$0xff]
  %v172 = vld [vmem:[%s0 + $0x410] sm:$0xff]
  %v173 = vld [vmem:[%s0 + $0x418] sm:$0xff]
  %v174 = vld [vmem:[%s0 + $0x420] sm:$0xff]
  %v175 = vld [vmem:[%s0 + $0x428] sm:$0xff]
  %v176 = vld [vmem:[%s0 + $0x430] sm:$0xff]
  %v177 = vld [vmem:[%s0 + $0x438] sm:$0xff]
  %v178 = vld [vmem:[%s0 + $0x440] sm:$0xff]
  %v179 = vld [vmem:[%s0 + $0x448] sm:$0xff]
  %v180 = vld [vmem:[%s0 + $0x450] sm:$0xff]
  %v181 = vld [vmem:[%s0 + $0x458] sm:$0xff]
  %v182 = vld [vmem:[%s0 + $0x460] sm:$0xff]
  %v183 = vld [vmem:[%s0 + $0x468] sm:$0xff]
  %v184 = vld [vmem:[%s0 + $0x470] sm:$0xff]
  %v185 = vld [vmem:[%s0 + $0x478] sm:$0xff]
  %v186 = vld [vmem:[%s0 + $0x480] sm:$0xff]
  %v187 = vld [vmem:[%s0 + $0x488] sm:$0xff]
  %v188 = vld [vmem:[%s0 + $0x490] sm:$0xff]
  %v189 = vld [vmem:[%s0 + $0x498] sm:$0xff]
  %v190 = vld [vmem:[%s0 + $0x4a0] sm:$0xff]
  %v191 = vld [vmem:[%s0 + $0x4a8] sm:$0xff]
  %v192 = vld [vmem:[%s0 + $0x4b0] sm:$0xff]
  %v193 = vld [vmem:[%s0 + $0x4b8] sm:$0xff]
  %v194 = vld [vmem:[%s0 + $0x4c0] sm:$0xff]
  %v195 = vld [vmem:[%s0 + $0x4c8] sm:$0xff]
  %v196 = vld [vmem:[%s0 + $0x4d0] sm:$0xff]
  %v197 = vld [vmem:[%s0 + $0x4d8] sm:$0xff]
  %v198 = vld [vmem:[%s0 + $0x4e0] sm:$0xff]
  %v199 = vld [vmem:[%s0 + $0x4e8] sm:$0xff]
  %v200 = vld [vmem:[%s0 + $0x4f0] sm:$0xff]
  %v201 = vld [vmem:[%s0 + $0x4f8] sm:$0xff]
  %v202 = vld [vmem:[%s0 + $0x500] sm:$0xff]
  %v203 = vld [vmem:[%s0 + $0x508] sm:$0xff]
  %v204 = vld [vmem:[%s0 + $0x510] sm:$0xff]
  %v205 = vld [vmem:[%s0 + $0x518] sm:$0xff]
  %v206 = vld [vmem:[%s0 + $0x520] sm:$0xff]
  %v207 = vld [vmem:[%s0 + $0x528] sm:$0xff]
  %v208 = vld [vmem:[%s0 + $0x530] sm:$0xff]
  %v209 = vld [vmem:[%s0 + $0x538] sm:$0xff]
  %v210 = vld [vmem:[%s0 + $0x540] sm:$0xff]
  %v211 = vld [vmem:[%s0 + $0x548] sm:$0xff]
  %v212 = vld [vmem:[%s0 + $0x550] sm:$0xff]
  %v213 = vld [vmem:[%s0 + $0x558] sm:$0xff]
  %v214 = vld [vmem:[%s0 + $0x560] sm:$0xff]
  %v215 = vld [vmem:[%s0 + $0x568] sm:$0xff]
  %v216 = vld [vmem:[%s0 + $0x570] sm:$0xff]
  %v217 = vld [vmem:[%s0 + $0x578] sm:$0xff]
  %v218 = vld [vmem:[%s0 + $0x580] sm:$0xff]
  %v219 = vld [vmem:[%s0 + $0x588] sm:$0xff]
  %v220 = vld [vmem:[%s0 + $0x590] sm:$0xff]
  %v221 = vld [vmem:[%s0 + $0x598] sm:$0xff]
  %v222 = vld [vmem:[%s0 + $0x5a0] sm:$0xff]
  %v223 = vld [vmem:[%s0 + $0x5a8] sm:$0xff]
  %v224 = vld [vmem:[%s0 + $0x5b0] sm:$0xff]
  %v225 = vld [vmem:[%s0 + $0x5b8] sm:$0xff]
  %v226 = vld [vmem:[%s0 + $0x5c0] sm:$0xff]
  %v227 = vld [vmem:[%s0 + $0x5c8] sm:$0xff]
  %v228 = vld [vmem:[%s0 + $0x5d0] sm:$0xff]
  %v229 = vld [vmem:[%s0 + $0x5d8] sm:$0xff]
  %v230 = vld [vmem:[%s0 + $0x5e0] sm:$0xff]
  %v231 = vld [vmem:[%s0 + $0x5e8] sm:$0xff]
  %v232 = vld [vmem:[%s0 + $0x5f0] sm:$0xff]
  %v233 = vld [vmem:[%s0 + $0x5f8] sm:$0xff]
  %v234 = vld [vmem:[%s0 + $0x600] sm:$0xff]
  %v235 = vld [vmem:[%s0 + $0x608] sm:$0xff]
  %v236 = vld [vmem:[%s0 + $0x610] sm:$0xff]
  %v237 = vld [vmem:[%s0 + $0x618] sm:$0xff]
  %v238 = vld [vmem:[%s0 + $0x620] sm:$0xff]
  %v239 = vld [vmem:[%s0 + $0x628] sm:$0xff]
  %v240 = vld [vmem:[%s0 + $0x630] sm:$0xff]
  %v241 = vld [vmem:[%s0 + $0x638] sm:$0xff]
  %v242 = vld [vmem:[%s0 + $0x640] sm:$0xff]
  %v243 = vld [vmem:[%s0 + $0x648] sm:$0xff]
  %v244 = vld [vmem:[%s0 + $0x650] sm:$0xff]
  %v245 = vld [vmem:[%s0 + $0x658] sm:$0xff]
  %v246 = vld [vmem:[%s0 + $0x660] sm:$0xff]
  %v247 = vld [vmem:[%s0 + $0x668] sm:$0xff]
  %v248 = vld [vmem:[%s0 + $0x670] sm:$0xff]
  %v249 = vld [vmem:[%s0 + $0x678] sm:$0xff]
  %v250 = vld [vmem:[%s0 + $0x680] sm:$0xff]
  %v251 = vld [vmem:[%s0 + $0x688] sm:$0xff]
  %v252 = vld [vmem:[%s0 + $0x690] sm:$0xff]
  %v253 = vld [vmem:[%s0 + $0x698] sm:$0xff]
  %v254 = vld [vmem:[%s0 + $0x6a0] sm:$0xff]
  %v255 = vld [vmem:[%s0 + $0x6a8] sm:$0xff]
  %v256 = vld [vmem:[%s0 + $0x6b0] sm:$0xff]
  %v257 = vld [vmem:[%s0 + $0x6b8] sm:$0xff]
  %v258 = vld [vmem:[%s0 + $0x6c0] sm:$0xff]
  %v259 = vld [vmem:[%s0 + $0x6c8] sm:$0xff]
  %v260 = vld [vmem:[%s0 + $0x6d0] sm:$0xff]
  %v261 = vld [vmem:[%s0 + $0x6d8] sm:$0xff]
  %v262 = vld [vmem:[%s0 + $0x6e0] sm:$0xff]
  %v263 = vld [vmem:[%s0 + $0x6e8] sm:$0xff]
  %v264 = vld [vmem:[%s0 + $0x6f0] sm:$0xff]
  %v265 = vld [vmem:[%s0 + $0x6f8] sm:$0xff]
  %v266 = vld [vmem:[%s0 + $0x700] sm:$0xff]
  %v267 = vld [vmem:[%s0 + $0x708] sm:$0xff]
  %v268 = vld [vmem:[%s0 + $0x710] sm:$0xff]
  %v269 = vld [vmem:[%s0 + $0x718] sm:$0xff]
  %v270 = vld [vmem:[%s0 + $0x720] sm:$0xff]
  %v271 = vld [vmem:[%s0 + $0x728] sm:$0xff]
  %v272 = vld [vmem:[%s0 + $0x730] sm:$0xff]
  %v273 = vld [vmem:[%s0 + $0x738] sm:$0xff]
  %v274 = vld [vmem:[%s0 + $0x740] sm:$0xff]
  %v275 = vld [vmem:[%s0 + $0x748] sm:$0xff]
  %v276 = vld [vmem:[%s0 + $0x750] sm:$0xff]
  %v277 = vld [vmem:[%s0 + $0x758] sm:$0xff]
  %v278 = vld [vmem:[%s0 + $0x760] sm:$0xff]
  %v279 = vld [vmem:[%s0 + $0x768] sm:$0xff]
  %v280 = vld [vmem:[%s0 + $0x770] sm:$0xff]
  %v281 = vld [vmem:[%s0 + $0x778] sm:$0xff]
  %v282 = vld [vmem:[%s0 + $0x780] sm:$0xff]
  %v283 = vld [vmem:[%s0 + $0x788] sm:$0xff]
  %v284 = vld [vmem:[%s0 + $0x790] sm:$0xff]
  %v285 = vld [vmem:[%s0 + $0x798] sm:$0xff]
  %v286 = vld [vmem:[%s0 + $0x7a0] sm:$0xff]
  %v287 = vld [vmem:[%s0 + $0x7a8] sm:$0xff]
  %v288 = vld [vmem:[%s0 + $0x7b0] sm:$0xff]
  %v289 = vld [vmem:[%s0 + $0x7b8] sm:$0xff]
  %v290 = vld [vmem:[%s0 + $0x7c0] sm:$0xf]
  %v291 = vld [vmem:[%s0 + $0x7c8] sm:$0xf]
  %v292 = vld [vmem:[%s0 + $0x7d0] sm:$0xf]
  %v293 = vld [vmem:[%s0 + $0x7d8] sm:$0xf]
  %vm294 = vcmask 949248
  %v296 = vsel %vm294, %v17, 0
  %v299 = vsel %vm294, %v21, 0
  %v302 = vsel %vm294, %v25, 0
  %v305 = vsel %vm294, %v29, 0
  %v308 = vsel %vm294, %v33, 0
  %v311 = vsel %vm294, %v37, 0
  %v314 = vsel %vm294, %v41, 0
  %vm316 = vcmask 1043456
  %v318 = vsel %vm316, %v290, 0
  %v321 = vsel %vm316, %v291, 0
  %v324 = vsel %vm316, %v292, 0
  %v327 = vsel %vm316, %v293, 0
  %329 = vmatprep.subr.mxu0 %v103
  %330 = vmatpush1.msra.mxu0 %v102
  %331 = vmatprep.subr.mxu0 %v99
  %332 = vmatpush1.msra.mxu0 %v98
  %333 = vmatprep.subr.mxu0 %v95
  %334 = vmatpush1.msra.mxu0 %v94
  %335 = vmatprep.subr.mxu0 %v91
  %336 = vmatpush1.msra.mxu0 %v90
  %337 = vmatprep.subr.mxu0 %v87
  %338 = vmatpush1.msra.mxu0 %v86
  %339 = vmatprep.subr.mxu0 %v83
  %340 = vmatpush1.msra.mxu0 %v82
  %341 = vmatprep.subr.mxu0 %v79
  %342 = vmatpush1.msra.mxu0 %v78
  %343 = vmatprep.subr.mxu0 %v75
  %344 = vmatpush1.msra.mxu0 %v74
  %345 = vmatprep.subr.mxu0 %v71
  %346 = vmatpush1.msra.mxu0 %v70
  %347 = vmatprep.subr.mxu0 %v67
  %348 = vmatpush1.msra.mxu0 %v66
  %349 = vmatprep.subr.mxu0 %v63
  %350 = vmatpush1.msra.mxu0 %v62
  %351 = vmatprep.subr.mxu0 %v59
  %352 = vmatpush1.msra.mxu0 %v58
  %353 = vmatprep.subr.mxu0 %v55
  %354 = vmatpush1.msra.mxu0 %v54
  %355 = vmatprep.subr.mxu0 %v51
  %356 = vmatpush1.msra.mxu0 %v50
  %357 = vmatprep.subr.mxu0 %v47
  %358 = vmatpush1.msra.mxu0 %v46
  %359 = vmatprep.subr.mxu0 %v43
  %360 = vmatpush1.msra.mxu0 %v42
  %361 = vmatprep.subr.mxu0 %v167
  %362 = vmatpush2.msra.mxu0 %v166
  %363 = vmatprep.subr.mxu0 %v163
  %364 = vmatpush2.msra.mxu0 %v162
  %365 = vmatprep.subr.mxu0 %v159
  %366 = vmatpush2.msra.mxu0 %v158
  %367 = vmatprep.subr.mxu0 %v155
  %368 = vmatpush2.msra.mxu0 %v154
  %369 = vmatprep.subr.mxu0 %v151
  %370 = vmatpush2.msra.mxu0 %v150
  %371 = vmatprep.subr.mxu0 %v147
  %372 = vmatpush2.msra.mxu0 %v146
  %373 = vmatprep.subr.mxu0 %v143
  %374 = vmatpush2.msra.mxu0 %v142
  %375 = vmatprep.subr.mxu0 %v139
  %376 = vmatpush2.msra.mxu0 %v138
  %377 = vmatprep.subr.mxu0 %v135
  %378 = vmatpush2.msra.mxu0 %v134
  %379 = vmatprep.subr.mxu0 %v131
  %380 = vmatpush2.msra.mxu0 %v130
  %381 = vmatprep.subr.mxu0 %v127
  %382 = vmatpush2.msra.mxu0 %v126
  %383 = vmatprep.subr.mxu0 %v123
  %384 = vmatpush2.msra.mxu0 %v122
  %385 = vmatprep.subr.mxu0 %v119
  %386 = vmatpush2.msra.mxu0 %v118
  %387 = vmatprep.subr.mxu0 %v115
  %388 = vmatpush2.msra.mxu0 %v114
  %389 = vmatprep.subr.mxu0 %v111
  %390 = vmatpush2.msra.mxu0 %v110
  %391 = vmatprep.subr.mxu0 %v107
  %392 = vmatpush2.msra.mxu0 %v106
  %393 = vmatprep.mubr.f32.mxu0 %v15
  %394 = vmatmul.mubr.f32.gmra.mxu0 %v14
  %v395 = vpop.f32.mrf.mxu0
  %v396 = vadd.f32 0.0, %v395
  %v397 = vpop.f32.mrf.mxu0
  %v398 = vadd.f32 0.0, %v397
  %399 = vmatprep.mubr.f32.mxu0 %v19
  %400 = vmatmul.mubr.f32.gmra.mxu0 %v18
  %v401 = vpop.f32.mrf.mxu0
  %v402 = vadd.f32 0.0, %v401
  %v403 = vpop.f32.mrf.mxu0
  %v404 = vadd.f32 0.0, %v403
  %405 = vmatprep.mubr.f32.mxu0 %v23
  %406 = vmatmul.mubr.f32.gmra.mxu0 %v22
  %v407 = vpop.f32.mrf.mxu0
  %v408 = vadd.f32 0.0, %v407
  %v409 = vpop.f32.mrf.mxu0
  %v410 = vadd.f32 0.0, %v409
  %411 = vmatprep.mubr.f32.mxu0 %v27
  %412 = vmatmul.mubr.f32.gmra.mxu0 %v26
  %v413 = vpop.f32.mrf.mxu0
  %v414 = vadd.f32 0.0, %v413
  %v415 = vpop.f32.mrf.mxu0
  %v416 = vadd.f32 0.0, %v415
  %417 = vmatprep.mubr.f32.mxu0 %v31
  %418 = vmatmul.mubr.f32.gmra.mxu0 %v30
  %v419 = vpop.f32.mrf.mxu0
  %v420 = vadd.f32 0.0, %v419
  %v421 = vpop.f32.mrf.mxu0
  %v422 = vadd.f32 0.0, %v421
  %423 = vmatprep.mubr.f32.mxu0 %v35
  %424 = vmatmul.mubr.f32.gmra.mxu0 %v34
  %v425 = vpop.f32.mrf.mxu0
  %v426 = vadd.f32 0.0, %v425
  %v427 = vpop.f32.mrf.mxu0
  %v428 = vadd.f32 0.0, %v427
  %429 = vmatprep.mubr.f32.mxu0 %v39
  %430 = vmatmul.mubr.f32.gmra.mxu0 %v38
  %v431 = vpop.f32.mrf.mxu0
  %v432 = vadd.f32 0.0, %v431
  %v433 = vpop.f32.mrf.mxu0
  %v434 = vadd.f32 0.0, %v433
  %435 = vdwg.mxu0
  %436 = vmatprep.subr.mxu0 %v231
  %437 = vmatpush1.msra.mxu0 %v230
  %438 = vmatprep.subr.mxu0 %v227
  %439 = vmatpush1.msra.mxu0 %v226
  %440 = vmatprep.subr.mxu0 %v223
  %441 = vmatpush1.msra.mxu0 %v222
  %442 = vmatprep.subr.mxu0 %v219
  %443 = vmatpush1.msra.mxu0 %v218
  %444 = vmatprep.subr.mxu0 %v215
  %445 = vmatpush1.msra.mxu0 %v214
  %446 = vmatprep.subr.mxu0 %v211
  %447 = vmatpush1.msra.mxu0 %v210
  %448 = vmatprep.subr.mxu0 %v207
  %449 = vmatpush1.msra.mxu0 %v206
  %450 = vmatprep.subr.mxu0 %v203
  %451 = vmatpush1.msra.mxu0 %v202
  %452 = vmatprep.subr.mxu0 %v199
  %453 = vmatpush1.msra.mxu0 %v198
  %454 = vmatprep.subr.mxu0 %v195
  %455 = vmatpush1.msra.mxu0 %v194
  %456 = vmatprep.subr.mxu0 %v191
  %457 = vmatpush1.msra.mxu0 %v190
  %458 = vmatprep.subr.mxu0 %v187
  %459 = vmatpush1.msra.mxu0 %v186
  %460 = vmatprep.subr.mxu0 %v183
  %461 = vmatpush1.msra.mxu0 %v182
  %462 = vmatprep.subr.mxu0 %v179
  %463 = vmatpush1.msra.mxu0 %v178
  %464 = vmatprep.subr.mxu0 %v175
  %465 = vmatpush1.msra.mxu0 %v174
  %466 = vmatprep.subr.mxu0 %v171
  %467 = vmatpush1.msra.mxu0 %v170
  %468 = vmatprep.subr.mxu0 0.0
  %469 = vmatpush2.msra.mxu0 0.0
  %470 = vmatprep.subr.mxu0 %v321
  %471 = vmatpush2.msra.mxu0 %v318
  %472 = vmatprep.subr.mxu0 %v287
  %473 = vmatpush2.msra.mxu0 %v286
  %474 = vmatprep.subr.mxu0 %v283
  %475 = vmatpush2.msra.mxu0 %v282
  %476 = vmatprep.subr.mxu0 %v279
  %477 = vmatpush2.msra.mxu0 %v278
  %478 = vmatprep.subr.mxu0 %v275
  %479 = vmatpush2.msra.mxu0 %v274
  %480 = vmatprep.subr.mxu0 %v271
  %481 = vmatpush2.msra.mxu0 %v270
  %482 = vmatprep.subr.mxu0 %v267
  %483 = vmatpush2.msra.mxu0 %v266
  %484 = vmatprep.subr.mxu0 %v263
  %485 = vmatpush2.msra.mxu0 %v262
  %486 = vmatprep.subr.mxu0 %v259
  %487 = vmatpush2.msra.mxu0 %v258
  %488 = vmatprep.subr.mxu0 %v255
  %489 = vmatpush2.msra.mxu0 %v254
  %490 = vmatprep.subr.mxu0 %v251
  %491 = vmatpush2.msra.mxu0 %v250
  %492 = vmatprep.subr.mxu0 %v247
  %493 = vmatpush2.msra.mxu0 %v246
  %494 = vmatprep.subr.mxu0 %v243
  %495 = vmatpush2.msra.mxu0 %v242
  %496 = vmatprep.subr.mxu0 %v239
  %497 = vmatpush2.msra.mxu0 %v238
  %498 = vmatprep.subr.mxu0 %v235
  %499 = vmatpush2.msra.mxu0 %v234
  %500 = vmatprep.mubr.f32.mxu0 %v296
  %501 = vmatmul.mubr.f32.gmra.mxu0 %v16
  %v502 = vpop.f32.mrf.mxu0
  %v503 = vadd.f32 %v396, %v502
  %v504 = vpop.f32.mrf.mxu0
  %v505 = vadd.f32 %v398, %v504
  %506 = vmatprep.mubr.f32.mxu0 %v299
  %507 = vmatmul.mubr.f32.gmra.mxu0 %v20
  %v508 = vpop.f32.mrf.mxu0
  %v509 = vadd.f32 %v402, %v508
  %v510 = vpop.f32.mrf.mxu0
  %v511 = vadd.f32 %v404, %v510
  %512 = vmatprep.mubr.f32.mxu0 %v302
  %513 = vmatmul.mubr.f32.gmra.mxu0 %v24
  %v514 = vpop.f32.mrf.mxu0
  %v515 = vadd.f32 %v408, %v514
  %v516 = vpop.f32.mrf.mxu0
  %v517 = vadd.f32 %v410, %v516
  %518 = vmatprep.mubr.f32.mxu0 %v305
  %519 = vmatmul.mubr.f32.gmra.mxu0 %v28
  %v520 = vpop.f32.mrf.mxu0
  %v521 = vadd.f32 %v414, %v520
  %v522 = vpop.f32.mrf.mxu0
  %v523 = vadd.f32 %v416, %v522
  %524 = vmatprep.mubr.f32.mxu0 %v308
  %525 = vmatmul.mubr.f32.gmra.mxu0 %v32
  %v526 = vpop.f32.mrf.mxu0
  %v527 = vadd.f32 %v420, %v526
  %v528 = vpop.f32.mrf.mxu0
  %v529 = vadd.f32 %v422, %v528
  %530 = vmatprep.mubr.f32.mxu0 %v311
  %531 = vmatmul.mubr.f32.gmra.mxu0 %v36
  %v532 = vpop.f32.mrf.mxu0
  %v533 = vadd.f32 %v426, %v532
  %v534 = vpop.f32.mrf.mxu0
  %v535 = vadd.f32 %v428, %v534
  %536 = vmatprep.mubr.f32.mxu0 %v314
  %537 = vmatmul.mubr.f32.gmra.mxu0 %v40
  %v538 = vpop.f32.mrf.mxu0
  %v539 = vadd.f32 %v432, %v538
  %v540 = vpop.f32.mrf.mxu0
  %v541 = vadd.f32 %v434, %v540
  %542 = vdwg.mxu0
  %543 = vmatprep.subr.mxu0 %v105
  %544 = vmatpush1.msra.mxu0 %v104
  %545 = vmatprep.subr.mxu0 %v101
  %546 = vmatpush1.msra.mxu0 %v100
  %547 = vmatprep.subr.mxu0 %v97
  %548 = vmatpush1.msra.mxu0 %v96
  %549 = vmatprep.subr.mxu0 %v93
  %550 = vmatpush1.msra.mxu0 %v92
  %551 = vmatprep.subr.mxu0 %v89
  %552 = vmatpush1.msra.mxu0 %v88
  %553 = vmatprep.subr.mxu0 %v85
  %554 = vmatpush1.msra.mxu0 %v84
  %555 = vmatprep.subr.mxu0 %v81
  %556 = vmatpush1.msra.mxu0 %v80
  %557 = vmatprep.subr.mxu0 %v77
  %558 = vmatpush1.msra.mxu0 %v76
  %559 = vmatprep.subr.mxu0 %v73
  %560 = vmatpush1.msra.mxu0 %v72
  %561 = vmatprep.subr.mxu0 %v69
  %562 = vmatpush1.msra.mxu0 %v68
  %563 = vmatprep.subr.mxu0 %v65
  %564 = vmatpush1.msra.mxu0 %v64
  %565 = vmatprep.subr.mxu0 %v61
  %566 = vmatpush1.msra.mxu0 %v60
  %567 = vmatprep.subr.mxu0 %v57
  %568 = vmatpush1.msra.mxu0 %v56
  %569 = vmatprep.subr.mxu0 %v53
  %570 = vmatpush1.msra.mxu0 %v52
  %571 = vmatprep.subr.mxu0 %v49
  %572 = vmatpush1.msra.mxu0 %v48
  %573 = vmatprep.subr.mxu0 %v45
  %574 = vmatpush1.msra.mxu0 %v44
  %575 = vmatprep.subr.mxu0 %v169
  %576 = vmatpush2.msra.mxu0 %v168
  %577 = vmatprep.subr.mxu0 %v165
  %578 = vmatpush2.msra.mxu0 %v164
  %579 = vmatprep.subr.mxu0 %v161
  %580 = vmatpush2.msra.mxu0 %v160
  %581 = vmatprep.subr.mxu0 %v157
  %582 = vmatpush2.msra.mxu0 %v156
  %583 = vmatprep.subr.mxu0 %v153
  %584 = vmatpush2.msra.mxu0 %v152
  %585 = vmatprep.subr.mxu0 %v149
  %586 = vmatpush2.msra.mxu0 %v148
  %587 = vmatprep.subr.mxu0 %v145
  %588 = vmatpush2.msra.mxu0 %v144
  %589 = vmatprep.subr.mxu0 %v141
  %590 = vmatpush2.msra.mxu0 %v140
  %591 = vmatprep.subr.mxu0 %v137
  %592 = vmatpush2.msra.mxu0 %v136
  %593 = vmatprep.subr.mxu0 %v133
  %594 = vmatpush2.msra.mxu0 %v132
  %595 = vmatprep.subr.mxu0 %v129
  %596 = vmatpush2.msra.mxu0 %v128
  %597 = vmatprep.subr.mxu0 %v125
  %598 = vmatpush2.msra.mxu0 %v124
  %599 = vmatprep.subr.mxu0 %v121
  %600 = vmatpush2.msra.mxu0 %v120
  %601 = vmatprep.subr.mxu0 %v117
  %602 = vmatpush2.msra.mxu0 %v116
  %603 = vmatprep.subr.mxu0 %v113
  %604 = vmatpush2.msra.mxu0 %v112
  %605 = vmatprep.subr.mxu0 %v109
  %606 = vmatpush2.msra.mxu0 %v108
  %607 = vmatprep.mubr.f32.mxu0 %v15
  %608 = vmatmul.mubr.f32.gmra.mxu0 %v14
  %v609 = vpop.f32.mrf.mxu0
  %v610 = vadd.f32 0.0, %v609
  %v611 = vpop.f32.mrf.mxu0
  %v612 = vadd.f32 0.0, %v611
  %613 = vmatprep.mubr.f32.mxu0 %v19
  %614 = vmatmul.mubr.f32.gmra.mxu0 %v18
  %v615 = vpop.f32.mrf.mxu0
  %v616 = vadd.f32 0.0, %v615
  %v617 = vpop.f32.mrf.mxu0
  %v618 = vadd.f32 0.0, %v617
  %619 = vmatprep.mubr.f32.mxu0 %v23
  %620 = vmatmul.mubr.f32.gmra.mxu0 %v22
  %v621 = vpop.f32.mrf.mxu0
  %v622 = vadd.f32 0.0, %v621
  %v623 = vpop.f32.mrf.mxu0
  %v624 = vadd.f32 0.0, %v623
  %625 = vmatprep.mubr.f32.mxu0 %v27
  %626 = vmatmul.mubr.f32.gmra.mxu0 %v26
  %v627 = vpop.f32.mrf.mxu0
  %v628 = vadd.f32 0.0, %v627
  %v629 = vpop.f32.mrf.mxu0
  %v630 = vadd.f32 0.0, %v629
  %631 = vmatprep.mubr.f32.mxu0 %v31
  %632 = vmatmul.mubr.f32.gmra.mxu0 %v30
  %v633 = vpop.f32.mrf.mxu0
  %v634 = vadd.f32 0.0, %v633
  %v635 = vpop.f32.mrf.mxu0
  %v636 = vadd.f32 0.0, %v635
  %637 = vmatprep.mubr.f32.mxu0 %v35
  %638 = vmatmul.mubr.f32.gmra.mxu0 %v34
  %v639 = vpop.f32.mrf.mxu0
  %v640 = vadd.f32 0.0, %v639
  %v641 = vpop.f32.mrf.mxu0
  %v642 = vadd.f32 0.0, %v641
  %643 = vmatprep.mubr.f32.mxu0 %v39
  %644 = vmatmul.mubr.f32.gmra.mxu0 %v38
  %v645 = vpop.f32.mrf.mxu0
  %v646 = vadd.f32 0.0, %v645
  %v647 = vpop.f32.mrf.mxu0
  %v648 = vadd.f32 0.0, %v647
  %649 = vdwg.mxu0
  %650 = vmatprep.subr.mxu0 %v233
  %651 = vmatpush1.msra.mxu0 %v232
  %652 = vmatprep.subr.mxu0 %v229
  %653 = vmatpush1.msra.mxu0 %v228
  %654 = vmatprep.subr.mxu0 %v225
  %655 = vmatpush1.msra.mxu0 %v224
  %656 = vmatprep.subr.mxu0 %v221
  %657 = vmatpush1.msra.mxu0 %v220
  %658 = vmatprep.subr.mxu0 %v217
  %659 = vmatpush1.msra.mxu0 %v216
  %660 = vmatprep.subr.mxu0 %v213
  %661 = vmatpush1.msra.mxu0 %v212
  %662 = vmatprep.subr.mxu0 %v209
  %663 = vmatpush1.msra.mxu0 %v208
  %664 = vmatprep.subr.mxu0 %v205
  %665 = vmatpush1.msra.mxu0 %v204
  %666 = vmatprep.subr.mxu0 %v201
  %667 = vmatpush1.msra.mxu0 %v200
  %668 = vmatprep.subr.mxu0 %v197
  %669 = vmatpush1.msra.mxu0 %v196
  %670 = vmatprep.subr.mxu0 %v193
  %671 = vmatpush1.msra.mxu0 %v192
  %672 = vmatprep.subr.mxu0 %v189
  %673 = vmatpush1.msra.mxu0 %v188
  %674 = vmatprep.subr.mxu0 %v185
  %675 = vmatpush1.msra.mxu0 %v184
  %676 = vmatprep.subr.mxu0 %v181
  %677 = vmatpush1.msra.mxu0 %v180
  %678 = vmatprep.subr.mxu0 %v177
  %679 = vmatpush1.msra.mxu0 %v176
  %680 = vmatprep.subr.mxu0 %v173
  %681 = vmatpush1.msra.mxu0 %v172
  %682 = vmatprep.subr.mxu0 0.0
  %683 = vmatpush2.msra.mxu0 0.0
  %684 = vmatprep.subr.mxu0 %v327
  %685 = vmatpush2.msra.mxu0 %v324
  %686 = vmatprep.subr.mxu0 %v289
  %687 = vmatpush2.msra.mxu0 %v288
  %688 = vmatprep.subr.mxu0 %v285
  %689 = vmatpush2.msra.mxu0 %v284
  %690 = vmatprep.subr.mxu0 %v281
  %691 = vmatpush2.msra.mxu0 %v280
  %692 = vmatprep.subr.mxu0 %v277
  %693 = vmatpush2.msra.mxu0 %v276
  %694 = vmatprep.subr.mxu0 %v273
  %695 = vmatpush2.msra.mxu0 %v272
  %696 = vmatprep.subr.mxu0 %v269
  %697 = vmatpush2.msra.mxu0 %v268
  %698 = vmatprep.subr.mxu0 %v265
  %699 = vmatpush2.msra.mxu0 %v264
  %700 = vmatprep.subr.mxu0 %v261
  %701 = vmatpush2.msra.mxu0 %v260
  %702 = vmatprep.subr.mxu0 %v257
  %703 = vmatpush2.msra.mxu0 %v256
  %704 = vmatprep.subr.mxu0 %v253
  %705 = vmatpush2.msra.mxu0 %v252
  %706 = vmatprep.subr.mxu0 %v249
  %707 = vmatpush2.msra.mxu0 %v248
  %708 = vmatprep.subr.mxu0 %v245
  %709 = vmatpush2.msra.mxu0 %v244
  %710 = vmatprep.subr.mxu0 %v241
  %711 = vmatpush2.msra.mxu0 %v240
  %712 = vmatprep.subr.mxu0 %v237
  %713 = vmatpush2.msra.mxu0 %v236
  %714 = vmatprep.mubr.f32.mxu0 %v296
  %715 = vmatmul.mubr.f32.gmra.mxu0 %v16
  %v716 = vpop.f32.mrf.mxu0
  %v717 = vadd.f32 %v610, %v716
  %v718 = vpop.f32.mrf.mxu0
  %v719 = vadd.f32 %v612, %v718
  %720 = vmatprep.mubr.f32.mxu0 %v299
  %721 = vmatmul.mubr.f32.gmra.mxu0 %v20
  %v722 = vpop.f32.mrf.mxu0
  %v723 = vadd.f32 %v616, %v722
  %v724 = vpop.f32.mrf.mxu0
  %v725 = vadd.f32 %v618, %v724
  %726 = vmatprep.mubr.f32.mxu0 %v302
  %727 = vmatmul.mubr.f32.gmra.mxu0 %v24
  %v728 = vpop.f32.mrf.mxu0
  %v729 = vadd.f32 %v622, %v728
  %v730 = vpop.f32.mrf.mxu0
  %v731 = vadd.f32 %v624, %v730
  %732 = vmatprep.mubr.f32.mxu0 %v305
  %733 = vmatmul.mubr.f32.gmra.mxu0 %v28
  %v734 = vpop.f32.mrf.mxu0
  %v735 = vadd.f32 %v628, %v734
  %v736 = vpop.f32.mrf.mxu0
  %v737 = vadd.f32 %v630, %v736
  %738 = vmatprep.mubr.f32.mxu0 %v308
  %739 = vmatmul.mubr.f32.gmra.mxu0 %v32
  %v740 = vpop.f32.mrf.mxu0
  %v741 = vadd.f32 %v634, %v740
  %v742 = vpop.f32.mrf.mxu0
  %v743 = vadd.f32 %v636, %v742
  %744 = vmatprep.mubr.f32.mxu0 %v311
  %745 = vmatmul.mubr.f32.gmra.mxu0 %v36
  %v746 = vpop.f32.mrf.mxu0
  %v747 = vadd.f32 %v640, %v746
  %v748 = vpop.f32.mrf.mxu0
  %v749 = vadd.f32 %v642, %v748
  %750 = vmatprep.mubr.f32.mxu0 %v314
  %751 = vmatmul.mubr.f32.gmra.mxu0 %v40
  %v752 = vpop.f32.mrf.mxu0
  %v753 = vadd.f32 %v646, %v752
  %v754 = vpop.f32.mrf.mxu0
  %v755 = vadd.f32 %v648, %v754
  %756 = vdwg.mxu0
  %s757 = scalar_lea.vmem %s0, 2016
  %v758 = vld [vmem:[%s757] sm:$0xff]
  %v759 = vld [vmem:[%s757 + $0x8] sm:$0xff]
  %v760 = vld [vmem:[%s757 + $0x10] sm:$0xff]
  %v761 = vld [vmem:[%s757 + $0x18] sm:$0xff]
  %v762 = vld [vmem:[%s757 + $0x20] sm:$0xff]
  %v763 = vld [vmem:[%s757 + $0x28] sm:$0xff]
  %v764 = vld [vmem:[%s757 + $0x30] sm:$0xff]
  %v765 = vld [vmem:[%s757 + $0x38] sm:$0xff]
  %v766 = vld [vmem:[%s757 + $0x40] sm:$0xff]
  %v767 = vld [vmem:[%s757 + $0x48] sm:$0xff]
  %v768 = vld [vmem:[%s757 + $0x50] sm:$0xff]
  %v769 = vld [vmem:[%s757 + $0x58] sm:$0xff]
  %v770 = vld [vmem:[%s757 + $0x60] sm:$0xff]
  %v771 = vld [vmem:[%s757 + $0x68] sm:$0xff]
  %v772 = vld [vmem:[%s757 + $0x70] sm:$0xff]
  %v773 = vld [vmem:[%s757 + $0x78] sm:$0xff]
  %v774 = vld [vmem:[%s757 + $0x80] sm:$0xff]
  %v775 = vld [vmem:[%s757 + $0x88] sm:$0xff]
  %v776 = vld [vmem:[%s757 + $0x90] sm:$0xff]
  %v777 = vld [vmem:[%s757 + $0x98] sm:$0xff]
  %v778 = vld [vmem:[%s757 + $0xa0] sm:$0xff]
  %v779 = vld [vmem:[%s757 + $0xa8] sm:$0xff]
  %v780 = vld [vmem:[%s757 + $0xb0] sm:$0xff]
  %v781 = vld [vmem:[%s757 + $0xb8] sm:$0xff]
  %v782 = vld [vmem:[%s757 + $0xc0] sm:$0xff]
  %v783 = vld [vmem:[%s757 + $0xc8] sm:$0xff]
  %v784 = vld [vmem:[%s757 + $0xd0] sm:$0xff]
  %v785 = vld [vmem:[%s757 + $0xd8] sm:$0xff]
  %v786 = vld [vmem:[%s757 + $0xe0] sm:$0xff]
  %v787 = vld [vmem:[%s757 + $0xe8] sm:$0xff]
  %v788 = vld [vmem:[%s757 + $0xf0] sm:$0xff]
  %v789 = vld [vmem:[%s757 + $0xf8] sm:$0xff]
  %v790 = vld [vmem:[%s757 + $0x100] sm:$0xff]
  %v791 = vld [vmem:[%s757 + $0x108] sm:$0xff]
  %v792 = vld [vmem:[%s757 + $0x110] sm:$0xff]
  %v793 = vld [vmem:[%s757 + $0x118] sm:$0xff]
  %v794 = vld [vmem:[%s757 + $0x120] sm:$0xff]
  %v795 = vld [vmem:[%s757 + $0x128] sm:$0xff]
  %v796 = vld [vmem:[%s757 + $0x130] sm:$0xff]
  %v797 = vld [vmem:[%s757 + $0x138] sm:$0xff]
  %v798 = vld [vmem:[%s757 + $0x140] sm:$0xff]
  %v799 = vld [vmem:[%s757 + $0x148] sm:$0xff]
  %v800 = vld [vmem:[%s757 + $0x150] sm:$0xff]
  %v801 = vld [vmem:[%s757 + $0x158] sm:$0xff]
  %v802 = vld [vmem:[%s757 + $0x160] sm:$0xff]
  %v803 = vld [vmem:[%s757 + $0x168] sm:$0xff]
  %v804 = vld [vmem:[%s757 + $0x170] sm:$0xff]
  %v805 = vld [vmem:[%s757 + $0x178] sm:$0xff]
  %v806 = vld [vmem:[%s757 + $0x180] sm:$0xff]
  %v807 = vld [vmem:[%s757 + $0x188] sm:$0xff]
  %v808 = vld [vmem:[%s757 + $0x190] sm:$0xff]
  %v809 = vld [vmem:[%s757 + $0x198] sm:$0xff]
  %v810 = vld [vmem:[%s757 + $0x1a0] sm:$0xff]
  %v811 = vld [vmem:[%s757 + $0x1a8] sm:$0xff]
  %v812 = vld [vmem:[%s757 + $0x1b0] sm:$0xff]
  %v813 = vld [vmem:[%s757 + $0x1b8] sm:$0xff]
  %v814 = vld [vmem:[%s757 + $0x1c0] sm:$0xff]
  %v815 = vld [vmem:[%s757 + $0x1c8] sm:$0xff]
  %v816 = vld [vmem:[%s757 + $0x1d0] sm:$0xff]
  %v817 = vld [vmem:[%s757 + $0x1d8] sm:$0xff]
  %v818 = vld [vmem:[%s757 + $0x1e0] sm:$0xff]
  %v819 = vld [vmem:[%s757 + $0x1e8] sm:$0xff]
  %v820 = vld [vmem:[%s757 + $0x1f0] sm:$0xff]
  %v821 = vld [vmem:[%s757 + $0x1f8] sm:$0xff]
  %v822 = vld [vmem:[%s757 + $0x200] sm:$0xff]
  %v823 = vld [vmem:[%s757 + $0x208] sm:$0xff]
  %v824 = vld [vmem:[%s757 + $0x210] sm:$0xff]
  %v825 = vld [vmem:[%s757 + $0x218] sm:$0xff]
  %v826 = vld [vmem:[%s757 + $0x220] sm:$0xff]
  %v827 = vld [vmem:[%s757 + $0x228] sm:$0xff]
  %v828 = vld [vmem:[%s757 + $0x230] sm:$0xff]
  %v829 = vld [vmem:[%s757 + $0x238] sm:$0xff]
  %v830 = vld [vmem:[%s757 + $0x240] sm:$0xff]
  %v831 = vld [vmem:[%s757 + $0x248] sm:$0xff]
  %v832 = vld [vmem:[%s757 + $0x250] sm:$0xff]
  %v833 = vld [vmem:[%s757 + $0x258] sm:$0xff]
  %v834 = vld [vmem:[%s757 + $0x260] sm:$0xff]
  %v835 = vld [vmem:[%s757 + $0x268] sm:$0xff]
  %v836 = vld [vmem:[%s757 + $0x270] sm:$0xff]
  %v837 = vld [vmem:[%s757 + $0x278] sm:$0xff]
  %v838 = vld [vmem:[%s757 + $0x280] sm:$0xff]
  %v839 = vld [vmem:[%s757 + $0x288] sm:$0xff]
  %v840 = vld [vmem:[%s757 + $0x290] sm:$0xff]
  %v841 = vld [vmem:[%s757 + $0x298] sm:$0xff]
  %v842 = vld [vmem:[%s757 + $0x2a0] sm:$0xff]
  %v843 = vld [vmem:[%s757 + $0x2a8] sm:$0xff]
  %v844 = vld [vmem:[%s757 + $0x2b0] sm:$0xff]
  %v845 = vld [vmem:[%s757 + $0x2b8] sm:$0xff]
  %v846 = vld [vmem:[%s757 + $0x2c0] sm:$0xff]
  %v847 = vld [vmem:[%s757 + $0x2c8] sm:$0xff]
  %v848 = vld [vmem:[%s757 + $0x2d0] sm:$0xff]
  %v849 = vld [vmem:[%s757 + $0x2d8] sm:$0xff]
  %v850 = vld [vmem:[%s757 + $0x2e0] sm:$0xff]
  %v851 = vld [vmem:[%s757 + $0x2e8] sm:$0xff]
  %v852 = vld [vmem:[%s757 + $0x2f0] sm:$0xff]
  %v853 = vld [vmem:[%s757 + $0x2f8] sm:$0xff]
  %v854 = vld [vmem:[%s757 + $0x300] sm:$0xff]
  %v855 = vld [vmem:[%s757 + $0x308] sm:$0xff]
  %v856 = vld [vmem:[%s757 + $0x310] sm:$0xff]
  %v857 = vld [vmem:[%s757 + $0x318] sm:$0xff]
  %v858 = vld [vmem:[%s757 + $0x320] sm:$0xff]
  %v859 = vld [vmem:[%s757 + $0x328] sm:$0xff]
  %v860 = vld [vmem:[%s757 + $0x330] sm:$0xff]
  %v861 = vld [vmem:[%s757 + $0x338] sm:$0xff]
  %v862 = vld [vmem:[%s757 + $0x340] sm:$0xff]
  %v863 = vld [vmem:[%s757 + $0x348] sm:$0xff]
  %v864 = vld [vmem:[%s757 + $0x350] sm:$0xff]
  %v865 = vld [vmem:[%s757 + $0x358] sm:$0xff]
  %v866 = vld [vmem:[%s757 + $0x360] sm:$0xff]
  %v867 = vld [vmem:[%s757 + $0x368] sm:$0xff]
  %v868 = vld [vmem:[%s757 + $0x370] sm:$0xff]
  %v869 = vld [vmem:[%s757 + $0x378] sm:$0xff]
  %v870 = vld [vmem:[%s757 + $0x380] sm:$0xff]
  %v871 = vld [vmem:[%s757 + $0x388] sm:$0xff]
  %v872 = vld [vmem:[%s757 + $0x390] sm:$0xff]
  %v873 = vld [vmem:[%s757 + $0x398] sm:$0xff]
  %v874 = vld [vmem:[%s757 + $0x3a0] sm:$0xff]
  %v875 = vld [vmem:[%s757 + $0x3a8] sm:$0xff]
  %v876 = vld [vmem:[%s757 + $0x3b0] sm:$0xff]
  %v877 = vld [vmem:[%s757 + $0x3b8] sm:$0xff]
  %v878 = vld [vmem:[%s757 + $0x3c0] sm:$0xff]
  %v879 = vld [vmem:[%s757 + $0x3c8] sm:$0xff]
  %v880 = vld [vmem:[%s757 + $0x3d0] sm:$0xff]
  %v881 = vld [vmem:[%s757 + $0x3d8] sm:$0xff]
  %v882 = vld [vmem:[%s757 + $0x3e0] sm:$0xff]
  %v883 = vld [vmem:[%s757 + $0x3e8] sm:$0xff]
  %v884 = vld [vmem:[%s757 + $0x3f0] sm:$0xff]
  %v885 = vld [vmem:[%s757 + $0x3f8] sm:$0xff]
  %v886 = vld [vmem:[%s757 + $0x400] sm:$0xff]
  %v887 = vld [vmem:[%s757 + $0x408] sm:$0xff]
  %v888 = vld [vmem:[%s757 + $0x410] sm:$0xff]
  %v889 = vld [vmem:[%s757 + $0x418] sm:$0xff]
  %v890 = vld [vmem:[%s757 + $0x420] sm:$0xff]
  %v891 = vld [vmem:[%s757 + $0x428] sm:$0xff]
  %v892 = vld [vmem:[%s757 + $0x430] sm:$0xff]
  %v893 = vld [vmem:[%s757 + $0x438] sm:$0xff]
  %v894 = vld [vmem:[%s757 + $0x440] sm:$0xff]
  %v895 = vld [vmem:[%s757 + $0x448] sm:$0xff]
  %v896 = vld [vmem:[%s757 + $0x450] sm:$0xff]
  %v897 = vld [vmem:[%s757 + $0x458] sm:$0xff]
  %v898 = vld [vmem:[%s757 + $0x460] sm:$0xff]
  %v899 = vld [vmem:[%s757 + $0x468] sm:$0xff]
  %v900 = vld [vmem:[%s757 + $0x470] sm:$0xff]
  %v901 = vld [vmem:[%s757 + $0x478] sm:$0xff]
  %v902 = vld [vmem:[%s757 + $0x480] sm:$0xff]
  %v903 = vld [vmem:[%s757 + $0x488] sm:$0xff]
  %v904 = vld [vmem:[%s757 + $0x490] sm:$0xff]
  %v905 = vld [vmem:[%s757 + $0x498] sm:$0xff]
  %v906 = vld [vmem:[%s757 + $0x4a0] sm:$0xff]
  %v907 = vld [vmem:[%s757 + $0x4a8] sm:$0xff]
  %v908 = vld [vmem:[%s757 + $0x4b0] sm:$0xff]
  %v909 = vld [vmem:[%s757 + $0x4b8] sm:$0xff]
  %v910 = vld [vmem:[%s757 + $0x4c0] sm:$0xff]
  %v911 = vld [vmem:[%s757 + $0x4c8] sm:$0xff]
  %v912 = vld [vmem:[%s757 + $0x4d0] sm:$0xff]
  %v913 = vld [vmem:[%s757 + $0x4d8] sm:$0xff]
  %v914 = vld [vmem:[%s757 + $0x4e0] sm:$0xff]
  %v915 = vld [vmem:[%s757 + $0x4e8] sm:$0xff]
  %v916 = vld [vmem:[%s757 + $0x4f0] sm:$0xff]
  %v917 = vld [vmem:[%s757 + $0x4f8] sm:$0xff]
  %v918 = vld [vmem:[%s757 + $0x500] sm:$0xff]
  %v919 = vld [vmem:[%s757 + $0x508] sm:$0xff]
  %v920 = vld [vmem:[%s757 + $0x510] sm:$0xff]
  %v921 = vld [vmem:[%s757 + $0x518] sm:$0xff]
  %v922 = vld [vmem:[%s757 + $0x520] sm:$0xff]
  %v923 = vld [vmem:[%s757 + $0x528] sm:$0xff]
  %v924 = vld [vmem:[%s757 + $0x530] sm:$0xff]
  %v925 = vld [vmem:[%s757 + $0x538] sm:$0xff]
  %v926 = vld [vmem:[%s757 + $0x540] sm:$0xff]
  %v927 = vld [vmem:[%s757 + $0x548] sm:$0xff]
  %v928 = vld [vmem:[%s757 + $0x550] sm:$0xff]
  %v929 = vld [vmem:[%s757 + $0x558] sm:$0xff]
  %v930 = vld [vmem:[%s757 + $0x560] sm:$0xff]
  %v931 = vld [vmem:[%s757 + $0x568] sm:$0xff]
  %v932 = vld [vmem:[%s757 + $0x570] sm:$0xff]
  %v933 = vld [vmem:[%s757 + $0x578] sm:$0xff]
  %v934 = vld [vmem:[%s757 + $0x580] sm:$0xff]
  %v935 = vld [vmem:[%s757 + $0x588] sm:$0xff]
  %v936 = vld [vmem:[%s757 + $0x590] sm:$0xff]
  %v937 = vld [vmem:[%s757 + $0x598] sm:$0xff]
  %v938 = vld [vmem:[%s757 + $0x5a0] sm:$0xff]
  %v939 = vld [vmem:[%s757 + $0x5a8] sm:$0xff]
  %v940 = vld [vmem:[%s757 + $0x5b0] sm:$0xff]
  %v941 = vld [vmem:[%s757 + $0x5b8] sm:$0xff]
  %v942 = vld [vmem:[%s757 + $0x5c0] sm:$0xff]
  %v943 = vld [vmem:[%s757 + $0x5c8] sm:$0xff]
  %v944 = vld [vmem:[%s757 + $0x5d0] sm:$0xff]
  %v945 = vld [vmem:[%s757 + $0x5d8] sm:$0xff]
  %v946 = vld [vmem:[%s757 + $0x5e0] sm:$0xff]
  %v947 = vld [vmem:[%s757 + $0x5e8] sm:$0xff]
  %v948 = vld [vmem:[%s757 + $0x5f0] sm:$0xff]
  %v949 = vld [vmem:[%s757 + $0x5f8] sm:$0xff]
  %v950 = vld [vmem:[%s757 + $0x600] sm:$0xff]
  %v951 = vld [vmem:[%s757 + $0x608] sm:$0xff]
  %v952 = vld [vmem:[%s757 + $0x610] sm:$0xff]
  %v953 = vld [vmem:[%s757 + $0x618] sm:$0xff]
  %v954 = vld [vmem:[%s757 + $0x620] sm:$0xff]
  %v955 = vld [vmem:[%s757 + $0x628] sm:$0xff]
  %v956 = vld [vmem:[%s757 + $0x630] sm:$0xff]
  %v957 = vld [vmem:[%s757 + $0x638] sm:$0xff]
  %v958 = vld [vmem:[%s757 + $0x640] sm:$0xff]
  %v959 = vld [vmem:[%s757 + $0x648] sm:$0xff]
  %v960 = vld [vmem:[%s757 + $0x650] sm:$0xff]
  %v961 = vld [vmem:[%s757 + $0x658] sm:$0xff]
  %v962 = vld [vmem:[%s757 + $0x660] sm:$0xff]
  %v963 = vld [vmem:[%s757 + $0x668] sm:$0xff]
  %v964 = vld [vmem:[%s757 + $0x670] sm:$0xff]
  %v965 = vld [vmem:[%s757 + $0x678] sm:$0xff]
  %v966 = vld [vmem:[%s757 + $0x680] sm:$0xff]
  %v967 = vld [vmem:[%s757 + $0x688] sm:$0xff]
  %v968 = vld [vmem:[%s757 + $0x690] sm:$0xff]
  %v969 = vld [vmem:[%s757 + $0x698] sm:$0xff]
  %v970 = vld [vmem:[%s757 + $0x6a0] sm:$0xff]
  %v971 = vld [vmem:[%s757 + $0x6a8] sm:$0xff]
  %v972 = vld [vmem:[%s757 + $0x6b0] sm:$0xff]
  %v973 = vld [vmem:[%s757 + $0x6b8] sm:$0xff]
  %v974 = vld [vmem:[%s757 + $0x6c0] sm:$0xff]
  %v975 = vld [vmem:[%s757 + $0x6c8] sm:$0xff]
  %v976 = vld [vmem:[%s757 + $0x6d0] sm:$0xff]
  %v977 = vld [vmem:[%s757 + $0x6d8] sm:$0xff]
  %v978 = vld [vmem:[%s757 + $0x6e0] sm:$0xff]
  %v979 = vld [vmem:[%s757 + $0x6e8] sm:$0xff]
  %v980 = vld [vmem:[%s757 + $0x6f0] sm:$0xff]
  %v981 = vld [vmem:[%s757 + $0x6f8] sm:$0xff]
  %v982 = vld [vmem:[%s757 + $0x700] sm:$0xff]
  %v983 = vld [vmem:[%s757 + $0x708] sm:$0xff]
  %v984 = vld [vmem:[%s757 + $0x710] sm:$0xff]
  %v985 = vld [vmem:[%s757 + $0x718] sm:$0xff]
  %v986 = vld [vmem:[%s757 + $0x720] sm:$0xff]
  %v987 = vld [vmem:[%s757 + $0x728] sm:$0xff]
  %v988 = vld [vmem:[%s757 + $0x730] sm:$0xff]
  %v989 = vld [vmem:[%s757 + $0x738] sm:$0xff]
  %v990 = vld [vmem:[%s757 + $0x740] sm:$0xff]
  %v991 = vld [vmem:[%s757 + $0x748] sm:$0xff]
  %v992 = vld [vmem:[%s757 + $0x750] sm:$0xff]
  %v993 = vld [vmem:[%s757 + $0x758] sm:$0xff]
  %v994 = vld [vmem:[%s757 + $0x760] sm:$0xff]
  %v995 = vld [vmem:[%s757 + $0x768] sm:$0xff]
  %v996 = vld [vmem:[%s757 + $0x770] sm:$0xff]
  %v997 = vld [vmem:[%s757 + $0x778] sm:$0xff]
  %v998 = vld [vmem:[%s757 + $0x780] sm:$0xff]
  %v999 = vld [vmem:[%s757 + $0x788] sm:$0xff]
  %v1000 = vld [vmem:[%s757 + $0x790] sm:$0xff]
  %v1001 = vld [vmem:[%s757 + $0x798] sm:$0xff]
  %v1002 = vld [vmem:[%s757 + $0x7a0] sm:$0xff]
  %v1003 = vld [vmem:[%s757 + $0x7a8] sm:$0xff]
  %v1004 = vld [vmem:[%s757 + $0x7b0] sm:$0xff]
  %v1005 = vld [vmem:[%s757 + $0x7b8] sm:$0xff]
  %v1006 = vld [vmem:[%s757 + $0x7c0] sm:$0xf]
  %v1007 = vld [vmem:[%s757 + $0x7c8] sm:$0xf]
  %v1008 = vld [vmem:[%s757 + $0x7d0] sm:$0xf]
  %v1009 = vld [vmem:[%s757 + $0x7d8] sm:$0xf]
  %v1011 = vsel %vm316, %v1006, 0
  %v1014 = vsel %vm316, %v1007, 0
  %v1017 = vsel %vm316, %v1008, 0
  %v1020 = vsel %vm316, %v1009, 0
  %1022 = vmatprep.subr.mxu0 %v819
  %1023 = vmatpush1.msra.mxu0 %v818
  %1024 = vmatprep.subr.mxu0 %v815
  %1025 = vmatpush1.msra.mxu0 %v814
  %1026 = vmatprep.subr.mxu0 %v811
  %1027 = vmatpush1.msra.mxu0 %v810
  %1028 = vmatprep.subr.mxu0 %v807
  %1029 = vmatpush1.msra.mxu0 %v806
  %1030 = vmatprep.subr.mxu0 %v803
  %1031 = vmatpush1.msra.mxu0 %v802
  %1032 = vmatprep.subr.mxu0 %v799
  %1033 = vmatpush1.msra.mxu0 %v798
  %1034 = vmatprep.subr.mxu0 %v795
  %1035 = vmatpush1.msra.mxu0 %v794
  %1036 = vmatprep.subr.mxu0 %v791
  %1037 = vmatpush1.msra.mxu0 %v790
  %1038 = vmatprep.subr.mxu0 %v787
  %1039 = vmatpush1.msra.mxu0 %v786
  %1040 = vmatprep.subr.mxu0 %v783
  %1041 = vmatpush1.msra.mxu0 %v782
  %1042 = vmatprep.subr.mxu0 %v779
  %1043 = vmatpush1.msra.mxu0 %v778
  %1044 = vmatprep.subr.mxu0 %v775
  %1045 = vmatpush1.msra.mxu0 %v774
  %1046 = vmatprep.subr.mxu0 %v771
  %1047 = vmatpush1.msra.mxu0 %v770
  %1048 = vmatprep.subr.mxu0 %v767
  %1049 = vmatpush1.msra.mxu0 %v766
  %1050 = vmatprep.subr.mxu0 %v763
  %1051 = vmatpush1.msra.mxu0 %v762
  %1052 = vmatprep.subr.mxu0 %v759
  %1053 = vmatpush1.msra.mxu0 %v758
  %1054 = vmatprep.subr.mxu0 %v883
  %1055 = vmatpush2.msra.mxu0 %v882
  %1056 = vmatprep.subr.mxu0 %v879
  %1057 = vmatpush2.msra.mxu0 %v878
  %1058 = vmatprep.subr.mxu0 %v875
  %1059 = vmatpush2.msra.mxu0 %v874
  %1060 = vmatprep.subr.mxu0 %v871
  %1061 = vmatpush2.msra.mxu0 %v870
  %1062 = vmatprep.subr.mxu0 %v867
  %1063 = vmatpush2.msra.mxu0 %v866
  %1064 = vmatprep.subr.mxu0 %v863
  %1065 = vmatpush2.msra.mxu0 %v862
  %1066 = vmatprep.subr.mxu0 %v859
  %1067 = vmatpush2.msra.mxu0 %v858
  %1068 = vmatprep.subr.mxu0 %v855
  %1069 = vmatpush2.msra.mxu0 %v854
  %1070 = vmatprep.subr.mxu0 %v851
  %1071 = vmatpush2.msra.mxu0 %v850
  %1072 = vmatprep.subr.mxu0 %v847
  %1073 = vmatpush2.msra.mxu0 %v846
  %1074 = vmatprep.subr.mxu0 %v843
  %1075 = vmatpush2.msra.mxu0 %v842
  %1076 = vmatprep.subr.mxu0 %v839
  %1077 = vmatpush2.msra.mxu0 %v838
  %1078 = vmatprep.subr.mxu0 %v835
  %1079 = vmatpush2.msra.mxu0 %v834
  %1080 = vmatprep.subr.mxu0 %v831
  %1081 = vmatpush2.msra.mxu0 %v830
  %1082 = vmatprep.subr.mxu0 %v827
  %1083 = vmatpush2.msra.mxu0 %v826
  %1084 = vmatprep.subr.mxu0 %v823
  %1085 = vmatpush2.msra.mxu0 %v822
  %1086 = vmatprep.mubr.f32.mxu0 %v15
  %1087 = vmatmul.mubr.f32.gmra.mxu0 %v14
  %v1088 = vpop.f32.mrf.mxu0
  %v1089 = vadd.f32 0.0, %v1088
  %v1090 = vpop.f32.mrf.mxu0
  %v1091 = vadd.f32 0.0, %v1090
  %1092 = vmatprep.mubr.f32.mxu0 %v19
  %1093 = vmatmul.mubr.f32.gmra.mxu0 %v18
  %v1094 = vpop.f32.mrf.mxu0
  %v1095 = vadd.f32 0.0, %v1094
  %v1096 = vpop.f32.mrf.mxu0
  %v1097 = vadd.f32 0.0, %v1096
  %1098 = vmatprep.mubr.f32.mxu0 %v23
  %1099 = vmatmul.mubr.f32.gmra.mxu0 %v22
  %v1100 = vpop.f32.mrf.mxu0
  %v1101 = vadd.f32 0.0, %v1100
  %v1102 = vpop.f32.mrf.mxu0
  %v1103 = vadd.f32 0.0, %v1102
  %1104 = vmatprep.mubr.f32.mxu0 %v27
  %1105 = vmatmul.mubr.f32.gmra.mxu0 %v26
  %v1106 = vpop.f32.mrf.mxu0
  %v1107 = vadd.f32 0.0, %v1106
  %v1108 = vpop.f32.mrf.mxu0
  %v1109 = vadd.f32 0.0, %v1108
  %1110 = vmatprep.mubr.f32.mxu0 %v31
  %1111 = vmatmul.mubr.f32.gmra.mxu0 %v30
  %v1112 = vpop.f32.mrf.mxu0
  %v1113 = vadd.f32 0.0, %v1112
  %v1114 = vpop.f32.mrf.mxu0
  %v1115 = vadd.f32 0.0, %v1114
  %1116 = vmatprep.mubr.f32.mxu0 %v35
  %1117 = vmatmul.mubr.f32.gmra.mxu0 %v34
  %v1118 = vpop.f32.mrf.mxu0
  %v1119 = vadd.f32 0.0, %v1118
  %v1120 = vpop.f32.mrf.mxu0
  %v1121 = vadd.f32 0.0, %v1120
  %1122 = vmatprep.mubr.f32.mxu0 %v39
  %1123 = vmatmul.mubr.f32.gmra.mxu0 %v38
  %v1124 = vpop.f32.mrf.mxu0
  %v1125 = vadd.f32 0.0, %v1124
  %v1126 = vpop.f32.mrf.mxu0
  %v1127 = vadd.f32 0.0, %v1126
  %1128 = vdwg.mxu0
  %1129 = vmatprep.subr.mxu0 %v947
  %1130 = vmatpush1.msra.mxu0 %v946
  %1131 = vmatprep.subr.mxu0 %v943
  %1132 = vmatpush1.msra.mxu0 %v942
  %1133 = vmatprep.subr.mxu0 %v939
  %1134 = vmatpush1.msra.mxu0 %v938
  %1135 = vmatprep.subr.mxu0 %v935
  %1136 = vmatpush1.msra.mxu0 %v934
  %1137 = vmatprep.subr.mxu0 %v931
  %1138 = vmatpush1.msra.mxu0 %v930
  %1139 = vmatprep.subr.mxu0 %v927
  %1140 = vmatpush1.msra.mxu0 %v926
  %1141 = vmatprep.subr.mxu0 %v923
  %1142 = vmatpush1.msra.mxu0 %v922
  %1143 = vmatprep.subr.mxu0 %v919
  %1144 = vmatpush1.msra.mxu0 %v918
  %1145 = vmatprep.subr.mxu0 %v915
  %1146 = vmatpush1.msra.mxu0 %v914
  %1147 = vmatprep.subr.mxu0 %v911
  %1148 = vmatpush1.msra.mxu0 %v910
  %1149 = vmatprep.subr.mxu0 %v907
  %1150 = vmatpush1.msra.mxu0 %v906
  %1151 = vmatprep.subr.mxu0 %v903
  %1152 = vmatpush1.msra.mxu0 %v902
  %1153 = vmatprep.subr.mxu0 %v899
  %1154 = vmatpush1.msra.mxu0 %v898
  %1155 = vmatprep.subr.mxu0 %v895
  %1156 = vmatpush1.msra.mxu0 %v894
  %1157 = vmatprep.subr.mxu0 %v891
  %1158 = vmatpush1.msra.mxu0 %v890
  %1159 = vmatprep.subr.mxu0 %v887
  %1160 = vmatpush1.msra.mxu0 %v886
  %1161 = vmatprep.subr.mxu0 0.0
  %1162 = vmatpush2.msra.mxu0 0.0
  %1163 = vmatprep.subr.mxu0 %v1014
  %1164 = vmatpush2.msra.mxu0 %v1011
  %1165 = vmatprep.subr.mxu0 %v1003
  %1166 = vmatpush2.msra.mxu0 %v1002
  %1167 = vmatprep.subr.mxu0 %v999
  %1168 = vmatpush2.msra.mxu0 %v998
  %1169 = vmatprep.subr.mxu0 %v995
  %1170 = vmatpush2.msra.mxu0 %v994
  %1171 = vmatprep.subr.mxu0 %v991
  %1172 = vmatpush2.msra.mxu0 %v990
  %1173 = vmatprep.subr.mxu0 %v987
  %1174 = vmatpush2.msra.mxu0 %v986
  %1175 = vmatprep.subr.mxu0 %v983
  %1176 = vmatpush2.msra.mxu0 %v982
  %1177 = vmatprep.subr.mxu0 %v979
  %1178 = vmatpush2.msra.mxu0 %v978
  %1179 = vmatprep.subr.mxu0 %v975
  %1180 = vmatpush2.msra.mxu0 %v974
  %1181 = vmatprep.subr.mxu0 %v971
  %1182 = vmatpush2.msra.mxu0 %v970
  %1183 = vmatprep.subr.mxu0 %v967
  %1184 = vmatpush2.msra.mxu0 %v966
  %1185 = vmatprep.subr.mxu0 %v963
  %1186 = vmatpush2.msra.mxu0 %v962
  %1187 = vmatprep.subr.mxu0 %v959
  %1188 = vmatpush2.msra.mxu0 %v958
  %1189 = vmatprep.subr.mxu0 %v955
  %1190 = vmatpush2.msra.mxu0 %v954
  %1191 = vmatprep.subr.mxu0 %v951
  %1192 = vmatpush2.msra.mxu0 %v950
  %1193 = vmatprep.mubr.f32.mxu0 %v296
  %1194 = vmatmul.mubr.f32.gmra.mxu0 %v16
  %v1195 = vpop.f32.mrf.mxu0
  %v1196 = vadd.f32 %v1089, %v1195
  %v1197 = vpop.f32.mrf.mxu0
  %v1198 = vadd.f32 %v1091, %v1197
  %1199 = vmatprep.mubr.f32.mxu0 %v299
  %1200 = vmatmul.mubr.f32.gmra.mxu0 %v20
  %v1201 = vpop.f32.mrf.mxu0
  %v1202 = vadd.f32 %v1095, %v1201
  %v1203 = vpop.f32.mrf.mxu0
  %v1204 = vadd.f32 %v1097, %v1203
  %1205 = vmatprep.mubr.f32.mxu0 %v302
  %1206 = vmatmul.mubr.f32.gmra.mxu0 %v24
  %v1207 = vpop.f32.mrf.mxu0
  %v1208 = vadd.f32 %v1101, %v1207
  %v1209 = vpop.f32.mrf.mxu0
  %v1210 = vadd.f32 %v1103, %v1209
  %1211 = vmatprep.mubr.f32.mxu0 %v305
  %1212 = vmatmul.mubr.f32.gmra.mxu0 %v28
  %v1213 = vpop.f32.mrf.mxu0
  %v1214 = vadd.f32 %v1107, %v1213
  %v1215 = vpop.f32.mrf.mxu0
  %v1216 = vadd.f32 %v1109, %v1215
  %1217 = vmatprep.mubr.f32.mxu0 %v308
  %1218 = vmatmul.mubr.f32.gmra.mxu0 %v32
  %v1219 = vpop.f32.mrf.mxu0
  %v1220 = vadd.f32 %v1113, %v1219
  %v1221 = vpop.f32.mrf.mxu0
  %v1222 = vadd.f32 %v1115, %v1221
  %1223 = vmatprep.mubr.f32.mxu0 %v311
  %1224 = vmatmul.mubr.f32.gmra.mxu0 %v36
  %v1225 = vpop.f32.mrf.mxu0
  %v1226 = vadd.f32 %v1119, %v1225
  %v1227 = vpop.f32.mrf.mxu0
  %v1228 = vadd.f32 %v1121, %v1227
  %1229 = vmatprep.mubr.f32.mxu0 %v314
  %1230 = vmatmul.mubr.f32.gmra.mxu0 %v40
  %v1231 = vpop.f32.mrf.mxu0
  %v1232 = vadd.f32 %v1125, %v1231
  %v1233 = vpop.f32.mrf.mxu0
  %v1234 = vadd.f32 %v1127, %v1233
  %1235 = vdwg.mxu0
  %1236 = vmatprep.subr.mxu0 %v821
  %1237 = vmatpush1.msra.mxu0 %v820
  %1238 = vmatprep.subr.mxu0 %v817
  %1239 = vmatpush1.msra.mxu0 %v816
  %1240 = vmatprep.subr.mxu0 %v813
  %1241 = vmatpush1.msra.mxu0 %v812
  %1242 = vmatprep.subr.mxu0 %v809
  %1243 = vmatpush1.msra.mxu0 %v808
  %1244 = vmatprep.subr.mxu0 %v805
  %1245 = vmatpush1.msra.mxu0 %v804
  %1246 = vmatprep.subr.mxu0 %v801
  %1247 = vmatpush1.msra.mxu0 %v800
  %1248 = vmatprep.subr.mxu0 %v797
  %1249 = vmatpush1.msra.mxu0 %v796
  %1250 = vmatprep.subr.mxu0 %v793
  %1251 = vmatpush1.msra.mxu0 %v792
  %1252 = vmatprep.subr.mxu0 %v789
  %1253 = vmatpush1.msra.mxu0 %v788
  %1254 = vmatprep.subr.mxu0 %v785
  %1255 = vmatpush1.msra.mxu0 %v784
  %1256 = vmatprep.subr.mxu0 %v781
  %1257 = vmatpush1.msra.mxu0 %v780
  %1258 = vmatprep.subr.mxu0 %v777
  %1259 = vmatpush1.msra.mxu0 %v776
  %1260 = vmatprep.subr.mxu0 %v773
  %1261 = vmatpush1.msra.mxu0 %v772
  %1262 = vmatprep.subr.mxu0 %v769
  %1263 = vmatpush1.msra.mxu0 %v768
  %1264 = vmatprep.subr.mxu0 %v765
  %1265 = vmatpush1.msra.mxu0 %v764
  %1266 = vmatprep.subr.mxu0 %v761
  %1267 = vmatpush1.msra.mxu0 %v760
  %1268 = vmatprep.subr.mxu0 %v885
  %1269 = vmatpush2.msra.mxu0 %v884
  %1270 = vmatprep.subr.mxu0 %v881
  %1271 = vmatpush2.msra.mxu0 %v880
  %1272 = vmatprep.subr.mxu0 %v877
  %1273 = vmatpush2.msra.mxu0 %v876
  %1274 = vmatprep.subr.mxu0 %v873
  %1275 = vmatpush2.msra.mxu0 %v872
  %1276 = vmatprep.subr.mxu0 %v869
  %1277 = vmatpush2.msra.mxu0 %v868
  %1278 = vmatprep.subr.mxu0 %v865
  %1279 = vmatpush2.msra.mxu0 %v864
  %1280 = vmatprep.subr.mxu0 %v861
  %1281 = vmatpush2.msra.mxu0 %v860
  %1282 = vmatprep.subr.mxu0 %v857
  %1283 = vmatpush2.msra.mxu0 %v856
  %1284 = vmatprep.subr.mxu0 %v853
  %1285 = vmatpush2.msra.mxu0 %v852
  %1286 = vmatprep.subr.mxu0 %v849
  %1287 = vmatpush2.msra.mxu0 %v848
  %1288 = vmatprep.subr.mxu0 %v845
  %1289 = vmatpush2.msra.mxu0 %v844
  %1290 = vmatprep.subr.mxu0 %v841
  %1291 = vmatpush2.msra.mxu0 %v840
  %1292 = vmatprep.subr.mxu0 %v837
  %1293 = vmatpush2.msra.mxu0 %v836
  %1294 = vmatprep.subr.mxu0 %v833
  %1295 = vmatpush2.msra.mxu0 %v832
  %1296 = vmatprep.subr.mxu0 %v829
  %1297 = vmatpush2.msra.mxu0 %v828
  %1298 = vmatprep.subr.mxu0 %v825
  %1299 = vmatpush2.msra.mxu0 %v824
  %1300 = vmatprep.mubr.f32.mxu0 %v15
  %1301 = vmatmul.mubr.f32.gmra.mxu0 %v14
  %v1302 = vpop.f32.mrf.mxu0
  %v1303 = vadd.f32 0.0, %v1302
  %v1304 = vpop.f32.mrf.mxu0
  %v1305 = vadd.f32 0.0, %v1304
  %1306 = vmatprep.mubr.f32.mxu0 %v19
  %1307 = vmatmul.mubr.f32.gmra.mxu0 %v18
  %v1308 = vpop.f32.mrf.mxu0
  %v1309 = vadd.f32 0.0, %v1308
  %v1310 = vpop.f32.mrf.mxu0
  %v1311 = vadd.f32 0.0, %v1310
  %1312 = vmatprep.mubr.f32.mxu0 %v23
  %1313 = vmatmul.mubr.f32.gmra.mxu0 %v22
  %v1314 = vpop.f32.mrf.mxu0
  %v1315 = vadd.f32 0.0, %v1314
  %v1316 = vpop.f32.mrf.mxu0
  %v1317 = vadd.f32 0.0, %v1316
  %1318 = vmatprep.mubr.f32.mxu0 %v27
  %1319 = vmatmul.mubr.f32.gmra.mxu0 %v26
  %v1320 = vpop.f32.mrf.mxu0
  %v1321 = vadd.f32 0.0, %v1320
  %v1322 = vpop.f32.mrf.mxu0
  %v1323 = vadd.f32 0.0, %v1322
  %1324 = vmatprep.mubr.f32.mxu0 %v31
  %1325 = vmatmul.mubr.f32.gmra.mxu0 %v30
  %v1326 = vpop.f32.mrf.mxu0
  %v1327 = vadd.f32 0.0, %v1326
  %v1328 = vpop.f32.mrf.mxu0
  %v1329 = vadd.f32 0.0, %v1328
  %1330 = vmatprep.mubr.f32.mxu0 %v35
  %1331 = vmatmul.mubr.f32.gmra.mxu0 %v34
  %v1332 = vpop.f32.mrf.mxu0
  %v1333 = vadd.f32 0.0, %v1332
  %v1334 = vpop.f32.mrf.mxu0
  %v1335 = vadd.f32 0.0, %v1334
  %1336 = vmatprep.mubr.f32.mxu0 %v39
  %1337 = vmatmul.mubr.f32.gmra.mxu0 %v38
  %v1338 = vpop.f32.mrf.mxu0
  %v1339 = vadd.f32 0.0, %v1338
  %v1340 = vpop.f32.mrf.mxu0
  %v1341 = vadd.f32 0.0, %v1340
  %1342 = vdwg.mxu0
  %1343 = vmatprep.subr.mxu0 %v949
  %1344 = vmatpush1.msra.mxu0 %v948
  %1345 = vmatprep.subr.mxu0 %v945
  %1346 = vmatpush1.msra.mxu0 %v944
  %1347 = vmatprep.subr.mxu0 %v941
  %1348 = vmatpush1.msra.mxu0 %v940
  %1349 = vmatprep.subr.mxu0 %v937
  %1350 = vmatpush1.msra.mxu0 %v936
  %1351 = vmatprep.subr.mxu0 %v933
  %1352 = vmatpush1.msra.mxu0 %v932
  %1353 = vmatprep.subr.mxu0 %v929
  %1354 = vmatpush1.msra.mxu0 %v928
  %1355 = vmatprep.subr.mxu0 %v925
  %1356 = vmatpush1.msra.mxu0 %v924
  %1357 = vmatprep.subr.mxu0 %v921
  %1358 = vmatpush1.msra.mxu0 %v920
  %1359 = vmatprep.subr.mxu0 %v917
  %1360 = vmatpush1.msra.mxu0 %v916
  %1361 = vmatprep.subr.mxu0 %v913
  %1362 = vmatpush1.msra.mxu0 %v912
  %1363 = vmatprep.subr.mxu0 %v909
  %1364 = vmatpush1.msra.mxu0 %v908
  %1365 = vmatprep.subr.mxu0 %v905
  %1366 = vmatpush1.msra.mxu0 %v904
  %1367 = vmatprep.subr.mxu0 %v901
  %1368 = vmatpush1.msra.mxu0 %v900
  %1369 = vmatprep.subr.mxu0 %v897
  %1370 = vmatpush1.msra.mxu0 %v896
  %1371 = vmatprep.subr.mxu0 %v893
  %1372 = vmatpush1.msra.mxu0 %v892
  %1373 = vmatprep.subr.mxu0 %v889
  %1374 = vmatpush1.msra.mxu0 %v888
  %1375 = vmatprep.subr.mxu0 0.0
  %1376 = vmatpush2.msra.mxu0 0.0
  %1377 = vmatprep.subr.mxu0 %v1020
  %1378 = vmatpush2.msra.mxu0 %v1017
  %1379 = vmatprep.subr.mxu0 %v1005
  %1380 = vmatpush2.msra.mxu0 %v1004
  %1381 = vmatprep.subr.mxu0 %v1001
  %1382 = vmatpush2.msra.mxu0 %v1000
  %1383 = vmatprep.subr.mxu0 %v997
  %1384 = vmatpush2.msra.mxu0 %v996
  %1385 = vmatprep.subr.mxu0 %v993
  %1386 = vmatpush2.msra.mxu0 %v992
  %1387 = vmatprep.subr.mxu0 %v989
  %1388 = vmatpush2.msra.mxu0 %v988
  %1389 = vmatprep.subr.mxu0 %v985
  %1390 = vmatpush2.msra.mxu0 %v984
  %1391 = vmatprep.subr.mxu0 %v981
  %1392 = vmatpush2.msra.mxu0 %v980
  %1393 = vmatprep.subr.mxu0 %v977
  %1394 = vmatpush2.msra.mxu0 %v976
  %1395 = vmatprep.subr.mxu0 %v973
  %1396 = vmatpush2.msra.mxu0 %v972
  %1397 = vmatprep.subr.mxu0 %v969
  %1398 = vmatpush2.msra.mxu0 %v968
  %1399 = vmatprep.subr.mxu0 %v965
  %1400 = vmatpush2.msra.mxu0 %v964
  %1401 = vmatprep.subr.mxu0 %v961
  %1402 = vmatpush2.msra.mxu0 %v960
  %1403 = vmatprep.subr.mxu0 %v957
  %1404 = vmatpush2.msra.mxu0 %v956
  %1405 = vmatprep.subr.mxu0 %v953
  %1406 = vmatpush2.msra.mxu0 %v952
  %1407 = vmatprep.mubr.f32.mxu0 %v296
  %1408 = vmatmul.mubr.f32.gmra.mxu0 %v16
  %v1409 = vpop.f32.mrf.mxu0
  %v1410 = vadd.f32 %v1303, %v1409
  %v1411 = vpop.f32.mrf.mxu0
  %v1412 = vadd.f32 %v1305, %v1411
  %1413 = vmatprep.mubr.f32.mxu0 %v299
  %1414 = vmatmul.mubr.f32.gmra.mxu0 %v20
  %v1415 = vpop.f32.mrf.mxu0
  %v1416 = vadd.f32 %v1309, %v1415
  %v1417 = vpop.f32.mrf.mxu0
  %v1418 = vadd.f32 %v1311, %v1417
  %1419 = vmatprep.mubr.f32.mxu0 %v302
  %1420 = vmatmul.mubr.f32.gmra.mxu0 %v24
  %v1421 = vpop.f32.mrf.mxu0
  %v1422 = vadd.f32 %v1315, %v1421
  %v1423 = vpop.f32.mrf.mxu0
  %v1424 = vadd.f32 %v1317, %v1423
  %1425 = vmatprep.mubr.f32.mxu0 %v305
  %1426 = vmatmul.mubr.f32.gmra.mxu0 %v28
  %v1427 = vpop.f32.mrf.mxu0
  %v1428 = vadd.f32 %v1321, %v1427
  %v1429 = vpop.f32.mrf.mxu0
  %v1430 = vadd.f32 %v1323, %v1429
  %1431 = vmatprep.mubr.f32.mxu0 %v308
  %1432 = vmatmul.mubr.f32.gmra.mxu0 %v32
  %v1433 = vpop.f32.mrf.mxu0
  %v1434 = vadd.f32 %v1327, %v1433
  %v1435 = vpop.f32.mrf.mxu0
  %v1436 = vadd.f32 %v1329, %v1435
  %1437 = vmatprep.mubr.f32.mxu0 %v311
  %1438 = vmatmul.mubr.f32.gmra.mxu0 %v36
  %v1439 = vpop.f32.mrf.mxu0
  %v1440 = vadd.f32 %v1333, %v1439
  %v1441 = vpop.f32.mrf.mxu0
  %v1442 = vadd.f32 %v1335, %v1441
  %1443 = vmatprep.mubr.f32.mxu0 %v314
  %1444 = vmatmul.mubr.f32.gmra.mxu0 %v40
  %v1445 = vpop.f32.mrf.mxu0
  %v1446 = vadd.f32 %v1339, %v1445
  %v1447 = vpop.f32.mrf.mxu0
  %v1448 = vadd.f32 %v1341, %v1447
  %1449 = vdwg.mxu0
  %v1450 = vmax.f32 %v503, %v1196
  %v1451 = vmax.f32 %v505, %v1198
  %v1452 = vmax.f32 %v717, %v1410
  %v1453 = vmax.f32 %v719, %v1412
  %v1454 = vmax.f32 %v509, %v1202
  %v1455 = vmax.f32 %v511, %v1204
  %v1456 = vmax.f32 %v723, %v1416
  %v1457 = vmax.f32 %v725, %v1418
  %v1458 = vmax.f32 %v515, %v1208
  %v1459 = vmax.f32 %v517, %v1210
  %v1460 = vmax.f32 %v729, %v1422
  %v1461 = vmax.f32 %v731, %v1424
  %v1462 = vmax.f32 %v521, %v1214
  %v1463 = vmax.f32 %v523, %v1216
  %v1464 = vmax.f32 %v735, %v1428
  %v1465 = vmax.f32 %v737, %v1430
  %v1466 = vmax.f32 %v527, %v1220
  %v1467 = vmax.f32 %v529, %v1222
  %v1468 = vmax.f32 %v741, %v1434
  %v1469 = vmax.f32 %v743, %v1436
  %v1470 = vmax.f32 %v533, %v1226
  %v1471 = vmax.f32 %v535, %v1228
  %v1472 = vmax.f32 %v747, %v1440
  %v1473 = vmax.f32 %v749, %v1442
  %v1474 = vmax.f32 %v539, %v1232
  %v1475 = vmax.f32 %v541, %v1234
  %v1476 = vmax.f32 %v753, %v1446
  %v1477 = vmax.f32 %v755, %v1448
  %s1478 = scalar_lea.vmem %s0, 4032
  %v1479 = vld [vmem:[%s1478] sm:$0xff]
  %v1480 = vld [vmem:[%s1478 + $0x8] sm:$0xff]
  %v1481 = vld [vmem:[%s1478 + $0x10] sm:$0xff]
  %v1482 = vld [vmem:[%s1478 + $0x18] sm:$0xff]
  %v1483 = vld [vmem:[%s1478 + $0x20] sm:$0xff]
  %v1484 = vld [vmem:[%s1478 + $0x28] sm:$0xff]
  %v1485 = vld [vmem:[%s1478 + $0x30] sm:$0xff]
  %v1486 = vld [vmem:[%s1478 + $0x38] sm:$0xff]
  %v1487 = vld [vmem:[%s1478 + $0x40] sm:$0xff]
  %v1488 = vld [vmem:[%s1478 + $0x48] sm:$0xff]
  %v1489 = vld [vmem:[%s1478 + $0x50] sm:$0xff]
  %v1490 = vld [vmem:[%s1478 + $0x58] sm:$0xff]
  %v1491 = vld [vmem:[%s1478 + $0x60] sm:$0xff]
  %v1492 = vld [vmem:[%s1478 + $0x68] sm:$0xff]
  %v1493 = vld [vmem:[%s1478 + $0x70] sm:$0xff]
  %v1494 = vld [vmem:[%s1478 + $0x78] sm:$0xff]
  %v1495 = vld [vmem:[%s1478 + $0x80] sm:$0xff]
  %v1496 = vld [vmem:[%s1478 + $0x88] sm:$0xff]
  %v1497 = vld [vmem:[%s1478 + $0x90] sm:$0xff]
  %v1498 = vld [vmem:[%s1478 + $0x98] sm:$0xff]
  %v1499 = vld [vmem:[%s1478 + $0xa0] sm:$0xff]
  %v1500 = vld [vmem:[%s1478 + $0xa8] sm:$0xff]
  %v1501 = vld [vmem:[%s1478 + $0xb0] sm:$0xff]
  %v1502 = vld [vmem:[%s1478 + $0xb8] sm:$0xff]
  %v1503 = vld [vmem:[%s1478 + $0xc0] sm:$0xff]
  %v1504 = vld [vmem:[%s1478 + $0xc8] sm:$0xff]
  %v1505 = vld [vmem:[%s1478 + $0xd0] sm:$0xff]
  %v1506 = vld [vmem:[%s1478 + $0xd8] sm:$0xff]
  %v1507 = vld [vmem:[%s1478 + $0xe0] sm:$0xff]
  %v1508 = vld [vmem:[%s1478 + $0xe8] sm:$0xff]
  %v1509 = vld [vmem:[%s1478 + $0xf0] sm:$0xff]
  %v1510 = vld [vmem:[%s1478 + $0xf8] sm:$0xff]
  %v1511 = vld [vmem:[%s1478 + $0x100] sm:$0xff]
  %v1512 = vld [vmem:[%s1478 + $0x108] sm:$0xff]
  %v1513 = vld [vmem:[%s1478 + $0x110] sm:$0xff]
  %v1514 = vld [vmem:[%s1478 + $0x118] sm:$0xff]
  %v1515 = vld [vmem:[%s1478 + $0x120] sm:$0xff]
  %v1516 = vld [vmem:[%s1478 + $0x128] sm:$0xff]
  %v1517 = vld [vmem:[%s1478 + $0x130] sm:$0xff]
  %v1518 = vld [vmem:[%s1478 + $0x138] sm:$0xff]
  %v1519 = vld [vmem:[%s1478 + $0x140] sm:$0xff]
  %v1520 = vld [vmem:[%s1478 + $0x148] sm:$0xff]
  %v1521 = vld [vmem:[%s1478 + $0x150] sm:$0xff]
  %v1522 = vld [vmem:[%s1478 + $0x158] sm:$0xff]
  %v1523 = vld [vmem:[%s1478 + $0x160] sm:$0xff]
  %v1524 = vld [vmem:[%s1478 + $0x168] sm:$0xff]
  %v1525 = vld [vmem:[%s1478 + $0x170] sm:$0xff]
  %v1526 = vld [vmem:[%s1478 + $0x178] sm:$0xff]
  %v1527 = vld [vmem:[%s1478 + $0x180] sm:$0xff]
  %v1528 = vld [vmem:[%s1478 + $0x188] sm:$0xff]
  %v1529 = vld [vmem:[%s1478 + $0x190] sm:$0xff]
  %v1530 = vld [vmem:[%s1478 + $0x198] sm:$0xff]
  %v1531 = vld [vmem:[%s1478 + $0x1a0] sm:$0xff]
  %v1532 = vld [vmem:[%s1478 + $0x1a8] sm:$0xff]
  %v1533 = vld [vmem:[%s1478 + $0x1b0] sm:$0xff]
  %v1534 = vld [vmem:[%s1478 + $0x1b8] sm:$0xff]
  %v1535 = vld [vmem:[%s1478 + $0x1c0] sm:$0xff]
  %v1536 = vld [vmem:[%s1478 + $0x1c8] sm:$0xff]
  %v1537 = vld [vmem:[%s1478 + $0x1d0] sm:$0xff]
  %v1538 = vld [vmem:[%s1478 + $0x1d8] sm:$0xff]
  %v1539 = vld [vmem:[%s1478 + $0x1e0] sm:$0xff]
  %v1540 = vld [vmem:[%s1478 + $0x1e8] sm:$0xff]
  %v1541 = vld [vmem:[%s1478 + $0x1f0] sm:$0xff]
  %v1542 = vld [vmem:[%s1478 + $0x1f8] sm:$0xff]
  %v1543 = vld [vmem:[%s1478 + $0x200] sm:$0xff]
  %v1544 = vld [vmem:[%s1478 + $0x208] sm:$0xff]
  %v1545 = vld [vmem:[%s1478 + $0x210] sm:$0xff]
  %v1546 = vld [vmem:[%s1478 + $0x218] sm:$0xff]
  %v1547 = vld [vmem:[%s1478 + $0x220] sm:$0xff]
  %v1548 = vld [vmem:[%s1478 + $0x228] sm:$0xff]
  %v1549 = vld [vmem:[%s1478 + $0x230] sm:$0xff]
  %v1550 = vld [vmem:[%s1478 + $0x238] sm:$0xff]
  %v1551 = vld [vmem:[%s1478 + $0x240] sm:$0xff]
  %v1552 = vld [vmem:[%s1478 + $0x248] sm:$0xff]
  %v1553 = vld [vmem:[%s1478 + $0x250] sm:$0xff]
  %v1554 = vld [vmem:[%s1478 + $0x258] sm:$0xff]
  %v1555 = vld [vmem:[%s1478 + $0x260] sm:$0xff]
  %v1556 = vld [vmem:[%s1478 + $0x268] sm:$0xff]
  %v1557 = vld [vmem:[%s1478 + $0x270] sm:$0xff]
  %v1558 = vld [vmem:[%s1478 + $0x278] sm:$0xff]
  %v1559 = vld [vmem:[%s1478 + $0x280] sm:$0xff]
  %v1560 = vld [vmem:[%s1478 + $0x288] sm:$0xff]
  %v1561 = vld [vmem:[%s1478 + $0x290] sm:$0xff]
  %v1562 = vld [vmem:[%s1478 + $0x298] sm:$0xff]
  %v1563 = vld [vmem:[%s1478 + $0x2a0] sm:$0xff]
  %v1564 = vld [vmem:[%s1478 + $0x2a8] sm:$0xff]
  %v1565 = vld [vmem:[%s1478 + $0x2b0] sm:$0xff]
  %v1566 = vld [vmem:[%s1478 + $0x2b8] sm:$0xff]
  %v1567 = vld [vmem:[%s1478 + $0x2c0] sm:$0xff]
  %v1568 = vld [vmem:[%s1478 + $0x2c8] sm:$0xff]
  %v1569 = vld [vmem:[%s1478 + $0x2d0] sm:$0xff]
  %v1570 = vld [vmem:[%s1478 + $0x2d8] sm:$0xff]
  %v1571 = vld [vmem:[%s1478 + $0x2e0] sm:$0xff]
  %v1572 = vld [vmem:[%s1478 + $0x2e8] sm:$0xff]
  %v1573 = vld [vmem:[%s1478 + $0x2f0] sm:$0xff]
  %v1574 = vld [vmem:[%s1478 + $0x2f8] sm:$0xff]
  %v1575 = vld [vmem:[%s1478 + $0x300] sm:$0xff]
  %v1576 = vld [vmem:[%s1478 + $0x308] sm:$0xff]
  %v1577 = vld [vmem:[%s1478 + $0x310] sm:$0xff]
  %v1578 = vld [vmem:[%s1478 + $0x318] sm:$0xff]
  %v1579 = vld [vmem:[%s1478 + $0x320] sm:$0xff]
  %v1580 = vld [vmem:[%s1478 + $0x328] sm:$0xff]
  %v1581 = vld [vmem:[%s1478 + $0x330] sm:$0xff]
  %v1582 = vld [vmem:[%s1478 + $0x338] sm:$0xff]
  %v1583 = vld [vmem:[%s1478 + $0x340] sm:$0xff]
  %v1584 = vld [vmem:[%s1478 + $0x348] sm:$0xff]
  %v1585 = vld [vmem:[%s1478 + $0x350] sm:$0xff]
  %v1586 = vld [vmem:[%s1478 + $0x358] sm:$0xff]
  %v1587 = vld [vmem:[%s1478 + $0x360] sm:$0xff]
  %v1588 = vld [vmem:[%s1478 + $0x368] sm:$0xff]
  %v1589 = vld [vmem:[%s1478 + $0x370] sm:$0xff]
  %v1590 = vld [vmem:[%s1478 + $0x378] sm:$0xff]
  %v1591 = vld [vmem:[%s1478 + $0x380] sm:$0xff]
  %v1592 = vld [vmem:[%s1478 + $0x388] sm:$0xff]
  %v1593 = vld [vmem:[%s1478 + $0x390] sm:$0xff]
  %v1594 = vld [vmem:[%s1478 + $0x398] sm:$0xff]
  %v1595 = vld [vmem:[%s1478 + $0x3a0] sm:$0xff]
  %v1596 = vld [vmem:[%s1478 + $0x3a8] sm:$0xff]
  %v1597 = vld [vmem:[%s1478 + $0x3b0] sm:$0xff]
  %v1598 = vld [vmem:[%s1478 + $0x3b8] sm:$0xff]
  %v1599 = vld [vmem:[%s1478 + $0x3c0] sm:$0xff]
  %v1600 = vld [vmem:[%s1478 + $0x3c8] sm:$0xff]
  %v1601 = vld [vmem:[%s1478 + $0x3d0] sm:$0xff]
  %v1602 = vld [vmem:[%s1478 + $0x3d8] sm:$0xff]
  %v1603 = vld [vmem:[%s1478 + $0x3e0] sm:$0xff]
  %v1604 = vld [vmem:[%s1478 + $0x3e8] sm:$0xff]
  %v1605 = vld [vmem:[%s1478 + $0x3f0] sm:$0xff]
  %v1606 = vld [vmem:[%s1478 + $0x3f8] sm:$0xff]
  %v1607 = vld [vmem:[%s1478 + $0x400] sm:$0xff]
  %v1608 = vld [vmem:[%s1478 + $0x408] sm:$0xff]
  %v1609 = vld [vmem:[%s1478 + $0x410] sm:$0xff]
  %v1610 = vld [vmem:[%s1478 + $0x418] sm:$0xff]
  %v1611 = vld [vmem:[%s1478 + $0x420] sm:$0xff]
  %v1612 = vld [vmem:[%s1478 + $0x428] sm:$0xff]
  %v1613 = vld [vmem:[%s1478 + $0x430] sm:$0xff]
  %v1614 = vld [vmem:[%s1478 + $0x438] sm:$0xff]
  %v1615 = vld [vmem:[%s1478 + $0x440] sm:$0xff]
  %v1616 = vld [vmem:[%s1478 + $0x448] sm:$0xff]
  %v1617 = vld [vmem:[%s1478 + $0x450] sm:$0xff]
  %v1618 = vld [vmem:[%s1478 + $0x458] sm:$0xff]
  %v1619 = vld [vmem:[%s1478 + $0x460] sm:$0xff]
  %v1620 = vld [vmem:[%s1478 + $0x468] sm:$0xff]
  %v1621 = vld [vmem:[%s1478 + $0x470] sm:$0xff]
  %v1622 = vld [vmem:[%s1478 + $0x478] sm:$0xff]
  %v1623 = vld [vmem:[%s1478 + $0x480] sm:$0xff]
  %v1624 = vld [vmem:[%s1478 + $0x488] sm:$0xff]
  %v1625 = vld [vmem:[%s1478 + $0x490] sm:$0xff]
  %v1626 = vld [vmem:[%s1478 + $0x498] sm:$0xff]
  %v1627 = vld [vmem:[%s1478 + $0x4a0] sm:$0xff]
  %v1628 = vld [vmem:[%s1478 + $0x4a8] sm:$0xff]
  %v1629 = vld [vmem:[%s1478 + $0x4b0] sm:$0xff]
  %v1630 = vld [vmem:[%s1478 + $0x4b8] sm:$0xff]
  %v1631 = vld [vmem:[%s1478 + $0x4c0] sm:$0xff]
  %v1632 = vld [vmem:[%s1478 + $0x4c8] sm:$0xff]
  %v1633 = vld [vmem:[%s1478 + $0x4d0] sm:$0xff]
  %v1634 = vld [vmem:[%s1478 + $0x4d8] sm:$0xff]
  %v1635 = vld [vmem:[%s1478 + $0x4e0] sm:$0xff]
  %v1636 = vld [vmem:[%s1478 + $0x4e8] sm:$0xff]
  %v1637 = vld [vmem:[%s1478 + $0x4f0] sm:$0xff]
  %v1638 = vld [vmem:[%s1478 + $0x4f8] sm:$0xff]
  %v1639 = vld [vmem:[%s1478 + $0x500] sm:$0xff]
  %v1640 = vld [vmem:[%s1478 + $0x508] sm:$0xff]
  %v1641 = vld [vmem:[%s1478 + $0x510] sm:$0xff]
  %v1642 = vld [vmem:[%s1478 + $0x518] sm:$0xff]
  %v1643 = vld [vmem:[%s1478 + $0x520] sm:$0xff]
  %v1644 = vld [vmem:[%s1478 + $0x528] sm:$0xff]
  %v1645 = vld [vmem:[%s1478 + $0x530] sm:$0xff]
  %v1646 = vld [vmem:[%s1478 + $0x538] sm:$0xff]
  %v1647 = vld [vmem:[%s1478 + $0x540] sm:$0xff]
  %v1648 = vld [vmem:[%s1478 + $0x548] sm:$0xff]
  %v1649 = vld [vmem:[%s1478 + $0x550] sm:$0xff]
  %v1650 = vld [vmem:[%s1478 + $0x558] sm:$0xff]
  %v1651 = vld [vmem:[%s1478 + $0x560] sm:$0xff]
  %v1652 = vld [vmem:[%s1478 + $0x568] sm:$0xff]
  %v1653 = vld [vmem:[%s1478 + $0x570] sm:$0xff]
  %v1654 = vld [vmem:[%s1478 + $0x578] sm:$0xff]
  %v1655 = vld [vmem:[%s1478 + $0x580] sm:$0xff]
  %v1656 = vld [vmem:[%s1478 + $0x588] sm:$0xff]
  %v1657 = vld [vmem:[%s1478 + $0x590] sm:$0xff]
  %v1658 = vld [vmem:[%s1478 + $0x598] sm:$0xff]
  %v1659 = vld [vmem:[%s1478 + $0x5a0] sm:$0xff]
  %v1660 = vld [vmem:[%s1478 + $0x5a8] sm:$0xff]
  %v1661 = vld [vmem:[%s1478 + $0x5b0] sm:$0xff]
  %v1662 = vld [vmem:[%s1478 + $0x5b8] sm:$0xff]
  %v1663 = vld [vmem:[%s1478 + $0x5c0] sm:$0xff]
  %v1664 = vld [vmem:[%s1478 + $0x5c8] sm:$0xff]
  %v1665 = vld [vmem:[%s1478 + $0x5d0] sm:$0xff]
  %v1666 = vld [vmem:[%s1478 + $0x5d8] sm:$0xff]
  %v1667 = vld [vmem:[%s1478 + $0x5e0] sm:$0xff]
  %v1668 = vld [vmem:[%s1478 + $0x5e8] sm:$0xff]
  %v1669 = vld [vmem:[%s1478 + $0x5f0] sm:$0xff]
  %v1670 = vld [vmem:[%s1478 + $0x5f8] sm:$0xff]
  %v1671 = vld [vmem:[%s1478 + $0x600] sm:$0xff]
  %v1672 = vld [vmem:[%s1478 + $0x608] sm:$0xff]
  %v1673 = vld [vmem:[%s1478 + $0x610] sm:$0xff]
  %v1674 = vld [vmem:[%s1478 + $0x618] sm:$0xff]
  %v1675 = vld [vmem:[%s1478 + $0x620] sm:$0xff]
  %v1676 = vld [vmem:[%s1478 + $0x628] sm:$0xff]
  %v1677 = vld [vmem:[%s1478 + $0x630] sm:$0xff]
  %v1678 = vld [vmem:[%s1478 + $0x638] sm:$0xff]
  %v1679 = vld [vmem:[%s1478 + $0x640] sm:$0xff]
  %v1680 = vld [vmem:[%s1478 + $0x648] sm:$0xff]
  %v1681 = vld [vmem:[%s1478 + $0x650] sm:$0xff]
  %v1682 = vld [vmem:[%s1478 + $0x658] sm:$0xff]
  %v1683 = vld [vmem:[%s1478 + $0x660] sm:$0xff]
  %v1684 = vld [vmem:[%s1478 + $0x668] sm:$0xff]
  %v1685 = vld [vmem:[%s1478 + $0x670] sm:$0xff]
  %v1686 = vld [vmem:[%s1478 + $0x678] sm:$0xff]
  %v1687 = vld [vmem:[%s1478 + $0x680] sm:$0xff]
  %v1688 = vld [vmem:[%s1478 + $0x688] sm:$0xff]
  %v1689 = vld [vmem:[%s1478 + $0x690] sm:$0xff]
  %v1690 = vld [vmem:[%s1478 + $0x698] sm:$0xff]
  %v1691 = vld [vmem:[%s1478 + $0x6a0] sm:$0xff]
  %v1692 = vld [vmem:[%s1478 + $0x6a8] sm:$0xff]
  %v1693 = vld [vmem:[%s1478 + $0x6b0] sm:$0xff]
  %v1694 = vld [vmem:[%s1478 + $0x6b8] sm:$0xff]
  %v1695 = vld [vmem:[%s1478 + $0x6c0] sm:$0xff]
  %v1696 = vld [vmem:[%s1478 + $0x6c8] sm:$0xff]
  %v1697 = vld [vmem:[%s1478 + $0x6d0] sm:$0xff]
  %v1698 = vld [vmem:[%s1478 + $0x6d8] sm:$0xff]
  %v1699 = vld [vmem:[%s1478 + $0x6e0] sm:$0xff]
  %v1700 = vld [vmem:[%s1478 + $0x6e8] sm:$0xff]
  %v1701 = vld [vmem:[%s1478 + $0x6f0] sm:$0xff]
  %v1702 = vld [vmem:[%s1478 + $0x6f8] sm:$0xff]
  %v1703 = vld [vmem:[%s1478 + $0x700] sm:$0xff]
  %v1704 = vld [vmem:[%s1478 + $0x708] sm:$0xff]
  %v1705 = vld [vmem:[%s1478 + $0x710] sm:$0xff]
  %v1706 = vld [vmem:[%s1478 + $0x718] sm:$0xff]
  %v1707 = vld [vmem:[%s1478 + $0x720] sm:$0xff]
  %v1708 = vld [vmem:[%s1478 + $0x728] sm:$0xff]
  %v1709 = vld [vmem:[%s1478 + $0x730] sm:$0xff]
  %v1710 = vld [vmem:[%s1478 + $0x738] sm:$0xff]
  %v1711 = vld [vmem:[%s1478 + $0x740] sm:$0xff]
  %v1712 = vld [vmem:[%s1478 + $0x748] sm:$0xff]
  %v1713 = vld [vmem:[%s1478 + $0x750] sm:$0xff]
  %v1714 = vld [vmem:[%s1478 + $0x758] sm:$0xff]
  %v1715 = vld [vmem:[%s1478 + $0x760] sm:$0xff]
  %v1716 = vld [vmem:[%s1478 + $0x768] sm:$0xff]
  %v1717 = vld [vmem:[%s1478 + $0x770] sm:$0xff]
  %v1718 = vld [vmem:[%s1478 + $0x778] sm:$0xff]
  %v1719 = vld [vmem:[%s1478 + $0x780] sm:$0xff]
  %v1720 = vld [vmem:[%s1478 + $0x788] sm:$0xff]
  %v1721 = vld [vmem:[%s1478 + $0x790] sm:$0xff]
  %v1722 = vld [vmem:[%s1478 + $0x798] sm:$0xff]
  %v1723 = vld [vmem:[%s1478 + $0x7a0] sm:$0xff]
  %v1724 = vld [vmem:[%s1478 + $0x7a8] sm:$0xff]
  %v1725 = vld [vmem:[%s1478 + $0x7b0] sm:$0xff]
  %v1726 = vld [vmem:[%s1478 + $0x7b8] sm:$0xff]
  %v1727 = vld [vmem:[%s1478 + $0x7c0] sm:$0xf]
  %v1728 = vld [vmem:[%s1478 + $0x7c8] sm:$0xf]
  %v1729 = vld [vmem:[%s1478 + $0x7d0] sm:$0xf]
  %v1730 = vld [vmem:[%s1478 + $0x7d8] sm:$0xf]
  %v1732 = vsel %vm316, %v1727, 0
  %v1735 = vsel %vm316, %v1728, 0
  %v1738 = vsel %vm316, %v1729, 0
  %v1741 = vsel %vm316, %v1730, 0
  %1743 = vmatprep.subr.mxu0 %v1540
  %1744 = vmatpush1.msra.mxu0 %v1539
  %1745 = vmatprep.subr.mxu0 %v1536
  %1746 = vmatpush1.msra.mxu0 %v1535
  %1747 = vmatprep.subr.mxu0 %v1532
  %1748 = vmatpush1.msra.mxu0 %v1531
  %1749 = vmatprep.subr.mxu0 %v1528
  %1750 = vmatpush1.msra.mxu0 %v1527
  %1751 = vmatprep.subr.mxu0 %v1524
  %1752 = vmatpush1.msra.mxu0 %v1523
  %1753 = vmatprep.subr.mxu0 %v1520
  %1754 = vmatpush1.msra.mxu0 %v1519
  %1755 = vmatprep.subr.mxu0 %v1516
  %1756 = vmatpush1.msra.mxu0 %v1515
  %1757 = vmatprep.subr.mxu0 %v1512
  %1758 = vmatpush1.msra.mxu0 %v1511
  %1759 = vmatprep.subr.mxu0 %v1508
  %1760 = vmatpush1.msra.mxu0 %v1507
  %1761 = vmatprep.subr.mxu0 %v1504
  %1762 = vmatpush1.msra.mxu0 %v1503
  %1763 = vmatprep.subr.mxu0 %v1500
  %1764 = vmatpush1.msra.mxu0 %v1499
  %1765 = vmatprep.subr.mxu0 %v1496
  %1766 = vmatpush1.msra.mxu0 %v1495
  %1767 = vmatprep.subr.mxu0 %v1492
  %1768 = vmatpush1.msra.mxu0 %v1491
  %1769 = vmatprep.subr.mxu0 %v1488
  %1770 = vmatpush1.msra.mxu0 %v1487
  %1771 = vmatprep.subr.mxu0 %v1484
  %1772 = vmatpush1.msra.mxu0 %v1483
  %1773 = vmatprep.subr.mxu0 %v1480
  %1774 = vmatpush1.msra.mxu0 %v1479
  %1775 = vmatprep.subr.mxu0 %v1604
  %1776 = vmatpush2.msra.mxu0 %v1603
  %1777 = vmatprep.subr.mxu0 %v1600
  %1778 = vmatpush2.msra.mxu0 %v1599
  %1779 = vmatprep.subr.mxu0 %v1596
  %1780 = vmatpush2.msra.mxu0 %v1595
  %1781 = vmatprep.subr.mxu0 %v1592
  %1782 = vmatpush2.msra.mxu0 %v1591
  %1783 = vmatprep.subr.mxu0 %v1588
  %1784 = vmatpush2.msra.mxu0 %v1587
  %1785 = vmatprep.subr.mxu0 %v1584
  %1786 = vmatpush2.msra.mxu0 %v1583
  %1787 = vmatprep.subr.mxu0 %v1580
  %1788 = vmatpush2.msra.mxu0 %v1579
  %1789 = vmatprep.subr.mxu0 %v1576
  %1790 = vmatpush2.msra.mxu0 %v1575
  %1791 = vmatprep.subr.mxu0 %v1572
  %1792 = vmatpush2.msra.mxu0 %v1571
  %1793 = vmatprep.subr.mxu0 %v1568
  %1794 = vmatpush2.msra.mxu0 %v1567
  %1795 = vmatprep.subr.mxu0 %v1564
  %1796 = vmatpush2.msra.mxu0 %v1563
  %1797 = vmatprep.subr.mxu0 %v1560
  %1798 = vmatpush2.msra.mxu0 %v1559
  %1799 = vmatprep.subr.mxu0 %v1556
  %1800 = vmatpush2.msra.mxu0 %v1555
  %1801 = vmatprep.subr.mxu0 %v1552
  %1802 = vmatpush2.msra.mxu0 %v1551
  %1803 = vmatprep.subr.mxu0 %v1548
  %1804 = vmatpush2.msra.mxu0 %v1547
  %1805 = vmatprep.subr.mxu0 %v1544
  %1806 = vmatpush2.msra.mxu0 %v1543
  %1807 = vmatprep.mubr.f32.mxu0 %v15
  %1808 = vmatmul.mubr.f32.gmra.mxu0 %v14
  %v1809 = vpop.f32.mrf.mxu0
  %v1810 = vadd.f32 0.0, %v1809
  %v1811 = vpop.f32.mrf.mxu0
  %v1812 = vadd.f32 0.0, %v1811
  %1813 = vmatprep.mubr.f32.mxu0 %v19
  %1814 = vmatmul.mubr.f32.gmra.mxu0 %v18
  %v1815 = vpop.f32.mrf.mxu0
  %v1816 = vadd.f32 0.0, %v1815
  %v1817 = vpop.f32.mrf.mxu0
  %v1818 = vadd.f32 0.0, %v1817
  %1819 = vmatprep.mubr.f32.mxu0 %v23
  %1820 = vmatmul.mubr.f32.gmra.mxu0 %v22
  %v1821 = vpop.f32.mrf.mxu0
  %v1822 = vadd.f32 0.0, %v1821
  %v1823 = vpop.f32.mrf.mxu0
  %v1824 = vadd.f32 0.0, %v1823
  %1825 = vmatprep.mubr.f32.mxu0 %v27
  %1826 = vmatmul.mubr.f32.gmra.mxu0 %v26
  %v1827 = vpop.f32.mrf.mxu0
  %v1828 = vadd.f32 0.0, %v1827
  %v1829 = vpop.f32.mrf.mxu0
  %v1830 = vadd.f32 0.0, %v1829
  %1831 = vmatprep.mubr.f32.mxu0 %v31
  %1832 = vmatmul.mubr.f32.gmra.mxu0 %v30
  %v1833 = vpop.f32.mrf.mxu0
  %v1834 = vadd.f32 0.0, %v1833
  %v1835 = vpop.f32.mrf.mxu0
  %v1836 = vadd.f32 0.0, %v1835
  %1837 = vmatprep.mubr.f32.mxu0 %v35
  %1838 = vmatmul.mubr.f32.gmra.mxu0 %v34
  %v1839 = vpop.f32.mrf.mxu0
  %v1840 = vadd.f32 0.0, %v1839
  %v1841 = vpop.f32.mrf.mxu0
  %v1842 = vadd.f32 0.0, %v1841
  %1843 = vmatprep.mubr.f32.mxu0 %v39
  %1844 = vmatmul.mubr.f32.gmra.mxu0 %v38
  %v1845 = vpop.f32.mrf.mxu0
  %v1846 = vadd.f32 0.0, %v1845
  %v1847 = vpop.f32.mrf.mxu0
  %v1848 = vadd.f32 0.0, %v1847
  %1849 = vdwg.mxu0
  %1850 = vmatprep.subr.mxu0 %v1668
  %1851 = vmatpush1.msra.mxu0 %v1667
  %1852 = vmatprep.subr.mxu0 %v1664
  %1853 = vmatpush1.msra.mxu0 %v1663
  %1854 = vmatprep.subr.mxu0 %v1660
  %1855 = vmatpush1.msra.mxu0 %v1659
  %1856 = vmatprep.subr.mxu0 %v1656
  %1857 = vmatpush1.msra.mxu0 %v1655
  %1858 = vmatprep.subr.mxu0 %v1652
  %1859 = vmatpush1.msra.mxu0 %v1651
  %1860 = vmatprep.subr.mxu0 %v1648
  %1861 = vmatpush1.msra.mxu0 %v1647
  %1862 = vmatprep.subr.mxu0 %v1644
  %1863 = vmatpush1.msra.mxu0 %v1643
  %1864 = vmatprep.subr.mxu0 %v1640
  %1865 = vmatpush1.msra.mxu0 %v1639
  %1866 = vmatprep.subr.mxu0 %v1636
  %1867 = vmatpush1.msra.mxu0 %v1635
  %1868 = vmatprep.subr.mxu0 %v1632
  %1869 = vmatpush1.msra.mxu0 %v1631
  %1870 = vmatprep.subr.mxu0 %v1628
  %1871 = vmatpush1.msra.mxu0 %v1627
  %1872 = vmatprep.subr.mxu0 %v1624
  %1873 = vmatpush1.msra.mxu0 %v1623
  %1874 = vmatprep.subr.mxu0 %v1620
  %1875 = vmatpush1.msra.mxu0 %v1619
  %1876 = vmatprep.subr.mxu0 %v1616
  %1877 = vmatpush1.msra.mxu0 %v1615
  %1878 = vmatprep.subr.mxu0 %v1612
  %1879 = vmatpush1.msra.mxu0 %v1611
  %1880 = vmatprep.subr.mxu0 %v1608
  %1881 = vmatpush1.msra.mxu0 %v1607
  %1882 = vmatprep.subr.mxu0 0.0
  %1883 = vmatpush2.msra.mxu0 0.0
  %1884 = vmatprep.subr.mxu0 %v1735
  %1885 = vmatpush2.msra.mxu0 %v1732
  %1886 = vmatprep.subr.mxu0 %v1724
  %1887 = vmatpush2.msra.mxu0 %v1723
  %1888 = vmatprep.subr.mxu0 %v1720
  %1889 = vmatpush2.msra.mxu0 %v1719
  %1890 = vmatprep.subr.mxu0 %v1716
  %1891 = vmatpush2.msra.mxu0 %v1715
  %1892 = vmatprep.subr.mxu0 %v1712
  %1893 = vmatpush2.msra.mxu0 %v1711
  %1894 = vmatprep.subr.mxu0 %v1708
  %1895 = vmatpush2.msra.mxu0 %v1707
  %1896 = vmatprep.subr.mxu0 %v1704
  %1897 = vmatpush2.msra.mxu0 %v1703
  %1898 = vmatprep.subr.mxu0 %v1700
  %1899 = vmatpush2.msra.mxu0 %v1699
  %1900 = vmatprep.subr.mxu0 %v1696
  %1901 = vmatpush2.msra.mxu0 %v1695
  %1902 = vmatprep.subr.mxu0 %v1692
  %1903 = vmatpush2.msra.mxu0 %v1691
  %1904 = vmatprep.subr.mxu0 %v1688
  %1905 = vmatpush2.msra.mxu0 %v1687
  %1906 = vmatprep.subr.mxu0 %v1684
  %1907 = vmatpush2.msra.mxu0 %v1683
  %1908 = vmatprep.subr.mxu0 %v1680
  %1909 = vmatpush2.msra.mxu0 %v1679
  %1910 = vmatprep.subr.mxu0 %v1676
  %1911 = vmatpush2.msra.mxu0 %v1675
  %1912 = vmatprep.subr.mxu0 %v1672
  %1913 = vmatpush2.msra.mxu0 %v1671
  %1914 = vmatprep.mubr.f32.mxu0 %v296
  %1915 = vmatmul.mubr.f32.gmra.mxu0 %v16
  %v1916 = vpop.f32.mrf.mxu0
  %v1917 = vadd.f32 %v1810, %v1916
  %v1918 = vpop.f32.mrf.mxu0
  %v1919 = vadd.f32 %v1812, %v1918
  %1920 = vmatprep.mubr.f32.mxu0 %v299
  %1921 = vmatmul.mubr.f32.gmra.mxu0 %v20
  %v1922 = vpop.f32.mrf.mxu0
  %v1923 = vadd.f32 %v1816, %v1922
  %v1924 = vpop.f32.mrf.mxu0
  %v1925 = vadd.f32 %v1818, %v1924
  %1926 = vmatprep.mubr.f32.mxu0 %v302
  %1927 = vmatmul.mubr.f32.gmra.mxu0 %v24
  %v1928 = vpop.f32.mrf.mxu0
  %v1929 = vadd.f32 %v1822, %v1928
  %v1930 = vpop.f32.mrf.mxu0
  %v1931 = vadd.f32 %v1824, %v1930
  %1932 = vmatprep.mubr.f32.mxu0 %v305
  %1933 = vmatmul.mubr.f32.gmra.mxu0 %v28
  %v1934 = vpop.f32.mrf.mxu0
  %v1935 = vadd.f32 %v1828, %v1934
  %v1936 = vpop.f32.mrf.mxu0
  %v1937 = vadd.f32 %v1830, %v1936
  %1938 = vmatprep.mubr.f32.mxu0 %v308
  %1939 = vmatmul.mubr.f32.gmra.mxu0 %v32
  %v1940 = vpop.f32.mrf.mxu0
  %v1941 = vadd.f32 %v1834, %v1940
  %v1942 = vpop.f32.mrf.mxu0
  %v1943 = vadd.f32 %v1836, %v1942
  %1944 = vmatprep.mubr.f32.mxu0 %v311
  %1945 = vmatmul.mubr.f32.gmra.mxu0 %v36
  %v1946 = vpop.f32.mrf.mxu0
  %v1947 = vadd.f32 %v1840, %v1946
  %v1948 = vpop.f32.mrf.mxu0
  %v1949 = vadd.f32 %v1842, %v1948
  %1950 = vmatprep.mubr.f32.mxu0 %v314
  %1951 = vmatmul.mubr.f32.gmra.mxu0 %v40
  %v1952 = vpop.f32.mrf.mxu0
  %v1953 = vadd.f32 %v1846, %v1952
  %v1954 = vpop.f32.mrf.mxu0
  %v1955 = vadd.f32 %v1848, %v1954
  %1956 = vdwg.mxu0
  %1957 = vmatprep.subr.mxu0 %v1542
  %1958 = vmatpush1.msra.mxu0 %v1541
  %1959 = vmatprep.subr.mxu0 %v1538
  %1960 = vmatpush1.msra.mxu0 %v1537
  %1961 = vmatprep.subr.mxu0 %v1534
  %1962 = vmatpush1.msra.mxu0 %v1533
  %1963 = vmatprep.subr.mxu0 %v1530
  %1964 = vmatpush1.msra.mxu0 %v1529
  %1965 = vmatprep.subr.mxu0 %v1526
  %1966 = vmatpush1.msra.mxu0 %v1525
  %1967 = vmatprep.subr.mxu0 %v1522
  %1968 = vmatpush1.msra.mxu0 %v1521
  %1969 = vmatprep.subr.mxu0 %v1518
  %1970 = vmatpush1.msra.mxu0 %v1517
  %1971 = vmatprep.subr.mxu0 %v1514
  %1972 = vmatpush1.msra.mxu0 %v1513
  %1973 = vmatprep.subr.mxu0 %v1510
  %1974 = vmatpush1.msra.mxu0 %v1509
  %1975 = vmatprep.subr.mxu0 %v1506
  %1976 = vmatpush1.msra.mxu0 %v1505
  %1977 = vmatprep.subr.mxu0 %v1502
  %1978 = vmatpush1.msra.mxu0 %v1501
  %1979 = vmatprep.subr.mxu0 %v1498
  %1980 = vmatpush1.msra.mxu0 %v1497
  %1981 = vmatprep.subr.mxu0 %v1494
  %1982 = vmatpush1.msra.mxu0 %v1493
  %1983 = vmatprep.subr.mxu0 %v1490
  %1984 = vmatpush1.msra.mxu0 %v1489
  %1985 = vmatprep.subr.mxu0 %v1486
  %1986 = vmatpush1.msra.mxu0 %v1485
  %1987 = vmatprep.subr.mxu0 %v1482
  %1988 = vmatpush1.msra.mxu0 %v1481
  %1989 = vmatprep.subr.mxu0 %v1606
  %1990 = vmatpush2.msra.mxu0 %v1605
  %1991 = vmatprep.subr.mxu0 %v1602
  %1992 = vmatpush2.msra.mxu0 %v1601
  %1993 = vmatprep.subr.mxu0 %v1598
  %1994 = vmatpush2.msra.mxu0 %v1597
  %1995 = vmatprep.subr.mxu0 %v1594
  %1996 = vmatpush2.msra.mxu0 %v1593
  %1997 = vmatprep.subr.mxu0 %v1590
  %1998 = vmatpush2.msra.mxu0 %v1589
  %1999 = vmatprep.subr.mxu0 %v1586
  %2000 = vmatpush2.msra.mxu0 %v1585
  %2001 = vmatprep.subr.mxu0 %v1582
  %2002 = vmatpush2.msra.mxu0 %v1581
  %2003 = vmatprep.subr.mxu0 %v1578
  %2004 = vmatpush2.msra.mxu0 %v1577
  %2005 = vmatprep.subr.mxu0 %v1574
  %2006 = vmatpush2.msra.mxu0 %v1573
  %2007 = vmatprep.subr.mxu0 %v1570
  %2008 = vmatpush2.msra.mxu0 %v1569
  %2009 = vmatprep.subr.mxu0 %v1566
  %2010 = vmatpush2.msra.mxu0 %v1565
  %2011 = vmatprep.subr.mxu0 %v1562
  %2012 = vmatpush2.msra.mxu0 %v1561
  %2013 = vmatprep.subr.mxu0 %v1558
  %2014 = vmatpush2.msra.mxu0 %v1557
  %2015 = vmatprep.subr.mxu0 %v1554
  %2016 = vmatpush2.msra.mxu0 %v1553
  %2017 = vmatprep.subr.mxu0 %v1550
  %2018 = vmatpush2.msra.mxu0 %v1549
  %2019 = vmatprep.subr.mxu0 %v1546
  %2020 = vmatpush2.msra.mxu0 %v1545
  %2021 = vmatprep.mubr.f32.mxu0 %v15
  %2022 = vmatmul.mubr.f32.gmra.mxu0 %v14
  %v2023 = vpop.f32.mrf.mxu0
  %v2024 = vadd.f32 0.0, %v2023
  %v2025 = vpop.f32.mrf.mxu0
  %v2026 = vadd.f32 0.0, %v2025
  %2027 = vmatprep.mubr.f32.mxu0 %v19
  %2028 = vmatmul.mubr.f32.gmra.mxu0 %v18
  %v2029 = vpop.f32.mrf.mxu0
  %v2030 = vadd.f32 0.0, %v2029
  %v2031 = vpop.f32.mrf.mxu0
  %v2032 = vadd.f32 0.0, %v2031
  %2033 = vmatprep.mubr.f32.mxu0 %v23
  %2034 = vmatmul.mubr.f32.gmra.mxu0 %v22
  %v2035 = vpop.f32.mrf.mxu0
  %v2036 = vadd.f32 0.0, %v2035
  %v2037 = vpop.f32.mrf.mxu0
  %v2038 = vadd.f32 0.0, %v2037
  %2039 = vmatprep.mubr.f32.mxu0 %v27
  %2040 = vmatmul.mubr.f32.gmra.mxu0 %v26
  %v2041 = vpop.f32.mrf.mxu0
  %v2042 = vadd.f32 0.0, %v2041
  %v2043 = vpop.f32.mrf.mxu0
  %v2044 = vadd.f32 0.0, %v2043
  %2045 = vmatprep.mubr.f32.mxu0 %v31
  %2046 = vmatmul.mubr.f32.gmra.mxu0 %v30
  %v2047 = vpop.f32.mrf.mxu0
  %v2048 = vadd.f32 0.0, %v2047
  %v2049 = vpop.f32.mrf.mxu0
  %v2050 = vadd.f32 0.0, %v2049
  %2051 = vmatprep.mubr.f32.mxu0 %v35
  %2052 = vmatmul.mubr.f32.gmra.mxu0 %v34
  %v2053 = vpop.f32.mrf.mxu0
  %v2054 = vadd.f32 0.0, %v2053
  %v2055 = vpop.f32.mrf.mxu0
  %v2056 = vadd.f32 0.0, %v2055
  %2057 = vmatprep.mubr.f32.mxu0 %v39
  %2058 = vmatmul.mubr.f32.gmra.mxu0 %v38
  %v2059 = vpop.f32.mrf.mxu0
  %v2060 = vadd.f32 0.0, %v2059
  %v2061 = vpop.f32.mrf.mxu0
  %v2062 = vadd.f32 0.0, %v2061
  %2063 = vdwg.mxu0
  %2064 = vmatprep.subr.mxu0 %v1670
  %2065 = vmatpush1.msra.mxu0 %v1669
  %2066 = vmatprep.subr.mxu0 %v1666
  %2067 = vmatpush1.msra.mxu0 %v1665
  %2068 = vmatprep.subr.mxu0 %v1662
  %2069 = vmatpush1.msra.mxu0 %v1661
  %2070 = vmatprep.subr.mxu0 %v1658
  %2071 = vmatpush1.msra.mxu0 %v1657
  %2072 = vmatprep.subr.mxu0 %v1654
  %2073 = vmatpush1.msra.mxu0 %v1653
  %2074 = vmatprep.subr.mxu0 %v1650
  %2075 = vmatpush1.msra.mxu0 %v1649
  %2076 = vmatprep.subr.mxu0 %v1646
  %2077 = vmatpush1.msra.mxu0 %v1645
  %2078 = vmatprep.subr.mxu0 %v1642
  %2079 = vmatpush1.msra.mxu0 %v1641
  %2080 = vmatprep.subr.mxu0 %v1638
  %2081 = vmatpush1.msra.mxu0 %v1637
  %2082 = vmatprep.subr.mxu0 %v1634
  %2083 = vmatpush1.msra.mxu0 %v1633
  %2084 = vmatprep.subr.mxu0 %v1630
  %2085 = vmatpush1.msra.mxu0 %v1629
  %2086 = vmatprep.subr.mxu0 %v1626
  %2087 = vmatpush1.msra.mxu0 %v1625
  %2088 = vmatprep.subr.mxu0 %v1622
  %2089 = vmatpush1.msra.mxu0 %v1621
  %2090 = vmatprep.subr.mxu0 %v1618
  %2091 = vmatpush1.msra.mxu0 %v1617
  %2092 = vmatprep.subr.mxu0 %v1614
  %2093 = vmatpush1.msra.mxu0 %v1613
  %2094 = vmatprep.subr.mxu0 %v1610
  %2095 = vmatpush1.msra.mxu0 %v1609
  %2096 = vmatprep.subr.mxu0 0.0
  %2097 = vmatpush2.msra.mxu0 0.0
  %2098 = vmatprep.subr.mxu0 %v1741
  %2099 = vmatpush2.msra.mxu0 %v1738
  %2100 = vmatprep.subr.mxu0 %v1726
  %2101 = vmatpush2.msra.mxu0 %v1725
  %2102 = vmatprep.subr.mxu0 %v1722
  %2103 = vmatpush2.msra.mxu0 %v1721
  %2104 = vmatprep.subr.mxu0 %v1718
  %2105 = vmatpush2.msra.mxu0 %v1717
  %2106 = vmatprep.subr.mxu0 %v1714
  %2107 = vmatpush2.msra.mxu0 %v1713
  %2108 = vmatprep.subr.mxu0 %v1710
  %2109 = vmatpush2.msra.mxu0 %v1709
  %2110 = vmatprep.subr.mxu0 %v1706
  %2111 = vmatpush2.msra.mxu0 %v1705
  %2112 = vmatprep.subr.mxu0 %v1702
  %2113 = vmatpush2.msra.mxu0 %v1701
  %2114 = vmatprep.subr.mxu0 %v1698
  %2115 = vmatpush2.msra.mxu0 %v1697
  %2116 = vmatprep.subr.mxu0 %v1694
  %2117 = vmatpush2.msra.mxu0 %v1693
  %2118 = vmatprep.subr.mxu0 %v1690
  %2119 = vmatpush2.msra.mxu0 %v1689
  %2120 = vmatprep.subr.mxu0 %v1686
  %2121 = vmatpush2.msra.mxu0 %v1685
  %2122 = vmatprep.subr.mxu0 %v1682
  %2123 = vmatpush2.msra.mxu0 %v1681
  %2124 = vmatprep.subr.mxu0 %v1678
  %2125 = vmatpush2.msra.mxu0 %v1677
  %2126 = vmatprep.subr.mxu0 %v1674
  %2127 = vmatpush2.msra.mxu0 %v1673
  %2128 = vmatprep.mubr.f32.mxu0 %v296
  %2129 = vmatmul.mubr.f32.gmra.mxu0 %v16
  %v2130 = vpop.f32.mrf.mxu0
  %v2131 = vadd.f32 %v2024, %v2130
  %v2132 = vpop.f32.mrf.mxu0
  %v2133 = vadd.f32 %v2026, %v2132
  %2134 = vmatprep.mubr.f32.mxu0 %v299
  %2135 = vmatmul.mubr.f32.gmra.mxu0 %v20
  %v2136 = vpop.f32.mrf.mxu0
  %v2137 = vadd.f32 %v2030, %v2136
  %v2138 = vpop.f32.mrf.mxu0
  %v2139 = vadd.f32 %v2032, %v2138
  %2140 = vmatprep.mubr.f32.mxu0 %v302
  %2141 = vmatmul.mubr.f32.gmra.mxu0 %v24
  %v2142 = vpop.f32.mrf.mxu0
  %v2143 = vadd.f32 %v2036, %v2142
  %v2144 = vpop.f32.mrf.mxu0
  %v2145 = vadd.f32 %v2038, %v2144
  %2146 = vmatprep.mubr.f32.mxu0 %v305
  %2147 = vmatmul.mubr.f32.gmra.mxu0 %v28
  %v2148 = vpop.f32.mrf.mxu0
  %v2149 = vadd.f32 %v2042, %v2148
  %v2150 = vpop.f32.mrf.mxu0
  %v2151 = vadd.f32 %v2044, %v2150
  %2152 = vmatprep.mubr.f32.mxu0 %v308
  %2153 = vmatmul.mubr.f32.gmra.mxu0 %v32
  %v2154 = vpop.f32.mrf.mxu0
  %v2155 = vadd.f32 %v2048, %v2154
  %v2156 = vpop.f32.mrf.mxu0
  %v2157 = vadd.f32 %v2050, %v2156
  %2158 = vmatprep.mubr.f32.mxu0 %v311
  %2159 = vmatmul.mubr.f32.gmra.mxu0 %v36
  %v2160 = vpop.f32.mrf.mxu0
  %v2161 = vadd.f32 %v2054, %v2160
  %v2162 = vpop.f32.mrf.mxu0
  %v2163 = vadd.f32 %v2056, %v2162
  %2164 = vmatprep.mubr.f32.mxu0 %v314
  %2165 = vmatmul.mubr.f32.gmra.mxu0 %v40
  %v2166 = vpop.f32.mrf.mxu0
  %v2167 = vadd.f32 %v2060, %v2166
  %v2168 = vpop.f32.mrf.mxu0
  %v2169 = vadd.f32 %v2062, %v2168
  %2170 = vdwg.mxu0
  %v2171 = vmax.f32 %v1450, %v1917
  %v2172 = vmax.f32 %v1451, %v1919
  %v2173 = vmax.f32 %v1452, %v2131
  %v2174 = vmax.f32 %v1453, %v2133
  %v2175 = vmax.f32 %v1454, %v1923
  %v2176 = vmax.f32 %v1455, %v1925
  %v2177 = vmax.f32 %v1456, %v2137
  %v2178 = vmax.f32 %v1457, %v2139
  %v2179 = vmax.f32 %v1458, %v1929
  %v2180 = vmax.f32 %v1459, %v1931
  %v2181 = vmax.f32 %v1460, %v2143
  %v2182 = vmax.f32 %v1461, %v2145
  %v2183 = vmax.f32 %v1462, %v1935
  %v2184 = vmax.f32 %v1463, %v1937
  %v2185 = vmax.f32 %v1464, %v2149
  %v2186 = vmax.f32 %v1465, %v2151
  %v2187 = vmax.f32 %v1466, %v1941
  %v2188 = vmax.f32 %v1467, %v1943
  %v2189 = vmax.f32 %v1468, %v2155
  %v2190 = vmax.f32 %v1469, %v2157
  %v2191 = vmax.f32 %v1470, %v1947
  %v2192 = vmax.f32 %v1471, %v1949
  %v2193 = vmax.f32 %v1472, %v2161
  %v2194 = vmax.f32 %v1473, %v2163
  %v2195 = vmax.f32 %v1474, %v1953
  %v2196 = vmax.f32 %v1475, %v1955
  %v2197 = vmax.f32 %v1476, %v2167
  %v2198 = vmax.f32 %v1477, %v2169
  %s2199 = scalar_lea.vmem %s0, 6048
  %v2200 = vld [vmem:[%s2199] sm:$0xff]
  %v2201 = vld [vmem:[%s2199 + $0x8] sm:$0xff]
  %v2202 = vld [vmem:[%s2199 + $0x10] sm:$0xff]
  %v2203 = vld [vmem:[%s2199 + $0x18] sm:$0xff]
  %v2204 = vld [vmem:[%s2199 + $0x20] sm:$0xff]
  %v2205 = vld [vmem:[%s2199 + $0x28] sm:$0xff]
  %v2206 = vld [vmem:[%s2199 + $0x30] sm:$0xff]
  %v2207 = vld [vmem:[%s2199 + $0x38] sm:$0xff]
  %v2208 = vld [vmem:[%s2199 + $0x40] sm:$0xff]
  %v2209 = vld [vmem:[%s2199 + $0x48] sm:$0xff]
  %v2210 = vld [vmem:[%s2199 + $0x50] sm:$0xff]
  %v2211 = vld [vmem:[%s2199 + $0x58] sm:$0xff]
  %v2212 = vld [vmem:[%s2199 + $0x60] sm:$0xff]
  %v2213 = vld [vmem:[%s2199 + $0x68] sm:$0xff]
  %v2214 = vld [vmem:[%s2199 + $0x70] sm:$0xff]
  %v2215 = vld [vmem:[%s2199 + $0x78] sm:$0xff]
  %v2216 = vld [vmem:[%s2199 + $0x80] sm:$0xff]
  %v2217 = vld [vmem:[%s2199 + $0x88] sm:$0xff]
  %v2218 = vld [vmem:[%s2199 + $0x90] sm:$0xff]
  %v2219 = vld [vmem:[%s2199 + $0x98] sm:$0xff]
  %v2220 = vld [vmem:[%s2199 + $0xa0] sm:$0xff]
  %v2221 = vld [vmem:[%s2199 + $0xa8] sm:$0xff]
  %v2222 = vld [vmem:[%s2199 + $0xb0] sm:$0xff]
  %v2223 = vld [vmem:[%s2199 + $0xb8] sm:$0xff]
  %v2224 = vld [vmem:[%s2199 + $0xc0] sm:$0xff]
  %v2225 = vld [vmem:[%s2199 + $0xc8] sm:$0xff]
  %v2226 = vld [vmem:[%s2199 + $0xd0] sm:$0xff]
  %v2227 = vld [vmem:[%s2199 + $0xd8] sm:$0xff]
  %v2228 = vld [vmem:[%s2199 + $0xe0] sm:$0xff]
  %v2229 = vld [vmem:[%s2199 + $0xe8] sm:$0xff]
  %v2230 = vld [vmem:[%s2199 + $0xf0] sm:$0xff]
  %v2231 = vld [vmem:[%s2199 + $0xf8] sm:$0xff]
  %v2232 = vld [vmem:[%s2199 + $0x100] sm:$0xff]
  %v2233 = vld [vmem:[%s2199 + $0x108] sm:$0xff]
  %v2234 = vld [vmem:[%s2199 + $0x110] sm:$0xff]
  %v2235 = vld [vmem:[%s2199 + $0x118] sm:$0xff]
  %v2236 = vld [vmem:[%s2199 + $0x120] sm:$0xff]
  %v2237 = vld [vmem:[%s2199 + $0x128] sm:$0xff]
  %v2238 = vld [vmem:[%s2199 + $0x130] sm:$0xff]
  %v2239 = vld [vmem:[%s2199 + $0x138] sm:$0xff]
  %v2240 = vld [vmem:[%s2199 + $0x140] sm:$0xff]
  %v2241 = vld [vmem:[%s2199 + $0x148] sm:$0xff]
  %v2242 = vld [vmem:[%s2199 + $0x150] sm:$0xff]
  %v2243 = vld [vmem:[%s2199 + $0x158] sm:$0xff]
  %v2244 = vld [vmem:[%s2199 + $0x160] sm:$0xff]
  %v2245 = vld [vmem:[%s2199 + $0x168] sm:$0xff]
  %v2246 = vld [vmem:[%s2199 + $0x170] sm:$0xff]
  %v2247 = vld [vmem:[%s2199 + $0x178] sm:$0xff]
  %v2248 = vld [vmem:[%s2199 + $0x180] sm:$0xff]
  %v2249 = vld [vmem:[%s2199 + $0x188] sm:$0xff]
  %v2250 = vld [vmem:[%s2199 + $0x190] sm:$0xff]
  %v2251 = vld [vmem:[%s2199 + $0x198] sm:$0xff]
  %v2252 = vld [vmem:[%s2199 + $0x1a0] sm:$0xff]
  %v2253 = vld [vmem:[%s2199 + $0x1a8] sm:$0xff]
  %v2254 = vld [vmem:[%s2199 + $0x1b0] sm:$0xff]
  %v2255 = vld [vmem:[%s2199 + $0x1b8] sm:$0xff]
  %v2256 = vld [vmem:[%s2199 + $0x1c0] sm:$0xff]
  %v2257 = vld [vmem:[%s2199 + $0x1c8] sm:$0xff]
  %v2258 = vld [vmem:[%s2199 + $0x1d0] sm:$0xff]
  %v2259 = vld [vmem:[%s2199 + $0x1d8] sm:$0xff]
  %v2260 = vld [vmem:[%s2199 + $0x1e0] sm:$0xff]
  %v2261 = vld [vmem:[%s2199 + $0x1e8] sm:$0xff]
  %v2262 = vld [vmem:[%s2199 + $0x1f0] sm:$0xff]
  %v2263 = vld [vmem:[%s2199 + $0x1f8] sm:$0xff]
  %v2264 = vld [vmem:[%s2199 + $0x200] sm:$0xff]
  %v2265 = vld [vmem:[%s2199 + $0x208] sm:$0xff]
  %v2266 = vld [vmem:[%s2199 + $0x210] sm:$0xff]
  %v2267 = vld [vmem:[%s2199 + $0x218] sm:$0xff]
  %v2268 = vld [vmem:[%s2199 + $0x220] sm:$0xff]
  %v2269 = vld [vmem:[%s2199 + $0x228] sm:$0xff]
  %v2270 = vld [vmem:[%s2199 + $0x230] sm:$0xff]
  %v2271 = vld [vmem:[%s2199 + $0x238] sm:$0xff]
  %v2272 = vld [vmem:[%s2199 + $0x240] sm:$0xff]
  %v2273 = vld [vmem:[%s2199 + $0x248] sm:$0xff]
  %v2274 = vld [vmem:[%s2199 + $0x250] sm:$0xff]
  %v2275 = vld [vmem:[%s2199 + $0x258] sm:$0xff]
  %v2276 = vld [vmem:[%s2199 + $0x260] sm:$0xff]
  %v2277 = vld [vmem:[%s2199 + $0x268] sm:$0xff]
  %v2278 = vld [vmem:[%s2199 + $0x270] sm:$0xff]
  %v2279 = vld [vmem:[%s2199 + $0x278] sm:$0xff]
  %v2280 = vld [vmem:[%s2199 + $0x280] sm:$0xff]
  %v2281 = vld [vmem:[%s2199 + $0x288] sm:$0xff]
  %v2282 = vld [vmem:[%s2199 + $0x290] sm:$0xff]
  %v2283 = vld [vmem:[%s2199 + $0x298] sm:$0xff]
  %v2284 = vld [vmem:[%s2199 + $0x2a0] sm:$0xff]
  %v2285 = vld [vmem:[%s2199 + $0x2a8] sm:$0xff]
  %v2286 = vld [vmem:[%s2199 + $0x2b0] sm:$0xff]
  %v2287 = vld [vmem:[%s2199 + $0x2b8] sm:$0xff]
  %v2288 = vld [vmem:[%s2199 + $0x2c0] sm:$0xff]
  %v2289 = vld [vmem:[%s2199 + $0x2c8] sm:$0xff]
  %v2290 = vld [vmem:[%s2199 + $0x2d0] sm:$0xff]
  %v2291 = vld [vmem:[%s2199 + $0x2d8] sm:$0xff]
  %v2292 = vld [vmem:[%s2199 + $0x2e0] sm:$0xff]
  %v2293 = vld [vmem:[%s2199 + $0x2e8] sm:$0xff]
  %v2294 = vld [vmem:[%s2199 + $0x2f0] sm:$0xff]
  %v2295 = vld [vmem:[%s2199 + $0x2f8] sm:$0xff]
  %v2296 = vld [vmem:[%s2199 + $0x300] sm:$0xff]
  %v2297 = vld [vmem:[%s2199 + $0x308] sm:$0xff]
  %v2298 = vld [vmem:[%s2199 + $0x310] sm:$0xff]
  %v2299 = vld [vmem:[%s2199 + $0x318] sm:$0xff]
  %v2300 = vld [vmem:[%s2199 + $0x320] sm:$0xff]
  %v2301 = vld [vmem:[%s2199 + $0x328] sm:$0xff]
  %v2302 = vld [vmem:[%s2199 + $0x330] sm:$0xff]
  %v2303 = vld [vmem:[%s2199 + $0x338] sm:$0xff]
  %v2304 = vld [vmem:[%s2199 + $0x340] sm:$0xff]
  %v2305 = vld [vmem:[%s2199 + $0x348] sm:$0xff]
  %v2306 = vld [vmem:[%s2199 + $0x350] sm:$0xff]
  %v2307 = vld [vmem:[%s2199 + $0x358] sm:$0xff]
  %v2308 = vld [vmem:[%s2199 + $0x360] sm:$0xff]
  %v2309 = vld [vmem:[%s2199 + $0x368] sm:$0xff]
  %v2310 = vld [vmem:[%s2199 + $0x370] sm:$0xff]
  %v2311 = vld [vmem:[%s2199 + $0x378] sm:$0xff]
  %v2312 = vld [vmem:[%s2199 + $0x380] sm:$0xff]
  %v2313 = vld [vmem:[%s2199 + $0x388] sm:$0xff]
  %v2314 = vld [vmem:[%s2199 + $0x390] sm:$0xff]
  %v2315 = vld [vmem:[%s2199 + $0x398] sm:$0xff]
  %v2316 = vld [vmem:[%s2199 + $0x3a0] sm:$0xff]
  %v2317 = vld [vmem:[%s2199 + $0x3a8] sm:$0xff]
  %v2318 = vld [vmem:[%s2199 + $0x3b0] sm:$0xff]
  %v2319 = vld [vmem:[%s2199 + $0x3b8] sm:$0xff]
  %v2320 = vld [vmem:[%s2199 + $0x3c0] sm:$0xff]
  %v2321 = vld [vmem:[%s2199 + $0x3c8] sm:$0xff]
  %v2322 = vld [vmem:[%s2199 + $0x3d0] sm:$0xff]
  %v2323 = vld [vmem:[%s2199 + $0x3d8] sm:$0xff]
  %v2324 = vld [vmem:[%s2199 + $0x3e0] sm:$0xff]
  %v2325 = vld [vmem:[%s2199 + $0x3e8] sm:$0xff]
  %v2326 = vld [vmem:[%s2199 + $0x3f0] sm:$0xff]
  %v2327 = vld [vmem:[%s2199 + $0x3f8] sm:$0xff]
  %v2328 = vld [vmem:[%s2199 + $0x400] sm:$0xff]
  %v2329 = vld [vmem:[%s2199 + $0x408] sm:$0xff]
  %v2330 = vld [vmem:[%s2199 + $0x410] sm:$0xff]
  %v2331 = vld [vmem:[%s2199 + $0x418] sm:$0xff]
  %v2332 = vld [vmem:[%s2199 + $0x420] sm:$0xff]
  %v2333 = vld [vmem:[%s2199 + $0x428] sm:$0xff]
  %v2334 = vld [vmem:[%s2199 + $0x430] sm:$0xff]
  %v2335 = vld [vmem:[%s2199 + $0x438] sm:$0xff]
  %v2336 = vld [vmem:[%s2199 + $0x440] sm:$0xff]
  %v2337 = vld [vmem:[%s2199 + $0x448] sm:$0xff]
  %v2338 = vld [vmem:[%s2199 + $0x450] sm:$0xff]
  %v2339 = vld [vmem:[%s2199 + $0x458] sm:$0xff]
  %v2340 = vld [vmem:[%s2199 + $0x460] sm:$0xff]
  %v2341 = vld [vmem:[%s2199 + $0x468] sm:$0xff]
  %v2342 = vld [vmem:[%s2199 + $0x470] sm:$0xff]
  %v2343 = vld [vmem:[%s2199 + $0x478] sm:$0xff]
  %v2344 = vld [vmem:[%s2199 + $0x480] sm:$0xff]
  %v2345 = vld [vmem:[%s2199 + $0x488] sm:$0xff]
  %v2346 = vld [vmem:[%s2199 + $0x490] sm:$0xff]
  %v2347 = vld [vmem:[%s2199 + $0x498] sm:$0xff]
  %v2348 = vld [vmem:[%s2199 + $0x4a0] sm:$0xff]
  %v2349 = vld [vmem:[%s2199 + $0x4a8] sm:$0xff]
  %v2350 = vld [vmem:[%s2199 + $0x4b0] sm:$0xff]
  %v2351 = vld [vmem:[%s2199 + $0x4b8] sm:$0xff]
  %v2352 = vld [vmem:[%s2199 + $0x4c0] sm:$0xff]
  %v2353 = vld [vmem:[%s2199 + $0x4c8] sm:$0xff]
  %v2354 = vld [vmem:[%s2199 + $0x4d0] sm:$0xff]
  %v2355 = vld [vmem:[%s2199 + $0x4d8] sm:$0xff]
  %v2356 = vld [vmem:[%s2199 + $0x4e0] sm:$0xff]
  %v2357 = vld [vmem:[%s2199 + $0x4e8] sm:$0xff]
  %v2358 = vld [vmem:[%s2199 + $0x4f0] sm:$0xff]
  %v2359 = vld [vmem:[%s2199 + $0x4f8] sm:$0xff]
  %v2360 = vld [vmem:[%s2199 + $0x500] sm:$0xff]
  %v2361 = vld [vmem:[%s2199 + $0x508] sm:$0xff]
  %v2362 = vld [vmem:[%s2199 + $0x510] sm:$0xff]
  %v2363 = vld [vmem:[%s2199 + $0x518] sm:$0xff]
  %v2364 = vld [vmem:[%s2199 + $0x520] sm:$0xff]
  %v2365 = vld [vmem:[%s2199 + $0x528] sm:$0xff]
  %v2366 = vld [vmem:[%s2199 + $0x530] sm:$0xff]
  %v2367 = vld [vmem:[%s2199 + $0x538] sm:$0xff]
  %v2368 = vld [vmem:[%s2199 + $0x540] sm:$0xff]
  %v2369 = vld [vmem:[%s2199 + $0x548] sm:$0xff]
  %v2370 = vld [vmem:[%s2199 + $0x550] sm:$0xff]
  %v2371 = vld [vmem:[%s2199 + $0x558] sm:$0xff]
  %v2372 = vld [vmem:[%s2199 + $0x560] sm:$0xff]
  %v2373 = vld [vmem:[%s2199 + $0x568] sm:$0xff]
  %v2374 = vld [vmem:[%s2199 + $0x570] sm:$0xff]
  %v2375 = vld [vmem:[%s2199 + $0x578] sm:$0xff]
  %v2376 = vld [vmem:[%s2199 + $0x580] sm:$0xff]
  %v2377 = vld [vmem:[%s2199 + $0x588] sm:$0xff]
  %v2378 = vld [vmem:[%s2199 + $0x590] sm:$0xff]
  %v2379 = vld [vmem:[%s2199 + $0x598] sm:$0xff]
  %v2380 = vld [vmem:[%s2199 + $0x5a0] sm:$0xff]
  %v2381 = vld [vmem:[%s2199 + $0x5a8] sm:$0xff]
  %v2382 = vld [vmem:[%s2199 + $0x5b0] sm:$0xff]
  %v2383 = vld [vmem:[%s2199 + $0x5b8] sm:$0xff]
  %v2384 = vld [vmem:[%s2199 + $0x5c0] sm:$0xff]
  %v2385 = vld [vmem:[%s2199 + $0x5c8] sm:$0xff]
  %v2386 = vld [vmem:[%s2199 + $0x5d0] sm:$0xff]
  %v2387 = vld [vmem:[%s2199 + $0x5d8] sm:$0xff]
  %v2388 = vld [vmem:[%s2199 + $0x5e0] sm:$0xff]
  %v2389 = vld [vmem:[%s2199 + $0x5e8] sm:$0xff]
  %v2390 = vld [vmem:[%s2199 + $0x5f0] sm:$0xff]
  %v2391 = vld [vmem:[%s2199 + $0x5f8] sm:$0xff]
  %v2392 = vld [vmem:[%s2199 + $0x600] sm:$0xff]
  %v2393 = vld [vmem:[%s2199 + $0x608] sm:$0xff]
  %v2394 = vld [vmem:[%s2199 + $0x610] sm:$0xff]
  %v2395 = vld [vmem:[%s2199 + $0x618] sm:$0xff]
  %v2396 = vld [vmem:[%s2199 + $0x620] sm:$0xff]
  %v2397 = vld [vmem:[%s2199 + $0x628] sm:$0xff]
  %v2398 = vld [vmem:[%s2199 + $0x630] sm:$0xff]
  %v2399 = vld [vmem:[%s2199 + $0x638] sm:$0xff]
  %v2400 = vld [vmem:[%s2199 + $0x640] sm:$0xff]
  %v2401 = vld [vmem:[%s2199 + $0x648] sm:$0xff]
  %v2402 = vld [vmem:[%s2199 + $0x650] sm:$0xff]
  %v2403 = vld [vmem:[%s2199 + $0x658] sm:$0xff]
  %v2404 = vld [vmem:[%s2199 + $0x660] sm:$0xff]
  %v2405 = vld [vmem:[%s2199 + $0x668] sm:$0xff]
  %v2406 = vld [vmem:[%s2199 + $0x670] sm:$0xff]
  %v2407 = vld [vmem:[%s2199 + $0x678] sm:$0xff]
  %v2408 = vld [vmem:[%s2199 + $0x680] sm:$0xff]
  %v2409 = vld [vmem:[%s2199 + $0x688] sm:$0xff]
  %v2410 = vld [vmem:[%s2199 + $0x690] sm:$0xff]
  %v2411 = vld [vmem:[%s2199 + $0x698] sm:$0xff]
  %v2412 = vld [vmem:[%s2199 + $0x6a0] sm:$0xff]
  %v2413 = vld [vmem:[%s2199 + $0x6a8] sm:$0xff]
  %v2414 = vld [vmem:[%s2199 + $0x6b0] sm:$0xff]
  %v2415 = vld [vmem:[%s2199 + $0x6b8] sm:$0xff]
  %v2416 = vld [vmem:[%s2199 + $0x6c0] sm:$0xff]
  %v2417 = vld [vmem:[%s2199 + $0x6c8] sm:$0xff]
  %v2418 = vld [vmem:[%s2199 + $0x6d0] sm:$0xff]
  %v2419 = vld [vmem:[%s2199 + $0x6d8] sm:$0xff]
  %v2420 = vld [vmem:[%s2199 + $0x6e0] sm:$0xff]
  %v2421 = vld [vmem:[%s2199 + $0x6e8] sm:$0xff]
  %v2422 = vld [vmem:[%s2199 + $0x6f0] sm:$0xff]
  %v2423 = vld [vmem:[%s2199 + $0x6f8] sm:$0xff]
  %v2424 = vld [vmem:[%s2199 + $0x700] sm:$0xff]
  %v2425 = vld [vmem:[%s2199 + $0x708] sm:$0xff]
  %v2426 = vld [vmem:[%s2199 + $0x710] sm:$0xff]
  %v2427 = vld [vmem:[%s2199 + $0x718] sm:$0xff]
  %v2428 = vld [vmem:[%s2199 + $0x720] sm:$0xff]
  %v2429 = vld [vmem:[%s2199 + $0x728] sm:$0xff]
  %v2430 = vld [vmem:[%s2199 + $0x730] sm:$0xff]
  %v2431 = vld [vmem:[%s2199 + $0x738] sm:$0xff]
  %v2432 = vld [vmem:[%s2199 + $0x740] sm:$0xff]
  %v2433 = vld [vmem:[%s2199 + $0x748] sm:$0xff]
  %v2434 = vld [vmem:[%s2199 + $0x750] sm:$0xff]
  %v2435 = vld [vmem:[%s2199 + $0x758] sm:$0xff]
  %v2436 = vld [vmem:[%s2199 + $0x760] sm:$0xff]
  %v2437 = vld [vmem:[%s2199 + $0x768] sm:$0xff]
  %v2438 = vld [vmem:[%s2199 + $0x770] sm:$0xff]
  %v2439 = vld [vmem:[%s2199 + $0x778] sm:$0xff]
  %v2440 = vld [vmem:[%s2199 + $0x780] sm:$0xff]
  %v2441 = vld [vmem:[%s2199 + $0x788] sm:$0xff]
  %v2442 = vld [vmem:[%s2199 + $0x790] sm:$0xff]
  %v2443 = vld [vmem:[%s2199 + $0x798] sm:$0xff]
  %v2444 = vld [vmem:[%s2199 + $0x7a0] sm:$0xff]
  %v2445 = vld [vmem:[%s2199 + $0x7a8] sm:$0xff]
  %v2446 = vld [vmem:[%s2199 + $0x7b0] sm:$0xff]
  %v2447 = vld [vmem:[%s2199 + $0x7b8] sm:$0xff]
  %v2448 = vld [vmem:[%s2199 + $0x7c0] sm:$0xf]
  %v2449 = vld [vmem:[%s2199 + $0x7c8] sm:$0xf]
  %v2450 = vld [vmem:[%s2199 + $0x7d0] sm:$0xf]
  %v2451 = vld [vmem:[%s2199 + $0x7d8] sm:$0xf]
  %v2453 = vsel %vm316, %v2448, 0
  %v2456 = vsel %vm316, %v2449, 0
  %v2459 = vsel %vm316, %v2450, 0
  %v2462 = vsel %vm316, %v2451, 0
  %2464 = vmatprep.subr.mxu0 %v2261
  %2465 = vmatpush1.msra.mxu0 %v2260
  %2466 = vmatprep.subr.mxu0 %v2257
  %2467 = vmatpush1.msra.mxu0 %v2256
  %2468 = vmatprep.subr.mxu0 %v2253
  %2469 = vmatpush1.msra.mxu0 %v2252
  %2470 = vmatprep.subr.mxu0 %v2249
  %2471 = vmatpush1.msra.mxu0 %v2248
  %2472 = vmatprep.subr.mxu0 %v2245
  %2473 = vmatpush1.msra.mxu0 %v2244
  %2474 = vmatprep.subr.mxu0 %v2241
  %2475 = vmatpush1.msra.mxu0 %v2240
  %2476 = vmatprep.subr.mxu0 %v2237
  %2477 = vmatpush1.msra.mxu0 %v2236
  %2478 = vmatprep.subr.mxu0 %v2233
  %2479 = vmatpush1.msra.mxu0 %v2232
  %2480 = vmatprep.subr.mxu0 %v2229
  %2481 = vmatpush1.msra.mxu0 %v2228
  %2482 = vmatprep.subr.mxu0 %v2225
  %2483 = vmatpush1.msra.mxu0 %v2224
  %2484 = vmatprep.subr.mxu0 %v2221
  %2485 = vmatpush1.msra.mxu0 %v2220
  %2486 = vmatprep.subr.mxu0 %v2217
  %2487 = vmatpush1.msra.mxu0 %v2216
  %2488 = vmatprep.subr.mxu0 %v2213
  %2489 = vmatpush1.msra.mxu0 %v2212
  %2490 = vmatprep.subr.mxu0 %v2209
  %2491 = vmatpush1.msra.mxu0 %v2208
  %2492 = vmatprep.subr.mxu0 %v2205
  %2493 = vmatpush1.msra.mxu0 %v2204
  %2494 = vmatprep.subr.mxu0 %v2201
  %2495 = vmatpush1.msra.mxu0 %v2200
  %2496 = vmatprep.subr.mxu0 %v2325
  %2497 = vmatpush2.msra.mxu0 %v2324
  %2498 = vmatprep.subr.mxu0 %v2321
  %2499 = vmatpush2.msra.mxu0 %v2320
  %2500 = vmatprep.subr.mxu0 %v2317
  %2501 = vmatpush2.msra.mxu0 %v2316
  %2502 = vmatprep.subr.mxu0 %v2313
  %2503 = vmatpush2.msra.mxu0 %v2312
  %2504 = vmatprep.subr.mxu0 %v2309
  %2505 = vmatpush2.msra.mxu0 %v2308
  %2506 = vmatprep.subr.mxu0 %v2305
  %2507 = vmatpush2.msra.mxu0 %v2304
  %2508 = vmatprep.subr.mxu0 %v2301
  %2509 = vmatpush2.msra.mxu0 %v2300
  %2510 = vmatprep.subr.mxu0 %v2297
  %2511 = vmatpush2.msra.mxu0 %v2296
  %2512 = vmatprep.subr.mxu0 %v2293
  %2513 = vmatpush2.msra.mxu0 %v2292
  %2514 = vmatprep.subr.mxu0 %v2289
  %2515 = vmatpush2.msra.mxu0 %v2288
  %2516 = vmatprep.subr.mxu0 %v2285
  %2517 = vmatpush2.msra.mxu0 %v2284
  %2518 = vmatprep.subr.mxu0 %v2281
  %2519 = vmatpush2.msra.mxu0 %v2280
  %2520 = vmatprep.subr.mxu0 %v2277
  %2521 = vmatpush2.msra.mxu0 %v2276
  %2522 = vmatprep.subr.mxu0 %v2273
  %2523 = vmatpush2.msra.mxu0 %v2272
  %2524 = vmatprep.subr.mxu0 %v2269
  %2525 = vmatpush2.msra.mxu0 %v2268
  %2526 = vmatprep.subr.mxu0 %v2265
  %2527 = vmatpush2.msra.mxu0 %v2264
  %2528 = vmatprep.mubr.f32.mxu0 %v15
  %2529 = vmatmul.mubr.f32.gmra.mxu0 %v14
  %v2530 = vpop.f32.mrf.mxu0
  %v2531 = vadd.f32 0.0, %v2530
  %v2532 = vpop.f32.mrf.mxu0
  %v2533 = vadd.f32 0.0, %v2532
  %2534 = vmatprep.mubr.f32.mxu0 %v19
  %2535 = vmatmul.mubr.f32.gmra.mxu0 %v18
  %v2536 = vpop.f32.mrf.mxu0
  %v2537 = vadd.f32 0.0, %v2536
  %v2538 = vpop.f32.mrf.mxu0
  %v2539 = vadd.f32 0.0, %v2538
  %2540 = vmatprep.mubr.f32.mxu0 %v23
  %2541 = vmatmul.mubr.f32.gmra.mxu0 %v22
  %v2542 = vpop.f32.mrf.mxu0
  %v2543 = vadd.f32 0.0, %v2542
  %v2544 = vpop.f32.mrf.mxu0
  %v2545 = vadd.f32 0.0, %v2544
  %2546 = vmatprep.mubr.f32.mxu0 %v27
  %2547 = vmatmul.mubr.f32.gmra.mxu0 %v26
  %v2548 = vpop.f32.mrf.mxu0
  %v2549 = vadd.f32 0.0, %v2548
  %v2550 = vpop.f32.mrf.mxu0
  %v2551 = vadd.f32 0.0, %v2550
  %2552 = vmatprep.mubr.f32.mxu0 %v31
  %2553 = vmatmul.mubr.f32.gmra.mxu0 %v30
  %v2554 = vpop.f32.mrf.mxu0
  %v2555 = vadd.f32 0.0, %v2554
  %v2556 = vpop.f32.mrf.mxu0
  %v2557 = vadd.f32 0.0, %v2556
  %2558 = vmatprep.mubr.f32.mxu0 %v35
  %2559 = vmatmul.mubr.f32.gmra.mxu0 %v34
  %v2560 = vpop.f32.mrf.mxu0
  %v2561 = vadd.f32 0.0, %v2560
  %v2562 = vpop.f32.mrf.mxu0
  %v2563 = vadd.f32 0.0, %v2562
  %2564 = vmatprep.mubr.f32.mxu0 %v39
  %2565 = vmatmul.mubr.f32.gmra.mxu0 %v38
  %v2566 = vpop.f32.mrf.mxu0
  %v2567 = vadd.f32 0.0, %v2566
  %v2568 = vpop.f32.mrf.mxu0
  %v2569 = vadd.f32 0.0, %v2568
  %2570 = vdwg.mxu0
  %2571 = vmatprep.subr.mxu0 %v2389
  %2572 = vmatpush1.msra.mxu0 %v2388
  %2573 = vmatprep.subr.mxu0 %v2385
  %2574 = vmatpush1.msra.mxu0 %v2384
  %2575 = vmatprep.subr.mxu0 %v2381
  %2576 = vmatpush1.msra.mxu0 %v2380
  %2577 = vmatprep.subr.mxu0 %v2377
  %2578 = vmatpush1.msra.mxu0 %v2376
  %2579 = vmatprep.subr.mxu0 %v2373
  %2580 = vmatpush1.msra.mxu0 %v2372
  %2581 = vmatprep.subr.mxu0 %v2369
  %2582 = vmatpush1.msra.mxu0 %v2368
  %2583 = vmatprep.subr.mxu0 %v2365
  %2584 = vmatpush1.msra.mxu0 %v2364
  %2585 = vmatprep.subr.mxu0 %v2361
  %2586 = vmatpush1.msra.mxu0 %v2360
  %2587 = vmatprep.subr.mxu0 %v2357
  %2588 = vmatpush1.msra.mxu0 %v2356
  %2589 = vmatprep.subr.mxu0 %v2353
  %2590 = vmatpush1.msra.mxu0 %v2352
  %2591 = vmatprep.subr.mxu0 %v2349
  %2592 = vmatpush1.msra.mxu0 %v2348
  %2593 = vmatprep.subr.mxu0 %v2345
  %2594 = vmatpush1.msra.mxu0 %v2344
  %2595 = vmatprep.subr.mxu0 %v2341
  %2596 = vmatpush1.msra.mxu0 %v2340
  %2597 = vmatprep.subr.mxu0 %v2337
  %2598 = vmatpush1.msra.mxu0 %v2336
  %2599 = vmatprep.subr.mxu0 %v2333
  %2600 = vmatpush1.msra.mxu0 %v2332
  %2601 = vmatprep.subr.mxu0 %v2329
  %2602 = vmatpush1.msra.mxu0 %v2328
  %2603 = vmatprep.subr.mxu0 0.0
  %2604 = vmatpush2.msra.mxu0 0.0
  %2605 = vmatprep.subr.mxu0 %v2456
  %2606 = vmatpush2.msra.mxu0 %v2453
  %2607 = vmatprep.subr.mxu0 %v2445
  %2608 = vmatpush2.msra.mxu0 %v2444
  %2609 = vmatprep.subr.mxu0 %v2441
  %2610 = vmatpush2.msra.mxu0 %v2440
  %2611 = vmatprep.subr.mxu0 %v2437
  %2612 = vmatpush2.msra.mxu0 %v2436
  %2613 = vmatprep.subr.mxu0 %v2433
  %2614 = vmatpush2.msra.mxu0 %v2432
  %2615 = vmatprep.subr.mxu0 %v2429
  %2616 = vmatpush2.msra.mxu0 %v2428
  %2617 = vmatprep.subr.mxu0 %v2425
  %2618 = vmatpush2.msra.mxu0 %v2424
  %2619 = vmatprep.subr.mxu0 %v2421
  %2620 = vmatpush2.msra.mxu0 %v2420
  %2621 = vmatprep.subr.mxu0 %v2417
  %2622 = vmatpush2.msra.mxu0 %v2416
  %2623 = vmatprep.subr.mxu0 %v2413
  %2624 = vmatpush2.msra.mxu0 %v2412
  %2625 = vmatprep.subr.mxu0 %v2409
  %2626 = vmatpush2.msra.mxu0 %v2408
  %2627 = vmatprep.subr.mxu0 %v2405
  %2628 = vmatpush2.msra.mxu0 %v2404
  %2629 = vmatprep.subr.mxu0 %v2401
  %2630 = vmatpush2.msra.mxu0 %v2400
  %2631 = vmatprep.subr.mxu0 %v2397
  %2632 = vmatpush2.msra.mxu0 %v2396
  %2633 = vmatprep.subr.mxu0 %v2393
  %2634 = vmatpush2.msra.mxu0 %v2392
  %2635 = vmatprep.mubr.f32.mxu0 %v296
  %2636 = vmatmul.mubr.f32.gmra.mxu0 %v16
  %v2637 = vpop.f32.mrf.mxu0
  %v2638 = vadd.f32 %v2531, %v2637
  %v2639 = vpop.f32.mrf.mxu0
  %v2640 = vadd.f32 %v2533, %v2639
  %2641 = vmatprep.mubr.f32.mxu0 %v299
  %2642 = vmatmul.mubr.f32.gmra.mxu0 %v20
  %v2643 = vpop.f32.mrf.mxu0
  %v2644 = vadd.f32 %v2537, %v2643
  %v2645 = vpop.f32.mrf.mxu0
  %v2646 = vadd.f32 %v2539, %v2645
  %2647 = vmatprep.mubr.f32.mxu0 %v302
  %2648 = vmatmul.mubr.f32.gmra.mxu0 %v24
  %v2649 = vpop.f32.mrf.mxu0
  %v2650 = vadd.f32 %v2543, %v2649
  %v2651 = vpop.f32.mrf.mxu0
  %v2652 = vadd.f32 %v2545, %v2651
  %2653 = vmatprep.mubr.f32.mxu0 %v305
  %2654 = vmatmul.mubr.f32.gmra.mxu0 %v28
  %v2655 = vpop.f32.mrf.mxu0
  %v2656 = vadd.f32 %v2549, %v2655
  %v2657 = vpop.f32.mrf.mxu0
  %v2658 = vadd.f32 %v2551, %v2657
  %2659 = vmatprep.mubr.f32.mxu0 %v308
  %2660 = vmatmul.mubr.f32.gmra.mxu0 %v32
  %v2661 = vpop.f32.mrf.mxu0
  %v2662 = vadd.f32 %v2555, %v2661
  %v2663 = vpop.f32.mrf.mxu0
  %v2664 = vadd.f32 %v2557, %v2663
  %2665 = vmatprep.mubr.f32.mxu0 %v311
  %2666 = vmatmul.mubr.f32.gmra.mxu0 %v36
  %v2667 = vpop.f32.mrf.mxu0
  %v2668 = vadd.f32 %v2561, %v2667
  %v2669 = vpop.f32.mrf.mxu0
  %v2670 = vadd.f32 %v2563, %v2669
  %2671 = vmatprep.mubr.f32.mxu0 %v314
  %2672 = vmatmul.mubr.f32.gmra.mxu0 %v40
  %v2673 = vpop.f32.mrf.mxu0
  %v2674 = vadd.f32 %v2567, %v2673
  %v2675 = vpop.f32.mrf.mxu0
  %v2676 = vadd.f32 %v2569, %v2675
  %2677 = vdwg.mxu0
  %2678 = vmatprep.subr.mxu0 %v2263
  %2679 = vmatpush1.msra.mxu0 %v2262
  %2680 = vmatprep.subr.mxu0 %v2259
  %2681 = vmatpush1.msra.mxu0 %v2258
  %2682 = vmatprep.subr.mxu0 %v2255
  %2683 = vmatpush1.msra.mxu0 %v2254
  %2684 = vmatprep.subr.mxu0 %v2251
  %2685 = vmatpush1.msra.mxu0 %v2250
  %2686 = vmatprep.subr.mxu0 %v2247
  %2687 = vmatpush1.msra.mxu0 %v2246
  %2688 = vmatprep.subr.mxu0 %v2243
  %2689 = vmatpush1.msra.mxu0 %v2242
  %2690 = vmatprep.subr.mxu0 %v2239
  %2691 = vmatpush1.msra.mxu0 %v2238
  %2692 = vmatprep.subr.mxu0 %v2235
  %2693 = vmatpush1.msra.mxu0 %v2234
  %2694 = vmatprep.subr.mxu0 %v2231
  %2695 = vmatpush1.msra.mxu0 %v2230
  %2696 = vmatprep.subr.mxu0 %v2227
  %2697 = vmatpush1.msra.mxu0 %v2226
  %2698 = vmatprep.subr.mxu0 %v2223
  %2699 = vmatpush1.msra.mxu0 %v2222
  %2700 = vmatprep.subr.mxu0 %v2219
  %2701 = vmatpush1.msra.mxu0 %v2218
  %2702 = vmatprep.subr.mxu0 %v2215
  %2703 = vmatpush1.msra.mxu0 %v2214
  %2704 = vmatprep.subr.mxu0 %v2211
  %2705 = vmatpush1.msra.mxu0 %v2210
  %2706 = vmatprep.subr.mxu0 %v2207
  %2707 = vmatpush1.msra.mxu0 %v2206
  %2708 = vmatprep.subr.mxu0 %v2203
  %2709 = vmatpush1.msra.mxu0 %v2202
  %2710 = vmatprep.subr.mxu0 %v2327
  %2711 = vmatpush2.msra.mxu0 %v2326
  %2712 = vmatprep.subr.mxu0 %v2323
  %2713 = vmatpush2.msra.mxu0 %v2322
  %2714 = vmatprep.subr.mxu0 %v2319
  %2715 = vmatpush2.msra.mxu0 %v2318
  %2716 = vmatprep.subr.mxu0 %v2315
  %2717 = vmatpush2.msra.mxu0 %v2314
  %2718 = vmatprep.subr.mxu0 %v2311
  %2719 = vmatpush2.msra.mxu0 %v2310
  %2720 = vmatprep.subr.mxu0 %v2307
  %2721 = vmatpush2.msra.mxu0 %v2306
  %2722 = vmatprep.subr.mxu0 %v2303
  %2723 = vmatpush2.msra.mxu0 %v2302
  %2724 = vmatprep.subr.mxu0 %v2299
  %2725 = vmatpush2.msra.mxu0 %v2298
  %2726 = vmatprep.subr.mxu0 %v2295
  %2727 = vmatpush2.msra.mxu0 %v2294
  %2728 = vmatprep.subr.mxu0 %v2291
  %2729 = vmatpush2.msra.mxu0 %v2290
  %2730 = vmatprep.subr.mxu0 %v2287
  %2731 = vmatpush2.msra.mxu0 %v2286
  %2732 = vmatprep.subr.mxu0 %v2283
  %2733 = vmatpush2.msra.mxu0 %v2282
  %2734 = vmatprep.subr.mxu0 %v2279
  %2735 = vmatpush2.msra.mxu0 %v2278
  %2736 = vmatprep.subr.mxu0 %v2275
  %2737 = vmatpush2.msra.mxu0 %v2274
  %2738 = vmatprep.subr.mxu0 %v2271
  %2739 = vmatpush2.msra.mxu0 %v2270
  %2740 = vmatprep.subr.mxu0 %v2267
  %2741 = vmatpush2.msra.mxu0 %v2266
  %2742 = vmatprep.mubr.f32.mxu0 %v15
  %2743 = vmatmul.mubr.f32.gmra.mxu0 %v14
  %v2744 = vpop.f32.mrf.mxu0
  %v2745 = vadd.f32 0.0, %v2744
  %v2746 = vpop.f32.mrf.mxu0
  %v2747 = vadd.f32 0.0, %v2746
  %2748 = vmatprep.mubr.f32.mxu0 %v19
  %2749 = vmatmul.mubr.f32.gmra.mxu0 %v18
  %v2750 = vpop.f32.mrf.mxu0
  %v2751 = vadd.f32 0.0, %v2750
  %v2752 = vpop.f32.mrf.mxu0
  %v2753 = vadd.f32 0.0, %v2752
  %2754 = vmatprep.mubr.f32.mxu0 %v23
  %2755 = vmatmul.mubr.f32.gmra.mxu0 %v22
  %v2756 = vpop.f32.mrf.mxu0
  %v2757 = vadd.f32 0.0, %v2756
  %v2758 = vpop.f32.mrf.mxu0
  %v2759 = vadd.f32 0.0, %v2758
  %2760 = vmatprep.mubr.f32.mxu0 %v27
  %2761 = vmatmul.mubr.f32.gmra.mxu0 %v26
  %v2762 = vpop.f32.mrf.mxu0
  %v2763 = vadd.f32 0.0, %v2762
  %v2764 = vpop.f32.mrf.mxu0
  %v2765 = vadd.f32 0.0, %v2764
  %2766 = vmatprep.mubr.f32.mxu0 %v31
  %2767 = vmatmul.mubr.f32.gmra.mxu0 %v30
  %v2768 = vpop.f32.mrf.mxu0
  %v2769 = vadd.f32 0.0, %v2768
  %v2770 = vpop.f32.mrf.mxu0
  %v2771 = vadd.f32 0.0, %v2770
  %2772 = vmatprep.mubr.f32.mxu0 %v35
  %2773 = vmatmul.mubr.f32.gmra.mxu0 %v34
  %v2774 = vpop.f32.mrf.mxu0
  %v2775 = vadd.f32 0.0, %v2774
  %v2776 = vpop.f32.mrf.mxu0
  %v2777 = vadd.f32 0.0, %v2776
  %2778 = vmatprep.mubr.f32.mxu0 %v39
  %2779 = vmatmul.mubr.f32.gmra.mxu0 %v38
  %v2780 = vpop.f32.mrf.mxu0
  %v2781 = vadd.f32 0.0, %v2780
  %v2782 = vpop.f32.mrf.mxu0
  %v2783 = vadd.f32 0.0, %v2782
  %2784 = vdwg.mxu0
  %2785 = vmatprep.subr.mxu0 %v2391
  %2786 = vmatpush1.msra.mxu0 %v2390
  %2787 = vmatprep.subr.mxu0 %v2387
  %2788 = vmatpush1.msra.mxu0 %v2386
  %2789 = vmatprep.subr.mxu0 %v2383
  %2790 = vmatpush1.msra.mxu0 %v2382
  %2791 = vmatprep.subr.mxu0 %v2379
  %2792 = vmatpush1.msra.mxu0 %v2378
  %2793 = vmatprep.subr.mxu0 %v2375
  %2794 = vmatpush1.msra.mxu0 %v2374
  %2795 = vmatprep.subr.mxu0 %v2371
  %2796 = vmatpush1.msra.mxu0 %v2370
  %2797 = vmatprep.subr.mxu0 %v2367
  %2798 = vmatpush1.msra.mxu0 %v2366
  %2799 = vmatprep.subr.mxu0 %v2363
  %2800 = vmatpush1.msra.mxu0 %v2362
  %2801 = vmatprep.subr.mxu0 %v2359
  %2802 = vmatpush1.msra.mxu0 %v2358
  %2803 = vmatprep.subr.mxu0 %v2355
  %2804 = vmatpush1.msra.mxu0 %v2354
  %2805 = vmatprep.subr.mxu0 %v2351
  %2806 = vmatpush1.msra.mxu0 %v2350
  %2807 = vmatprep.subr.mxu0 %v2347
  %2808 = vmatpush1.msra.mxu0 %v2346
  %2809 = vmatprep.subr.mxu0 %v2343
  %2810 = vmatpush1.msra.mxu0 %v2342
  %2811 = vmatprep.subr.mxu0 %v2339
  %2812 = vmatpush1.msra.mxu0 %v2338
  %2813 = vmatprep.subr.mxu0 %v2335
  %2814 = vmatpush1.msra.mxu0 %v2334
  %2815 = vmatprep.subr.mxu0 %v2331
  %2816 = vmatpush1.msra.mxu0 %v2330
  %2817 = vmatprep.subr.mxu0 0.0
  %2818 = vmatpush2.msra.mxu0 0.0
  %2819 = vmatprep.subr.mxu0 %v2462
  %2820 = vmatpush2.msra.mxu0 %v2459
  %2821 = vmatprep.subr.mxu0 %v2447
  %2822 = vmatpush2.msra.mxu0 %v2446
  %2823 = vmatprep.subr.mxu0 %v2443
  %2824 = vmatpush2.msra.mxu0 %v2442
  %2825 = vmatprep.subr.mxu0 %v2439
  %2826 = vmatpush2.msra.mxu0 %v2438
  %2827 = vmatprep.subr.mxu0 %v2435
  %2828 = vmatpush2.msra.mxu0 %v2434
  %2829 = vmatprep.subr.mxu0 %v2431
  %2830 = vmatpush2.msra.mxu0 %v2430
  %2831 = vmatprep.subr.mxu0 %v2427
  %2832 = vmatpush2.msra.mxu0 %v2426
  %2833 = vmatprep.subr.mxu0 %v2423
  %2834 = vmatpush2.msra.mxu0 %v2422
  %2835 = vmatprep.subr.mxu0 %v2419
  %2836 = vmatpush2.msra.mxu0 %v2418
  %2837 = vmatprep.subr.mxu0 %v2415
  %2838 = vmatpush2.msra.mxu0 %v2414
  %2839 = vmatprep.subr.mxu0 %v2411
  %2840 = vmatpush2.msra.mxu0 %v2410
  %2841 = vmatprep.subr.mxu0 %v2407
  %2842 = vmatpush2.msra.mxu0 %v2406
  %2843 = vmatprep.subr.mxu0 %v2403
  %2844 = vmatpush2.msra.mxu0 %v2402
  %2845 = vmatprep.subr.mxu0 %v2399
  %2846 = vmatpush2.msra.mxu0 %v2398
  %2847 = vmatprep.subr.mxu0 %v2395
  %2848 = vmatpush2.msra.mxu0 %v2394
  %2849 = vmatprep.mubr.f32.mxu0 %v296
  %2850 = vmatmul.mubr.f32.gmra.mxu0 %v16
  %v2851 = vpop.f32.mrf.mxu0
  %v2852 = vadd.f32 %v2745, %v2851
  %v2853 = vpop.f32.mrf.mxu0
  %v2854 = vadd.f32 %v2747, %v2853
  %2855 = vmatprep.mubr.f32.mxu0 %v299
  %2856 = vmatmul.mubr.f32.gmra.mxu0 %v20
  %v2857 = vpop.f32.mrf.mxu0
  %v2858 = vadd.f32 %v2751, %v2857
  %v2859 = vpop.f32.mrf.mxu0
  %v2860 = vadd.f32 %v2753, %v2859
  %2861 = vmatprep.mubr.f32.mxu0 %v302
  %2862 = vmatmul.mubr.f32.gmra.mxu0 %v24
  %v2863 = vpop.f32.mrf.mxu0
  %v2864 = vadd.f32 %v2757, %v2863
  %v2865 = vpop.f32.mrf.mxu0
  %v2866 = vadd.f32 %v2759, %v2865
  %2867 = vmatprep.mubr.f32.mxu0 %v305
  %2868 = vmatmul.mubr.f32.gmra.mxu0 %v28
  %v2869 = vpop.f32.mrf.mxu0
  %v2870 = vadd.f32 %v2763, %v2869
  %v2871 = vpop.f32.mrf.mxu0
  %v2872 = vadd.f32 %v2765, %v2871
  %2873 = vmatprep.mubr.f32.mxu0 %v308
  %2874 = vmatmul.mubr.f32.gmra.mxu0 %v32
  %v2875 = vpop.f32.mrf.mxu0
  %v2876 = vadd.f32 %v2769, %v2875
  %v2877 = vpop.f32.mrf.mxu0
  %v2878 = vadd.f32 %v2771, %v2877
  %2879 = vmatprep.mubr.f32.mxu0 %v311
  %2880 = vmatmul.mubr.f32.gmra.mxu0 %v36
  %v2881 = vpop.f32.mrf.mxu0
  %v2882 = vadd.f32 %v2775, %v2881
  %v2883 = vpop.f32.mrf.mxu0
  %v2884 = vadd.f32 %v2777, %v2883
  %2885 = vmatprep.mubr.f32.mxu0 %v314
  %2886 = vmatmul.mubr.f32.gmra.mxu0 %v40
  %v2887 = vpop.f32.mrf.mxu0
  %v2888 = vadd.f32 %v2781, %v2887
  %v2889 = vpop.f32.mrf.mxu0
  %v2890 = vadd.f32 %v2783, %v2889
  %2891 = vdwg.mxu0
  %v2892 = vmax.f32 %v2171, %v2638
  %v2893 = vmax.f32 %v2172, %v2640
  %v2894 = vmax.f32 %v2173, %v2852
  %v2895 = vmax.f32 %v2174, %v2854
  %v2896 = vmax.f32 %v2175, %v2644
  %v2897 = vmax.f32 %v2176, %v2646
  %v2898 = vmax.f32 %v2177, %v2858
  %v2899 = vmax.f32 %v2178, %v2860
  %v2900 = vmax.f32 %v2179, %v2650
  %v2901 = vmax.f32 %v2180, %v2652
  %v2902 = vmax.f32 %v2181, %v2864
  %v2903 = vmax.f32 %v2182, %v2866
  %v2904 = vmax.f32 %v2183, %v2656
  %v2905 = vmax.f32 %v2184, %v2658
  %v2906 = vmax.f32 %v2185, %v2870
  %v2907 = vmax.f32 %v2186, %v2872
  %v2908 = vmax.f32 %v2187, %v2662
  %v2909 = vmax.f32 %v2188, %v2664
  %v2910 = vmax.f32 %v2189, %v2876
  %v2911 = vmax.f32 %v2190, %v2878
  %v2912 = vmax.f32 %v2191, %v2668
  %v2913 = vmax.f32 %v2192, %v2670
  %v2914 = vmax.f32 %v2193, %v2882
  %v2915 = vmax.f32 %v2194, %v2884
  %v2916 = vmax.f32 %v2195, %v2674
  %v2917 = vmax.f32 %v2196, %v2676
  %v2918 = vmax.f32 %v2197, %v2888
  %v2919 = vmax.f32 %v2198, %v2890
  %v2920 = vld [vmem:[%s2] sm:$0xff]
  %v2921 = vld [vmem:[%s2 + $0x8] sm:$0xff]
  %v2922 = vld [vmem:[%s2 + $0x10] sm:$0xff]
  %v2923 = vld [vmem:[%s2 + $0x18] sm:$0xff]
  %v2924 = vld [vmem:[%s2 + $0x20] sm:$0xff]
  %v2925 = vld [vmem:[%s2 + $0x28] sm:$0xff]
  %v2926 = vld [vmem:[%s2 + $0x30] sm:$0x3]
  %2928 = vset.pattern.permute.xlu0 0
  %2929 = vperm.xlu0 %2928, %v2920
  %v2930 = vpop.permute.xlu0 %2929
  %2933 = vset.pattern.permute.xlu0 0
  %2934 = vperm.xlu0 %2933, %v2921
  %v2935 = vpop.permute.xlu0 %2934
  %2938 = vset.pattern.permute.xlu0 0
  %2939 = vperm.xlu0 %2938, %v2922
  %v2940 = vpop.permute.xlu0 %2939
  %2943 = vset.pattern.permute.xlu0 0
  %2944 = vperm.xlu0 %2943, %v2923
  %v2945 = vpop.permute.xlu0 %2944
  %2948 = vset.pattern.permute.xlu0 0
  %2949 = vperm.xlu0 %2948, %v2924
  %v2950 = vpop.permute.xlu0 %2949
  %2953 = vset.pattern.permute.xlu0 0
  %2954 = vperm.xlu0 %2953, %v2925
  %v2955 = vpop.permute.xlu0 %2954
  %2958 = vset.pattern.permute.xlu0 0
  %2959 = vperm.xlu0 %2958, %v2926
  %v2960 = vpop.permute.xlu0 %2959
  %v2962 = vadd.f32 %v2892, %v2930
  %v2963 = vadd.f32 %v2893, %v2930
  %v2964 = vadd.f32 %v2894, %v2930
  %v2965 = vadd.f32 %v2895, %v2930
  %v2966 = vadd.f32 %v2896, %v2935
  %v2967 = vadd.f32 %v2897, %v2935
  %v2968 = vadd.f32 %v2898, %v2935
  %v2969 = vadd.f32 %v2899, %v2935
  %v2970 = vadd.f32 %v2900, %v2940
  %v2971 = vadd.f32 %v2901, %v2940
  %v2972 = vadd.f32 %v2902, %v2940
  %v2973 = vadd.f32 %v2903, %v2940
  %v2974 = vadd.f32 %v2904, %v2945
  %v2975 = vadd.f32 %v2905, %v2945
  %v2976 = vadd.f32 %v2906, %v2945
  %v2977 = vadd.f32 %v2907, %v2945
  %v2978 = vadd.f32 %v2908, %v2950
  %v2979 = vadd.f32 %v2909, %v2950
  %v2980 = vadd.f32 %v2910, %v2950
  %v2981 = vadd.f32 %v2911, %v2950
  %v2982 = vadd.f32 %v2912, %v2955
  %v2983 = vadd.f32 %v2913, %v2955
  %v2984 = vadd.f32 %v2914, %v2955
  %v2985 = vadd.f32 %v2915, %v2955
  %v2986 = vadd.f32 %v2916, %v2960
  %v2987 = vadd.f32 %v2917, %v2960
  %v2988 = vadd.f32 %v2918, %v2960
  %v2989 = vadd.f32 %v2919, %v2960
  %v2990 = vmax.f32 %v2962, 0.0
  %v2991 = vmax.f32 %v2963, 0.0
  %v2992 = vmax.f32 %v2964, 0.0
  %v2993 = vmax.f32 %v2965, 0.0
  %v2994 = vmax.f32 %v2966, 0.0
  %v2995 = vmax.f32 %v2967, 0.0
  %v2996 = vmax.f32 %v2968, 0.0
  %v2997 = vmax.f32 %v2969, 0.0
  %v2998 = vmax.f32 %v2970, 0.0
  %v2999 = vmax.f32 %v2971, 0.0
  %v3000 = vmax.f32 %v2972, 0.0
  %v3001 = vmax.f32 %v2973, 0.0
  %v3002 = vmax.f32 %v2974, 0.0
  %v3003 = vmax.f32 %v2975, 0.0
  %v3004 = vmax.f32 %v2976, 0.0
  %v3005 = vmax.f32 %v2977, 0.0
  %v3006 = vmax.f32 %v2978, 0.0
  %v3007 = vmax.f32 %v2979, 0.0
  %v3008 = vmax.f32 %v2980, 0.0
  %v3009 = vmax.f32 %v2981, 0.0
  %v3010 = vmax.f32 %v2982, 0.0
  %v3011 = vmax.f32 %v2983, 0.0
  %v3012 = vmax.f32 %v2984, 0.0
  %v3013 = vmax.f32 %v2985, 0.0
  %v3014 = vmax.f32 %v2986, 0.0
  %v3015 = vmax.f32 %v2987, 0.0
  %v3016 = vmax.f32 %v2988, 0.0
  %v3017 = vmax.f32 %v2989, 0.0
  %v3018 = vpack.c.bf16 %v2994, %v2990
  %v3019 = vpack.c.bf16 %v2995, %v2991
  %v3020 = vpack.c.bf16 %v2996, %v2992
  %v3021 = vpack.c.bf16 %v2997, %v2993
  %v3022 = vpack.c.bf16 %v3002, %v2998
  %v3023 = vpack.c.bf16 %v3003, %v2999
  %v3024 = vpack.c.bf16 %v3004, %v3000
  %v3025 = vpack.c.bf16 %v3005, %v3001
  %v3026 = vpack.c.bf16 %v3010, %v3006
  %v3027 = vpack.c.bf16 %v3011, %v3007
  %v3028 = vpack.c.bf16 %v3012, %v3008
  %v3029 = vpack.c.bf16 %v3013, %v3009
  %v3030 = vpack.c.bf16 %v3014, %v3014
  %v3031 = vpack.c.bf16 %v3015, %v3015
  %v3032 = vpack.c.bf16 %v3016, %v3016
  %v3033 = vpack.c.bf16 %v3017, %v3017
  %v3050 = vunpack.c.l.b16 %v3018
  %v3051 = vunpack.c.l.b16 %v3019
  %v3052 = vunpack.c.l.b16 %v3020
  %v3053 = vunpack.c.l.b16 %v3021
  %v3054 = vunpack.c.h.b16 %v3018
  %v3055 = vunpack.c.h.b16 %v3019
  %v3056 = vunpack.c.h.b16 %v3020
  %v3057 = vunpack.c.h.b16 %v3021
  %v3058 = vunpack.c.l.b16 %v3022
  %v3059 = vunpack.c.l.b16 %v3023
  %v3060 = vunpack.c.l.b16 %v3024
  %v3061 = vunpack.c.l.b16 %v3025
  %v3062 = vunpack.c.h.b16 %v3022
  %v3063 = vunpack.c.h.b16 %v3023
  %v3064 = vunpack.c.h.b16 %v3024
  %v3065 = vunpack.c.h.b16 %v3025
  %v3066 = vunpack.c.l.b16 %v3026
  %v3067 = vunpack.c.l.b16 %v3027
  %v3068 = vunpack.c.l.b16 %v3028
  %v3069 = vunpack.c.l.b16 %v3029
  %v3070 = vunpack.c.h.b16 %v3026
  %v3071 = vunpack.c.h.b16 %v3027
  %v3072 = vunpack.c.h.b16 %v3028
  %v3073 = vunpack.c.h.b16 %v3029
  %v3074 = vunpack.c.l.b16 %v3030
  %v3075 = vunpack.c.l.b16 %v3031
  %v3076 = vunpack.c.l.b16 %v3032
  %v3077 = vunpack.c.l.b16 %v3033
  %v3078 = vpack.c.b16 %v3051, %v3050
  %v3079 = vpack.c.b16 %v3053, %v3052
  %v3080 = vpack.c.b16 %v3055, %v3054
  %v3081 = vpack.c.b16 %v3057, %v3056
  %v3082 = vpack.c.b16 %v3059, %v3058
  %v3083 = vpack.c.b16 %v3061, %v3060
  %v3084 = vpack.c.b16 %v3063, %v3062
  %v3085 = vpack.c.b16 %v3065, %v3064
  %v3086 = vpack.c.b16 %v3067, %v3066
  %v3087 = vpack.c.b16 %v3069, %v3068
  %v3088 = vpack.c.b16 %v3071, %v3070
  %v3089 = vpack.c.b16 %v3073, %v3072
  %v3090 = vpack.c.b16 %v3075, %v3074
  %v3091 = vpack.c.b16 %v3077, %v3076
  %3106 = vst [vmem:[%s3] sm:$0xff] %v3078
  %3107 = vst [vmem:[%s3 + $0x8] sm:$0xff] %v3079
  %3108 = vst [vmem:[%s3 + $0x10] sm:$0xff] %v3080
  %3109 = vst [vmem:[%s3 + $0x18] sm:$0xff] %v3081
  %3110 = vst [vmem:[%s3 + $0x20] sm:$0xff] %v3082
  %3111 = vst [vmem:[%s3 + $0x28] sm:$0xff] %v3083
  %3112 = vst [vmem:[%s3 + $0x30] sm:$0xff] %v3084
  %3113 = vst [vmem:[%s3 + $0x38] sm:$0xff] %v3085
  %3114 = vst [vmem:[%s3 + $0x40] sm:$0xff] %v3086
  %3115 = vst [vmem:[%s3 + $0x48] sm:$0xff] %v3087
  %3116 = vst [vmem:[%s3 + $0x50] sm:$0xff] %v3088
  %3117 = vst [vmem:[%s3 + $0x58] sm:$0xff] %v3089
  %3118 = vst [vmem:[%s3 + $0x60] sm:$0x11] %v3090
  %3119 = vst [vmem:[%s3 + $0x68] sm:$0x11] %v3091
  // Predicated region
  $region14: #{filter_classifier_forward.4} parent=0 // pred_check
    _
  $region15: #{filter_classifier_forward.4} parent=0 // pred_check_branch
    %3121 = sbr.rel (0) target = $region17
  $region16: #{filter_classifier_forward.4} parent=0 // pred_region
    _
  $region17: #{filter_classifier_forward.4} parent=0 // pred_fallthru
    _
  // Predicated region
  $region18: #{filter_classifier_forward.4} parent=0 // pred_check
    _
  $region19: #{filter_classifier_forward.4} parent=0 // pred_check_branch
    %3123 = sbr.rel (0) target = $region21
  $region20: #{filter_classifier_forward.4} parent=0 // pred_region
    _
  $region21: #{filter_classifier_forward.4} parent=0 // pred_fallthru
    _

// kernel: filter_classifier_forward.5
$region0: #{filter_classifier_forward.5}
  #allocation0 [shape = 'u32[]', space=smem, size = 0x4, offset = 0x4, fixed_abs, tag = 'smem constant byte address 0x4 - core index']
  #allocation1 [shape = 'u32[144,128]{1,0:T(1,128)}', space=vmem, size = 0x12000, scoped, tag = 'internal scratch']
  #allocation2 [shape = 'f32[2,500]{1,0:T(2,128)}', space=vmem, size = 0x1000, scoped, tag = 'scratch operand']
  #allocation3 [shape = 'f32[1,1]{1,0:T(1,128)S(1)}', space=vmem, size = 0x200, scoped, tag = 'scoped memory for filter_classifier_forward.5']
  %s0 = inlined_call_operand.vmem [shape: bf16[50,2,256], index: 0, kind: input, shape index: {}]
  %s1 = inlined_call_operand.vmem [shape: bf16[50,256,500], index: 1, kind: input, shape index: {}]
  %s2 = inlined_call_operand.vmem [shape: f32[1,500], index: 2, kind: input, shape index: {}]
  %s3 = inlined_call_operand.vmem [shape: f32[500,1], index: 3, kind: input, shape index: {}]
  %s4 = inlined_call_operand.<no memory space> [shape: f32[1,1], index: 4, kind: input, shape index: {}]
  %s5 = inlined_call_operand.vmem [shape: f32[2,1], index: 5, kind: output, shape index: {}]
  %s6 = sld [smem:[#allocation0]]
  $region61: #{filter_classifier_forward.5} parent=0
    _
  %s8 = ssub.s32 1, %s6
  %s9 = scalar_select 0, %s8, %s6
  %v10 = vstv %s4
  %11 = vst [vmem:[#allocation3] sm:$0x1] %v10
  loop: start=0, step=1, limit=7
  $region2: #{filter_classifier_forward.5} parent=0 // loop_pre_header
    _
  $region3: #{filter_classifier_forward.5} parent=0 // loop_header
    %s13 = sphi 0, %s17
    %p14 = scmp.ge.s32.totalorder %s13, 7
    %s23 = sphi 0, %s25
    %s26 = sphi 0, %s23
    %s27 = sphi 0, %s26
    %s43 = sphi 0, %s27
    %s49 = sphi 0, %s51
    %s52 = sphi 0, %s49
    %s53 = sphi 0, %s52
    %s69 = sphi 0, %s53
    %s73 = sphi 0, %s73
    %s75 = sphi 0, %s73
    %s76 = sphi 0, %s75
    %s90 = sphi 0, %s76
    %s94 = sphi 0, %s94
    %s96 = sphi 0, %s94
    %s97 = sphi 0, %s96
    %s111 = sphi 0, %s97
    %s115 = sphi 0, %s115
    %s117 = sphi 0, %s115
    %s118 = sphi 0, %s117
    %s132 = sphi 0, %s118
    %s136 = sphi 0, %s136
    %s138 = sphi 0, %s136
    %s139 = sphi 0, %s138
    %s153 = sphi 0, %s139
  $region4: #{filter_classifier_forward.5} parent=0 // loop_header_branch
    %16 = sbr.rel (%p14) target = $region8
  $region5: #{filter_classifier_forward.5} parent=0 // loop_body
    %s18 = ssub.s32 %s13, 1
    %s19 = ssub.s32 %s13, 2
    %s20 = sadd.s32 %s13, 1
    %s21 = ssub.s32 %s13, %s20
    %p22 = scmp.eq.s32.totalorder %s21, 0
    %s24 = sadd.s32 %s23, 1
    %s25 = scalar_select %p22, %s23, %s24
    %p28 = pneg %p22
    %p29 = scmp.eq.s32.totalorder %s13, 4
    %p30 = por %p28, %p29
    %p31 = scmp.ne.s32.totalorder %s23, %s26
    %p32 = scmp.eq.s32.totalorder %s13, 0
    %p33 = por %p31, %p32
    %p34 = scmp.ne.s32.totalorder %s23, %s26
    %p35 = scmp.eq.s32.totalorder %s18, 4
    %p36 = por %p34, %p35
    %p37 = scmp.ne.s32.totalorder %s26, %s27
    %p38 = scmp.eq.s32.totalorder %s18, 0
    %p39 = por %p37, %p38
    %p40 = scmp.ne.s32.totalorder %s26, %s27
    %p41 = scmp.eq.s32.totalorder %s19, 4
    %p42 = por %p40, %p41
    %p44 = scmp.ne.s32.totalorder %s27, %s43
    %p45 = scmp.eq.s32.totalorder %s19, 0
    %p46 = por %p44, %p45
    %s47 = ssub.s32 %s13, %s20
    %p48 = scmp.eq.s32.totalorder %s47, 0
    %s50 = sadd.s32 %s49, 1
    %s51 = scalar_select %p48, %s49, %s50
    %p54 = pneg %p48
    %p55 = scmp.eq.s32.totalorder %s13, 4
    %p56 = por %p54, %p55
    %p57 = scmp.ne.s32.totalorder %s49, %s52
    %p58 = scmp.eq.s32.totalorder %s13, 0
    %p59 = por %p57, %p58
    %p60 = scmp.ne.s32.totalorder %s49, %s52
    %p61 = scmp.eq.s32.totalorder %s18, 4
    %p62 = por %p60, %p61
    %p63 = scmp.ne.s32.totalorder %s52, %s53
    %p64 = scmp.eq.s32.totalorder %s18, 0
    %p65 = por %p63, %p64
    %p66 = scmp.ne.s32.totalorder %s52, %s53
    %p67 = scmp.eq.s32.totalorder %s19, 4
    %p68 = por %p66, %p67
    %p70 = scmp.ne.s32.totalorder %s53, %s69
    %p71 = scmp.eq.s32.totalorder %s19, 0
    %p72 = por %p70, %p71
    %s74 = sadd.s32 %s73, 1
    %p77 = scmp.eq.s32.totalorder %s13, 4
    %p78 = scmp.ne.s32.totalorder %s73, %s75
    %p79 = scmp.eq.s32.totalorder %s13, 0
    %p80 = por %p78, %p79
    %p81 = scmp.ne.s32.totalorder %s73, %s75
    %p82 = scmp.eq.s32.totalorder %s18, 4
    %p83 = por %p81, %p82
    %p84 = scmp.ne.s32.totalorder %s75, %s76
    %p85 = scmp.eq.s32.totalorder %s18, 0
    %p86 = por %p84, %p85
    %p87 = scmp.ne.s32.totalorder %s75, %s76
    %p88 = scmp.eq.s32.totalorder %s19, 4
    %p89 = por %p87, %p88
    %p91 = scmp.ne.s32.totalorder %s76, %s90
    %p92 = scmp.eq.s32.totalorder %s19, 0
    %p93 = por %p91, %p92
    %s95 = sadd.s32 %s94, 1
    %p98 = scmp.eq.s32.totalorder %s13, 4
    %p99 = scmp.ne.s32.totalorder %s94, %s96
    %p100 = scmp.eq.s32.totalorder %s13, 0
    %p101 = por %p99, %p100
    %p102 = scmp.ne.s32.totalorder %s94, %s96
    %p103 = scmp.eq.s32.totalorder %s18, 4
    %p104 = por %p102, %p103
    %p105 = scmp.ne.s32.totalorder %s96, %s97
    %p106 = scmp.eq.s32.totalorder %s18, 0
    %p107 = por %p105, %p106
    %p108 = scmp.ne.s32.totalorder %s96, %s97
    %p109 = scmp.eq.s32.totalorder %s19, 4
    %p110 = por %p108, %p109
    %p112 = scmp.ne.s32.totalorder %s97, %s111
    %p113 = scmp.eq.s32.totalorder %s19, 0
    %p114 = por %p112, %p113
    %s116 = sadd.s32 %s115, 1
    %p119 = scmp.eq.s32.totalorder %s13, 4
    %p120 = scmp.ne.s32.totalorder %s115, %s117
    %p121 = scmp.eq.s32.totalorder %s13, 0
    %p122 = por %p120, %p121
    %p123 = scmp.ne.s32.totalorder %s115, %s117
    %p124 = scmp.eq.s32.totalorder %s18, 4
    %p125 = por %p123, %p124
    %p126 = scmp.ne.s32.totalorder %s117, %s118
    %p127 = scmp.eq.s32.totalorder %s18, 0
    %p128 = por %p126, %p127
    %p129 = scmp.ne.s32.totalorder %s117, %s118
    %p130 = scmp.eq.s32.totalorder %s19, 4
    %p131 = por %p129, %p130
    %p133 = scmp.ne.s32.totalorder %s118, %s132
    %p134 = scmp.eq.s32.totalorder %s19, 0
    %p135 = por %p133, %p134
    %s137 = sadd.s32 %s136, 1
    %p140 = scmp.eq.s32.totalorder %s13, 4
    %p141 = scmp.ne.s32.totalorder %s136, %s138
    %p142 = scmp.eq.s32.totalorder %s13, 0
    %p143 = por %p141, %p142
    %p144 = scmp.ne.s32.totalorder %s136, %s138
    %p145 = scmp.eq.s32.totalorder %s18, 4
    %p146 = por %p144, %p145
    %p147 = scmp.ne.s32.totalorder %s138, %s139
    %p148 = scmp.eq.s32.totalorder %s18, 0
    %p149 = por %p147, %p148
    %p150 = scmp.ne.s32.totalorder %s138, %s139
    %p151 = scmp.eq.s32.totalorder %s19, 4
    %p152 = por %p150, %p151
    %p154 = scmp.ne.s32.totalorder %s139, %s153
    %p155 = scmp.eq.s32.totalorder %s19, 0
    %p156 = por %p154, %p155
    %p157 = scmp.le.s32.totalorder 1, %s13
    %p158 = scmp.lt.s32.totalorder %s13, 6
    %p159 = pnand %p157, %p158
    %p160 = pneg %p159
    // Predicated region
    $region9: #{filter_classifier_forward.5} parent=5 // pred_check
      _
    $region10: #{filter_classifier_forward.5} parent=5 // pred_check_branch
      %162 = sbr.rel (%p159) target = $region12
    $region11: #{filter_classifier_forward.5} parent=5 // pred_region
      %s163 = ssub.s32 %s13, 1
      // Predicated region
      $region13: #{filter_classifier_forward.5} parent=11 // pred_check
        %p164 = pneg %p86
      $region14: #{filter_classifier_forward.5} parent=11 // pred_check_branch
        %166 = sbr.rel (%p164) target = $region16
      $region15: #{filter_classifier_forward.5} parent=11 // pred_region
        _
      $region16: #{filter_classifier_forward.5} parent=11 // pred_fallthru
        _
      // Predicated region
      $region17: #{filter_classifier_forward.5} parent=11 // pred_check
        %p167 = pneg %p107
      $region18: #{filter_classifier_forward.5} parent=11 // pred_check_branch
        %169 = sbr.rel (%p167) target = $region20
      $region19: #{filter_classifier_forward.5} parent=11 // pred_region
        _
      $region20: #{filter_classifier_forward.5} parent=11 // pred_fallthru
        _
      // Predicated region
      $region21: #{filter_classifier_forward.5} parent=11 // pred_check
        %p170 = pneg %p128
      $region22: #{filter_classifier_forward.5} parent=11 // pred_check_branch
        %172 = sbr.rel (%p170) target = $region24
      $region23: #{filter_classifier_forward.5} parent=11 // pred_region
        _
      $region24: #{filter_classifier_forward.5} parent=11 // pred_fallthru
        _
    $region12: #{filter_classifier_forward.5} parent=5 // pred_fallthru
      _
    %p173 = scmp.lt.s32.totalorder %s13, 5
    // Predicated region
    $region25: #{filter_classifier_forward.5} parent=5 // pred_check
      %p174 = pneg %p173
    $region26: #{filter_classifier_forward.5} parent=5 // pred_check_branch
      %176 = sbr.rel (%p174) target = $region28
    $region27: #{filter_classifier_forward.5} parent=5 // pred_region
      // Predicated region
      $region29: #{filter_classifier_forward.5} parent=27 // pred_check
        %p177 = pneg %p33
      $region30: #{filter_classifier_forward.5} parent=27 // pred_check_branch
        %179 = sbr.rel (%p177) target = $region32
      $region31: #{filter_classifier_forward.5} parent=27 // pred_region
        %s180 = smul.u32 10, %s13
        %p181 = scmp.lt.s32.totalorder %s180, 49
        %s182 = scalar_select %p181, %s180, 49
        %s183 = smul.addr %s182, 2
        %s184 = scalar_lea.vmem %s0, %s183
        %s185 = smul.u32 10, %s13
      $region32: #{filter_classifier_forward.5} parent=27 // pred_fallthru
        _
      // Predicated region
      $region33: #{filter_classifier_forward.5} parent=27 // pred_check
        %p186 = pneg %p59
      $region34: #{filter_classifier_forward.5} parent=27 // pred_check_branch
        %188 = sbr.rel (%p186) target = $region36
      $region35: #{filter_classifier_forward.5} parent=27 // pred_region
        %s189 = smul.u32 10, %s13
        %p190 = scmp.lt.s32.totalorder %s189, 49
        %s191 = scalar_select %p190, %s189, 49
        %s192 = smul.addr %s191, 128
        %s193 = smul.addr %s192, 4
        %s194 = scalar_lea.vmem %s1, %s193
        %s195 = smul.u32 10, %s13
      $region36: #{filter_classifier_forward.5} parent=27 // pred_fallthru
        _
    $region28: #{filter_classifier_forward.5} parent=5 // pred_fallthru
      _
    %p196 = scmp.le.s32.totalorder 1, %s13
    %p197 = scmp.lt.s32.totalorder %s13, 6
    %p198 = pnand %p196, %p197
    %p199 = pneg %p198
    // Predicated region
    $region37: #{filter_classifier_forward.5} parent=5 // pred_check
      _
    $region38: #{filter_classifier_forward.5} parent=5 // pred_check_branch
      %201 = sbr.rel (%p198) target = $region40
    $region39: #{filter_classifier_forward.5} parent=5 // pred_region
      %s202 = ssub.s32 %s13, 1
      %s203 = smul.u32 10, %s18
      %p204 = scmp.lt.s32.totalorder %s203, 49
      %s205 = scalar_select %p204, %s203, 49
      %s206 = smul.addr %s205, 2
      %s207 = scalar_lea.vmem %s0, %s206
      %p208 = pneg %p39
      %p209 = pneg %p36
      %s210 = smul.u32 10, %s18
      %p211 = scmp.lt.s32.totalorder %s210, 49
      %s212 = scalar_select %p211, %s210, 49
      %s213 = smul.addr %s212, 128
      %s214 = smul.addr %s213, 4
      %s215 = scalar_lea.vmem %s1, %s214
      %p216 = pneg %p65
      %p217 = pneg %p62
      %p218 = pneg %p86
      %p219 = pneg %p83
      %p220 = pneg %p107
      %p221 = pneg %p104
      %p222 = pneg %p128
      %p223 = pneg %p125
      %p224 = pneg %p149
      %p225 = pneg %p146
      %s226 = smul.u32 10, %s18
      %p227 = scmp.lt.s32.totalorder %s226, 49
      %s228 = scalar_select %p227, %s226, 49
      %s229 = smul.addr %s228, 2
      %s230 = scalar_lea.vmem %s0, %s229
      %s231 = smul.u32 10, %s18
      %s232 = smul.u32 10, %s18
      %p233 = scmp.lt.s32.totalorder %s232, 49
      %s234 = scalar_select %p233, %s232, 49
      %s235 = smul.addr %s234, 128
      %s236 = smul.addr %s235, 4
      %s237 = scalar_lea.vmem %s1, %s236
      %s238 = smul.u32 10, %s18
      %p239 = scmp.eq.s32.totalorder %s18, 0
      // Predicated region
      $region41: #{filter_classifier_forward.5} parent=39 // pred_check
        %p240 = pneg %p239
      $region42: #{filter_classifier_forward.5} parent=39 // pred_check_branch
        %242 = sbr.rel (%p240) target = $region44
      $region43: #{filter_classifier_forward.5} parent=39 // pred_region
        %vm243 = vcmask 1041408
        %vm244 = vcmask 1043458
        %vm245 = vmor %vm244, %vm243
        %vm246 = vcmask 1045508
        %vm247 = vmor %vm246, %vm245
        %vm248 = vcmask 949254
        %vm249 = vmor %vm248, %vm247
        %250 = vst.msk [vmem:[#allocation2] sm:$0xff] %vm249, 0.0
      $region44: #{filter_classifier_forward.5} parent=39 // pred_fallthru
        _
      %v251 = vld [vmem:[#allocation2] sm:$0xff]
      %v252 = vld [vmem:[%s230] sm:$0x3]
      %v253 = vld [vmem:[%s237] sm:$0xff]
      %v254 = vld [vmem:[%s237 + $0x8] sm:$0xff]
      %v255 = vld [vmem:[%s237 + $0x10] sm:$0xff]
      %v256 = vld [vmem:[%s237 + $0x18] sm:$0xff]
      %v257 = vld [vmem:[%s237 + $0x20] sm:$0xff]
      %v258 = vld [vmem:[%s237 + $0x28] sm:$0xff]
      %v259 = vld [vmem:[%s237 + $0x30] sm:$0xff]
      %v260 = vld [vmem:[%s237 + $0x38] sm:$0xff]
      %v261 = vld [vmem:[%s237 + $0x40] sm:$0xff]
      %v262 = vld [vmem:[%s237 + $0x48] sm:$0xff]
      %v263 = vld [vmem:[%s237 + $0x50] sm:$0xff]
      %v264 = vld [vmem:[%s237 + $0x58] sm:$0xff]
      %v265 = vld [vmem:[%s237 + $0x60] sm:$0xff]
      %v266 = vld [vmem:[%s237 + $0x68] sm:$0xff]
      %v267 = vld [vmem:[%s237 + $0x70] sm:$0xff]
      %v268 = vld [vmem:[%s237 + $0x78] sm:$0xff]
      %v269 = vld [vmem:[%s237 + $0x80] sm:$0xff]
      %v270 = vld [vmem:[%s237 + $0x88] sm:$0xff]
      %v271 = vld [vmem:[%s237 + $0x90] sm:$0xff]
      %v272 = vld [vmem:[%s237 + $0x98] sm:$0xff]
      %v273 = vld [vmem:[%s237 + $0xa0] sm:$0xff]
      %v274 = vld [vmem:[%s237 + $0xa8] sm:$0xff]
      %v275 = vld [vmem:[%s237 + $0xb0] sm:$0xff]
      %v276 = vld [vmem:[%s237 + $0xb8] sm:$0xff]
      %v277 = vld [vmem:[%s237 + $0xc0] sm:$0xff]
      %v278 = vld [vmem:[%s237 + $0xc8] sm:$0xff]
      %v279 = vld [vmem:[%s237 + $0xd0] sm:$0xff]
      %v280 = vld [vmem:[%s237 + $0xd8] sm:$0xff]
      %v281 = vld [vmem:[%s237 + $0xe0] sm:$0xff]
      %v282 = vld [vmem:[%s237 + $0xe8] sm:$0xff]
      %v283 = vld [vmem:[%s237 + $0xf0] sm:$0xff]
      %v284 = vld [vmem:[%s237 + $0xf8] sm:$0xff]
      %v285 = vld [vmem:[%s237 + $0x100] sm:$0xff]
      %v286 = vld [vmem:[%s237 + $0x108] sm:$0xff]
      %v287 = vld [vmem:[%s237 + $0x110] sm:$0xff]
      %v288 = vld [vmem:[%s237 + $0x118] sm:$0xff]
      %v289 = vld [vmem:[%s237 + $0x120] sm:$0xff]
      %v290 = vld [vmem:[%s237 + $0x128] sm:$0xff]
      %v291 = vld [vmem:[%s237 + $0x130] sm:$0xff]
      %v292 = vld [vmem:[%s237 + $0x138] sm:$0xff]
      %v293 = vld [vmem:[%s237 + $0x140] sm:$0xff]
      %v294 = vld [vmem:[%s237 + $0x148] sm:$0xff]
      %v295 = vld [vmem:[%s237 + $0x150] sm:$0xff]
      %v296 = vld [vmem:[%s237 + $0x158] sm:$0xff]
      %v297 = vld [vmem:[%s237 + $0x160] sm:$0xff]
      %v298 = vld [vmem:[%s237 + $0x168] sm:$0xff]
      %v299 = vld [vmem:[%s237 + $0x170] sm:$0xff]
      %v300 = vld [vmem:[%s237 + $0x178] sm:$0xff]
      %v301 = vld [vmem:[%s237 + $0x180] sm:$0xff]
      %v302 = vld [vmem:[%s237 + $0x188] sm:$0xff]
      %v303 = vld [vmem:[%s237 + $0x190] sm:$0xff]
      %v304 = vld [vmem:[%s237 + $0x198] sm:$0xff]
      %v305 = vld [vmem:[%s237 + $0x1a0] sm:$0xff]
      %v306 = vld [vmem:[%s237 + $0x1a8] sm:$0xff]
      %v307 = vld [vmem:[%s237 + $0x1b0] sm:$0xff]
      %v308 = vld [vmem:[%s237 + $0x1b8] sm:$0xff]
      %v309 = vld [vmem:[%s237 + $0x1c0] sm:$0xff]
      %v310 = vld [vmem:[%s237 + $0x1c8] sm:$0xff]
      %v311 = vld [vmem:[%s237 + $0x1d0] sm:$0xff]
      %v312 = vld [vmem:[%s237 + $0x1d8] sm:$0xff]
      %v313 = vld [vmem:[%s237 + $0x1e0] sm:$0xff]
      %v314 = vld [vmem:[%s237 + $0x1e8] sm:$0xff]
      %v315 = vld [vmem:[%s237 + $0x1f0] sm:$0xff]
      %v316 = vld [vmem:[%s237 + $0x1f8] sm:$0xff]
      %v319 = vunpack.c.l.s4 1966171168
      %v320 = vunpack.c.0.s8 %v319
      %v321 = vlaneseq
      %v322 = vshrl.u32 %v321, 7
      %v323 = vsub.s32 %v320, %v322
      %v324 = vrot.slane %v252, %v323
      %v325 = vcombine.high %v324, %v324
      %v327 = vunpack.c.l.s4 1966171168
      %v328 = vunpack.c.0.s8 %v327
      %v329 = vlaneseq
      %v330 = vshrl.u32 %v329, 7
      %v331 = vsub.s32 %v328, %v330
      %v332 = vrot.slane %v324, %v331
      %v334 = vunpack.c.l.s4 1966171168
      %v335 = vunpack.c.0.s8 %v334
      %v336 = vlaneseq
      %v337 = vshrl.u32 %v336, 7
      %v338 = vsub.s32 %v335, %v337
      %v339 = vrot.slane %v325, %v338
      %v406 = vunpack.c.l.b16 %v253
      %v407 = vunpack.c.h.b16 %v253
      %v408 = vunpack.c.l.b16 %v254
      %v409 = vunpack.c.h.b16 %v254
      %v410 = vunpack.c.l.b16 %v255
      %v411 = vunpack.c.h.b16 %v255
      %v412 = vunpack.c.l.b16 %v256
      %v413 = vunpack.c.h.b16 %v256
      %v414 = vunpack.c.l.b16 %v257
      %v415 = vunpack.c.h.b16 %v257
      %v416 = vunpack.c.l.b16 %v258
      %v417 = vunpack.c.h.b16 %v258
      %v418 = vunpack.c.l.b16 %v259
      %v419 = vunpack.c.h.b16 %v259
      %v420 = vunpack.c.l.b16 %v260
      %v421 = vunpack.c.h.b16 %v260
      %v422 = vunpack.c.l.b16 %v261
      %v423 = vunpack.c.h.b16 %v261
      %v424 = vunpack.c.l.b16 %v262
      %v425 = vunpack.c.h.b16 %v262
      %v426 = vunpack.c.l.b16 %v263
      %v427 = vunpack.c.h.b16 %v263
      %v428 = vunpack.c.l.b16 %v264
      %v429 = vunpack.c.h.b16 %v264
      %v430 = vunpack.c.l.b16 %v265
      %v431 = vunpack.c.h.b16 %v265
      %v432 = vunpack.c.l.b16 %v266
      %v433 = vunpack.c.h.b16 %v266
      %v434 = vunpack.c.l.b16 %v267
      %v435 = vunpack.c.h.b16 %v267
      %v436 = vunpack.c.l.b16 %v268
      %v437 = vunpack.c.h.b16 %v268
      %v438 = vunpack.c.l.b16 %v269
      %v439 = vunpack.c.h.b16 %v269
      %v440 = vunpack.c.l.b16 %v270
      %v441 = vunpack.c.h.b16 %v270
      %v442 = vunpack.c.l.b16 %v271
      %v443 = vunpack.c.h.b16 %v271
      %v444 = vunpack.c.l.b16 %v272
      %v445 = vunpack.c.h.b16 %v272
      %v446 = vunpack.c.l.b16 %v273
      %v447 = vunpack.c.h.b16 %v273
      %v448 = vunpack.c.l.b16 %v274
      %v449 = vunpack.c.h.b16 %v274
      %v450 = vunpack.c.l.b16 %v275
      %v451 = vunpack.c.h.b16 %v275
      %v452 = vunpack.c.l.b16 %v276
      %v453 = vunpack.c.h.b16 %v276
      %v454 = vunpack.c.l.b16 %v277
      %v455 = vunpack.c.h.b16 %v277
      %v456 = vunpack.c.l.b16 %v278
      %v457 = vunpack.c.h.b16 %v278
      %v458 = vunpack.c.l.b16 %v279
      %v459 = vunpack.c.h.b16 %v279
      %v460 = vunpack.c.l.b16 %v280
      %v461 = vunpack.c.h.b16 %v280
      %v462 = vunpack.c.l.b16 %v281
      %v463 = vunpack.c.h.b16 %v281
      %v464 = vunpack.c.l.b16 %v282
      %v465 = vunpack.c.h.b16 %v282
      %v466 = vunpack.c.l.b16 %v283
      %v467 = vunpack.c.h.b16 %v283
      %v468 = vunpack.c.l.b16 %v284
      %v469 = vunpack.c.h.b16 %v284
      %v470 = vunpack.c.l.b16 %v285
      %v471 = vunpack.c.h.b16 %v285
      %v472 = vunpack.c.l.b16 %v286
      %v473 = vunpack.c.h.b16 %v286
      %v474 = vunpack.c.l.b16 %v287
      %v475 = vunpack.c.h.b16 %v287
      %v476 = vunpack.c.l.b16 %v288
      %v477 = vunpack.c.h.b16 %v288
      %v478 = vunpack.c.l.b16 %v289
      %v479 = vunpack.c.h.b16 %v289
      %v480 = vunpack.c.l.b16 %v290
      %v481 = vunpack.c.h.b16 %v290
      %v482 = vunpack.c.l.b16 %v291
      %v483 = vunpack.c.h.b16 %v291
      %v484 = vunpack.c.l.b16 %v292
      %v485 = vunpack.c.h.b16 %v292
      %v486 = vunpack.c.l.b16 %v293
      %v487 = vunpack.c.h.b16 %v293
      %v488 = vunpack.c.l.b16 %v294
      %v489 = vunpack.c.h.b16 %v294
      %v490 = vunpack.c.l.b16 %v295
      %v491 = vunpack.c.h.b16 %v295
      %v492 = vunpack.c.l.b16 %v296
      %v493 = vunpack.c.h.b16 %v296
      %v494 = vunpack.c.l.b16 %v297
      %v495 = vunpack.c.h.b16 %v297
      %v496 = vunpack.c.l.b16 %v298
      %v497 = vunpack.c.h.b16 %v298
      %v498 = vunpack.c.l.b16 %v299
      %v499 = vunpack.c.h.b16 %v299
      %v500 = vunpack.c.l.b16 %v300
      %v501 = vunpack.c.h.b16 %v300
      %v502 = vunpack.c.l.b16 %v301
      %v503 = vunpack.c.h.b16 %v301
      %v504 = vunpack.c.l.b16 %v302
      %v505 = vunpack.c.h.b16 %v302
      %v506 = vunpack.c.l.b16 %v303
      %v507 = vunpack.c.h.b16 %v303
      %v508 = vunpack.c.l.b16 %v304
      %v509 = vunpack.c.h.b16 %v304
      %v510 = vunpack.c.l.b16 %v305
      %v511 = vunpack.c.h.b16 %v305
      %v512 = vunpack.c.l.b16 %v306
      %v513 = vunpack.c.h.b16 %v306
      %v514 = vunpack.c.l.b16 %v307
      %v515 = vunpack.c.h.b16 %v307
      %v516 = vunpack.c.l.b16 %v308
      %v517 = vunpack.c.h.b16 %v308
      %v518 = vunpack.c.l.b16 %v309
      %v519 = vunpack.c.h.b16 %v309
      %v520 = vunpack.c.l.b16 %v310
      %v521 = vunpack.c.h.b16 %v310
      %v522 = vunpack.c.l.b16 %v311
      %v523 = vunpack.c.h.b16 %v311
      %v524 = vunpack.c.l.b16 %v312
      %v525 = vunpack.c.h.b16 %v312
      %v526 = vunpack.c.l.b16 %v313
      %v527 = vunpack.c.h.b16 %v313
      %v528 = vunpack.c.l.b16 %v314
      %v529 = vunpack.c.h.b16 %v314
      %v530 = vunpack.c.l.b16 %v315
      %v531 = vunpack.c.h.b16 %v315
      %v532 = vunpack.c.l.b16 %v316
      %v533 = vunpack.c.h.b16 %v316
      %v534 = vpack.c.b16 %v410, %v406
      %v535 = vpack.c.b16 %v411, %v407
      %v536 = vpack.c.b16 %v412, %v408
      %v537 = vpack.c.b16 %v413, %v409
      %v538 = vpack.c.b16 %v418, %v414
      %v539 = vpack.c.b16 %v419, %v415
      %v540 = vpack.c.b16 %v420, %v416
      %v541 = vpack.c.b16 %v421, %v417
      %v542 = vpack.c.b16 %v426, %v422
      %v543 = vpack.c.b16 %v427, %v423
      %v544 = vpack.c.b16 %v428, %v424
      %v545 = vpack.c.b16 %v429, %v425
      %v546 = vpack.c.b16 %v434, %v430
      %v547 = vpack.c.b16 %v435, %v431
      %v548 = vpack.c.b16 %v436, %v432
      %v549 = vpack.c.b16 %v437, %v433
      %v550 = vpack.c.b16 %v442, %v438
      %v551 = vpack.c.b16 %v443, %v439
      %v552 = vpack.c.b16 %v444, %v440
      %v553 = vpack.c.b16 %v445, %v441
      %v554 = vpack.c.b16 %v450, %v446
      %v555 = vpack.c.b16 %v451, %v447
      %v556 = vpack.c.b16 %v452, %v448
      %v557 = vpack.c.b16 %v453, %v449
      %v558 = vpack.c.b16 %v458, %v454
      %v559 = vpack.c.b16 %v459, %v455
      %v560 = vpack.c.b16 %v460, %v456
      %v561 = vpack.c.b16 %v461, %v457
      %v562 = vpack.c.b16 %v466, %v462
      %v563 = vpack.c.b16 %v467, %v463
      %v564 = vpack.c.b16 %v468, %v464
      %v565 = vpack.c.b16 %v469, %v465
      %v566 = vpack.c.b16 %v474, %v470
      %v567 = vpack.c.b16 %v475, %v471
      %v568 = vpack.c.b16 %v476, %v472
      %v569 = vpack.c.b16 %v477, %v473
      %v570 = vpack.c.b16 %v482, %v478
      %v571 = vpack.c.b16 %v483, %v479
      %v572 = vpack.c.b16 %v484, %v480
      %v573 = vpack.c.b16 %v485, %v481
      %v574 = vpack.c.b16 %v490, %v486
      %v575 = vpack.c.b16 %v491, %v487
      %v576 = vpack.c.b16 %v492, %v488
      %v577 = vpack.c.b16 %v493, %v489
      %v578 = vpack.c.b16 %v498, %v494
      %v579 = vpack.c.b16 %v499, %v495
      %v580 = vpack.c.b16 %v500, %v496
      %v581 = vpack.c.b16 %v501, %v497
      %v582 = vpack.c.b16 %v506, %v502
      %v583 = vpack.c.b16 %v507, %v503
      %v584 = vpack.c.b16 %v508, %v504
      %v585 = vpack.c.b16 %v509, %v505
      %v586 = vpack.c.b16 %v514, %v510
      %v587 = vpack.c.b16 %v515, %v511
      %v588 = vpack.c.b16 %v516, %v512
      %v589 = vpack.c.b16 %v517, %v513
      %v590 = vpack.c.b16 %v522, %v518
      %v591 = vpack.c.b16 %v523, %v519
      %v592 = vpack.c.b16 %v524, %v520
      %v593 = vpack.c.b16 %v525, %v521
      %v594 = vpack.c.b16 %v530, %v526
      %v595 = vpack.c.b16 %v531, %v527
      %v596 = vpack.c.b16 %v532, %v528
      %v597 = vpack.c.b16 %v533, %v529
      %662 = vmatprep.subr.bf16.mxu0 %v563
      %663 = vmatpush1.bf16.msra.mxu0 %v562
      %664 = vmatprep.subr.bf16.mxu0 %v559
      %665 = vmatpush1.bf16.msra.mxu0 %v558
      %666 = vmatprep.subr.bf16.mxu0 %v555
      %667 = vmatpush1.bf16.msra.mxu0 %v554
      %668 = vmatprep.subr.bf16.mxu0 %v551
      %669 = vmatpush1.bf16.msra.mxu0 %v550
      %670 = vmatprep.subr.bf16.mxu0 %v547
      %671 = vmatpush1.bf16.msra.mxu0 %v546
      %672 = vmatprep.subr.bf16.mxu0 %v543
      %673 = vmatpush1.bf16.msra.mxu0 %v542
      %674 = vmatprep.subr.bf16.mxu0 %v539
      %675 = vmatpush1.bf16.msra.mxu0 %v538
      %676 = vmatprep.subr.bf16.mxu0 %v535
      %677 = vmatpush1.bf16.msra.mxu0 %v534
      %678 = vmatprep.subr.bf16.mxu0 %v595
      %679 = vmatpush2.bf16.msra.mxu0 %v594
      %680 = vmatprep.subr.bf16.mxu0 %v591
      %681 = vmatpush2.bf16.msra.mxu0 %v590
      %682 = vmatprep.subr.bf16.mxu0 %v587
      %683 = vmatpush2.bf16.msra.mxu0 %v586
      %684 = vmatprep.subr.bf16.mxu0 %v583
      %685 = vmatpush2.bf16.msra.mxu0 %v582
      %686 = vmatprep.subr.bf16.mxu0 %v579
      %687 = vmatpush2.bf16.msra.mxu0 %v578
      %688 = vmatprep.subr.bf16.mxu0 %v575
      %689 = vmatpush2.bf16.msra.mxu0 %v574
      %690 = vmatprep.subr.bf16.mxu0 %v571
      %691 = vmatpush2.bf16.msra.mxu0 %v570
      %692 = vmatprep.subr.bf16.mxu0 %v567
      %693 = vmatpush2.bf16.msra.mxu0 %v566
      %694 = vmatprep.mubr.bf16.mxu0 %v339
      %695 = vmatmul.mubr.bf16.gmra.mxu0 %v332
      %v696 = vpop.f32.mrf.mxu0
      %v697 = vadd.f32 0.0, %v696
      %v698 = vpop.f32.mrf.mxu0
      %v699 = vadd.f32 0.0, %v698
      %v700 = vpop.f32.mrf.mxu0
      %v701 = vpop.f32.mrf.mxu0
      %702 = vdwg.mxu0
      %703 = vmatprep.subr.bf16.mxu0 %v565
      %704 = vmatpush1.bf16.msra.mxu0 %v564
      %705 = vmatprep.subr.bf16.mxu0 %v561
      %706 = vmatpush1.bf16.msra.mxu0 %v560
      %707 = vmatprep.subr.bf16.mxu0 %v557
      %708 = vmatpush1.bf16.msra.mxu0 %v556
      %709 = vmatprep.subr.bf16.mxu0 %v553
      %710 = vmatpush1.bf16.msra.mxu0 %v552
      %711 = vmatprep.subr.bf16.mxu0 %v549
      %712 = vmatpush1.bf16.msra.mxu0 %v548
      %713 = vmatprep.subr.bf16.mxu0 %v545
      %714 = vmatpush1.bf16.msra.mxu0 %v544
      %715 = vmatprep.subr.bf16.mxu0 %v541
      %716 = vmatpush1.bf16.msra.mxu0 %v540
      %717 = vmatprep.subr.bf16.mxu0 %v537
      %718 = vmatpush1.bf16.msra.mxu0 %v536
      %719 = vmatprep.subr.bf16.mxu0 %v597
      %720 = vmatpush2.bf16.msra.mxu0 %v596
      %721 = vmatprep.subr.bf16.mxu0 %v593
      %722 = vmatpush2.bf16.msra.mxu0 %v592
      %723 = vmatprep.subr.bf16.mxu0 %v589
      %724 = vmatpush2.bf16.msra.mxu0 %v588
      %725 = vmatprep.subr.bf16.mxu0 %v585
      %726 = vmatpush2.bf16.msra.mxu0 %v584
      %727 = vmatprep.subr.bf16.mxu0 %v581
      %728 = vmatpush2.bf16.msra.mxu0 %v580
      %729 = vmatprep.subr.bf16.mxu0 %v577
      %730 = vmatpush2.bf16.msra.mxu0 %v576
      %731 = vmatprep.subr.bf16.mxu0 %v573
      %732 = vmatpush2.bf16.msra.mxu0 %v572
      %733 = vmatprep.subr.bf16.mxu0 %v569
      %734 = vmatpush2.bf16.msra.mxu0 %v568
      %735 = vmatprep.mubr.bf16.mxu0 %v339
      %736 = vmatmul.mubr.bf16.gmra.mxu0 %v332
      %v737 = vpop.f32.mrf.mxu0
      %v738 = vadd.f32 0.0, %v737
      %v739 = vpop.f32.mrf.mxu0
      %v740 = vadd.f32 0.0, %v739
      %v741 = vpop.f32.mrf.mxu0
      %v742 = vpop.f32.mrf.mxu0
      %743 = vdwg.mxu0
      %v748 = vcombine.low %v697, %v699
      %v749 = vcombine.low %v738, %v740
      %v751 = vunpack.c.l.s4 1983009808
      %v752 = vunpack.c.0.s8 %v751
      %v753 = vlaneseq
      %v754 = vshrl.u32 %v753, 7
      %v755 = vsub.s32 %v752, %v754
      %v756 = vrot.slane %v748, %v755
      %v758 = vunpack.c.l.s4 1983009808
      %v759 = vunpack.c.0.s8 %v758
      %v760 = vlaneseq
      %v761 = vshrl.u32 %v760, 7
      %v762 = vsub.s32 %v759, %v761
      %v763 = vrot.slane %v749, %v762
      %v764 = vcombine.low %v756, %v763
      %v766 = vadd.f32 %v251, %v764
      %vm767 = vcmask 1041408
      %vm768 = vcmask 1043458
      %vm769 = vmor %vm768, %vm767
      %vm770 = vcmask 1045508
      %vm771 = vmor %vm770, %vm769
      %vm772 = vcmask 949254
      %vm773 = vmor %vm772, %vm771
      %774 = vst.msk [vmem:[#allocation2] sm:$0xff] %vm773, %v766
      %v775 = vld [vmem:[#allocation2] sm:$0xff]
      %s776 = scalar_lea.vmem %s230, 2
      %v777 = vld [vmem:[%s776] sm:$0x3]
      %s778 = scalar_lea.vmem %s237, 512
      %v779 = vld [vmem:[%s778] sm:$0xff]
      %v780 = vld [vmem:[%s778 + $0x8] sm:$0xff]
      %v781 = vld [vmem:[%s778 + $0x10] sm:$0xff]
      %v782 = vld [vmem:[%s778 + $0x18] sm:$0xff]
      %v783 = vld [vmem:[%s778 + $0x20] sm:$0xff]
      %v784 = vld [vmem:[%s778 + $0x28] sm:$0xff]
      %v785 = vld [vmem:[%s778 + $0x30] sm:$0xff]
      %v786 = vld [vmem:[%s778 + $0x38] sm:$0xff]
      %v787 = vld [vmem:[%s778 + $0x40] sm:$0xff]
      %v788 = vld [vmem:[%s778 + $0x48] sm:$0xff]
      %v789 = vld [vmem:[%s778 + $0x50] sm:$0xff]
      %v790 = vld [vmem:[%s778 + $0x58] sm:$0xff]
      %v791 = vld [vmem:[%s778 + $0x60] sm:$0xff]
      %v792 = vld [vmem:[%s778 + $0x68] sm:$0xff]
      %v793 = vld [vmem:[%s778 + $0x70] sm:$0xff]
      %v794 = vld [vmem:[%s778 + $0x78] sm:$0xff]
      %v795 = vld [vmem:[%s778 + $0x80] sm:$0xff]
      %v796 = vld [vmem:[%s778 + $0x88] sm:$0xff]
      %v797 = vld [vmem:[%s778 + $0x90] sm:$0xff]
      %v798 = vld [vmem:[%s778 + $0x98] sm:$0xff]
      %v799 = vld [vmem:[%s778 + $0xa0] sm:$0xff]
      %v800 = vld [vmem:[%s778 + $0xa8] sm:$0xff]
      %v801 = vld [vmem:[%s778 + $0xb0] sm:$0xff]
      %v802 = vld [vmem:[%s778 + $0xb8] sm:$0xff]
      %v803 = vld [vmem:[%s778 + $0xc0] sm:$0xff]
      %v804 = vld [vmem:[%s778 + $0xc8] sm:$0xff]
      %v805 = vld [vmem:[%s778 + $0xd0] sm:$0xff]
      %v806 = vld [vmem:[%s778 + $0xd8] sm:$0xff]
      %v807 = vld [vmem:[%s778 + $0xe0] sm:$0xff]
      %v808 = vld [vmem:[%s778 + $0xe8] sm:$0xff]
      %v809 = vld [vmem:[%s778 + $0xf0] sm:$0xff]
      %v810 = vld [vmem:[%s778 + $0xf8] sm:$0xff]
      %v811 = vld [vmem:[%s778 + $0x100] sm:$0xff]
      %v812 = vld [vmem:[%s778 + $0x108] sm:$0xff]
      %v813 = vld [vmem:[%s778 + $0x110] sm:$0xff]
      %v814 = vld [vmem:[%s778 + $0x118] sm:$0xff]
      %v815 = vld [vmem:[%s778 + $0x120] sm:$0xff]
      %v816 = vld [vmem:[%s778 + $0x128] sm:$0xff]
      %v817 = vld [vmem:[%s778 + $0x130] sm:$0xff]
      %v818 = vld [vmem:[%s778 + $0x138] sm:$0xff]
      %v819 = vld [vmem:[%s778 + $0x140] sm:$0xff]
      %v820 = vld [vmem:[%s778 + $0x148] sm:$0xff]
      %v821 = vld [vmem:[%s778 + $0x150] sm:$0xff]
      %v822 = vld [vmem:[%s778 + $0x158] sm:$0xff]
      %v823 = vld [vmem:[%s778 + $0x160] sm:$0xff]
      %v824 = vld [vmem:[%s778 + $0x168] sm:$0xff]
      %v825 = vld [vmem:[%s778 + $0x170] sm:$0xff]
      %v826 = vld [vmem:[%s778 + $0x178] sm:$0xff]
      %v827 = vld [vmem:[%s778 + $0x180] sm:$0xff]
      %v828 = vld [vmem:[%s778 + $0x188] sm:$0xff]
      %v829 = vld [vmem:[%s778 + $0x190] sm:$0xff]
      %v830 = vld [vmem:[%s778 + $0x198] sm:$0xff]
      %v831 = vld [vmem:[%s778 + $0x1a0] sm:$0xff]
      %v832 = vld [vmem:[%s778 + $0x1a8] sm:$0xff]
      %v833 = vld [vmem:[%s778 + $0x1b0] sm:$0xff]
      %v834 = vld [vmem:[%s778 + $0x1b8] sm:$0xff]
      %v835 = vld [vmem:[%s778 + $0x1c0] sm:$0xff]
      %v836 = vld [vmem:[%s778 + $0x1c8] sm:$0xff]
      %v837 = vld [vmem:[%s778 + $0x1d0] sm:$0xff]
      %v838 = vld [vmem:[%s778 + $0x1d8] sm:$0xff]
      %v839 = vld [vmem:[%s778 + $0x1e0] sm:$0xff]
      %v840 = vld [vmem:[%s778 + $0x1e8] sm:$0xff]
      %v841 = vld [vmem:[%s778 + $0x1f0] sm:$0xff]
      %v842 = vld [vmem:[%s778 + $0x1f8] sm:$0xff]
      %v845 = vunpack.c.l.s4 1966171168
      %v846 = vunpack.c.0.s8 %v845
      %v847 = vlaneseq
      %v848 = vshrl.u32 %v847, 7
      %v849 = vsub.s32 %v846, %v848
      %v850 = vrot.slane %v777, %v849
      %v851 = vcombine.high %v850, %v850
      %v853 = vunpack.c.l.s4 1966171168
      %v854 = vunpack.c.0.s8 %v853
      %v855 = vlaneseq
      %v856 = vshrl.u32 %v855, 7
      %v857 = vsub.s32 %v854, %v856
      %v858 = vrot.slane %v850, %v857
      %v860 = vunpack.c.l.s4 1966171168
      %v861 = vunpack.c.0.s8 %v860
      %v862 = vlaneseq
      %v863 = vshrl.u32 %v862, 7
      %v864 = vsub.s32 %v861, %v863
      %v865 = vrot.slane %v851, %v864
      %v932 = vunpack.c.l.b16 %v779
      %v933 = vunpack.c.h.b16 %v779
      %v934 = vunpack.c.l.b16 %v780
      %v935 = vunpack.c.h.b16 %v780
      %v936 = vunpack.c.l.b16 %v781
      %v937 = vunpack.c.h.b16 %v781
      %v938 = vunpack.c.l.b16 %v782
      %v939 = vunpack.c.h.b16 %v782
      %v940 = vunpack.c.l.b16 %v783
      %v941 = vunpack.c.h.b16 %v783
      %v942 = vunpack.c.l.b16 %v784
      %v943 = vunpack.c.h.b16 %v784
      %v944 = vunpack.c.l.b16 %v785
      %v945 = vunpack.c.h.b16 %v785
      %v946 = vunpack.c.l.b16 %v786
      %v947 = vunpack.c.h.b16 %v786
      %v948 = vunpack.c.l.b16 %v787
      %v949 = vunpack.c.h.b16 %v787
      %v950 = vunpack.c.l.b16 %v788
      %v951 = vunpack.c.h.b16 %v788
      %v952 = vunpack.c.l.b16 %v789
      %v953 = vunpack.c.h.b16 %v789
      %v954 = vunpack.c.l.b16 %v790
      %v955 = vunpack.c.h.b16 %v790
      %v956 = vunpack.c.l.b16 %v791
      %v957 = vunpack.c.h.b16 %v791
      %v958 = vunpack.c.l.b16 %v792
      %v959 = vunpack.c.h.b16 %v792
      %v960 = vunpack.c.l.b16 %v793
      %v961 = vunpack.c.h.b16 %v793
      %v962 = vunpack.c.l.b16 %v794
      %v963 = vunpack.c.h.b16 %v794
      %v964 = vunpack.c.l.b16 %v795
      %v965 = vunpack.c.h.b16 %v795
      %v966 = vunpack.c.l.b16 %v796
      %v967 = vunpack.c.h.b16 %v796
      %v968 = vunpack.c.l.b16 %v797
      %v969 = vunpack.c.h.b16 %v797
      %v970 = vunpack.c.l.b16 %v798
      %v971 = vunpack.c.h.b16 %v798
      %v972 = vunpack.c.l.b16 %v799
      %v973 = vunpack.c.h.b16 %v799
      %v974 = vunpack.c.l.b16 %v800
      %v975 = vunpack.c.h.b16 %v800
      %v976 = vunpack.c.l.b16 %v801
      %v977 = vunpack.c.h.b16 %v801
      %v978 = vunpack.c.l.b16 %v802
      %v979 = vunpack.c.h.b16 %v802
      %v980 = vunpack.c.l.b16 %v803
      %v981 = vunpack.c.h.b16 %v803
      %v982 = vunpack.c.l.b16 %v804
      %v983 = vunpack.c.h.b16 %v804
      %v984 = vunpack.c.l.b16 %v805
      %v985 = vunpack.c.h.b16 %v805
      %v986 = vunpack.c.l.b16 %v806
      %v987 = vunpack.c.h.b16 %v806
      %v988 = vunpack.c.l.b16 %v807
      %v989 = vunpack.c.h.b16 %v807
      %v990 = vunpack.c.l.b16 %v808
      %v991 = vunpack.c.h.b16 %v808
      %v992 = vunpack.c.l.b16 %v809
      %v993 = vunpack.c.h.b16 %v809
      %v994 = vunpack.c.l.b16 %v810
      %v995 = vunpack.c.h.b16 %v810
      %v996 = vunpack.c.l.b16 %v811
      %v997 = vunpack.c.h.b16 %v811
      %v998 = vunpack.c.l.b16 %v812
      %v999 = vunpack.c.h.b16 %v812
      %v1000 = vunpack.c.l.b16 %v813
      %v1001 = vunpack.c.h.b16 %v813
      %v1002 = vunpack.c.l.b16 %v814
      %v1003 = vunpack.c.h.b16 %v814
      %v1004 = vunpack.c.l.b16 %v815
      %v1005 = vunpack.c.h.b16 %v815
      %v1006 = vunpack.c.l.b16 %v816
      %v1007 = vunpack.c.h.b16 %v816
      %v1008 = vunpack.c.l.b16 %v817
      %v1009 = vunpack.c.h.b16 %v817
      %v1010 = vunpack.c.l.b16 %v818
      %v1011 = vunpack.c.h.b16 %v818
      %v1012 = vunpack.c.l.b16 %v819
      %v1013 = vunpack.c.h.b16 %v819
      %v1014 = vunpack.c.l.b16 %v820
      %v1015 = vunpack.c.h.b16 %v820
      %v1016 = vunpack.c.l.b16 %v821
      %v1017 = vunpack.c.h.b16 %v821
      %v1018 = vunpack.c.l.b16 %v822
      %v1019 = vunpack.c.h.b16 %v822
      %v1020 = vunpack.c.l.b16 %v823
      %v1021 = vunpack.c.h.b16 %v823
      %v1022 = vunpack.c.l.b16 %v824
      %v1023 = vunpack.c.h.b16 %v824
      %v1024 = vunpack.c.l.b16 %v825
      %v1025 = vunpack.c.h.b16 %v825
      %v1026 = vunpack.c.l.b16 %v826
      %v1027 = vunpack.c.h.b16 %v826
      %v1028 = vunpack.c.l.b16 %v827
      %v1029 = vunpack.c.h.b16 %v827
      %v1030 = vunpack.c.l.b16 %v828
      %v1031 = vunpack.c.h.b16 %v828
      %v1032 = vunpack.c.l.b16 %v829
      %v1033 = vunpack.c.h.b16 %v829
      %v1034 = vunpack.c.l.b16 %v830
      %v1035 = vunpack.c.h.b16 %v830
      %v1036 = vunpack.c.l.b16 %v831
      %v1037 = vunpack.c.h.b16 %v831
      %v1038 = vunpack.c.l.b16 %v832
      %v1039 = vunpack.c.h.b16 %v832
      %v1040 = vunpack.c.l.b16 %v833
      %v1041 = vunpack.c.h.b16 %v833
      %v1042 = vunpack.c.l.b16 %v834
      %v1043 = vunpack.c.h.b16 %v834
      %v1044 = vunpack.c.l.b16 %v835
      %v1045 = vunpack.c.h.b16 %v835
      %v1046 = vunpack.c.l.b16 %v836
      %v1047 = vunpack.c.h.b16 %v836
      %v1048 = vunpack.c.l.b16 %v837
      %v1049 = vunpack.c.h.b16 %v837
      %v1050 = vunpack.c.l.b16 %v838
      %v1051 = vunpack.c.h.b16 %v838
      %v1052 = vunpack.c.l.b16 %v839
      %v1053 = vunpack.c.h.b16 %v839
      %v1054 = vunpack.c.l.b16 %v840
      %v1055 = vunpack.c.h.b16 %v840
      %v1056 = vunpack.c.l.b16 %v841
      %v1057 = vunpack.c.h.b16 %v841
      %v1058 = vunpack.c.l.b16 %v842
      %v1059 = vunpack.c.h.b16 %v842
      %v1060 = vpack.c.b16 %v936, %v932
      %v1061 = vpack.c.b16 %v937, %v933
      %v1062 = vpack.c.b16 %v938, %v934
      %v1063 = vpack.c.b16 %v939, %v935
      %v1064 = vpack.c.b16 %v944, %v940
      %v1065 = vpack.c.b16 %v945, %v941
      %v1066 = vpack.c.b16 %v946, %v942
      %v1067 = vpack.c.b16 %v947, %v943
      %v1068 = vpack.c.b16 %v952, %v948
      %v1069 = vpack.c.b16 %v953, %v949
      %v1070 = vpack.c.b16 %v954, %v950
      %v1071 = vpack.c.b16 %v955, %v951
      %v1072 = vpack.c.b16 %v960, %v956
      %v1073 = vpack.c.b16 %v961, %v957
      %v1074 = vpack.c.b16 %v962, %v958
      %v1075 = vpack.c.b16 %v963, %v959
      %v1076 = vpack.c.b16 %v968, %v964
      %v1077 = vpack.c.b16 %v969, %v965
      %v1078 = vpack.c.b16 %v970, %v966
      %v1079 = vpack.c.b16 %v971, %v967
      %v1080 = vpack.c.b16 %v976, %v972
      %v1081 = vpack.c.b16 %v977, %v973
      %v1082 = vpack.c.b16 %v978, %v974
      %v1083 = vpack.c.b16 %v979, %v975
      %v1084 = vpack.c.b16 %v984, %v980
      %v1085 = vpack.c.b16 %v985, %v981
      %v1086 = vpack.c.b16 %v986, %v982
      %v1087 = vpack.c.b16 %v987, %v983
      %v1088 = vpack.c.b16 %v992, %v988
      %v1089 = vpack.c.b16 %v993, %v989
      %v1090 = vpack.c.b16 %v994, %v990
      %v1091 = vpack.c.b16 %v995, %v991
      %v1092 = vpack.c.b16 %v1000, %v996
      %v1093 = vpack.c.b16 %v1001, %v997
      %v1094 = vpack.c.b16 %v1002, %v998
      %v1095 = vpack.c.b16 %v1003, %v999
      %v1096 = vpack.c.b16 %v1008, %v1004
      %v1097 = vpack.c.b16 %v1009, %v1005
      %v1098 = vpack.c.b16 %v1010, %v1006
      %v1099 = vpack.c.b16 %v1011, %v1007
      %v1100 = vpack.c.b16 %v1016, %v1012
      %v1101 = vpack.c.b16 %v1017, %v1013
      %v1102 = vpack.c.b16 %v1018, %v1014
      %v1103 = vpack.c.b16 %v1019, %v1015
      %v1104 = vpack.c.b16 %v1024, %v1020
      %v1105 = vpack.c.b16 %v1025, %v1021
      %v1106 = vpack.c.b16 %v1026, %v1022
      %v1107 = vpack.c.b16 %v1027, %v1023
      %v1108 = vpack.c.b16 %v1032, %v1028
      %v1109 = vpack.c.b16 %v1033, %v1029
      %v1110 = vpack.c.b16 %v1034, %v1030
      %v1111 = vpack.c.b16 %v1035, %v1031
      %v1112 = vpack.c.b16 %v1040, %v1036
      %v1113 = vpack.c.b16 %v1041, %v1037
      %v1114 = vpack.c.b16 %v1042, %v1038
      %v1115 = vpack.c.b16 %v1043, %v1039
      %v1116 = vpack.c.b16 %v1048, %v1044
      %v1117 = vpack.c.b16 %v1049, %v1045
      %v1118 = vpack.c.b16 %v1050, %v1046
      %v1119 = vpack.c.b16 %v1051, %v1047
      %v1120 = vpack.c.b16 %v1056, %v1052
      %v1121 = vpack.c.b16 %v1057, %v1053
      %v1122 = vpack.c.b16 %v1058, %v1054
      %v1123 = vpack.c.b16 %v1059, %v1055
      %1188 = vmatprep.subr.bf16.mxu0 %v1089
      %1189 = vmatpush1.bf16.msra.mxu0 %v1088
      %1190 = vmatprep.subr.bf16.mxu0 %v1085
      %1191 = vmatpush1.bf16.msra.mxu0 %v1084
      %1192 = vmatprep.subr.bf16.mxu0 %v1081
      %1193 = vmatpush1.bf16.msra.mxu0 %v1080
      %1194 = vmatprep.subr.bf16.mxu0 %v1077
      %1195 = vmatpush1.bf16.msra.mxu0 %v1076
      %1196 = vmatprep.subr.bf16.mxu0 %v1073
      %1197 = vmatpush1.bf16.msra.mxu0 %v1072
      %1198 = vmatprep.subr.bf16.mxu0 %v1069
      %1199 = vmatpush1.bf16.msra.mxu0 %v1068
      %1200 = vmatprep.subr.bf16.mxu0 %v1065
      %1201 = vmatpush1.bf16.msra.mxu0 %v1064
      %1202 = vmatprep.subr.bf16.mxu0 %v1061
      %1203 = vmatpush1.bf16.msra.mxu0 %v1060
      %1204 = vmatprep.subr.bf16.mxu0 %v1121
      %1205 = vmatpush2.bf16.msra.mxu0 %v1120
      %1206 = vmatprep.subr.bf16.mxu0 %v1117
      %1207 = vmatpush2.bf16.msra.mxu0 %v1116
      %1208 = vmatprep.subr.bf16.mxu0 %v1113
      %1209 = vmatpush2.bf16.msra.mxu0 %v1112
      %1210 = vmatprep.subr.bf16.mxu0 %v1109
      %1211 = vmatpush2.bf16.msra.mxu0 %v1108
      %1212 = vmatprep.subr.bf16.mxu0 %v1105
      %1213 = vmatpush2.bf16.msra.mxu0 %v1104
      %1214 = vmatprep.subr.bf16.mxu0 %v1101
      %1215 = vmatpush2.bf16.msra.mxu0 %v1100
      %1216 = vmatprep.subr.bf16.mxu0 %v1097
      %1217 = vmatpush2.bf16.msra.mxu0 %v1096
      %1218 = vmatprep.subr.bf16.mxu0 %v1093
      %1219 = vmatpush2.bf16.msra.mxu0 %v1092
      %1220 = vmatprep.mubr.bf16.mxu0 %v865
      %1221 = vmatmul.mubr.bf16.gmra.mxu0 %v858
      %v1222 = vpop.f32.mrf.mxu0
      %v1223 = vadd.f32 0.0, %v1222
      %v1224 = vpop.f32.mrf.mxu0
      %v1225 = vadd.f32 0.0, %v1224
      %v1226 = vpop.f32.mrf.mxu0
      %v1227 = vpop.f32.mrf.mxu0
      %1228 = vdwg.mxu0
      %1229 = vmatprep.subr.bf16.mxu0 %v1091
      %1230 = vmatpush1.bf16.msra.mxu0 %v1090
      %1231 = vmatprep.subr.bf16.mxu0 %v1087
      %1232 = vmatpush1.bf16.msra.mxu0 %v1086
      %1233 = vmatprep.subr.bf16.mxu0 %v1083
      %1234 = vmatpush1.bf16.msra.mxu0 %v1082
      %1235 = vmatprep.subr.bf16.mxu0 %v1079
      %1236 = vmatpush1.bf16.msra.mxu0 %v1078
      %1237 = vmatprep.subr.bf16.mxu0 %v1075
      %1238 = vmatpush1.bf16.msra.mxu0 %v1074
      %1239 = vmatprep.subr.bf16.mxu0 %v1071
      %1240 = vmatpush1.bf16.msra.mxu0 %v1070
      %1241 = vmatprep.subr.bf16.mxu0 %v1067
      %1242 = vmatpush1.bf16.msra.mxu0 %v1066
      %1243 = vmatprep.subr.bf16.mxu0 %v1063
      %1244 = vmatpush1.bf16.msra.mxu0 %v1062
      %1245 = vmatprep.subr.bf16.mxu0 %v1123
      %1246 = vmatpush2.bf16.msra.mxu0 %v1122
      %1247 = vmatprep.subr.bf16.mxu0 %v1119
      %1248 = vmatpush2.bf16.msra.mxu0 %v1118
      %1249 = vmatprep.subr.bf16.mxu0 %v1115
      %1250 = vmatpush2.bf16.msra.mxu0 %v1114
      %1251 = vmatprep.subr.bf16.mxu0 %v1111
      %1252 = vmatpush2.bf16.msra.mxu0 %v1110
      %1253 = vmatprep.subr.bf16.mxu0 %v1107
      %1254 = vmatpush2.bf16.msra.mxu0 %v1106
      %1255 = vmatprep.subr.bf16.mxu0 %v1103
      %1256 = vmatpush2.bf16.msra.mxu0 %v1102
      %1257 = vmatprep.subr.bf16.mxu0 %v1099
      %1258 = vmatpush2.bf16.msra.mxu0 %v1098
      %1259 = vmatprep.subr.bf16.mxu0 %v1095
      %1260 = vmatpush2.bf16.msra.mxu0 %v1094
      %1261 = vmatprep.mubr.bf16.mxu0 %v865
      %1262 = vmatmul.mubr.bf16.gmra.mxu0 %v858
      %v1263 = vpop.f32.mrf.mxu0
      %v1264 = vadd.f32 0.0, %v1263
      %v1265 = vpop.f32.mrf.mxu0
      %v1266 = vadd.f32 0.0, %v1265
      %v1267 = vpop.f32.mrf.mxu0
      %v1268 = vpop.f32.mrf.mxu0
      %1269 = vdwg.mxu0
      %v1274 = vcombine.low %v1223, %v1225
      %v1275 = vcombine.low %v1264, %v1266
      %v1277 = vunpack.c.l.s4 1983009808
      %v1278 = vunpack.c.0.s8 %v1277
      %v1279 = vlaneseq
      %v1280 = vshrl.u32 %v1279, 7
      %v1281 = vsub.s32 %v1278, %v1280
      %v1282 = vrot.slane %v1274, %v1281
      %v1284 = vunpack.c.l.s4 1983009808
      %v1285 = vunpack.c.0.s8 %v1284
      %v1286 = vlaneseq
      %v1287 = vshrl.u32 %v1286, 7
      %v1288 = vsub.s32 %v1285, %v1287
      %v1289 = vrot.slane %v1275, %v1288
      %v1290 = vcombine.low %v1282, %v1289
      %v1292 = vadd.f32 %v775, %v1290
      %1293 = vst.msk [vmem:[#allocation2] sm:$0xff] %vm773, %v1292
      %v1294 = vld [vmem:[#allocation2] sm:$0xff]
      %s1295 = scalar_lea.vmem %s230, 4
      %v1296 = vld [vmem:[%s1295] sm:$0x3]
      %s1297 = scalar_lea.vmem %s237, 1024
      %v1298 = vld [vmem:[%s1297] sm:$0xff]
      %v1299 = vld [vmem:[%s1297 + $0x8] sm:$0xff]
      %v1300 = vld [vmem:[%s1297 + $0x10] sm:$0xff]
      %v1301 = vld [vmem:[%s1297 + $0x18] sm:$0xff]
      %v1302 = vld [vmem:[%s1297 + $0x20] sm:$0xff]
      %v1303 = vld [vmem:[%s1297 + $0x28] sm:$0xff]
      %v1304 = vld [vmem:[%s1297 + $0x30] sm:$0xff]
      %v1305 = vld [vmem:[%s1297 + $0x38] sm:$0xff]
      %v1306 = vld [vmem:[%s1297 + $0x40] sm:$0xff]
      %v1307 = vld [vmem:[%s1297 + $0x48] sm:$0xff]
      %v1308 = vld [vmem:[%s1297 + $0x50] sm:$0xff]
      %v1309 = vld [vmem:[%s1297 + $0x58] sm:$0xff]
      %v1310 = vld [vmem:[%s1297 + $0x60] sm:$0xff]
      %v1311 = vld [vmem:[%s1297 + $0x68] sm:$0xff]
      %v1312 = vld [vmem:[%s1297 + $0x70] sm:$0xff]
      %v1313 = vld [vmem:[%s1297 + $0x78] sm:$0xff]
      %v1314 = vld [vmem:[%s1297 + $0x80] sm:$0xff]
      %v1315 = vld [vmem:[%s1297 + $0x88] sm:$0xff]
      %v1316 = vld [vmem:[%s1297 + $0x90] sm:$0xff]
      %v1317 = vld [vmem:[%s1297 + $0x98] sm:$0xff]
      %v1318 = vld [vmem:[%s1297 + $0xa0] sm:$0xff]
      %v1319 = vld [vmem:[%s1297 + $0xa8] sm:$0xff]
      %v1320 = vld [vmem:[%s1297 + $0xb0] sm:$0xff]
      %v1321 = vld [vmem:[%s1297 + $0xb8] sm:$0xff]
      %v1322 = vld [vmem:[%s1297 + $0xc0] sm:$0xff]
      %v1323 = vld [vmem:[%s1297 + $0xc8] sm:$0xff]
      %v1324 = vld [vmem:[%s1297 + $0xd0] sm:$0xff]
      %v1325 = vld [vmem:[%s1297 + $0xd8] sm:$0xff]
      %v1326 = vld [vmem:[%s1297 + $0xe0] sm:$0xff]
      %v1327 = vld [vmem:[%s1297 + $0xe8] sm:$0xff]
      %v1328 = vld [vmem:[%s1297 + $0xf0] sm:$0xff]
      %v1329 = vld [vmem:[%s1297 + $0xf8] sm:$0xff]
      %v1330 = vld [vmem:[%s1297 + $0x100] sm:$0xff]
      %v1331 = vld [vmem:[%s1297 + $0x108] sm:$0xff]
      %v1332 = vld [vmem:[%s1297 + $0x110] sm:$0xff]
      %v1333 = vld [vmem:[%s1297 + $0x118] sm:$0xff]
      %v1334 = vld [vmem:[%s1297 + $0x120] sm:$0xff]
      %v1335 = vld [vmem:[%s1297 + $0x128] sm:$0xff]
      %v1336 = vld [vmem:[%s1297 + $0x130] sm:$0xff]
      %v1337 = vld [vmem:[%s1297 + $0x138] sm:$0xff]
      %v1338 = vld [vmem:[%s1297 + $0x140] sm:$0xff]
      %v1339 = vld [vmem:[%s1297 + $0x148] sm:$0xff]
      %v1340 = vld [vmem:[%s1297 + $0x150] sm:$0xff]
      %v1341 = vld [vmem:[%s1297 + $0x158] sm:$0xff]
      %v1342 = vld [vmem:[%s1297 + $0x160] sm:$0xff]
      %v1343 = vld [vmem:[%s1297 + $0x168] sm:$0xff]
      %v1344 = vld [vmem:[%s1297 + $0x170] sm:$0xff]
      %v1345 = vld [vmem:[%s1297 + $0x178] sm:$0xff]
      %v1346 = vld [vmem:[%s1297 + $0x180] sm:$0xff]
      %v1347 = vld [vmem:[%s1297 + $0x188] sm:$0xff]
      %v1348 = vld [vmem:[%s1297 + $0x190] sm:$0xff]
      %v1349 = vld [vmem:[%s1297 + $0x198] sm:$0xff]
      %v1350 = vld [vmem:[%s1297 + $0x1a0] sm:$0xff]
      %v1351 = vld [vmem:[%s1297 + $0x1a8] sm:$0xff]
      %v1352 = vld [vmem:[%s1297 + $0x1b0] sm:$0xff]
      %v1353 = vld [vmem:[%s1297 + $0x1b8] sm:$0xff]
      %v1354 = vld [vmem:[%s1297 + $0x1c0] sm:$0xff]
      %v1355 = vld [vmem:[%s1297 + $0x1c8] sm:$0xff]
      %v1356 = vld [vmem:[%s1297 + $0x1d0] sm:$0xff]
      %v1357 = vld [vmem:[%s1297 + $0x1d8] sm:$0xff]
      %v1358 = vld [vmem:[%s1297 + $0x1e0] sm:$0xff]
      %v1359 = vld [vmem:[%s1297 + $0x1e8] sm:$0xff]
      %v1360 = vld [vmem:[%s1297 + $0x1f0] sm:$0xff]
      %v1361 = vld [vmem:[%s1297 + $0x1f8] sm:$0xff]
      %v1364 = vunpack.c.l.s4 1966171168
      %v1365 = vunpack.c.0.s8 %v1364
      %v1366 = vlaneseq
      %v1367 = vshrl.u32 %v1366, 7
      %v1368 = vsub.s32 %v1365, %v1367
      %v1369 = vrot.slane %v1296, %v1368
      %v1370 = vcombine.high %v1369, %v1369
      %v1372 = vunpack.c.l.s4 1966171168
      %v1373 = vunpack.c.0.s8 %v1372
      %v1374 = vlaneseq
      %v1375 = vshrl.u32 %v1374, 7
      %v1376 = vsub.s32 %v1373, %v1375
      %v1377 = vrot.slane %v1369, %v1376
      %v1379 = vunpack.c.l.s4 1966171168
      %v1380 = vunpack.c.0.s8 %v1379
      %v1381 = vlaneseq
      %v1382 = vshrl.u32 %v1381, 7
      %v1383 = vsub.s32 %v1380, %v1382
      %v1384 = vrot.slane %v1370, %v1383
      %v1451 = vunpack.c.l.b16 %v1298
      %v1452 = vunpack.c.h.b16 %v1298
      %v1453 = vunpack.c.l.b16 %v1299
      %v1454 = vunpack.c.h.b16 %v1299
      %v1455 = vunpack.c.l.b16 %v1300
      %v1456 = vunpack.c.h.b16 %v1300
      %v1457 = vunpack.c.l.b16 %v1301
      %v1458 = vunpack.c.h.b16 %v1301
      %v1459 = vunpack.c.l.b16 %v1302
      %v1460 = vunpack.c.h.b16 %v1302
      %v1461 = vunpack.c.l.b16 %v1303
      %v1462 = vunpack.c.h.b16 %v1303
      %v1463 = vunpack.c.l.b16 %v1304
      %v1464 = vunpack.c.h.b16 %v1304
      %v1465 = vunpack.c.l.b16 %v1305
      %v1466 = vunpack.c.h.b16 %v1305
      %v1467 = vunpack.c.l.b16 %v1306
      %v1468 = vunpack.c.h.b16 %v1306
      %v1469 = vunpack.c.l.b16 %v1307
      %v1470 = vunpack.c.h.b16 %v1307
      %v1471 = vunpack.c.l.b16 %v1308
      %v1472 = vunpack.c.h.b16 %v1308
      %v1473 = vunpack.c.l.b16 %v1309
      %v1474 = vunpack.c.h.b16 %v1309
      %v1475 = vunpack.c.l.b16 %v1310
      %v1476 = vunpack.c.h.b16 %v1310
      %v1477 = vunpack.c.l.b16 %v1311
      %v1478 = vunpack.c.h.b16 %v1311
      %v1479 = vunpack.c.l.b16 %v1312
      %v1480 = vunpack.c.h.b16 %v1312
      %v1481 = vunpack.c.l.b16 %v1313
      %v1482 = vunpack.c.h.b16 %v1313
      %v1483 = vunpack.c.l.b16 %v1314
      %v1484 = vunpack.c.h.b16 %v1314
      %v1485 = vunpack.c.l.b16 %v1315
      %v1486 = vunpack.c.h.b16 %v1315
      %v1487 = vunpack.c.l.b16 %v1316
      %v1488 = vunpack.c.h.b16 %v1316
      %v1489 = vunpack.c.l.b16 %v1317
      %v1490 = vunpack.c.h.b16 %v1317
      %v1491 = vunpack.c.l.b16 %v1318
      %v1492 = vunpack.c.h.b16 %v1318
      %v1493 = vunpack.c.l.b16 %v1319
      %v1494 = vunpack.c.h.b16 %v1319
      %v1495 = vunpack.c.l.b16 %v1320
      %v1496 = vunpack.c.h.b16 %v1320
      %v1497 = vunpack.c.l.b16 %v1321
      %v1498 = vunpack.c.h.b16 %v1321
      %v1499 = vunpack.c.l.b16 %v1322
      %v1500 = vunpack.c.h.b16 %v1322
      %v1501 = vunpack.c.l.b16 %v1323
      %v1502 = vunpack.c.h.b16 %v1323
      %v1503 = vunpack.c.l.b16 %v1324
      %v1504 = vunpack.c.h.b16 %v1324
      %v1505 = vunpack.c.l.b16 %v1325
      %v1506 = vunpack.c.h.b16 %v1325
      %v1507 = vunpack.c.l.b16 %v1326
      %v1508 = vunpack.c.h.b16 %v1326
      %v1509 = vunpack.c.l.b16 %v1327
      %v1510 = vunpack.c.h.b16 %v1327
      %v1511 = vunpack.c.l.b16 %v1328
      %v1512 = vunpack.c.h.b16 %v1328
      %v1513 = vunpack.c.l.b16 %v1329
      %v1514 = vunpack.c.h.b16 %v1329
      %v1515 = vunpack.c.l.b16 %v1330
      %v1516 = vunpack.c.h.b16 %v1330
      %v1517 = vunpack.c.l.b16 %v1331
      %v1518 = vunpack.c.h.b16 %v1331
      %v1519 = vunpack.c.l.b16 %v1332
      %v1520 = vunpack.c.h.b16 %v1332
      %v1521 = vunpack.c.l.b16 %v1333
      %v1522 = vunpack.c.h.b16 %v1333
      %v1523 = vunpack.c.l.b16 %v1334
      %v1524 = vunpack.c.h.b16 %v1334
      %v1525 = vunpack.c.l.b16 %v1335
      %v1526 = vunpack.c.h.b16 %v1335
      %v1527 = vunpack.c.l.b16 %v1336
      %v1528 = vunpack.c.h.b16 %v1336
      %v1529 = vunpack.c.l.b16 %v1337
      %v1530 = vunpack.c.h.b16 %v1337
      %v1531 = vunpack.c.l.b16 %v1338
      %v1532 = vunpack.c.h.b16 %v1338
      %v1533 = vunpack.c.l.b16 %v1339
      %v1534 = vunpack.c.h.b16 %v1339
      %v1535 = vunpack.c.l.b16 %v1340
      %v1536 = vunpack.c.h.b16 %v1340
      %v1537 = vunpack.c.l.b16 %v1341
      %v1538 = vunpack.c.h.b16 %v1341
      %v1539 = vunpack.c.l.b16 %v1342
      %v1540 = vunpack.c.h.b16 %v1342
      %v1541 = vunpack.c.l.b16 %v1343
      %v1542 = vunpack.c.h.b16 %v1343
      %v1543 = vunpack.c.l.b16 %v1344
      %v1544 = vunpack.c.h.b16 %v1344
      %v1545 = vunpack.c.l.b16 %v1345
      %v1546 = vunpack.c.h.b16 %v1345
      %v1547 = vunpack.c.l.b16 %v1346
      %v1548 = vunpack.c.h.b16 %v1346
      %v1549 = vunpack.c.l.b16 %v1347
      %v1550 = vunpack.c.h.b16 %v1347
      %v1551 = vunpack.c.l.b16 %v1348
      %v1552 = vunpack.c.h.b16 %v1348
      %v1553 = vunpack.c.l.b16 %v1349
      %v1554 = vunpack.c.h.b16 %v1349
      %v1555 = vunpack.c.l.b16 %v1350
      %v1556 = vunpack.c.h.b16 %v1350
      %v1557 = vunpack.c.l.b16 %v1351
      %v1558 = vunpack.c.h.b16 %v1351
      %v1559 = vunpack.c.l.b16 %v1352
      %v1560 = vunpack.c.h.b16 %v1352
      %v1561 = vunpack.c.l.b16 %v1353
      %v1562 = vunpack.c.h.b16 %v1353
      %v1563 = vunpack.c.l.b16 %v1354
      %v1564 = vunpack.c.h.b16 %v1354
      %v1565 = vunpack.c.l.b16 %v1355
      %v1566 = vunpack.c.h.b16 %v1355
      %v1567 = vunpack.c.l.b16 %v1356
      %v1568 = vunpack.c.h.b16 %v1356
      %v1569 = vunpack.c.l.b16 %v1357
      %v1570 = vunpack.c.h.b16 %v1357
      %v1571 = vunpack.c.l.b16 %v1358
      %v1572 = vunpack.c.h.b16 %v1358
      %v1573 = vunpack.c.l.b16 %v1359
      %v1574 = vunpack.c.h.b16 %v1359
      %v1575 = vunpack.c.l.b16 %v1360
      %v1576 = vunpack.c.h.b16 %v1360
      %v1577 = vunpack.c.l.b16 %v1361
      %v1578 = vunpack.c.h.b16 %v1361
      %v1579 = vpack.c.b16 %v1455, %v1451
      %v1580 = vpack.c.b16 %v1456, %v1452
      %v1581 = vpack.c.b16 %v1457, %v1453
      %v1582 = vpack.c.b16 %v1458, %v1454
      %v1583 = vpack.c.b16 %v1463, %v1459
      %v1584 = vpack.c.b16 %v1464, %v1460
      %v1585 = vpack.c.b16 %v1465, %v1461
      %v1586 = vpack.c.b16 %v1466, %v1462
      %v1587 = vpack.c.b16 %v1471, %v1467
      %v1588 = vpack.c.b16 %v1472, %v1468
      %v1589 = vpack.c.b16 %v1473, %v1469
      %v1590 = vpack.c.b16 %v1474, %v1470
      %v1591 = vpack.c.b16 %v1479, %v1475
      %v1592 = vpack.c.b16 %v1480, %v1476
      %v1593 = vpack.c.b16 %v1481, %v1477
      %v1594 = vpack.c.b16 %v1482, %v1478
      %v1595 = vpack.c.b16 %v1487, %v1483
      %v1596 = vpack.c.b16 %v1488, %v1484
      %v1597 = vpack.c.b16 %v1489, %v1485
      %v1598 = vpack.c.b16 %v1490, %v1486
      %v1599 = vpack.c.b16 %v1495, %v1491
      %v1600 = vpack.c.b16 %v1496, %v1492
      %v1601 = vpack.c.b16 %v1497, %v1493
      %v1602 = vpack.c.b16 %v1498, %v1494
      %v1603 = vpack.c.b16 %v1503, %v1499
      %v1604 = vpack.c.b16 %v1504, %v1500
      %v1605 = vpack.c.b16 %v1505, %v1501
      %v1606 = vpack.c.b16 %v1506, %v1502
      %v1607 = vpack.c.b16 %v1511, %v1507
      %v1608 = vpack.c.b16 %v1512, %v1508
      %v1609 = vpack.c.b16 %v1513, %v1509
      %v1610 = vpack.c.b16 %v1514, %v1510
      %v1611 = vpack.c.b16 %v1519, %v1515
      %v1612 = vpack.c.b16 %v1520, %v1516
      %v1613 = vpack.c.b16 %v1521, %v1517
      %v1614 = vpack.c.b16 %v1522, %v1518
      %v1615 = vpack.c.b16 %v1527, %v1523
      %v1616 = vpack.c.b16 %v1528, %v1524
      %v1617 = vpack.c.b16 %v1529, %v1525
      %v1618 = vpack.c.b16 %v1530, %v1526
      %v1619 = vpack.c.b16 %v1535, %v1531
      %v1620 = vpack.c.b16 %v1536, %v1532
      %v1621 = vpack.c.b16 %v1537, %v1533
      %v1622 = vpack.c.b16 %v1538, %v1534
      %v1623 = vpack.c.b16 %v1543, %v1539
      %v1624 = vpack.c.b16 %v1544, %v1540
      %v1625 = vpack.c.b16 %v1545, %v1541
      %v1626 = vpack.c.b16 %v1546, %v1542
      %v1627 = vpack.c.b16 %v1551, %v1547
      %v1628 = vpack.c.b16 %v1552, %v1548
      %v1629 = vpack.c.b16 %v1553, %v1549
      %v1630 = vpack.c.b16 %v1554, %v1550
      %v1631 = vpack.c.b16 %v1559, %v1555
      %v1632 = vpack.c.b16 %v1560, %v1556
      %v1633 = vpack.c.b16 %v1561, %v1557
      %v1634 = vpack.c.b16 %v1562, %v1558
      %v1635 = vpack.c.b16 %v1567, %v1563
      %v1636 = vpack.c.b16 %v1568, %v1564
      %v1637 = vpack.c.b16 %v1569, %v1565
      %v1638 = vpack.c.b16 %v1570, %v1566
      %v1639 = vpack.c.b16 %v1575, %v1571
      %v1640 = vpack.c.b16 %v1576, %v1572
      %v1641 = vpack.c.b16 %v1577, %v1573
      %v1642 = vpack.c.b16 %v1578, %v1574
      %1707 = vmatprep.subr.bf16.mxu0 %v1608
      %1708 = vmatpush1.bf16.msra.mxu0 %v1607
      %1709 = vmatprep.subr.bf16.mxu0 %v1604
      %1710 = vmatpush1.bf16.msra.mxu0 %v1603
      %1711 = vmatprep.subr.bf16.mxu0 %v1600
      %1712 = vmatpush1.bf16.msra.mxu0 %v1599
      %1713 = vmatprep.subr.bf16.mxu0 %v1596
      %1714 = vmatpush1.bf16.msra.mxu0 %v1595
      %1715 = vmatprep.subr.bf16.mxu0 %v1592
      %1716 = vmatpush1.bf16.msra.mxu0 %v1591
      %1717 = vmatprep.subr.bf16.mxu0 %v1588
      %1718 = vmatpush1.bf16.msra.mxu0 %v1587
      %1719 = vmatprep.subr.bf16.mxu0 %v1584
      %1720 = vmatpush1.bf16.msra.mxu0 %v1583
      %1721 = vmatprep.subr.bf16.mxu0 %v1580
      %1722 = vmatpush1.bf16.msra.mxu0 %v1579
      %1723 = vmatprep.subr.bf16.mxu0 %v1640
      %1724 = vmatpush2.bf16.msra.mxu0 %v1639
      %1725 = vmatprep.subr.bf16.mxu0 %v1636
      %1726 = vmatpush2.bf16.msra.mxu0 %v1635
      %1727 = vmatprep.subr.bf16.mxu0 %v1632
      %1728 = vmatpush2.bf16.msra.mxu0 %v1631
      %1729 = vmatprep.subr.bf16.mxu0 %v1628
      %1730 = vmatpush2.bf16.msra.mxu0 %v1627
      %1731 = vmatprep.subr.bf16.mxu0 %v1624
      %1732 = vmatpush2.bf16.msra.mxu0 %v1623
      %1733 = vmatprep.subr.bf16.mxu0 %v1620
      %1734 = vmatpush2.bf16.msra.mxu0 %v1619
      %1735 = vmatprep.subr.bf16.mxu0 %v1616
      %1736 = vmatpush2.bf16.msra.mxu0 %v1615
      %1737 = vmatprep.subr.bf16.mxu0 %v1612
      %1738 = vmatpush2.bf16.msra.mxu0 %v1611
      %1739 = vmatprep.mubr.bf16.mxu0 %v1384
      %1740 = vmatmul.mubr.bf16.gmra.mxu0 %v1377
      %v1741 = vpop.f32.mrf.mxu0
      %v1742 = vadd.f32 0.0, %v1741
      %v1743 = vpop.f32.mrf.mxu0
      %v1744 = vadd.f32 0.0, %v1743
      %v1745 = vpop.f32.mrf.mxu0
      %v1746 = vpop.f32.mrf.mxu0
      %1747 = vdwg.mxu0
      %1748 = vmatprep.subr.bf16.mxu0 %v1610
      %1749 = vmatpush1.bf16.msra.mxu0 %v1609
      %1750 = vmatprep.subr.bf16.mxu0 %v1606
      %1751 = vmatpush1.bf16.msra.mxu0 %v1605
      %1752 = vmatprep.subr.bf16.mxu0 %v1602
      %1753 = vmatpush1.bf16.msra.mxu0 %v1601
      %1754 = vmatprep.subr.bf16.mxu0 %v1598
      %1755 = vmatpush1.bf16.msra.mxu0 %v1597
      %1756 = vmatprep.subr.bf16.mxu0 %v1594
      %1757 = vmatpush1.bf16.msra.mxu0 %v1593
      %1758 = vmatprep.subr.bf16.mxu0 %v1590
      %1759 = vmatpush1.bf16.msra.mxu0 %v1589
      %1760 = vmatprep.subr.bf16.mxu0 %v1586
      %1761 = vmatpush1.bf16.msra.mxu0 %v1585
      %1762 = vmatprep.subr.bf16.mxu0 %v1582
      %1763 = vmatpush1.bf16.msra.mxu0 %v1581
      %1764 = vmatprep.subr.bf16.mxu0 %v1642
      %1765 = vmatpush2.bf16.msra.mxu0 %v1641
      %1766 = vmatprep.subr.bf16.mxu0 %v1638
      %1767 = vmatpush2.bf16.msra.mxu0 %v1637
      %1768 = vmatprep.subr.bf16.mxu0 %v1634
      %1769 = vmatpush2.bf16.msra.mxu0 %v1633
      %1770 = vmatprep.subr.bf16.mxu0 %v1630
      %1771 = vmatpush2.bf16.msra.mxu0 %v1629
      %1772 = vmatprep.subr.bf16.mxu0 %v1626
      %1773 = vmatpush2.bf16.msra.mxu0 %v1625
      %1774 = vmatprep.subr.bf16.mxu0 %v1622
      %1775 = vmatpush2.bf16.msra.mxu0 %v1621
      %1776 = vmatprep.subr.bf16.mxu0 %v1618
      %1777 = vmatpush2.bf16.msra.mxu0 %v1617
      %1778 = vmatprep.subr.bf16.mxu0 %v1614
      %1779 = vmatpush2.bf16.msra.mxu0 %v1613
      %1780 = vmatprep.mubr.bf16.mxu0 %v1384
      %1781 = vmatmul.mubr.bf16.gmra.mxu0 %v1377
      %v1782 = vpop.f32.mrf.mxu0
      %v1783 = vadd.f32 0.0, %v1782
      %v1784 = vpop.f32.mrf.mxu0
      %v1785 = vadd.f32 0.0, %v1784
      %v1786 = vpop.f32.mrf.mxu0
      %v1787 = vpop.f32.mrf.mxu0
      %1788 = vdwg.mxu0
      %v1793 = vcombine.low %v1742, %v1744
      %v1794 = vcombine.low %v1783, %v1785
      %v1796 = vunpack.c.l.s4 1983009808
      %v1797 = vunpack.c.0.s8 %v1796
      %v1798 = vlaneseq
      %v1799 = vshrl.u32 %v1798, 7
      %v1800 = vsub.s32 %v1797, %v1799
      %v1801 = vrot.slane %v1793, %v1800
      %v1803 = vunpack.c.l.s4 1983009808
      %v1804 = vunpack.c.0.s8 %v1803
      %v1805 = vlaneseq
      %v1806 = vshrl.u32 %v1805, 7
      %v1807 = vsub.s32 %v1804, %v1806
      %v1808 = vrot.slane %v1794, %v1807
      %v1809 = vcombine.low %v1801, %v1808
      %v1811 = vadd.f32 %v1294, %v1809
      %1812 = vst.msk [vmem:[#allocation2] sm:$0xff] %vm773, %v1811
      %v1813 = vld [vmem:[#allocation2] sm:$0xff]
      %s1814 = scalar_lea.vmem %s230, 6
      %v1815 = vld [vmem:[%s1814] sm:$0x3]
      %s1816 = scalar_lea.vmem %s237, 1536
      %v1817 = vld [vmem:[%s1816] sm:$0xff]
      %v1818 = vld [vmem:[%s1816 + $0x8] sm:$0xff]
      %v1819 = vld [vmem:[%s1816 + $0x10] sm:$0xff]
      %v1820 = vld [vmem:[%s1816 + $0x18] sm:$0xff]
      %v1821 = vld [vmem:[%s1816 + $0x20] sm:$0xff]
      %v1822 = vld [vmem:[%s1816 + $0x28] sm:$0xff]
      %v1823 = vld [vmem:[%s1816 + $0x30] sm:$0xff]
      %v1824 = vld [vmem:[%s1816 + $0x38] sm:$0xff]
      %v1825 = vld [vmem:[%s1816 + $0x40] sm:$0xff]
      %v1826 = vld [vmem:[%s1816 + $0x48] sm:$0xff]
      %v1827 = vld [vmem:[%s1816 + $0x50] sm:$0xff]
      %v1828 = vld [vmem:[%s1816 + $0x58] sm:$0xff]
      %v1829 = vld [vmem:[%s1816 + $0x60] sm:$0xff]
      %v1830 = vld [vmem:[%s1816 + $0x68] sm:$0xff]
      %v1831 = vld [vmem:[%s1816 + $0x70] sm:$0xff]
      %v1832 = vld [vmem:[%s1816 + $0x78] sm:$0xff]
      %v1833 = vld [vmem:[%s1816 + $0x80] sm:$0xff]
      %v1834 = vld [vmem:[%s1816 + $0x88] sm:$0xff]
      %v1835 = vld [vmem:[%s1816 + $0x90] sm:$0xff]
      %v1836 = vld [vmem:[%s1816 + $0x98] sm:$0xff]
      %v1837 = vld [vmem:[%s1816 + $0xa0] sm:$0xff]
      %v1838 = vld [vmem:[%s1816 + $0xa8] sm:$0xff]
      %v1839 = vld [vmem:[%s1816 + $0xb0] sm:$0xff]
      %v1840 = vld [vmem:[%s1816 + $0xb8] sm:$0xff]
      %v1841 = vld [vmem:[%s1816 + $0xc0] sm:$0xff]
      %v1842 = vld [vmem:[%s1816 + $0xc8] sm:$0xff]
      %v1843 = vld [vmem:[%s1816 + $0xd0] sm:$0xff]
      %v1844 = vld [vmem:[%s1816 + $0xd8] sm:$0xff]
      %v1845 = vld [vmem:[%s1816 + $0xe0] sm:$0xff]
      %v1846 = vld [vmem:[%s1816 + $0xe8] sm:$0xff]
      %v1847 = vld [vmem:[%s1816 + $0xf0] sm:$0xff]
      %v1848 = vld [vmem:[%s1816 + $0xf8] sm:$0xff]
      %v1849 = vld [vmem:[%s1816 + $0x100] sm:$0xff]
      %v1850 = vld [vmem:[%s1816 + $0x108] sm:$0xff]
      %v1851 = vld [vmem:[%s1816 + $0x110] sm:$0xff]
      %v1852 = vld [vmem:[%s1816 + $0x118] sm:$0xff]
      %v1853 = vld [vmem:[%s1816 + $0x120] sm:$0xff]
      %v1854 = vld [vmem:[%s1816 + $0x128] sm:$0xff]
      %v1855 = vld [vmem:[%s1816 + $0x130] sm:$0xff]
      %v1856 = vld [vmem:[%s1816 + $0x138] sm:$0xff]
      %v1857 = vld [vmem:[%s1816 + $0x140] sm:$0xff]
      %v1858 = vld [vmem:[%s1816 + $0x148] sm:$0xff]
      %v1859 = vld [vmem:[%s1816 + $0x150] sm:$0xff]
      %v1860 = vld [vmem:[%s1816 + $0x158] sm:$0xff]
      %v1861 = vld [vmem:[%s1816 + $0x160] sm:$0xff]
      %v1862 = vld [vmem:[%s1816 + $0x168] sm:$0xff]
      %v1863 = vld [vmem:[%s1816 + $0x170] sm:$0xff]
      %v1864 = vld [vmem:[%s1816 + $0x178] sm:$0xff]
      %v1865 = vld [vmem:[%s1816 + $0x180] sm:$0xff]
      %v1866 = vld [vmem:[%s1816 + $0x188] sm:$0xff]
      %v1867 = vld [vmem:[%s1816 + $0x190] sm:$0xff]
      %v1868 = vld [vmem:[%s1816 + $0x198] sm:$0xff]
      %v1869 = vld [vmem:[%s1816 + $0x1a0] sm:$0xff]
      %v1870 = vld [vmem:[%s1816 + $0x1a8] sm:$0xff]
      %v1871 = vld [vmem:[%s1816 + $0x1b0] sm:$0xff]
      %v1872 = vld [vmem:[%s1816 + $0x1b8] sm:$0xff]
      %v1873 = vld [vmem:[%s1816 + $0x1c0] sm:$0xff]
      %v1874 = vld [vmem:[%s1816 + $0x1c8] sm:$0xff]
      %v1875 = vld [vmem:[%s1816 + $0x1d0] sm:$0xff]
      %v1876 = vld [vmem:[%s1816 + $0x1d8] sm:$0xff]
      %v1877 = vld [vmem:[%s1816 + $0x1e0] sm:$0xff]
      %v1878 = vld [vmem:[%s1816 + $0x1e8] sm:$0xff]
      %v1879 = vld [vmem:[%s1816 + $0x1f0] sm:$0xff]
      %v1880 = vld [vmem:[%s1816 + $0x1f8] sm:$0xff]
      %v1883 = vunpack.c.l.s4 1966171168
      %v1884 = vunpack.c.0.s8 %v1883
      %v1885 = vlaneseq
      %v1886 = vshrl.u32 %v1885, 7
      %v1887 = vsub.s32 %v1884, %v1886
      %v1888 = vrot.slane %v1815, %v1887
      %v1889 = vcombine.high %v1888, %v1888
      %v1891 = vunpack.c.l.s4 1966171168
      %v1892 = vunpack.c.0.s8 %v1891
      %v1893 = vlaneseq
      %v1894 = vshrl.u32 %v1893, 7
      %v1895 = vsub.s32 %v1892, %v1894
      %v1896 = vrot.slane %v1888, %v1895
      %v1898 = vunpack.c.l.s4 1966171168
      %v1899 = vunpack.c.0.s8 %v1898
      %v1900 = vlaneseq
      %v1901 = vshrl.u32 %v1900, 7
      %v1902 = vsub.s32 %v1899, %v1901
      %v1903 = vrot.slane %v1889, %v1902
      %v1970 = vunpack.c.l.b16 %v1817
      %v1971 = vunpack.c.h.b16 %v1817
      %v1972 = vunpack.c.l.b16 %v1818
      %v1973 = vunpack.c.h.b16 %v1818
      %v1974 = vunpack.c.l.b16 %v1819
      %v1975 = vunpack.c.h.b16 %v1819
      %v1976 = vunpack.c.l.b16 %v1820
      %v1977 = vunpack.c.h.b16 %v1820
      %v1978 = vunpack.c.l.b16 %v1821
      %v1979 = vunpack.c.h.b16 %v1821
      %v1980 = vunpack.c.l.b16 %v1822
      %v1981 = vunpack.c.h.b16 %v1822
      %v1982 = vunpack.c.l.b16 %v1823
      %v1983 = vunpack.c.h.b16 %v1823
      %v1984 = vunpack.c.l.b16 %v1824
      %v1985 = vunpack.c.h.b16 %v1824
      %v1986 = vunpack.c.l.b16 %v1825
      %v1987 = vunpack.c.h.b16 %v1825
      %v1988 = vunpack.c.l.b16 %v1826
      %v1989 = vunpack.c.h.b16 %v1826
      %v1990 = vunpack.c.l.b16 %v1827
      %v1991 = vunpack.c.h.b16 %v1827
      %v1992 = vunpack.c.l.b16 %v1828
      %v1993 = vunpack.c.h.b16 %v1828
      %v1994 = vunpack.c.l.b16 %v1829
      %v1995 = vunpack.c.h.b16 %v1829
      %v1996 = vunpack.c.l.b16 %v1830
      %v1997 = vunpack.c.h.b16 %v1830
      %v1998 = vunpack.c.l.b16 %v1831
      %v1999 = vunpack.c.h.b16 %v1831
      %v2000 = vunpack.c.l.b16 %v1832
      %v2001 = vunpack.c.h.b16 %v1832
      %v2002 = vunpack.c.l.b16 %v1833
      %v2003 = vunpack.c.h.b16 %v1833
      %v2004 = vunpack.c.l.b16 %v1834
      %v2005 = vunpack.c.h.b16 %v1834
      %v2006 = vunpack.c.l.b16 %v1835
      %v2007 = vunpack.c.h.b16 %v1835
      %v2008 = vunpack.c.l.b16 %v1836
      %v2009 = vunpack.c.h.b16 %v1836
      %v2010 = vunpack.c.l.b16 %v1837
      %v2011 = vunpack.c.h.b16 %v1837
      %v2012 = vunpack.c.l.b16 %v1838
      %v2013 = vunpack.c.h.b16 %v1838
      %v2014 = vunpack.c.l.b16 %v1839
      %v2015 = vunpack.c.h.b16 %v1839
      %v2016 = vunpack.c.l.b16 %v1840
      %v2017 = vunpack.c.h.b16 %v1840
      %v2018 = vunpack.c.l.b16 %v1841
      %v2019 = vunpack.c.h.b16 %v1841
      %v2020 = vunpack.c.l.b16 %v1842
      %v2021 = vunpack.c.h.b16 %v1842
      %v2022 = vunpack.c.l.b16 %v1843
      %v2023 = vunpack.c.h.b16 %v1843
      %v2024 = vunpack.c.l.b16 %v1844
      %v2025 = vunpack.c.h.b16 %v1844
      %v2026 = vunpack.c.l.b16 %v1845
      %v2027 = vunpack.c.h.b16 %v1845
      %v2028 = vunpack.c.l.b16 %v1846
      %v2029 = vunpack.c.h.b16 %v1846
      %v2030 = vunpack.c.l.b16 %v1847
      %v2031 = vunpack.c.h.b16 %v1847
      %v2032 = vunpack.c.l.b16 %v1848
      %v2033 = vunpack.c.h.b16 %v1848
      %v2034 = vunpack.c.l.b16 %v1849
      %v2035 = vunpack.c.h.b16 %v1849
      %v2036 = vunpack.c.l.b16 %v1850
      %v2037 = vunpack.c.h.b16 %v1850
      %v2038 = vunpack.c.l.b16 %v1851
      %v2039 = vunpack.c.h.b16 %v1851
      %v2040 = vunpack.c.l.b16 %v1852
      %v2041 = vunpack.c.h.b16 %v1852
      %v2042 = vunpack.c.l.b16 %v1853
      %v2043 = vunpack.c.h.b16 %v1853
      %v2044 = vunpack.c.l.b16 %v1854
      %v2045 = vunpack.c.h.b16 %v1854
      %v2046 = vunpack.c.l.b16 %v1855
      %v2047 = vunpack.c.h.b16 %v1855
      %v2048 = vunpack.c.l.b16 %v1856
      %v2049 = vunpack.c.h.b16 %v1856
      %v2050 = vunpack.c.l.b16 %v1857
      %v2051 = vunpack.c.h.b16 %v1857
      %v2052 = vunpack.c.l.b16 %v1858
      %v2053 = vunpack.c.h.b16 %v1858
      %v2054 = vunpack.c.l.b16 %v1859
      %v2055 = vunpack.c.h.b16 %v1859
      %v2056 = vunpack.c.l.b16 %v1860
      %v2057 = vunpack.c.h.b16 %v1860
      %v2058 = vunpack.c.l.b16 %v1861
      %v2059 = vunpack.c.h.b16 %v1861
      %v2060 = vunpack.c.l.b16 %v1862
      %v2061 = vunpack.c.h.b16 %v1862
      %v2062 = vunpack.c.l.b16 %v1863
      %v2063 = vunpack.c.h.b16 %v1863
      %v2064 = vunpack.c.l.b16 %v1864
      %v2065 = vunpack.c.h.b16 %v1864
      %v2066 = vunpack.c.l.b16 %v1865
      %v2067 = vunpack.c.h.b16 %v1865
      %v2068 = vunpack.c.l.b16 %v1866
      %v2069 = vunpack.c.h.b16 %v1866
      %v2070 = vunpack.c.l.b16 %v1867
      %v2071 = vunpack.c.h.b16 %v1867
      %v2072 = vunpack.c.l.b16 %v1868
      %v2073 = vunpack.c.h.b16 %v1868
      %v2074 = vunpack.c.l.b16 %v1869
      %v2075 = vunpack.c.h.b16 %v1869
      %v2076 = vunpack.c.l.b16 %v1870
      %v2077 = vunpack.c.h.b16 %v1870
      %v2078 = vunpack.c.l.b16 %v1871
      %v2079 = vunpack.c.h.b16 %v1871
      %v2080 = vunpack.c.l.b16 %v1872
      %v2081 = vunpack.c.h.b16 %v1872
      %v2082 = vunpack.c.l.b16 %v1873
      %v2083 = vunpack.c.h.b16 %v1873
      %v2084 = vunpack.c.l.b16 %v1874
      %v2085 = vunpack.c.h.b16 %v1874
      %v2086 = vunpack.c.l.b16 %v1875
      %v2087 = vunpack.c.h.b16 %v1875
      %v2088 = vunpack.c.l.b16 %v1876
      %v2089 = vunpack.c.h.b16 %v1876
      %v2090 = vunpack.c.l.b16 %v1877
      %v2091 = vunpack.c.h.b16 %v1877
      %v2092 = vunpack.c.l.b16 %v1878
      %v2093 = vunpack.c.h.b16 %v1878
      %v2094 = vunpack.c.l.b16 %v1879
      %v2095 = vunpack.c.h.b16 %v1879
      %v2096 = vunpack.c.l.b16 %v1880
      %v2097 = vunpack.c.h.b16 %v1880
      %v2098 = vpack.c.b16 %v1974, %v1970
      %v2099 = vpack.c.b16 %v1975, %v1971
      %v2100 = vpack.c.b16 %v1976, %v1972
      %v2101 = vpack.c.b16 %v1977, %v1973
      %v2102 = vpack.c.b16 %v1982, %v1978
      %v2103 = vpack.c.b16 %v1983, %v1979
      %v2104 = vpack.c.b16 %v1984, %v1980
      %v2105 = vpack.c.b16 %v1985, %v1981
      %v2106 = vpack.c.b16 %v1990, %v1986
      %v2107 = vpack.c.b16 %v1991, %v1987
      %v2108 = vpack.c.b16 %v1992, %v1988
      %v2109 = vpack.c.b16 %v1993, %v1989
      %v2110 = vpack.c.b16 %v1998, %v1994
      %v2111 = vpack.c.b16 %v1999, %v1995
      %v2112 = vpack.c.b16 %v2000, %v1996
      %v2113 = vpack.c.b16 %v2001, %v1997
      %v2114 = vpack.c.b16 %v2006, %v2002
      %v2115 = vpack.c.b16 %v2007, %v2003
      %v2116 = vpack.c.b16 %v2008, %v2004
      %v2117 = vpack.c.b16 %v2009, %v2005
      %v2118 = vpack.c.b16 %v2014, %v2010
      %v2119 = vpack.c.b16 %v2015, %v2011
      %v2120 = vpack.c.b16 %v2016, %v2012
      %v2121 = vpack.c.b16 %v2017, %v2013
      %v2122 = vpack.c.b16 %v2022, %v2018
      %v2123 = vpack.c.b16 %v2023, %v2019
      %v2124 = vpack.c.b16 %v2024, %v2020
      %v2125 = vpack.c.b16 %v2025, %v2021
      %v2126 = vpack.c.b16 %v2030, %v2026
      %v2127 = vpack.c.b16 %v2031, %v2027
      %v2128 = vpack.c.b16 %v2032, %v2028
      %v2129 = vpack.c.b16 %v2033, %v2029
      %v2130 = vpack.c.b16 %v2038, %v2034
      %v2131 = vpack.c.b16 %v2039, %v2035
      %v2132 = vpack.c.b16 %v2040, %v2036
      %v2133 = vpack.c.b16 %v2041, %v2037
      %v2134 = vpack.c.b16 %v2046, %v2042
      %v2135 = vpack.c.b16 %v2047, %v2043
      %v2136 = vpack.c.b16 %v2048, %v2044
      %v2137 = vpack.c.b16 %v2049, %v2045
      %v2138 = vpack.c.b16 %v2054, %v2050
      %v2139 = vpack.c.b16 %v2055, %v2051
      %v2140 = vpack.c.b16 %v2056, %v2052
      %v2141 = vpack.c.b16 %v2057, %v2053
      %v2142 = vpack.c.b16 %v2062, %v2058
      %v2143 = vpack.c.b16 %v2063, %v2059
      %v2144 = vpack.c.b16 %v2064, %v2060
      %v2145 = vpack.c.b16 %v2065, %v2061
      %v2146 = vpack.c.b16 %v2070, %v2066
      %v2147 = vpack.c.b16 %v2071, %v2067
      %v2148 = vpack.c.b16 %v2072, %v2068
      %v2149 = vpack.c.b16 %v2073, %v2069
      %v2150 = vpack.c.b16 %v2078, %v2074
      %v2151 = vpack.c.b16 %v2079, %v2075
      %v2152 = vpack.c.b16 %v2080, %v2076
      %v2153 = vpack.c.b16 %v2081, %v2077
      %v2154 = vpack.c.b16 %v2086, %v2082
      %v2155 = vpack.c.b16 %v2087, %v2083
      %v2156 = vpack.c.b16 %v2088, %v2084
      %v2157 = vpack.c.b16 %v2089, %v2085
      %v2158 = vpack.c.b16 %v2094, %v2090
      %v2159 = vpack.c.b16 %v2095, %v2091
      %v2160 = vpack.c.b16 %v2096, %v2092
      %v2161 = vpack.c.b16 %v2097, %v2093
      %2226 = vmatprep.subr.bf16.mxu0 %v2127
      %2227 = vmatpush1.bf16.msra.mxu0 %v2126
      %2228 = vmatprep.subr.bf16.mxu0 %v2123
      %2229 = vmatpush1.bf16.msra.mxu0 %v2122
      %2230 = vmatprep.subr.bf16.mxu0 %v2119
      %2231 = vmatpush1.bf16.msra.mxu0 %v2118
      %2232 = vmatprep.subr.bf16.mxu0 %v2115
      %2233 = vmatpush1.bf16.msra.mxu0 %v2114
      %2234 = vmatprep.subr.bf16.mxu0 %v2111
      %2235 = vmatpush1.bf16.msra.mxu0 %v2110
      %2236 = vmatprep.subr.bf16.mxu0 %v2107
      %2237 = vmatpush1.bf16.msra.mxu0 %v2106
      %2238 = vmatprep.subr.bf16.mxu0 %v2103
      %2239 = vmatpush1.bf16.msra.mxu0 %v2102
      %2240 = vmatprep.subr.bf16.mxu0 %v2099
      %2241 = vmatpush1.bf16.msra.mxu0 %v2098
      %2242 = vmatprep.subr.bf16.mxu0 %v2159
      %2243 = vmatpush2.bf16.msra.mxu0 %v2158
      %2244 = vmatprep.subr.bf16.mxu0 %v2155
      %2245 = vmatpush2.bf16.msra.mxu0 %v2154
      %2246 = vmatprep.subr.bf16.mxu0 %v2151
      %2247 = vmatpush2.bf16.msra.mxu0 %v2150
      %2248 = vmatprep.subr.bf16.mxu0 %v2147
      %2249 = vmatpush2.bf16.msra.mxu0 %v2146
      %2250 = vmatprep.subr.bf16.mxu0 %v2143
      %2251 = vmatpush2.bf16.msra.mxu0 %v2142
      %2252 = vmatprep.subr.bf16.mxu0 %v2139
      %2253 = vmatpush2.bf16.msra.mxu0 %v2138
      %2254 = vmatprep.subr.bf16.mxu0 %v2135
      %2255 = vmatpush2.bf16.msra.mxu0 %v2134
      %2256 = vmatprep.subr.bf16.mxu0 %v2131
      %2257 = vmatpush2.bf16.msra.mxu0 %v2130
      %2258 = vmatprep.mubr.bf16.mxu0 %v1903
      %2259 = vmatmul.mubr.bf16.gmra.mxu0 %v1896
      %v2260 = vpop.f32.mrf.mxu0
      %v2261 = vadd.f32 0.0, %v2260
      %v2262 = vpop.f32.mrf.mxu0
      %v2263 = vadd.f32 0.0, %v2262
      %v2264 = vpop.f32.mrf.mxu0
      %v2265 = vpop.f32.mrf.mxu0
      %2266 = vdwg.mxu0
      %2267 = vmatprep.subr.bf16.mxu0 %v2129
      %2268 = vmatpush1.bf16.msra.mxu0 %v2128
      %2269 = vmatprep.subr.bf16.mxu0 %v2125
      %2270 = vmatpush1.bf16.msra.mxu0 %v2124
      %2271 = vmatprep.subr.bf16.mxu0 %v2121
      %2272 = vmatpush1.bf16.msra.mxu0 %v2120
      %2273 = vmatprep.subr.bf16.mxu0 %v2117
      %2274 = vmatpush1.bf16.msra.mxu0 %v2116
      %2275 = vmatprep.subr.bf16.mxu0 %v2113
      %2276 = vmatpush1.bf16.msra.mxu0 %v2112
      %2277 = vmatprep.subr.bf16.mxu0 %v2109
      %2278 = vmatpush1.bf16.msra.mxu0 %v2108
      %2279 = vmatprep.subr.bf16.mxu0 %v2105
      %2280 = vmatpush1.bf16.msra.mxu0 %v2104
      %2281 = vmatprep.subr.bf16.mxu0 %v2101
      %2282 = vmatpush1.bf16.msra.mxu0 %v2100
      %2283 = vmatprep.subr.bf16.mxu0 %v2161
      %2284 = vmatpush2.bf16.msra.mxu0 %v2160
      %2285 = vmatprep.subr.bf16.mxu0 %v2157
      %2286 = vmatpush2.bf16.msra.mxu0 %v2156
      %2287 = vmatprep.subr.bf16.mxu0 %v2153
      %2288 = vmatpush2.bf16.msra.mxu0 %v2152
      %2289 = vmatprep.subr.bf16.mxu0 %v2149
      %2290 = vmatpush2.bf16.msra.mxu0 %v2148
      %2291 = vmatprep.subr.bf16.mxu0 %v2145
      %2292 = vmatpush2.bf16.msra.mxu0 %v2144
      %2293 = vmatprep.subr.bf16.mxu0 %v2141
      %2294 = vmatpush2.bf16.msra.mxu0 %v2140
      %2295 = vmatprep.subr.bf16.mxu0 %v2137
      %2296 = vmatpush2.bf16.msra.mxu0 %v2136
      %2297 = vmatprep.subr.bf16.mxu0 %v2133
      %2298 = vmatpush2.bf16.msra.mxu0 %v2132
      %2299 = vmatprep.mubr.bf16.mxu0 %v1903
      %2300 = vmatmul.mubr.bf16.gmra.mxu0 %v1896
      %v2301 = vpop.f32.mrf.mxu0
      %v2302 = vadd.f32 0.0, %v2301
      %v2303 = vpop.f32.mrf.mxu0
      %v2304 = vadd.f32 0.0, %v2303
      %v2305 = vpop.f32.mrf.mxu0
      %v2306 = vpop.f32.mrf.mxu0
      %2307 = vdwg.mxu0
      %v2312 = vcombine.low %v2261, %v2263
      %v2313 = vcombine.low %v2302, %v2304
      %v2315 = vunpack.c.l.s4 1983009808
      %v2316 = vunpack.c.0.s8 %v2315
      %v2317 = vlaneseq
      %v2318 = vshrl.u32 %v2317, 7
      %v2319 = vsub.s32 %v2316, %v2318
      %v2320 = vrot.slane %v2312, %v2319
      %v2322 = vunpack.c.l.s4 1983009808
      %v2323 = vunpack.c.0.s8 %v2322
      %v2324 = vlaneseq
      %v2325 = vshrl.u32 %v2324, 7
      %v2326 = vsub.s32 %v2323, %v2325
      %v2327 = vrot.slane %v2313, %v2326
      %v2328 = vcombine.low %v2320, %v2327
      %v2330 = vadd.f32 %v1813, %v2328
      %2331 = vst.msk [vmem:[#allocation2] sm:$0xff] %vm773, %v2330
      %v2332 = vld [vmem:[#allocation2] sm:$0xff]
      %s2333 = scalar_lea.vmem %s230, 8
      %v2334 = vld [vmem:[%s2333] sm:$0x3]
      %s2335 = scalar_lea.vmem %s237, 2048
      %v2336 = vld [vmem:[%s2335] sm:$0xff]
      %v2337 = vld [vmem:[%s2335 + $0x8] sm:$0xff]
      %v2338 = vld [vmem:[%s2335 + $0x10] sm:$0xff]
      %v2339 = vld [vmem:[%s2335 + $0x18] sm:$0xff]
      %v2340 = vld [vmem:[%s2335 + $0x20] sm:$0xff]
      %v2341 = vld [vmem:[%s2335 + $0x28] sm:$0xff]
      %v2342 = vld [vmem:[%s2335 + $0x30] sm:$0xff]
      %v2343 = vld [vmem:[%s2335 + $0x38] sm:$0xff]
      %v2344 = vld [vmem:[%s2335 + $0x40] sm:$0xff]
      %v2345 = vld [vmem:[%s2335 + $0x48] sm:$0xff]
      %v2346 = vld [vmem:[%s2335 + $0x50] sm:$0xff]
      %v2347 = vld [vmem:[%s2335 + $0x58] sm:$0xff]
      %v2348 = vld [vmem:[%s2335 + $0x60] sm:$0xff]
      %v2349 = vld [vmem:[%s2335 + $0x68] sm:$0xff]
      %v2350 = vld [vmem:[%s2335 + $0x70] sm:$0xff]
      %v2351 = vld [vmem:[%s2335 + $0x78] sm:$0xff]
      %v2352 = vld [vmem:[%s2335 + $0x80] sm:$0xff]
      %v2353 = vld [vmem:[%s2335 + $0x88] sm:$0xff]
      %v2354 = vld [vmem:[%s2335 + $0x90] sm:$0xff]
      %v2355 = vld [vmem:[%s2335 + $0x98] sm:$0xff]
      %v2356 = vld [vmem:[%s2335 + $0xa0] sm:$0xff]
      %v2357 = vld [vmem:[%s2335 + $0xa8] sm:$0xff]
      %v2358 = vld [vmem:[%s2335 + $0xb0] sm:$0xff]
      %v2359 = vld [vmem:[%s2335 + $0xb8] sm:$0xff]
      %v2360 = vld [vmem:[%s2335 + $0xc0] sm:$0xff]
      %v2361 = vld [vmem:[%s2335 + $0xc8] sm:$0xff]
      %v2362 = vld [vmem:[%s2335 + $0xd0] sm:$0xff]
      %v2363 = vld [vmem:[%s2335 + $0xd8] sm:$0xff]
      %v2364 = vld [vmem:[%s2335 + $0xe0] sm:$0xff]
      %v2365 = vld [vmem:[%s2335 + $0xe8] sm:$0xff]
      %v2366 = vld [vmem:[%s2335 + $0xf0] sm:$0xff]
      %v2367 = vld [vmem:[%s2335 + $0xf8] sm:$0xff]
      %v2368 = vld [vmem:[%s2335 + $0x100] sm:$0xff]
      %v2369 = vld [vmem:[%s2335 + $0x108] sm:$0xff]
      %v2370 = vld [vmem:[%s2335 + $0x110] sm:$0xff]
      %v2371 = vld [vmem:[%s2335 + $0x118] sm:$0xff]
      %v2372 = vld [vmem:[%s2335 + $0x120] sm:$0xff]
      %v2373 = vld [vmem:[%s2335 + $0x128] sm:$0xff]
      %v2374 = vld [vmem:[%s2335 + $0x130] sm:$0xff]
      %v2375 = vld [vmem:[%s2335 + $0x138] sm:$0xff]
      %v2376 = vld [vmem:[%s2335 + $0x140] sm:$0xff]
      %v2377 = vld [vmem:[%s2335 + $0x148] sm:$0xff]
      %v2378 = vld [vmem:[%s2335 + $0x150] sm:$0xff]
      %v2379 = vld [vmem:[%s2335 + $0x158] sm:$0xff]
      %v2380 = vld [vmem:[%s2335 + $0x160] sm:$0xff]
      %v2381 = vld [vmem:[%s2335 + $0x168] sm:$0xff]
      %v2382 = vld [vmem:[%s2335 + $0x170] sm:$0xff]
      %v2383 = vld [vmem:[%s2335 + $0x178] sm:$0xff]
      %v2384 = vld [vmem:[%s2335 + $0x180] sm:$0xff]
      %v2385 = vld [vmem:[%s2335 + $0x188] sm:$0xff]
      %v2386 = vld [vmem:[%s2335 + $0x190] sm:$0xff]
      %v2387 = vld [vmem:[%s2335 + $0x198] sm:$0xff]
      %v2388 = vld [vmem:[%s2335 + $0x1a0] sm:$0xff]
      %v2389 = vld [vmem:[%s2335 + $0x1a8] sm:$0xff]
      %v2390 = vld [vmem:[%s2335 + $0x1b0] sm:$0xff]
      %v2391 = vld [vmem:[%s2335 + $0x1b8] sm:$0xff]
      %v2392 = vld [vmem:[%s2335 + $0x1c0] sm:$0xff]
      %v2393 = vld [vmem:[%s2335 + $0x1c8] sm:$0xff]
      %v2394 = vld [vmem:[%s2335 + $0x1d0] sm:$0xff]
      %v2395 = vld [vmem:[%s2335 + $0x1d8] sm:$0xff]
      %v2396 = vld [vmem:[%s2335 + $0x1e0] sm:$0xff]
      %v2397 = vld [vmem:[%s2335 + $0x1e8] sm:$0xff]
      %v2398 = vld [vmem:[%s2335 + $0x1f0] sm:$0xff]
      %v2399 = vld [vmem:[%s2335 + $0x1f8] sm:$0xff]
      %v2402 = vunpack.c.l.s4 1966171168
      %v2403 = vunpack.c.0.s8 %v2402
      %v2404 = vlaneseq
      %v2405 = vshrl.u32 %v2404, 7
      %v2406 = vsub.s32 %v2403, %v2405
      %v2407 = vrot.slane %v2334, %v2406
      %v2408 = vcombine.high %v2407, %v2407
      %v2410 = vunpack.c.l.s4 1966171168
      %v2411 = vunpack.c.0.s8 %v2410
      %v2412 = vlaneseq
      %v2413 = vshrl.u32 %v2412, 7
      %v2414 = vsub.s32 %v2411, %v2413
      %v2415 = vrot.slane %v2407, %v2414
      %v2417 = vunpack.c.l.s4 1966171168
      %v2418 = vunpack.c.0.s8 %v2417
      %v2419 = vlaneseq
      %v2420 = vshrl.u32 %v2419, 7
      %v2421 = vsub.s32 %v2418, %v2420
      %v2422 = vrot.slane %v2408, %v2421
      %v2489 = vunpack.c.l.b16 %v2336
      %v2490 = vunpack.c.h.b16 %v2336
      %v2491 = vunpack.c.l.b16 %v2337
      %v2492 = vunpack.c.h.b16 %v2337
      %v2493 = vunpack.c.l.b16 %v2338
      %v2494 = vunpack.c.h.b16 %v2338
      %v2495 = vunpack.c.l.b16 %v2339
      %v2496 = vunpack.c.h.b16 %v2339
      %v2497 = vunpack.c.l.b16 %v2340
      %v2498 = vunpack.c.h.b16 %v2340
      %v2499 = vunpack.c.l.b16 %v2341
      %v2500 = vunpack.c.h.b16 %v2341
      %v2501 = vunpack.c.l.b16 %v2342
      %v2502 = vunpack.c.h.b16 %v2342
      %v2503 = vunpack.c.l.b16 %v2343
      %v2504 = vunpack.c.h.b16 %v2343
      %v2505 = vunpack.c.l.b16 %v2344
      %v2506 = vunpack.c.h.b16 %v2344
      %v2507 = vunpack.c.l.b16 %v2345
      %v2508 = vunpack.c.h.b16 %v2345
      %v2509 = vunpack.c.l.b16 %v2346
      %v2510 = vunpack.c.h.b16 %v2346
      %v2511 = vunpack.c.l.b16 %v2347
      %v2512 = vunpack.c.h.b16 %v2347
      %v2513 = vunpack.c.l.b16 %v2348
      %v2514 = vunpack.c.h.b16 %v2348
      %v2515 = vunpack.c.l.b16 %v2349
      %v2516 = vunpack.c.h.b16 %v2349
      %v2517 = vunpack.c.l.b16 %v2350
      %v2518 = vunpack.c.h.b16 %v2350
      %v2519 = vunpack.c.l.b16 %v2351
      %v2520 = vunpack.c.h.b16 %v2351
      %v2521 = vunpack.c.l.b16 %v2352
      %v2522 = vunpack.c.h.b16 %v2352
      %v2523 = vunpack.c.l.b16 %v2353
      %v2524 = vunpack.c.h.b16 %v2353
      %v2525 = vunpack.c.l.b16 %v2354
      %v2526 = vunpack.c.h.b16 %v2354
      %v2527 = vunpack.c.l.b16 %v2355
      %v2528 = vunpack.c.h.b16 %v2355
      %v2529 = vunpack.c.l.b16 %v2356
      %v2530 = vunpack.c.h.b16 %v2356
      %v2531 = vunpack.c.l.b16 %v2357
      %v2532 = vunpack.c.h.b16 %v2357
      %v2533 = vunpack.c.l.b16 %v2358
      %v2534 = vunpack.c.h.b16 %v2358
      %v2535 = vunpack.c.l.b16 %v2359
      %v2536 = vunpack.c.h.b16 %v2359
      %v2537 = vunpack.c.l.b16 %v2360
      %v2538 = vunpack.c.h.b16 %v2360
      %v2539 = vunpack.c.l.b16 %v2361
      %v2540 = vunpack.c.h.b16 %v2361
      %v2541 = vunpack.c.l.b16 %v2362
      %v2542 = vunpack.c.h.b16 %v2362
      %v2543 = vunpack.c.l.b16 %v2363
      %v2544 = vunpack.c.h.b16 %v2363
      %v2545 = vunpack.c.l.b16 %v2364
      %v2546 = vunpack.c.h.b16 %v2364
      %v2547 = vunpack.c.l.b16 %v2365
      %v2548 = vunpack.c.h.b16 %v2365
      %v2549 = vunpack.c.l.b16 %v2366
      %v2550 = vunpack.c.h.b16 %v2366
      %v2551 = vunpack.c.l.b16 %v2367
      %v2552 = vunpack.c.h.b16 %v2367
      %v2553 = vunpack.c.l.b16 %v2368
      %v2554 = vunpack.c.h.b16 %v2368
      %v2555 = vunpack.c.l.b16 %v2369
      %v2556 = vunpack.c.h.b16 %v2369
      %v2557 = vunpack.c.l.b16 %v2370
      %v2558 = vunpack.c.h.b16 %v2370
      %v2559 = vunpack.c.l.b16 %v2371
      %v2560 = vunpack.c.h.b16 %v2371
      %v2561 = vunpack.c.l.b16 %v2372
      %v2562 = vunpack.c.h.b16 %v2372
      %v2563 = vunpack.c.l.b16 %v2373
      %v2564 = vunpack.c.h.b16 %v2373
      %v2565 = vunpack.c.l.b16 %v2374
      %v2566 = vunpack.c.h.b16 %v2374
      %v2567 = vunpack.c.l.b16 %v2375
      %v2568 = vunpack.c.h.b16 %v2375
      %v2569 = vunpack.c.l.b16 %v2376
      %v2570 = vunpack.c.h.b16 %v2376
      %v2571 = vunpack.c.l.b16 %v2377
      %v2572 = vunpack.c.h.b16 %v2377
      %v2573 = vunpack.c.l.b16 %v2378
      %v2574 = vunpack.c.h.b16 %v2378
      %v2575 = vunpack.c.l.b16 %v2379
      %v2576 = vunpack.c.h.b16 %v2379
      %v2577 = vunpack.c.l.b16 %v2380
      %v2578 = vunpack.c.h.b16 %v2380
      %v2579 = vunpack.c.l.b16 %v2381
      %v2580 = vunpack.c.h.b16 %v2381
      %v2581 = vunpack.c.l.b16 %v2382
      %v2582 = vunpack.c.h.b16 %v2382
      %v2583 = vunpack.c.l.b16 %v2383
      %v2584 = vunpack.c.h.b16 %v2383
      %v2585 = vunpack.c.l.b16 %v2384
      %v2586 = vunpack.c.h.b16 %v2384
      %v2587 = vunpack.c.l.b16 %v2385
      %v2588 = vunpack.c.h.b16 %v2385
      %v2589 = vunpack.c.l.b16 %v2386
      %v2590 = vunpack.c.h.b16 %v2386
      %v2591 = vunpack.c.l.b16 %v2387
      %v2592 = vunpack.c.h.b16 %v2387
      %v2593 = vunpack.c.l.b16 %v2388
      %v2594 = vunpack.c.h.b16 %v2388
      %v2595 = vunpack.c.l.b16 %v2389
      %v2596 = vunpack.c.h.b16 %v2389
      %v2597 = vunpack.c.l.b16 %v2390
      %v2598 = vunpack.c.h.b16 %v2390
      %v2599 = vunpack.c.l.b16 %v2391
      %v2600 = vunpack.c.h.b16 %v2391
      %v2601 = vunpack.c.l.b16 %v2392
      %v2602 = vunpack.c.h.b16 %v2392
      %v2603 = vunpack.c.l.b16 %v2393
      %v2604 = vunpack.c.h.b16 %v2393
      %v2605 = vunpack.c.l.b16 %v2394
      %v2606 = vunpack.c.h.b16 %v2394
      %v2607 = vunpack.c.l.b16 %v2395
      %v2608 = vunpack.c.h.b16 %v2395
      %v2609 = vunpack.c.l.b16 %v2396
      %v2610 = vunpack.c.h.b16 %v2396
      %v2611 = vunpack.c.l.b16 %v2397
      %v2612 = vunpack.c.h.b16 %v2397
      %v2613 = vunpack.c.l.b16 %v2398
      %v2614 = vunpack.c.h.b16 %v2398
      %v2615 = vunpack.c.l.b16 %v2399
      %v2616 = vunpack.c.h.b16 %v2399
      %v2617 = vpack.c.b16 %v2493, %v2489
      %v2618 = vpack.c.b16 %v2494, %v2490
      %v2619 = vpack.c.b16 %v2495, %v2491
      %v2620 = vpack.c.b16 %v2496, %v2492
      %v2621 = vpack.c.b16 %v2501, %v2497
      %v2622 = vpack.c.b16 %v2502, %v2498
      %v2623 = vpack.c.b16 %v2503, %v2499
      %v2624 = vpack.c.b16 %v2504, %v2500
      %v2625 = vpack.c.b16 %v2509, %v2505
      %v2626 = vpack.c.b16 %v2510, %v2506
      %v2627 = vpack.c.b16 %v2511, %v2507
      %v2628 = vpack.c.b16 %v2512, %v2508
      %v2629 = vpack.c.b16 %v2517, %v2513
      %v2630 = vpack.c.b16 %v2518, %v2514
      %v2631 = vpack.c.b16 %v2519, %v2515
      %v2632 = vpack.c.b16 %v2520, %v2516
      %v2633 = vpack.c.b16 %v2525, %v2521
      %v2634 = vpack.c.b16 %v2526, %v2522
      %v2635 = vpack.c.b16 %v2527, %v2523
      %v2636 = vpack.c.b16 %v2528, %v2524
      %v2637 = vpack.c.b16 %v2533, %v2529
      %v2638 = vpack.c.b16 %v2534, %v2530
      %v2639 = vpack.c.b16 %v2535, %v2531
      %v2640 = vpack.c.b16 %v2536, %v2532
      %v2641 = vpack.c.b16 %v2541, %v2537
      %v2642 = vpack.c.b16 %v2542, %v2538
      %v2643 = vpack.c.b16 %v2543, %v2539
      %v2644 = vpack.c.b16 %v2544, %v2540
      %v2645 = vpack.c.b16 %v2549, %v2545
      %v2646 = vpack.c.b16 %v2550, %v2546
      %v2647 = vpack.c.b16 %v2551, %v2547
      %v2648 = vpack.c.b16 %v2552, %v2548
      %v2649 = vpack.c.b16 %v2557, %v2553
      %v2650 = vpack.c.b16 %v2558, %v2554
      %v2651 = vpack.c.b16 %v2559, %v2555
      %v2652 = vpack.c.b16 %v2560, %v2556
      %v2653 = vpack.c.b16 %v2565, %v2561
      %v2654 = vpack.c.b16 %v2566, %v2562
      %v2655 = vpack.c.b16 %v2567, %v2563
      %v2656 = vpack.c.b16 %v2568, %v2564
      %v2657 = vpack.c.b16 %v2573, %v2569
      %v2658 = vpack.c.b16 %v2574, %v2570
      %v2659 = vpack.c.b16 %v2575, %v2571
      %v2660 = vpack.c.b16 %v2576, %v2572
      %v2661 = vpack.c.b16 %v2581, %v2577
      %v2662 = vpack.c.b16 %v2582, %v2578
      %v2663 = vpack.c.b16 %v2583, %v2579
      %v2664 = vpack.c.b16 %v2584, %v2580
      %v2665 = vpack.c.b16 %v2589, %v2585
      %v2666 = vpack.c.b16 %v2590, %v2586
      %v2667 = vpack.c.b16 %v2591, %v2587
      %v2668 = vpack.c.b16 %v2592, %v2588
      %v2669 = vpack.c.b16 %v2597, %v2593
      %v2670 = vpack.c.b16 %v2598, %v2594
      %v2671 = vpack.c.b16 %v2599, %v2595
      %v2672 = vpack.c.b16 %v2600, %v2596
      %v2673 = vpack.c.b16 %v2605, %v2601
      %v2674 = vpack.c.b16 %v2606, %v2602
      %v2675 = vpack.c.b16 %v2607, %v2603
      %v2676 = vpack.c.b16 %v2608, %v2604
      %v2677 = vpack.c.b16 %v2613, %v2609
      %v2678 = vpack.c.b16 %v2614, %v2610
      %v2679 = vpack.c.b16 %v2615, %v2611
      %v2680 = vpack.c.b16 %v2616, %v2612
      %2745 = vmatprep.subr.bf16.mxu0 %v2646
      %2746 = vmatpush1.bf16.msra.mxu0 %v2645
      %2747 = vmatprep.subr.bf16.mxu0 %v2642
      %2748 = vmatpush1.bf16.msra.mxu0 %v2641
      %2749 = vmatprep.subr.bf16.mxu0 %v2638
      %2750 = vmatpush1.bf16.msra.mxu0 %v2637
      %2751 = vmatprep.subr.bf16.mxu0 %v2634
      %2752 = vmatpush1.bf16.msra.mxu0 %v2633
      %2753 = vmatprep.subr.bf16.mxu0 %v2630
      %2754 = vmatpush1.bf16.msra.mxu0 %v2629
      %2755 = vmatprep.subr.bf16.mxu0 %v2626
      %2756 = vmatpush1.bf16.msra.mxu0 %v2625
      %2757 = vmatprep.subr.bf16.mxu0 %v2622
      %2758 = vmatpush1.bf16.msra.mxu0 %v2621
      %2759 = vmatprep.subr.bf16.mxu0 %v2618
      %2760 = vmatpush1.bf16.msra.mxu0 %v2617
      %2761 = vmatprep.subr.bf16.mxu0 %v2678
      %2762 = vmatpush2.bf16.msra.mxu0 %v2677
      %2763 = vmatprep.subr.bf16.mxu0 %v2674
      %2764 = vmatpush2.bf16.msra.mxu0 %v2673
      %2765 = vmatprep.subr.bf16.mxu0 %v2670
      %2766 = vmatpush2.bf16.msra.mxu0 %v2669
      %2767 = vmatprep.subr.bf16.mxu0 %v2666
      %2768 = vmatpush2.bf16.msra.mxu0 %v2665
      %2769 = vmatprep.subr.bf16.mxu0 %v2662
      %2770 = vmatpush2.bf16.msra.mxu0 %v2661
      %2771 = vmatprep.subr.bf16.mxu0 %v2658
      %2772 = vmatpush2.bf16.msra.mxu0 %v2657
      %2773 = vmatprep.subr.bf16.mxu0 %v2654
      %2774 = vmatpush2.bf16.msra.mxu0 %v2653
      %2775 = vmatprep.subr.bf16.mxu0 %v2650
      %2776 = vmatpush2.bf16.msra.mxu0 %v2649
      %2777 = vmatprep.mubr.bf16.mxu0 %v2422
      %2778 = vmatmul.mubr.bf16.gmra.mxu0 %v2415
      %v2779 = vpop.f32.mrf.mxu0
      %v2780 = vadd.f32 0.0, %v2779
      %v2781 = vpop.f32.mrf.mxu0
      %v2782 = vadd.f32 0.0, %v2781
      %v2783 = vpop.f32.mrf.mxu0
      %v2784 = vpop.f32.mrf.mxu0
      %2785 = vdwg.mxu0
      %2786 = vmatprep.subr.bf16.mxu0 %v2648
      %2787 = vmatpush1.bf16.msra.mxu0 %v2647
      %2788 = vmatprep.subr.bf16.mxu0 %v2644
      %2789 = vmatpush1.bf16.msra.mxu0 %v2643
      %2790 = vmatprep.subr.bf16.mxu0 %v2640
      %2791 = vmatpush1.bf16.msra.mxu0 %v2639
      %2792 = vmatprep.subr.bf16.mxu0 %v2636
      %2793 = vmatpush1.bf16.msra.mxu0 %v2635
      %2794 = vmatprep.subr.bf16.mxu0 %v2632
      %2795 = vmatpush1.bf16.msra.mxu0 %v2631
      %2796 = vmatprep.subr.bf16.mxu0 %v2628
      %2797 = vmatpush1.bf16.msra.mxu0 %v2627
      %2798 = vmatprep.subr.bf16.mxu0 %v2624
      %2799 = vmatpush1.bf16.msra.mxu0 %v2623
      %2800 = vmatprep.subr.bf16.mxu0 %v2620
      %2801 = vmatpush1.bf16.msra.mxu0 %v2619
      %2802 = vmatprep.subr.bf16.mxu0 %v2680
      %2803 = vmatpush2.bf16.msra.mxu0 %v2679
      %2804 = vmatprep.subr.bf16.mxu0 %v2676
      %2805 = vmatpush2.bf16.msra.mxu0 %v2675
      %2806 = vmatprep.subr.bf16.mxu0 %v2672
      %2807 = vmatpush2.bf16.msra.mxu0 %v2671
      %2808 = vmatprep.subr.bf16.mxu0 %v2668
      %2809 = vmatpush2.bf16.msra.mxu0 %v2667
      %2810 = vmatprep.subr.bf16.mxu0 %v2664
      %2811 = vmatpush2.bf16.msra.mxu0 %v2663
      %2812 = vmatprep.subr.bf16.mxu0 %v2660
      %2813 = vmatpush2.bf16.msra.mxu0 %v2659
      %2814 = vmatprep.subr.bf16.mxu0 %v2656
      %2815 = vmatpush2.bf16.msra.mxu0 %v2655
      %2816 = vmatprep.subr.bf16.mxu0 %v2652
      %2817 = vmatpush2.bf16.msra.mxu0 %v2651
      %2818 = vmatprep.mubr.bf16.mxu0 %v2422
      %2819 = vmatmul.mubr.bf16.gmra.mxu0 %v2415
      %v2820 = vpop.f32.mrf.mxu0
      %v2821 = vadd.f32 0.0, %v2820
      %v2822 = vpop.f32.mrf.mxu0
      %v2823 = vadd.f32 0.0, %v2822
      %v2824 = vpop.f32.mrf.mxu0
      %v2825 = vpop.f32.mrf.mxu0
      %2826 = vdwg.mxu0
      %v2831 = vcombine.low %v2780, %v2782
      %v2832 = vcombine.low %v2821, %v2823
      %v2834 = vunpack.c.l.s4 1983009808
      %v2835 = vunpack.c.0.s8 %v2834
      %v2836 = vlaneseq
      %v2837 = vshrl.u32 %v2836, 7
      %v2838 = vsub.s32 %v2835, %v2837
      %v2839 = vrot.slane %v2831, %v2838
      %v2841 = vunpack.c.l.s4 1983009808
      %v2842 = vunpack.c.0.s8 %v2841
      %v2843 = vlaneseq
      %v2844 = vshrl.u32 %v2843, 7
      %v2845 = vsub.s32 %v2842, %v2844
      %v2846 = vrot.slane %v2832, %v2845
      %v2847 = vcombine.low %v2839, %v2846
      %v2849 = vadd.f32 %v2332, %v2847
      %2850 = vst.msk [vmem:[#allocation2] sm:$0xff] %vm773, %v2849
      %v2851 = vld [vmem:[#allocation2] sm:$0xff]
      %s2852 = scalar_lea.vmem %s230, 10
      %v2853 = vld [vmem:[%s2852] sm:$0x3]
      %s2854 = scalar_lea.vmem %s237, 2560
      %v2855 = vld [vmem:[%s2854] sm:$0xff]
      %v2856 = vld [vmem:[%s2854 + $0x8] sm:$0xff]
      %v2857 = vld [vmem:[%s2854 + $0x10] sm:$0xff]
      %v2858 = vld [vmem:[%s2854 + $0x18] sm:$0xff]
      %v2859 = vld [vmem:[%s2854 + $0x20] sm:$0xff]
      %v2860 = vld [vmem:[%s2854 + $0x28] sm:$0xff]
      %v2861 = vld [vmem:[%s2854 + $0x30] sm:$0xff]
      %v2862 = vld [vmem:[%s2854 + $0x38] sm:$0xff]
      %v2863 = vld [vmem:[%s2854 + $0x40] sm:$0xff]
      %v2864 = vld [vmem:[%s2854 + $0x48] sm:$0xff]
      %v2865 = vld [vmem:[%s2854 + $0x50] sm:$0xff]
      %v2866 = vld [vmem:[%s2854 + $0x58] sm:$0xff]
      %v2867 = vld [vmem:[%s2854 + $0x60] sm:$0xff]
      %v2868 = vld [vmem:[%s2854 + $0x68] sm:$0xff]
      %v2869 = vld [vmem:[%s2854 + $0x70] sm:$0xff]
      %v2870 = vld [vmem:[%s2854 + $0x78] sm:$0xff]
      %v2871 = vld [vmem:[%s2854 + $0x80] sm:$0xff]
      %v2872 = vld [vmem:[%s2854 + $0x88] sm:$0xff]
      %v2873 = vld [vmem:[%s2854 + $0x90] sm:$0xff]
      %v2874 = vld [vmem:[%s2854 + $0x98] sm:$0xff]
      %v2875 = vld [vmem:[%s2854 + $0xa0] sm:$0xff]
      %v2876 = vld [vmem:[%s2854 + $0xa8] sm:$0xff]
      %v2877 = vld [vmem:[%s2854 + $0xb0] sm:$0xff]
      %v2878 = vld [vmem:[%s2854 + $0xb8] sm:$0xff]
      %v2879 = vld [vmem:[%s2854 + $0xc0] sm:$0xff]
      %v2880 = vld [vmem:[%s2854 + $0xc8] sm:$0xff]
      %v2881 = vld [vmem:[%s2854 + $0xd0] sm:$0xff]
      %v2882 = vld [vmem:[%s2854 + $0xd8] sm:$0xff]
      %v2883 = vld [vmem:[%s2854 + $0xe0] sm:$0xff]
      %v2884 = vld [vmem:[%s2854 + $0xe8] sm:$0xff]
      %v2885 = vld [vmem:[%s2854 + $0xf0] sm:$0xff]
      %v2886 = vld [vmem:[%s2854 + $0xf8] sm:$0xff]
      %v2887 = vld [vmem:[%s2854 + $0x100] sm:$0xff]
      %v2888 = vld [vmem:[%s2854 + $0x108] sm:$0xff]
      %v2889 = vld [vmem:[%s2854 + $0x110] sm:$0xff]
      %v2890 = vld [vmem:[%s2854 + $0x118] sm:$0xff]
      %v2891 = vld [vmem:[%s2854 + $0x120] sm:$0xff]
      %v2892 = vld [vmem:[%s2854 + $0x128] sm:$0xff]
      %v2893 = vld [vmem:[%s2854 + $0x130] sm:$0xff]
      %v2894 = vld [vmem:[%s2854 + $0x138] sm:$0xff]
      %v2895 = vld [vmem:[%s2854 + $0x140] sm:$0xff]
      %v2896 = vld [vmem:[%s2854 + $0x148] sm:$0xff]
      %v2897 = vld [vmem:[%s2854 + $0x150] sm:$0xff]
      %v2898 = vld [vmem:[%s2854 + $0x158] sm:$0xff]
      %v2899 = vld [vmem:[%s2854 + $0x160] sm:$0xff]
      %v2900 = vld [vmem:[%s2854 + $0x168] sm:$0xff]
      %v2901 = vld [vmem:[%s2854 + $0x170] sm:$0xff]
      %v2902 = vld [vmem:[%s2854 + $0x178] sm:$0xff]
      %v2903 = vld [vmem:[%s2854 + $0x180] sm:$0xff]
      %v2904 = vld [vmem:[%s2854 + $0x188] sm:$0xff]
      %v2905 = vld [vmem:[%s2854 + $0x190] sm:$0xff]
      %v2906 = vld [vmem:[%s2854 + $0x198] sm:$0xff]
      %v2907 = vld [vmem:[%s2854 + $0x1a0] sm:$0xff]
      %v2908 = vld [vmem:[%s2854 + $0x1a8] sm:$0xff]
      %v2909 = vld [vmem:[%s2854 + $0x1b0] sm:$0xff]
      %v2910 = vld [vmem:[%s2854 + $0x1b8] sm:$0xff]
      %v2911 = vld [vmem:[%s2854 + $0x1c0] sm:$0xff]
      %v2912 = vld [vmem:[%s2854 + $0x1c8] sm:$0xff]
      %v2913 = vld [vmem:[%s2854 + $0x1d0] sm:$0xff]
      %v2914 = vld [vmem:[%s2854 + $0x1d8] sm:$0xff]
      %v2915 = vld [vmem:[%s2854 + $0x1e0] sm:$0xff]
      %v2916 = vld [vmem:[%s2854 + $0x1e8] sm:$0xff]
      %v2917 = vld [vmem:[%s2854 + $0x1f0] sm:$0xff]
      %v2918 = vld [vmem:[%s2854 + $0x1f8] sm:$0xff]
      %v2921 = vunpack.c.l.s4 1966171168
      %v2922 = vunpack.c.0.s8 %v2921
      %v2923 = vlaneseq
      %v2924 = vshrl.u32 %v2923, 7
      %v2925 = vsub.s32 %v2922, %v2924
      %v2926 = vrot.slane %v2853, %v2925
      %v2927 = vcombine.high %v2926, %v2926
      %v2929 = vunpack.c.l.s4 1966171168
      %v2930 = vunpack.c.0.s8 %v2929
      %v2931 = vlaneseq
      %v2932 = vshrl.u32 %v2931, 7
      %v2933 = vsub.s32 %v2930, %v2932
      %v2934 = vrot.slane %v2926, %v2933
      %v2936 = vunpack.c.l.s4 1966171168
      %v2937 = vunpack.c.0.s8 %v2936
      %v2938 = vlaneseq
      %v2939 = vshrl.u32 %v2938, 7
      %v2940 = vsub.s32 %v2937, %v2939
      %v2941 = vrot.slane %v2927, %v2940
      %v3008 = vunpack.c.l.b16 %v2855
      %v3009 = vunpack.c.h.b16 %v2855
      %v3010 = vunpack.c.l.b16 %v2856
      %v3011 = vunpack.c.h.b16 %v2856
      %v3012 = vunpack.c.l.b16 %v2857
      %v3013 = vunpack.c.h.b16 %v2857
      %v3014 = vunpack.c.l.b16 %v2858
      %v3015 = vunpack.c.h.b16 %v2858
      %v3016 = vunpack.c.l.b16 %v2859
      %v3017 = vunpack.c.h.b16 %v2859
      %v3018 = vunpack.c.l.b16 %v2860
      %v3019 = vunpack.c.h.b16 %v2860
      %v3020 = vunpack.c.l.b16 %v2861
      %v3021 = vunpack.c.h.b16 %v2861
      %v3022 = vunpack.c.l.b16 %v2862
      %v3023 = vunpack.c.h.b16 %v2862
      %v3024 = vunpack.c.l.b16 %v2863
      %v3025 = vunpack.c.h.b16 %v2863
      %v3026 = vunpack.c.l.b16 %v2864
      %v3027 = vunpack.c.h.b16 %v2864
      %v3028 = vunpack.c.l.b16 %v2865
      %v3029 = vunpack.c.h.b16 %v2865
      %v3030 = vunpack.c.l.b16 %v2866
      %v3031 = vunpack.c.h.b16 %v2866
      %v3032 = vunpack.c.l.b16 %v2867
      %v3033 = vunpack.c.h.b16 %v2867
      %v3034 = vunpack.c.l.b16 %v2868
      %v3035 = vunpack.c.h.b16 %v2868
      %v3036 = vunpack.c.l.b16 %v2869
      %v3037 = vunpack.c.h.b16 %v2869
      %v3038 = vunpack.c.l.b16 %v2870
      %v3039 = vunpack.c.h.b16 %v2870
      %v3040 = vunpack.c.l.b16 %v2871
      %v3041 = vunpack.c.h.b16 %v2871
      %v3042 = vunpack.c.l.b16 %v2872
      %v3043 = vunpack.c.h.b16 %v2872
      %v3044 = vunpack.c.l.b16 %v2873
      %v3045 = vunpack.c.h.b16 %v2873
      %v3046 = vunpack.c.l.b16 %v2874
      %v3047 = vunpack.c.h.b16 %v2874
      %v3048 = vunpack.c.l.b16 %v2875
      %v3049 = vunpack.c.h.b16 %v2875
      %v3050 = vunpack.c.l.b16 %v2876
      %v3051 = vunpack.c.h.b16 %v2876
      %v3052 = vunpack.c.l.b16 %v2877
      %v3053 = vunpack.c.h.b16 %v2877
      %v3054 = vunpack.c.l.b16 %v2878
      %v3055 = vunpack.c.h.b16 %v2878
      %v3056 = vunpack.c.l.b16 %v2879
      %v3057 = vunpack.c.h.b16 %v2879
      %v3058 = vunpack.c.l.b16 %v2880
      %v3059 = vunpack.c.h.b16 %v2880
      %v3060 = vunpack.c.l.b16 %v2881
      %v3061 = vunpack.c.h.b16 %v2881
      %v3062 = vunpack.c.l.b16 %v2882
      %v3063 = vunpack.c.h.b16 %v2882
      %v3064 = vunpack.c.l.b16 %v2883
      %v3065 = vunpack.c.h.b16 %v2883
      %v3066 = vunpack.c.l.b16 %v2884
      %v3067 = vunpack.c.h.b16 %v2884
      %v3068 = vunpack.c.l.b16 %v2885
      %v3069 = vunpack.c.h.b16 %v2885
      %v3070 = vunpack.c.l.b16 %v2886
      %v3071 = vunpack.c.h.b16 %v2886
      %v3072 = vunpack.c.l.b16 %v2887
      %v3073 = vunpack.c.h.b16 %v2887
      %v3074 = vunpack.c.l.b16 %v2888
      %v3075 = vunpack.c.h.b16 %v2888
      %v3076 = vunpack.c.l.b16 %v2889
      %v3077 = vunpack.c.h.b16 %v2889
      %v3078 = vunpack.c.l.b16 %v2890
      %v3079 = vunpack.c.h.b16 %v2890
      %v3080 = vunpack.c.l.b16 %v2891
      %v3081 = vunpack.c.h.b16 %v2891
      %v3082 = vunpack.c.l.b16 %v2892
      %v3083 = vunpack.c.h.b16 %v2892
      %v3084 = vunpack.c.l.b16 %v2893
      %v3085 = vunpack.c.h.b16 %v2893
      %v3086 = vunpack.c.l.b16 %v2894
      %v3087 = vunpack.c.h.b16 %v2894
      %v3088 = vunpack.c.l.b16 %v2895
      %v3089 = vunpack.c.h.b16 %v2895
      %v3090 = vunpack.c.l.b16 %v2896
      %v3091 = vunpack.c.h.b16 %v2896
      %v3092 = vunpack.c.l.b16 %v2897
      %v3093 = vunpack.c.h.b16 %v2897
      %v3094 = vunpack.c.l.b16 %v2898
      %v3095 = vunpack.c.h.b16 %v2898
      %v3096 = vunpack.c.l.b16 %v2899
      %v3097 = vunpack.c.h.b16 %v2899
      %v3098 = vunpack.c.l.b16 %v2900
      %v3099 = vunpack.c.h.b16 %v2900
      %v3100 = vunpack.c.l.b16 %v2901
      %v3101 = vunpack.c.h.b16 %v2901
      %v3102 = vunpack.c.l.b16 %v2902
      %v3103 = vunpack.c.h.b16 %v2902
      %v3104 = vunpack.c.l.b16 %v2903
      %v3105 = vunpack.c.h.b16 %v2903
      %v3106 = vunpack.c.l.b16 %v2904
      %v3107 = vunpack.c.h.b16 %v2904
      %v3108 = vunpack.c.l.b16 %v2905
      %v3109 = vunpack.c.h.b16 %v2905
      %v3110 = vunpack.c.l.b16 %v2906
      %v3111 = vunpack.c.h.b16 %v2906
      %v3112 = vunpack.c.l.b16 %v2907
      %v3113 = vunpack.c.h.b16 %v2907
      %v3114 = vunpack.c.l.b16 %v2908
      %v3115 = vunpack.c.h.b16 %v2908
      %v3116 = vunpack.c.l.b16 %v2909
      %v3117 = vunpack.c.h.b16 %v2909
      %v3118 = vunpack.c.l.b16 %v2910
      %v3119 = vunpack.c.h.b16 %v2910
      %v3120 = vunpack.c.l.b16 %v2911
      %v3121 = vunpack.c.h.b16 %v2911
      %v3122 = vunpack.c.l.b16 %v2912
      %v3123 = vunpack.c.h.b16 %v2912
      %v3124 = vunpack.c.l.b16 %v2913
      %v3125 = vunpack.c.h.b16 %v2913
      %v3126 = vunpack.c.l.b16 %v2914
      %v3127 = vunpack.c.h.b16 %v2914
      %v3128 = vunpack.c.l.b16 %v2915
      %v3129 = vunpack.c.h.b16 %v2915
      %v3130 = vunpack.c.l.b16 %v2916
      %v3131 = vunpack.c.h.b16 %v2916
      %v3132 = vunpack.c.l.b16 %v2917
      %v3133 = vunpack.c.h.b16 %v2917
      %v3134 = vunpack.c.l.b16 %v2918
      %v3135 = vunpack.c.h.b16 %v2918
      %v3136 = vpack.c.b16 %v3012, %v3008
      %v3137 = vpack.c.b16 %v3013, %v3009
      %v3138 = vpack.c.b16 %v3014, %v3010
      %v3139 = vpack.c.b16 %v3015, %v3011
      %v3140 = vpack.c.b16 %v3020, %v3016
      %v3141 = vpack.c.b16 %v3021, %v3017
      %v3142 = vpack.c.b16 %v3022, %v3018
      %v3143 = vpack.c.b16 %v3023, %v3019
      %v3144 = vpack.c.b16 %v3028, %v3024
      %v3145 = vpack.c.b16 %v3029, %v3025
      %v3146 = vpack.c.b16 %v3030, %v3026
      %v3147 = vpack.c.b16 %v3031, %v3027
      %v3148 = vpack.c.b16 %v3036, %v3032
      %v3149 = vpack.c.b16 %v3037, %v3033
      %v3150 = vpack.c.b16 %v3038, %v3034
      %v3151 = vpack.c.b16 %v3039, %v3035
      %v3152 = vpack.c.b16 %v3044, %v3040
      %v3153 = vpack.c.b16 %v3045, %v3041
      %v3154 = vpack.c.b16 %v3046, %v3042
      %v3155 = vpack.c.b16 %v3047, %v3043
      %v3156 = vpack.c.b16 %v3052, %v3048
      %v3157 = vpack.c.b16 %v3053, %v3049
      %v3158 = vpack.c.b16 %v3054, %v3050
      %v3159 = vpack.c.b16 %v3055, %v3051
      %v3160 = vpack.c.b16 %v3060, %v3056
      %v3161 = vpack.c.b16 %v3061, %v3057
      %v3162 = vpack.c.b16 %v3062, %v3058
      %v3163 = vpack.c.b16 %v3063, %v3059
      %v3164 = vpack.c.b16 %v3068, %v3064
      %v3165 = vpack.c.b16 %v3069, %v3065
      %v3166 = vpack.c.b16 %v3070, %v3066
      %v3167 = vpack.c.b16 %v3071, %v3067
      %v3168 = vpack.c.b16 %v3076, %v3072
      %v3169 = vpack.c.b16 %v3077, %v3073
      %v3170 = vpack.c.b16 %v3078, %v3074
      %v3171 = vpack.c.b16 %v3079, %v3075
      %v3172 = vpack.c.b16 %v3084, %v3080
      %v3173 = vpack.c.b16 %v3085, %v3081
      %v3174 = vpack.c.b16 %v3086, %v3082
      %v3175 = vpack.c.b16 %v3087, %v3083
      %v3176 = vpack.c.b16 %v3092, %v3088
      %v3177 = vpack.c.b16 %v3093, %v3089
      %v3178 = vpack.c.b16 %v3094, %v3090
      %v3179 = vpack.c.b16 %v3095, %v3091
      %v3180 = vpack.c.b16 %v3100, %v3096
      %v3181 = vpack.c.b16 %v3101, %v3097
      %v3182 = vpack.c.b16 %v3102, %v3098
      %v3183 = vpack.c.b16 %v3103, %v3099
      %v3184 = vpack.c.b16 %v3108, %v3104
      %v3185 = vpack.c.b16 %v3109, %v3105
      %v3186 = vpack.c.b16 %v3110, %v3106
      %v3187 = vpack.c.b16 %v3111, %v3107
      %v3188 = vpack.c.b16 %v3116, %v3112
      %v3189 = vpack.c.b16 %v3117, %v3113
      %v3190 = vpack.c.b16 %v3118, %v3114
      %v3191 = vpack.c.b16 %v3119, %v3115
      %v3192 = vpack.c.b16 %v3124, %v3120
      %v3193 = vpack.c.b16 %v3125, %v3121
      %v3194 = vpack.c.b16 %v3126, %v3122
      %v3195 = vpack.c.b16 %v3127, %v3123
      %v3196 = vpack.c.b16 %v3132, %v3128
      %v3197 = vpack.c.b16 %v3133, %v3129
      %v3198 = vpack.c.b16 %v3134, %v3130
      %v3199 = vpack.c.b16 %v3135, %v3131
      %3264 = vmatprep.subr.bf16.mxu0 %v3165
      %3265 = vmatpush1.bf16.msra.mxu0 %v3164
      %3266 = vmatprep.subr.bf16.mxu0 %v3161
      %3267 = vmatpush1.bf16.msra.mxu0 %v3160
      %3268 = vmatprep.subr.bf16.mxu0 %v3157
      %3269 = vmatpush1.bf16.msra.mxu0 %v3156
      %3270 = vmatprep.subr.bf16.mxu0 %v3153
      %3271 = vmatpush1.bf16.msra.mxu0 %v3152
      %3272 = vmatprep.subr.bf16.mxu0 %v3149
      %3273 = vmatpush1.bf16.msra.mxu0 %v3148
      %3274 = vmatprep.subr.bf16.mxu0 %v3145
      %3275 = vmatpush1.bf16.msra.mxu0 %v3144
      %3276 = vmatprep.subr.bf16.mxu0 %v3141
      %3277 = vmatpush1.bf16.msra.mxu0 %v3140
      %3278 = vmatprep.subr.bf16.mxu0 %v3137
      %3279 = vmatpush1.bf16.msra.mxu0 %v3136
      %3280 = vmatprep.subr.bf16.mxu0 %v3197
      %3281 = vmatpush2.bf16.msra.mxu0 %v3196
      %3282 = vmatprep.subr.bf16.mxu0 %v3193
      %3283 = vmatpush2.bf16.msra.mxu0 %v3192
      %3284 = vmatprep.subr.bf16.mxu0 %v3189
      %3285 = vmatpush2.bf16.msra.mxu0 %v3188
      %3286 = vmatprep.subr.bf16.mxu0 %v3185
      %3287 = vmatpush2.bf16.msra.mxu0 %v3184
      %3288 = vmatprep.subr.bf16.mxu0 %v3181
      %3289 = vmatpush2.bf16.msra.mxu0 %v3180
      %3290 = vmatprep.subr.bf16.mxu0 %v3177
      %3291 = vmatpush2.bf16.msra.mxu0 %v3176
      %3292 = vmatprep.subr.bf16.mxu0 %v3173
      %3293 = vmatpush2.bf16.msra.mxu0 %v3172
      %3294 = vmatprep.subr.bf16.mxu0 %v3169
      %3295 = vmatpush2.bf16.msra.mxu0 %v3168
      %3296 = vmatprep.mubr.bf16.mxu0 %v2941
      %3297 = vmatmul.mubr.bf16.gmra.mxu0 %v2934
      %v3298 = vpop.f32.mrf.mxu0
      %v3299 = vadd.f32 0.0, %v3298
      %v3300 = vpop.f32.mrf.mxu0
      %v3301 = vadd.f32 0.0, %v3300
      %v3302 = vpop.f32.mrf.mxu0
      %v3303 = vpop.f32.mrf.mxu0
      %3304 = vdwg.mxu0
      %3305 = vmatprep.subr.bf16.mxu0 %v3167
      %3306 = vmatpush1.bf16.msra.mxu0 %v3166
      %3307 = vmatprep.subr.bf16.mxu0 %v3163
      %3308 = vmatpush1.bf16.msra.mxu0 %v3162
      %3309 = vmatprep.subr.bf16.mxu0 %v3159
      %3310 = vmatpush1.bf16.msra.mxu0 %v3158
      %3311 = vmatprep.subr.bf16.mxu0 %v3155
      %3312 = vmatpush1.bf16.msra.mxu0 %v3154
      %3313 = vmatprep.subr.bf16.mxu0 %v3151
      %3314 = vmatpush1.bf16.msra.mxu0 %v3150
      %3315 = vmatprep.subr.bf16.mxu0 %v3147
      %3316 = vmatpush1.bf16.msra.mxu0 %v3146
      %3317 = vmatprep.subr.bf16.mxu0 %v3143
      %3318 = vmatpush1.bf16.msra.mxu0 %v3142
      %3319 = vmatprep.subr.bf16.mxu0 %v3139
      %3320 = vmatpush1.bf16.msra.mxu0 %v3138
      %3321 = vmatprep.subr.bf16.mxu0 %v3199
      %3322 = vmatpush2.bf16.msra.mxu0 %v3198
      %3323 = vmatprep.subr.bf16.mxu0 %v3195
      %3324 = vmatpush2.bf16.msra.mxu0 %v3194
      %3325 = vmatprep.subr.bf16.mxu0 %v3191
      %3326 = vmatpush2.bf16.msra.mxu0 %v3190
      %3327 = vmatprep.subr.bf16.mxu0 %v3187
      %3328 = vmatpush2.bf16.msra.mxu0 %v3186
      %3329 = vmatprep.subr.bf16.mxu0 %v3183
      %3330 = vmatpush2.bf16.msra.mxu0 %v3182
      %3331 = vmatprep.subr.bf16.mxu0 %v3179
      %3332 = vmatpush2.bf16.msra.mxu0 %v3178
      %3333 = vmatprep.subr.bf16.mxu0 %v3175
      %3334 = vmatpush2.bf16.msra.mxu0 %v3174
      %3335 = vmatprep.subr.bf16.mxu0 %v3171
      %3336 = vmatpush2.bf16.msra.mxu0 %v3170
      %3337 = vmatprep.mubr.bf16.mxu0 %v2941
      %3338 = vmatmul.mubr.bf16.gmra.mxu0 %v2934
      %v3339 = vpop.f32.mrf.mxu0
      %v3340 = vadd.f32 0.0, %v3339
      %v3341 = vpop.f32.mrf.mxu0
      %v3342 = vadd.f32 0.0, %v3341
      %v3343 = vpop.f32.mrf.mxu0
      %v3344 = vpop.f32.mrf.mxu0
      %3345 = vdwg.mxu0
      %v3350 = vcombine.low %v3299, %v3301
      %v3351 = vcombine.low %v3340, %v3342
      %v3353 = vunpack.c.l.s4 1983009808
      %v3354 = vunpack.c.0.s8 %v3353
      %v3355 = vlaneseq
      %v3356 = vshrl.u32 %v3355, 7
      %v3357 = vsub.s32 %v3354, %v3356
      %v3358 = vrot.slane %v3350, %v3357
      %v3360 = vunpack.c.l.s4 1983009808
      %v3361 = vunpack.c.0.s8 %v3360
      %v3362 = vlaneseq
      %v3363 = vshrl.u32 %v3362, 7
      %v3364 = vsub.s32 %v3361, %v3363
      %v3365 = vrot.slane %v3351, %v3364
      %v3366 = vcombine.low %v3358, %v3365
      %v3368 = vadd.f32 %v2851, %v3366
      %3369 = vst.msk [vmem:[#allocation2] sm:$0xff] %vm773, %v3368
      %v3370 = vld [vmem:[#allocation2] sm:$0xff]
      %s3371 = scalar_lea.vmem %s230, 12
      %v3372 = vld [vmem:[%s3371] sm:$0x3]
      %s3373 = scalar_lea.vmem %s237, 3072
      %v3374 = vld [vmem:[%s3373] sm:$0xff]
      %v3375 = vld [vmem:[%s3373 + $0x8] sm:$0xff]
      %v3376 = vld [vmem:[%s3373 + $0x10] sm:$0xff]
      %v3377 = vld [vmem:[%s3373 + $0x18] sm:$0xff]
      %v3378 = vld [vmem:[%s3373 + $0x20] sm:$0xff]
      %v3379 = vld [vmem:[%s3373 + $0x28] sm:$0xff]
      %v3380 = vld [vmem:[%s3373 + $0x30] sm:$0xff]
      %v3381 = vld [vmem:[%s3373 + $0x38] sm:$0xff]
      %v3382 = vld [vmem:[%s3373 + $0x40] sm:$0xff]
      %v3383 = vld [vmem:[%s3373 + $0x48] sm:$0xff]
      %v3384 = vld [vmem:[%s3373 + $0x50] sm:$0xff]
      %v3385 = vld [vmem:[%s3373 + $0x58] sm:$0xff]
      %v3386 = vld [vmem:[%s3373 + $0x60] sm:$0xff]
      %v3387 = vld [vmem:[%s3373 + $0x68] sm:$0xff]
      %v3388 = vld [vmem:[%s3373 + $0x70] sm:$0xff]
      %v3389 = vld [vmem:[%s3373 + $0x78] sm:$0xff]
      %v3390 = vld [vmem:[%s3373 + $0x80] sm:$0xff]
      %v3391 = vld [vmem:[%s3373 + $0x88] sm:$0xff]
      %v3392 = vld [vmem:[%s3373 + $0x90] sm:$0xff]
      %v3393 = vld [vmem:[%s3373 + $0x98] sm:$0xff]
      %v3394 = vld [vmem:[%s3373 + $0xa0] sm:$0xff]
      %v3395 = vld [vmem:[%s3373 + $0xa8] sm:$0xff]
      %v3396 = vld [vmem:[%s3373 + $0xb0] sm:$0xff]
      %v3397 = vld [vmem:[%s3373 + $0xb8] sm:$0xff]
      %v3398 = vld [vmem:[%s3373 + $0xc0] sm:$0xff]
      %v3399 = vld [vmem:[%s3373 + $0xc8] sm:$0xff]
      %v3400 = vld [vmem:[%s3373 + $0xd0] sm:$0xff]
      %v3401 = vld [vmem:[%s3373 + $0xd8] sm:$0xff]
      %v3402 = vld [vmem:[%s3373 + $0xe0] sm:$0xff]
      %v3403 = vld [vmem:[%s3373 + $0xe8] sm:$0xff]
      %v3404 = vld [vmem:[%s3373 + $0xf0] sm:$0xff]
      %v3405 = vld [vmem:[%s3373 + $0xf8] sm:$0xff]
      %v3406 = vld [vmem:[%s3373 + $0x100] sm:$0xff]
      %v3407 = vld [vmem:[%s3373 + $0x108] sm:$0xff]
      %v3408 = vld [vmem:[%s3373 + $0x110] sm:$0xff]
      %v3409 = vld [vmem:[%s3373 + $0x118] sm:$0xff]
      %v3410 = vld [vmem:[%s3373 + $0x120] sm:$0xff]
      %v3411 = vld [vmem:[%s3373 + $0x128] sm:$0xff]
      %v3412 = vld [vmem:[%s3373 + $0x130] sm:$0xff]
      %v3413 = vld [vmem:[%s3373 + $0x138] sm:$0xff]
      %v3414 = vld [vmem:[%s3373 + $0x140] sm:$0xff]
      %v3415 = vld [vmem:[%s3373 + $0x148] sm:$0xff]
      %v3416 = vld [vmem:[%s3373 + $0x150] sm:$0xff]
      %v3417 = vld [vmem:[%s3373 + $0x158] sm:$0xff]
      %v3418 = vld [vmem:[%s3373 + $0x160] sm:$0xff]
      %v3419 = vld [vmem:[%s3373 + $0x168] sm:$0xff]
      %v3420 = vld [vmem:[%s3373 + $0x170] sm:$0xff]
      %v3421 = vld [vmem:[%s3373 + $0x178] sm:$0xff]
      %v3422 = vld [vmem:[%s3373 + $0x180] sm:$0xff]
      %v3423 = vld [vmem:[%s3373 + $0x188] sm:$0xff]
      %v3424 = vld [vmem:[%s3373 + $0x190] sm:$0xff]
      %v3425 = vld [vmem:[%s3373 + $0x198] sm:$0xff]
      %v3426 = vld [vmem:[%s3373 + $0x1a0] sm:$0xff]
      %v3427 = vld [vmem:[%s3373 + $0x1a8] sm:$0xff]
      %v3428 = vld [vmem:[%s3373 + $0x1b0] sm:$0xff]
      %v3429 = vld [vmem:[%s3373 + $0x1b8] sm:$0xff]
      %v3430 = vld [vmem:[%s3373 + $0x1c0] sm:$0xff]
      %v3431 = vld [vmem:[%s3373 + $0x1c8] sm:$0xff]
      %v3432 = vld [vmem:[%s3373 + $0x1d0] sm:$0xff]
      %v3433 = vld [vmem:[%s3373 + $0x1d8] sm:$0xff]
      %v3434 = vld [vmem:[%s3373 + $0x1e0] sm:$0xff]
      %v3435 = vld [vmem:[%s3373 + $0x1e8] sm:$0xff]
      %v3436 = vld [vmem:[%s3373 + $0x1f0] sm:$0xff]
      %v3437 = vld [vmem:[%s3373 + $0x1f8] sm:$0xff]
      %v3440 = vunpack.c.l.s4 1966171168
      %v3441 = vunpack.c.0.s8 %v3440
      %v3442 = vlaneseq
      %v3443 = vshrl.u32 %v3442, 7
      %v3444 = vsub.s32 %v3441, %v3443
      %v3445 = vrot.slane %v3372, %v3444
      %v3446 = vcombine.high %v3445, %v3445
      %v3448 = vunpack.c.l.s4 1966171168
      %v3449 = vunpack.c.0.s8 %v3448
      %v3450 = vlaneseq
      %v3451 = vshrl.u32 %v3450, 7
      %v3452 = vsub.s32 %v3449, %v3451
      %v3453 = vrot.slane %v3445, %v3452
      %v3455 = vunpack.c.l.s4 1966171168
      %v3456 = vunpack.c.0.s8 %v3455
      %v3457 = vlaneseq
      %v3458 = vshrl.u32 %v3457, 7
      %v3459 = vsub.s32 %v3456, %v3458
      %v3460 = vrot.slane %v3446, %v3459
      %v3527 = vunpack.c.l.b16 %v3374
      %v3528 = vunpack.c.h.b16 %v3374
      %v3529 = vunpack.c.l.b16 %v3375
      %v3530 = vunpack.c.h.b16 %v3375
      %v3531 = vunpack.c.l.b16 %v3376
      %v3532 = vunpack.c.h.b16 %v3376
      %v3533 = vunpack.c.l.b16 %v3377
      %v3534 = vunpack.c.h.b16 %v3377
      %v3535 = vunpack.c.l.b16 %v3378
      %v3536 = vunpack.c.h.b16 %v3378
      %v3537 = vunpack.c.l.b16 %v3379
      %v3538 = vunpack.c.h.b16 %v3379
      %v3539 = vunpack.c.l.b16 %v3380
      %v3540 = vunpack.c.h.b16 %v3380
      %v3541 = vunpack.c.l.b16 %v3381
      %v3542 = vunpack.c.h.b16 %v3381
      %v3543 = vunpack.c.l.b16 %v3382
      %v3544 = vunpack.c.h.b16 %v3382
      %v3545 = vunpack.c.l.b16 %v3383
      %v3546 = vunpack.c.h.b16 %v3383
      %v3547 = vunpack.c.l.b16 %v3384
      %v3548 = vunpack.c.h.b16 %v3384
      %v3549 = vunpack.c.l.b16 %v3385
      %v3550 = vunpack.c.h.b16 %v3385
      %v3551 = vunpack.c.l.b16 %v3386
      %v3552 = vunpack.c.h.b16 %v3386
      %v3553 = vunpack.c.l.b16 %v3387
      %v3554 = vunpack.c.h.b16 %v3387
      %v3555 = vunpack.c.l.b16 %v3388
      %v3556 = vunpack.c.h.b16 %v3388
      %v3557 = vunpack.c.l.b16 %v3389
      %v3558 = vunpack.c.h.b16 %v3389
      %v3559 = vunpack.c.l.b16 %v3390
      %v3560 = vunpack.c.h.b16 %v3390
      %v3561 = vunpack.c.l.b16 %v3391
      %v3562 = vunpack.c.h.b16 %v3391
      %v3563 = vunpack.c.l.b16 %v3392
      %v3564 = vunpack.c.h.b16 %v3392
      %v3565 = vunpack.c.l.b16 %v3393
      %v3566 = vunpack.c.h.b16 %v3393
      %v3567 = vunpack.c.l.b16 %v3394
      %v3568 = vunpack.c.h.b16 %v3394
      %v3569 = vunpack.c.l.b16 %v3395
      %v3570 = vunpack.c.h.b16 %v3395
      %v3571 = vunpack.c.l.b16 %v3396
      %v3572 = vunpack.c.h.b16 %v3396
      %v3573 = vunpack.c.l.b16 %v3397
      %v3574 = vunpack.c.h.b16 %v3397
      %v3575 = vunpack.c.l.b16 %v3398
      %v3576 = vunpack.c.h.b16 %v3398
      %v3577 = vunpack.c.l.b16 %v3399
      %v3578 = vunpack.c.h.b16 %v3399
      %v3579 = vunpack.c.l.b16 %v3400
      %v3580 = vunpack.c.h.b16 %v3400
      %v3581 = vunpack.c.l.b16 %v3401
      %v3582 = vunpack.c.h.b16 %v3401
      %v3583 = vunpack.c.l.b16 %v3402
      %v3584 = vunpack.c.h.b16 %v3402
      %v3585 = vunpack.c.l.b16 %v3403
      %v3586 = vunpack.c.h.b16 %v3403
      %v3587 = vunpack.c.l.b16 %v3404
      %v3588 = vunpack.c.h.b16 %v3404
      %v3589 = vunpack.c.l.b16 %v3405
      %v3590 = vunpack.c.h.b16 %v3405
      %v3591 = vunpack.c.l.b16 %v3406
      %v3592 = vunpack.c.h.b16 %v3406
      %v3593 = vunpack.c.l.b16 %v3407
      %v3594 = vunpack.c.h.b16 %v3407
      %v3595 = vunpack.c.l.b16 %v3408
      %v3596 = vunpack.c.h.b16 %v3408
      %v3597 = vunpack.c.l.b16 %v3409
      %v3598 = vunpack.c.h.b16 %v3409
      %v3599 = vunpack.c.l.b16 %v3410
      %v3600 = vunpack.c.h.b16 %v3410
      %v3601 = vunpack.c.l.b16 %v3411
      %v3602 = vunpack.c.h.b16 %v3411
      %v3603 = vunpack.c.l.b16 %v3412
      %v3604 = vunpack.c.h.b16 %v3412
      %v3605 = vunpack.c.l.b16 %v3413
      %v3606 = vunpack.c.h.b16 %v3413
      %v3607 = vunpack.c.l.b16 %v3414
      %v3608 = vunpack.c.h.b16 %v3414
      %v3609 = vunpack.c.l.b16 %v3415
      %v3610 = vunpack.c.h.b16 %v3415
      %v3611 = vunpack.c.l.b16 %v3416
      %v3612 = vunpack.c.h.b16 %v3416
      %v3613 = vunpack.c.l.b16 %v3417
      %v3614 = vunpack.c.h.b16 %v3417
      %v3615 = vunpack.c.l.b16 %v3418
      %v3616 = vunpack.c.h.b16 %v3418
      %v3617 = vunpack.c.l.b16 %v3419
      %v3618 = vunpack.c.h.b16 %v3419
      %v3619 = vunpack.c.l.b16 %v3420
      %v3620 = vunpack.c.h.b16 %v3420
      %v3621 = vunpack.c.l.b16 %v3421
      %v3622 = vunpack.c.h.b16 %v3421
      %v3623 = vunpack.c.l.b16 %v3422
      %v3624 = vunpack.c.h.b16 %v3422
      %v3625 = vunpack.c.l.b16 %v3423
      %v3626 = vunpack.c.h.b16 %v3423
      %v3627 = vunpack.c.l.b16 %v3424
      %v3628 = vunpack.c.h.b16 %v3424
      %v3629 = vunpack.c.l.b16 %v3425
      %v3630 = vunpack.c.h.b16 %v3425
      %v3631 = vunpack.c.l.b16 %v3426
      %v3632 = vunpack.c.h.b16 %v3426
      %v3633 = vunpack.c.l.b16 %v3427
      %v3634 = vunpack.c.h.b16 %v3427
      %v3635 = vunpack.c.l.b16 %v3428
      %v3636 = vunpack.c.h.b16 %v3428
      %v3637 = vunpack.c.l.b16 %v3429
      %v3638 = vunpack.c.h.b16 %v3429
      %v3639 = vunpack.c.l.b16 %v3430
      %v3640 = vunpack.c.h.b16 %v3430
      %v3641 = vunpack.c.l.b16 %v3431
      %v3642 = vunpack.c.h.b16 %v3431
      %v3643 = vunpack.c.l.b16 %v3432
      %v3644 = vunpack.c.h.b16 %v3432
      %v3645 = vunpack.c.l.b16 %v3433
      %v3646 = vunpack.c.h.b16 %v3433
      %v3647 = vunpack.c.l.b16 %v3434
      %v3648 = vunpack.c.h.b16 %v3434
      %v3649 = vunpack.c.l.b16 %v3435
      %v3650 = vunpack.c.h.b16 %v3435
      %v3651 = vunpack.c.l.b16 %v3436
      %v3652 = vunpack.c.h.b16 %v3436
      %v3653 = vunpack.c.l.b16 %v3437
      %v3654 = vunpack.c.h.b16 %v3437
      %v3655 = vpack.c.b16 %v3531, %v3527
      %v3656 = vpack.c.b16 %v3532, %v3528
      %v3657 = vpack.c.b16 %v3533, %v3529
      %v3658 = vpack.c.b16 %v3534, %v3530
      %v3659 = vpack.c.b16 %v3539, %v3535
      %v3660 = vpack.c.b16 %v3540, %v3536
      %v3661 = vpack.c.b16 %v3541, %v3537
      %v3662 = vpack.c.b16 %v3542, %v3538
      %v3663 = vpack.c.b16 %v3547, %v3543
      %v3664 = vpack.c.b16 %v3548, %v3544
      %v3665 = vpack.c.b16 %v3549, %v3545
      %v3666 = vpack.c.b16 %v3550, %v3546
      %v3667 = vpack.c.b16 %v3555, %v3551
      %v3668 = vpack.c.b16 %v3556, %v3552
      %v3669 = vpack.c.b16 %v3557, %v3553
      %v3670 = vpack.c.b16 %v3558, %v3554
      %v3671 = vpack.c.b16 %v3563, %v3559
      %v3672 = vpack.c.b16 %v3564, %v3560
      %v3673 = vpack.c.b16 %v3565, %v3561
      %v3674 = vpack.c.b16 %v3566, %v3562
      %v3675 = vpack.c.b16 %v3571, %v3567
      %v3676 = vpack.c.b16 %v3572, %v3568
      %v3677 = vpack.c.b16 %v3573, %v3569
      %v3678 = vpack.c.b16 %v3574, %v3570
      %v3679 = vpack.c.b16 %v3579, %v3575
      %v3680 = vpack.c.b16 %v3580, %v3576
      %v3681 = vpack.c.b16 %v3581, %v3577
      %v3682 = vpack.c.b16 %v3582, %v3578
      %v3683 = vpack.c.b16 %v3587, %v3583
      %v3684 = vpack.c.b16 %v3588, %v3584
      %v3685 = vpack.c.b16 %v3589, %v3585
      %v3686 = vpack.c.b16 %v3590, %v3586
      %v3687 = vpack.c.b16 %v3595, %v3591
      %v3688 = vpack.c.b16 %v3596, %v3592
      %v3689 = vpack.c.b16 %v3597, %v3593
      %v3690 = vpack.c.b16 %v3598, %v3594
      %v3691 = vpack.c.b16 %v3603, %v3599
      %v3692 = vpack.c.b16 %v3604, %v3600
      %v3693 = vpack.c.b16 %v3605, %v3601
      %v3694 = vpack.c.b16 %v3606, %v3602
      %v3695 = vpack.c.b16 %v3611, %v3607
      %v3696 = vpack.c.b16 %v3612, %v3608
      %v3697 = vpack.c.b16 %v3613, %v3609
      %v3698 = vpack.c.b16 %v3614, %v3610
      %v3699 = vpack.c.b16 %v3619, %v3615
      %v3700 = vpack.c.b16 %v3620, %v3616
      %v3701 = vpack.c.b16 %v3621, %v3617
      %v3702 = vpack.c.b16 %v3622, %v3618
      %v3703 = vpack.c.b16 %v3627, %v3623
      %v3704 = vpack.c.b16 %v3628, %v3624
      %v3705 = vpack.c.b16 %v3629, %v3625
      %v3706 = vpack.c.b16 %v3630, %v3626
      %v3707 = vpack.c.b16 %v3635, %v3631
      %v3708 = vpack.c.b16 %v3636, %v3632
      %v3709 = vpack.c.b16 %v3637, %v3633
      %v3710 = vpack.c.b16 %v3638, %v3634
      %v3711 = vpack.c.b16 %v3643, %v3639
      %v3712 = vpack.c.b16 %v3644, %v3640
      %v3713 = vpack.c.b16 %v3645, %v3641
      %v3714 = vpack.c.b16 %v3646, %v3642
      %v3715 = vpack.c.b16 %v3651, %v3647
      %v3716 = vpack.c.b16 %v3652, %v3648
      %v3717 = vpack.c.b16 %v3653, %v3649
      %v3718 = vpack.c.b16 %v3654, %v3650
      %3783 = vmatprep.subr.bf16.mxu0 %v3684
      %3784 = vmatpush1.bf16.msra.mxu0 %v3683
      %3785 = vmatprep.subr.bf16.mxu0 %v3680
      %3786 = vmatpush1.bf16.msra.mxu0 %v3679
      %3787 = vmatprep.subr.bf16.mxu0 %v3676
      %3788 = vmatpush1.bf16.msra.mxu0 %v3675
      %3789 = vmatprep.subr.bf16.mxu0 %v3672
      %3790 = vmatpush1.bf16.msra.mxu0 %v3671
      %3791 = vmatprep.subr.bf16.mxu0 %v3668
      %3792 = vmatpush1.bf16.msra.mxu0 %v3667
      %3793 = vmatprep.subr.bf16.mxu0 %v3664
      %3794 = vmatpush1.bf16.msra.mxu0 %v3663
      %3795 = vmatprep.subr.bf16.mxu0 %v3660
      %3796 = vmatpush1.bf16.msra.mxu0 %v3659
      %3797 = vmatprep.subr.bf16.mxu0 %v3656
      %3798 = vmatpush1.bf16.msra.mxu0 %v3655
      %3799 = vmatprep.subr.bf16.mxu0 %v3716
      %3800 = vmatpush2.bf16.msra.mxu0 %v3715
      %3801 = vmatprep.subr.bf16.mxu0 %v3712
      %3802 = vmatpush2.bf16.msra.mxu0 %v3711
      %3803 = vmatprep.subr.bf16.mxu0 %v3708
      %3804 = vmatpush2.bf16.msra.mxu0 %v3707
      %3805 = vmatprep.subr.bf16.mxu0 %v3704
      %3806 = vmatpush2.bf16.msra.mxu0 %v3703
      %3807 = vmatprep.subr.bf16.mxu0 %v3700
      %3808 = vmatpush2.bf16.msra.mxu0 %v3699
      %3809 = vmatprep.subr.bf16.mxu0 %v3696
      %3810 = vmatpush2.bf16.msra.mxu0 %v3695
      %3811 = vmatprep.subr.bf16.mxu0 %v3692
      %3812 = vmatpush2.bf16.msra.mxu0 %v3691
      %3813 = vmatprep.subr.bf16.mxu0 %v3688
      %3814 = vmatpush2.bf16.msra.mxu0 %v3687
      %3815 = vmatprep.mubr.bf16.mxu0 %v3460
      %3816 = vmatmul.mubr.bf16.gmra.mxu0 %v3453
      %v3817 = vpop.f32.mrf.mxu0
      %v3818 = vadd.f32 0.0, %v3817
      %v3819 = vpop.f32.mrf.mxu0
      %v3820 = vadd.f32 0.0, %v3819
      %v3821 = vpop.f32.mrf.mxu0
      %v3822 = vpop.f32.mrf.mxu0
      %3823 = vdwg.mxu0
      %3824 = vmatprep.subr.bf16.mxu0 %v3686
      %3825 = vmatpush1.bf16.msra.mxu0 %v3685
      %3826 = vmatprep.subr.bf16.mxu0 %v3682
      %3827 = vmatpush1.bf16.msra.mxu0 %v3681
      %3828 = vmatprep.subr.bf16.mxu0 %v3678
      %3829 = vmatpush1.bf16.msra.mxu0 %v3677
      %3830 = vmatprep.subr.bf16.mxu0 %v3674
      %3831 = vmatpush1.bf16.msra.mxu0 %v3673
      %3832 = vmatprep.subr.bf16.mxu0 %v3670
      %3833 = vmatpush1.bf16.msra.mxu0 %v3669
      %3834 = vmatprep.subr.bf16.mxu0 %v3666
      %3835 = vmatpush1.bf16.msra.mxu0 %v3665
      %3836 = vmatprep.subr.bf16.mxu0 %v3662
      %3837 = vmatpush1.bf16.msra.mxu0 %v3661
      %3838 = vmatprep.subr.bf16.mxu0 %v3658
      %3839 = vmatpush1.bf16.msra.mxu0 %v3657
      %3840 = vmatprep.subr.bf16.mxu0 %v3718
      %3841 = vmatpush2.bf16.msra.mxu0 %v3717
      %3842 = vmatprep.subr.bf16.mxu0 %v3714
      %3843 = vmatpush2.bf16.msra.mxu0 %v3713
      %3844 = vmatprep.subr.bf16.mxu0 %v3710
      %3845 = vmatpush2.bf16.msra.mxu0 %v3709
      %3846 = vmatprep.subr.bf16.mxu0 %v3706
      %3847 = vmatpush2.bf16.msra.mxu0 %v3705
      %3848 = vmatprep.subr.bf16.mxu0 %v3702
      %3849 = vmatpush2.bf16.msra.mxu0 %v3701
      %3850 = vmatprep.subr.bf16.mxu0 %v3698
      %3851 = vmatpush2.bf16.msra.mxu0 %v3697
      %3852 = vmatprep.subr.bf16.mxu0 %v3694
      %3853 = vmatpush2.bf16.msra.mxu0 %v3693
      %3854 = vmatprep.subr.bf16.mxu0 %v3690
      %3855 = vmatpush2.bf16.msra.mxu0 %v3689
      %3856 = vmatprep.mubr.bf16.mxu0 %v3460
      %3857 = vmatmul.mubr.bf16.gmra.mxu0 %v3453
      %v3858 = vpop.f32.mrf.mxu0
      %v3859 = vadd.f32 0.0, %v3858
      %v3860 = vpop.f32.mrf.mxu0
      %v3861 = vadd.f32 0.0, %v3860
      %v3862 = vpop.f32.mrf.mxu0
      %v3863 = vpop.f32.mrf.mxu0
      %3864 = vdwg.mxu0
      %v3869 = vcombine.low %v3818, %v3820
      %v3870 = vcombine.low %v3859, %v3861
      %v3872 = vunpack.c.l.s4 1983009808
      %v3873 = vunpack.c.0.s8 %v3872
      %v3874 = vlaneseq
      %v3875 = vshrl.u32 %v3874, 7
      %v3876 = vsub.s32 %v3873, %v3875
      %v3877 = vrot.slane %v3869, %v3876
      %v3879 = vunpack.c.l.s4 1983009808
      %v3880 = vunpack.c.0.s8 %v3879
      %v3881 = vlaneseq
      %v3882 = vshrl.u32 %v3881, 7
      %v3883 = vsub.s32 %v3880, %v3882
      %v3884 = vrot.slane %v3870, %v3883
      %v3885 = vcombine.low %v3877, %v3884
      %v3887 = vadd.f32 %v3370, %v3885
      %3888 = vst.msk [vmem:[#allocation2] sm:$0xff] %vm773, %v3887
      %v3889 = vld [vmem:[#allocation2] sm:$0xff]
      %s3890 = scalar_lea.vmem %s230, 14
      %v3891 = vld [vmem:[%s3890] sm:$0x3]
      %s3892 = scalar_lea.vmem %s237, 3584
      %v3893 = vld [vmem:[%s3892] sm:$0xff]
      %v3894 = vld [vmem:[%s3892 + $0x8] sm:$0xff]
      %v3895 = vld [vmem:[%s3892 + $0x10] sm:$0xff]
      %v3896 = vld [vmem:[%s3892 + $0x18] sm:$0xff]
      %v3897 = vld [vmem:[%s3892 + $0x20] sm:$0xff]
      %v3898 = vld [vmem:[%s3892 + $0x28] sm:$0xff]
      %v3899 = vld [vmem:[%s3892 + $0x30] sm:$0xff]
      %v3900 = vld [vmem:[%s3892 + $0x38] sm:$0xff]
      %v3901 = vld [vmem:[%s3892 + $0x40] sm:$0xff]
      %v3902 = vld [vmem:[%s3892 + $0x48] sm:$0xff]
      %v3903 = vld [vmem:[%s3892 + $0x50] sm:$0xff]
      %v3904 = vld [vmem:[%s3892 + $0x58] sm:$0xff]
      %v3905 = vld [vmem:[%s3892 + $0x60] sm:$0xff]
      %v3906 = vld [vmem:[%s3892 + $0x68] sm:$0xff]
      %v3907 = vld [vmem:[%s3892 + $0x70] sm:$0xff]
      %v3908 = vld [vmem:[%s3892 + $0x78] sm:$0xff]
      %v3909 = vld [vmem:[%s3892 + $0x80] sm:$0xff]
      %v3910 = vld [vmem:[%s3892 + $0x88] sm:$0xff]
      %v3911 = vld [vmem:[%s3892 + $0x90] sm:$0xff]
      %v3912 = vld [vmem:[%s3892 + $0x98] sm:$0xff]
      %v3913 = vld [vmem:[%s3892 + $0xa0] sm:$0xff]
      %v3914 = vld [vmem:[%s3892 + $0xa8] sm:$0xff]
      %v3915 = vld [vmem:[%s3892 + $0xb0] sm:$0xff]
      %v3916 = vld [vmem:[%s3892 + $0xb8] sm:$0xff]
      %v3917 = vld [vmem:[%s3892 + $0xc0] sm:$0xff]
      %v3918 = vld [vmem:[%s3892 + $0xc8] sm:$0xff]
      %v3919 = vld [vmem:[%s3892 + $0xd0] sm:$0xff]
      %v3920 = vld [vmem:[%s3892 + $0xd8] sm:$0xff]
      %v3921 = vld [vmem:[%s3892 + $0xe0] sm:$0xff]
      %v3922 = vld [vmem:[%s3892 + $0xe8] sm:$0xff]
      %v3923 = vld [vmem:[%s3892 + $0xf0] sm:$0xff]
      %v3924 = vld [vmem:[%s3892 + $0xf8] sm:$0xff]
      %v3925 = vld [vmem:[%s3892 + $0x100] sm:$0xff]
      %v3926 = vld [vmem:[%s3892 + $0x108] sm:$0xff]
      %v3927 = vld [vmem:[%s3892 + $0x110] sm:$0xff]
      %v3928 = vld [vmem:[%s3892 + $0x118] sm:$0xff]
      %v3929 = vld [vmem:[%s3892 + $0x120] sm:$0xff]
      %v3930 = vld [vmem:[%s3892 + $0x128] sm:$0xff]
      %v3931 = vld [vmem:[%s3892 + $0x130] sm:$0xff]
      %v3932 = vld [vmem:[%s3892 + $0x138] sm:$0xff]
      %v3933 = vld [vmem:[%s3892 + $0x140] sm:$0xff]
      %v3934 = vld [vmem:[%s3892 + $0x148] sm:$0xff]
      %v3935 = vld [vmem:[%s3892 + $0x150] sm:$0xff]
      %v3936 = vld [vmem:[%s3892 + $0x158] sm:$0xff]
      %v3937 = vld [vmem:[%s3892 + $0x160] sm:$0xff]
      %v3938 = vld [vmem:[%s3892 + $0x168] sm:$0xff]
      %v3939 = vld [vmem:[%s3892 + $0x170] sm:$0xff]
      %v3940 = vld [vmem:[%s3892 + $0x178] sm:$0xff]
      %v3941 = vld [vmem:[%s3892 + $0x180] sm:$0xff]
      %v3942 = vld [vmem:[%s3892 + $0x188] sm:$0xff]
      %v3943 = vld [vmem:[%s3892 + $0x190] sm:$0xff]
      %v3944 = vld [vmem:[%s3892 + $0x198] sm:$0xff]
      %v3945 = vld [vmem:[%s3892 + $0x1a0] sm:$0xff]
      %v3946 = vld [vmem:[%s3892 + $0x1a8] sm:$0xff]
      %v3947 = vld [vmem:[%s3892 + $0x1b0] sm:$0xff]
      %v3948 = vld [vmem:[%s3892 + $0x1b8] sm:$0xff]
      %v3949 = vld [vmem:[%s3892 + $0x1c0] sm:$0xff]
      %v3950 = vld [vmem:[%s3892 + $0x1c8] sm:$0xff]
      %v3951 = vld [vmem:[%s3892 + $0x1d0] sm:$0xff]
      %v3952 = vld [vmem:[%s3892 + $0x1d8] sm:$0xff]
      %v3953 = vld [vmem:[%s3892 + $0x1e0] sm:$0xff]
      %v3954 = vld [vmem:[%s3892 + $0x1e8] sm:$0xff]
      %v3955 = vld [vmem:[%s3892 + $0x1f0] sm:$0xff]
      %v3956 = vld [vmem:[%s3892 + $0x1f8] sm:$0xff]
      %v3959 = vunpack.c.l.s4 1966171168
      %v3960 = vunpack.c.0.s8 %v3959
      %v3961 = vlaneseq
      %v3962 = vshrl.u32 %v3961, 7
      %v3963 = vsub.s32 %v3960, %v3962
      %v3964 = vrot.slane %v3891, %v3963
      %v3965 = vcombine.high %v3964, %v3964
      %v3967 = vunpack.c.l.s4 1966171168
      %v3968 = vunpack.c.0.s8 %v3967
      %v3969 = vlaneseq
      %v3970 = vshrl.u32 %v3969, 7
      %v3971 = vsub.s32 %v3968, %v3970
      %v3972 = vrot.slane %v3964, %v3971
      %v3974 = vunpack.c.l.s4 1966171168
      %v3975 = vunpack.c.0.s8 %v3974
      %v3976 = vlaneseq
      %v3977 = vshrl.u32 %v3976, 7
      %v3978 = vsub.s32 %v3975, %v3977
      %v3979 = vrot.slane %v3965, %v3978
      %v4046 = vunpack.c.l.b16 %v3893
      %v4047 = vunpack.c.h.b16 %v3893
      %v4048 = vunpack.c.l.b16 %v3894
      %v4049 = vunpack.c.h.b16 %v3894
      %v4050 = vunpack.c.l.b16 %v3895
      %v4051 = vunpack.c.h.b16 %v3895
      %v4052 = vunpack.c.l.b16 %v3896
      %v4053 = vunpack.c.h.b16 %v3896
      %v4054 = vunpack.c.l.b16 %v3897
      %v4055 = vunpack.c.h.b16 %v3897
      %v4056 = vunpack.c.l.b16 %v3898
      %v4057 = vunpack.c.h.b16 %v3898
      %v4058 = vunpack.c.l.b16 %v3899
      %v4059 = vunpack.c.h.b16 %v3899
      %v4060 = vunpack.c.l.b16 %v3900
      %v4061 = vunpack.c.h.b16 %v3900
      %v4062 = vunpack.c.l.b16 %v3901
      %v4063 = vunpack.c.h.b16 %v3901
      %v4064 = vunpack.c.l.b16 %v3902
      %v4065 = vunpack.c.h.b16 %v3902
      %v4066 = vunpack.c.l.b16 %v3903
      %v4067 = vunpack.c.h.b16 %v3903
      %v4068 = vunpack.c.l.b16 %v3904
      %v4069 = vunpack.c.h.b16 %v3904
      %v4070 = vunpack.c.l.b16 %v3905
      %v4071 = vunpack.c.h.b16 %v3905
      %v4072 = vunpack.c.l.b16 %v3906
      %v4073 = vunpack.c.h.b16 %v3906
      %v4074 = vunpack.c.l.b16 %v3907
      %v4075 = vunpack.c.h.b16 %v3907
      %v4076 = vunpack.c.l.b16 %v3908
      %v4077 = vunpack.c.h.b16 %v3908
      %v4078 = vunpack.c.l.b16 %v3909
      %v4079 = vunpack.c.h.b16 %v3909
      %v4080 = vunpack.c.l.b16 %v3910
      %v4081 = vunpack.c.h.b16 %v3910
      %v4082 = vunpack.c.l.b16 %v3911
      %v4083 = vunpack.c.h.b16 %v3911
      %v4084 = vunpack.c.l.b16 %v3912
      %v4085 = vunpack.c.h.b16 %v3912
      %v4086 = vunpack.c.l.b16 %v3913
      %v4087 = vunpack.c.h.b16 %v3913
      %v4088 = vunpack.c.l.b16 %v3914
      %v4089 = vunpack.c.h.b16 %v3914
      %v4090 = vunpack.c.l.b16 %v3915
      %v4091 = vunpack.c.h.b16 %v3915
      %v4092 = vunpack.c.l.b16 %v3916
      %v4093 = vunpack.c.h.b16 %v3916
      %v4094 = vunpack.c.l.b16 %v3917
      %v4095 = vunpack.c.h.b16 %v3917
      %v4096 = vunpack.c.l.b16 %v3918
      %v4097 = vunpack.c.h.b16 %v3918
      %v4098 = vunpack.c.l.b16 %v3919
      %v4099 = vunpack.c.h.b16 %v3919
      %v4100 = vunpack.c.l.b16 %v3920
      %v4101 = vunpack.c.h.b16 %v3920
      %v4102 = vunpack.c.l.b16 %v3921
      %v4103 = vunpack.c.h.b16 %v3921
      %v4104 = vunpack.c.l.b16 %v3922
      %v4105 = vunpack.c.h.b16 %v3922
      %v4106 = vunpack.c.l.b16 %v3923
      %v4107 = vunpack.c.h.b16 %v3923
      %v4108 = vunpack.c.l.b16 %v3924
      %v4109 = vunpack.c.h.b16 %v3924
      %v4110 = vunpack.c.l.b16 %v3925
      %v4111 = vunpack.c.h.b16 %v3925
      %v4112 = vunpack.c.l.b16 %v3926
      %v4113 = vunpack.c.h.b16 %v3926
      %v4114 = vunpack.c.l.b16 %v3927
      %v4115 = vunpack.c.h.b16 %v3927
      %v4116 = vunpack.c.l.b16 %v3928
      %v4117 = vunpack.c.h.b16 %v3928
      %v4118 = vunpack.c.l.b16 %v3929
      %v4119 = vunpack.c.h.b16 %v3929
      %v4120 = vunpack.c.l.b16 %v3930
      %v4121 = vunpack.c.h.b16 %v3930
      %v4122 = vunpack.c.l.b16 %v3931
      %v4123 = vunpack.c.h.b16 %v3931
      %v4124 = vunpack.c.l.b16 %v3932
      %v4125 = vunpack.c.h.b16 %v3932
      %v4126 = vunpack.c.l.b16 %v3933
      %v4127 = vunpack.c.h.b16 %v3933
      %v4128 = vunpack.c.l.b16 %v3934
      %v4129 = vunpack.c.h.b16 %v3934
      %v4130 = vunpack.c.l.b16 %v3935
      %v4131 = vunpack.c.h.b16 %v3935
      %v4132 = vunpack.c.l.b16 %v3936
      %v4133 = vunpack.c.h.b16 %v3936
      %v4134 = vunpack.c.l.b16 %v3937
      %v4135 = vunpack.c.h.b16 %v3937
      %v4136 = vunpack.c.l.b16 %v3938
      %v4137 = vunpack.c.h.b16 %v3938
      %v4138 = vunpack.c.l.b16 %v3939
      %v4139 = vunpack.c.h.b16 %v3939
      %v4140 = vunpack.c.l.b16 %v3940
      %v4141 = vunpack.c.h.b16 %v3940
      %v4142 = vunpack.c.l.b16 %v3941
      %v4143 = vunpack.c.h.b16 %v3941
      %v4144 = vunpack.c.l.b16 %v3942
      %v4145 = vunpack.c.h.b16 %v3942
      %v4146 = vunpack.c.l.b16 %v3943
      %v4147 = vunpack.c.h.b16 %v3943
      %v4148 = vunpack.c.l.b16 %v3944
      %v4149 = vunpack.c.h.b16 %v3944
      %v4150 = vunpack.c.l.b16 %v3945
      %v4151 = vunpack.c.h.b16 %v3945
      %v4152 = vunpack.c.l.b16 %v3946
      %v4153 = vunpack.c.h.b16 %v3946
      %v4154 = vunpack.c.l.b16 %v3947
      %v4155 = vunpack.c.h.b16 %v3947
      %v4156 = vunpack.c.l.b16 %v3948
      %v4157 = vunpack.c.h.b16 %v3948
      %v4158 = vunpack.c.l.b16 %v3949
      %v4159 = vunpack.c.h.b16 %v3949
      %v4160 = vunpack.c.l.b16 %v3950
      %v4161 = vunpack.c.h.b16 %v3950
      %v4162 = vunpack.c.l.b16 %v3951
      %v4163 = vunpack.c.h.b16 %v3951
      %v4164 = vunpack.c.l.b16 %v3952
      %v4165 = vunpack.c.h.b16 %v3952
      %v4166 = vunpack.c.l.b16 %v3953
      %v4167 = vunpack.c.h.b16 %v3953
      %v4168 = vunpack.c.l.b16 %v3954
      %v4169 = vunpack.c.h.b16 %v3954
      %v4170 = vunpack.c.l.b16 %v3955
      %v4171 = vunpack.c.h.b16 %v3955
      %v4172 = vunpack.c.l.b16 %v3956
      %v4173 = vunpack.c.h.b16 %v3956
      %v4174 = vpack.c.b16 %v4050, %v4046
      %v4175 = vpack.c.b16 %v4051, %v4047
      %v4176 = vpack.c.b16 %v4052, %v4048
      %v4177 = vpack.c.b16 %v4053, %v4049
      %v4178 = vpack.c.b16 %v4058, %v4054
      %v4179 = vpack.c.b16 %v4059, %v4055
      %v4180 = vpack.c.b16 %v4060, %v4056
      %v4181 = vpack.c.b16 %v4061, %v4057
      %v4182 = vpack.c.b16 %v4066, %v4062
      %v4183 = vpack.c.b16 %v4067, %v4063
      %v4184 = vpack.c.b16 %v4068, %v4064
      %v4185 = vpack.c.b16 %v4069, %v4065
      %v4186 = vpack.c.b16 %v4074, %v4070
      %v4187 = vpack.c.b16 %v4075, %v4071
      %v4188 = vpack.c.b16 %v4076, %v4072
      %v4189 = vpack.c.b16 %v4077, %v4073
      %v4190 = vpack.c.b16 %v4082, %v4078
      %v4191 = vpack.c.b16 %v4083, %v4079
      %v4192 = vpack.c.b16 %v4084, %v4080
      %v4193 = vpack.c.b16 %v4085, %v4081
      %v4194 = vpack.c.b16 %v4090, %v4086
      %v4195 = vpack.c.b16 %v4091, %v4087
      %v4196 = vpack.c.b16 %v4092, %v4088
      %v4197 = vpack.c.b16 %v4093, %v4089
      %v4198 = vpack.c.b16 %v4098, %v4094
      %v4199 = vpack.c.b16 %v4099, %v4095
      %v4200 = vpack.c.b16 %v4100, %v4096
      %v4201 = vpack.c.b16 %v4101, %v4097
      %v4202 = vpack.c.b16 %v4106, %v4102
      %v4203 = vpack.c.b16 %v4107, %v4103
      %v4204 = vpack.c.b16 %v4108, %v4104
      %v4205 = vpack.c.b16 %v4109, %v4105
      %v4206 = vpack.c.b16 %v4114, %v4110
      %v4207 = vpack.c.b16 %v4115, %v4111
      %v4208 = vpack.c.b16 %v4116, %v4112
      %v4209 = vpack.c.b16 %v4117, %v4113
      %v4210 = vpack.c.b16 %v4122, %v4118
      %v4211 = vpack.c.b16 %v4123, %v4119
      %v4212 = vpack.c.b16 %v4124, %v4120
      %v4213 = vpack.c.b16 %v4125, %v4121
      %v4214 = vpack.c.b16 %v4130, %v4126
      %v4215 = vpack.c.b16 %v4131, %v4127
      %v4216 = vpack.c.b16 %v4132, %v4128
      %v4217 = vpack.c.b16 %v4133, %v4129
      %v4218 = vpack.c.b16 %v4138, %v4134
      %v4219 = vpack.c.b16 %v4139, %v4135
      %v4220 = vpack.c.b16 %v4140, %v4136
      %v4221 = vpack.c.b16 %v4141, %v4137
      %v4222 = vpack.c.b16 %v4146, %v4142
      %v4223 = vpack.c.b16 %v4147, %v4143
      %v4224 = vpack.c.b16 %v4148, %v4144
      %v4225 = vpack.c.b16 %v4149, %v4145
      %v4226 = vpack.c.b16 %v4154, %v4150
      %v4227 = vpack.c.b16 %v4155, %v4151
      %v4228 = vpack.c.b16 %v4156, %v4152
      %v4229 = vpack.c.b16 %v4157, %v4153
      %v4230 = vpack.c.b16 %v4162, %v4158
      %v4231 = vpack.c.b16 %v4163, %v4159
      %v4232 = vpack.c.b16 %v4164, %v4160
      %v4233 = vpack.c.b16 %v4165, %v4161
      %v4234 = vpack.c.b16 %v4170, %v4166
      %v4235 = vpack.c.b16 %v4171, %v4167
      %v4236 = vpack.c.b16 %v4172, %v4168
      %v4237 = vpack.c.b16 %v4173, %v4169
      %4302 = vmatprep.subr.bf16.mxu0 %v4203
      %4303 = vmatpush1.bf16.msra.mxu0 %v4202
      %4304 = vmatprep.subr.bf16.mxu0 %v4199
      %4305 = vmatpush1.bf16.msra.mxu0 %v4198
      %4306 = vmatprep.subr.bf16.mxu0 %v4195
      %4307 = vmatpush1.bf16.msra.mxu0 %v4194
      %4308 = vmatprep.subr.bf16.mxu0 %v4191
      %4309 = vmatpush1.bf16.msra.mxu0 %v4190
      %4310 = vmatprep.subr.bf16.mxu0 %v4187
      %4311 = vmatpush1.bf16.msra.mxu0 %v4186
      %4312 = vmatprep.subr.bf16.mxu0 %v4183
      %4313 = vmatpush1.bf16.msra.mxu0 %v4182
      %4314 = vmatprep.subr.bf16.mxu0 %v4179
      %4315 = vmatpush1.bf16.msra.mxu0 %v4178
      %4316 = vmatprep.subr.bf16.mxu0 %v4175
      %4317 = vmatpush1.bf16.msra.mxu0 %v4174
      %4318 = vmatprep.subr.bf16.mxu0 %v4235
      %4319 = vmatpush2.bf16.msra.mxu0 %v4234
      %4320 = vmatprep.subr.bf16.mxu0 %v4231
      %4321 = vmatpush2.bf16.msra.mxu0 %v4230
      %4322 = vmatprep.subr.bf16.mxu0 %v4227
      %4323 = vmatpush2.bf16.msra.mxu0 %v4226
      %4324 = vmatprep.subr.bf16.mxu0 %v4223
      %4325 = vmatpush2.bf16.msra.mxu0 %v4222
      %4326 = vmatprep.subr.bf16.mxu0 %v4219
      %4327 = vmatpush2.bf16.msra.mxu0 %v4218
      %4328 = vmatprep.subr.bf16.mxu0 %v4215
      %4329 = vmatpush2.bf16.msra.mxu0 %v4214
      %4330 = vmatprep.subr.bf16.mxu0 %v4211
      %4331 = vmatpush2.bf16.msra.mxu0 %v4210
      %4332 = vmatprep.subr.bf16.mxu0 %v4207
      %4333 = vmatpush2.bf16.msra.mxu0 %v4206
      %4334 = vmatprep.mubr.bf16.mxu0 %v3979
      %4335 = vmatmul.mubr.bf16.gmra.mxu0 %v3972
      %v4336 = vpop.f32.mrf.mxu0
      %v4337 = vadd.f32 0.0, %v4336
      %v4338 = vpop.f32.mrf.mxu0
      %v4339 = vadd.f32 0.0, %v4338
      %v4340 = vpop.f32.mrf.mxu0
      %v4341 = vpop.f32.mrf.mxu0
      %4342 = vdwg.mxu0
      %4343 = vmatprep.subr.bf16.mxu0 %v4205
      %4344 = vmatpush1.bf16.msra.mxu0 %v4204
      %4345 = vmatprep.subr.bf16.mxu0 %v4201
      %4346 = vmatpush1.bf16.msra.mxu0 %v4200
      %4347 = vmatprep.subr.bf16.mxu0 %v4197
      %4348 = vmatpush1.bf16.msra.mxu0 %v4196
      %4349 = vmatprep.subr.bf16.mxu0 %v4193
      %4350 = vmatpush1.bf16.msra.mxu0 %v4192
      %4351 = vmatprep.subr.bf16.mxu0 %v4189
      %4352 = vmatpush1.bf16.msra.mxu0 %v4188
      %4353 = vmatprep.subr.bf16.mxu0 %v4185
      %4354 = vmatpush1.bf16.msra.mxu0 %v4184
      %4355 = vmatprep.subr.bf16.mxu0 %v4181
      %4356 = vmatpush1.bf16.msra.mxu0 %v4180
      %4357 = vmatprep.subr.bf16.mxu0 %v4177
      %4358 = vmatpush1.bf16.msra.mxu0 %v4176
      %4359 = vmatprep.subr.bf16.mxu0 %v4237
      %4360 = vmatpush2.bf16.msra.mxu0 %v4236
      %4361 = vmatprep.subr.bf16.mxu0 %v4233
      %4362 = vmatpush2.bf16.msra.mxu0 %v4232
      %4363 = vmatprep.subr.bf16.mxu0 %v4229
      %4364 = vmatpush2.bf16.msra.mxu0 %v4228
      %4365 = vmatprep.subr.bf16.mxu0 %v4225
      %4366 = vmatpush2.bf16.msra.mxu0 %v4224
      %4367 = vmatprep.subr.bf16.mxu0 %v4221
      %4368 = vmatpush2.bf16.msra.mxu0 %v4220
      %4369 = vmatprep.subr.bf16.mxu0 %v4217
      %4370 = vmatpush2.bf16.msra.mxu0 %v4216
      %4371 = vmatprep.subr.bf16.mxu0 %v4213
      %4372 = vmatpush2.bf16.msra.mxu0 %v4212
      %4373 = vmatprep.subr.bf16.mxu0 %v4209
      %4374 = vmatpush2.bf16.msra.mxu0 %v4208
      %4375 = vmatprep.mubr.bf16.mxu0 %v3979
      %4376 = vmatmul.mubr.bf16.gmra.mxu0 %v3972
      %v4377 = vpop.f32.mrf.mxu0
      %v4378 = vadd.f32 0.0, %v4377
      %v4379 = vpop.f32.mrf.mxu0
      %v4380 = vadd.f32 0.0, %v4379
      %v4381 = vpop.f32.mrf.mxu0
      %v4382 = vpop.f32.mrf.mxu0
      %4383 = vdwg.mxu0
      %v4388 = vcombine.low %v4337, %v4339
      %v4389 = vcombine.low %v4378, %v4380
      %v4391 = vunpack.c.l.s4 1983009808
      %v4392 = vunpack.c.0.s8 %v4391
      %v4393 = vlaneseq
      %v4394 = vshrl.u32 %v4393, 7
      %v4395 = vsub.s32 %v4392, %v4394
      %v4396 = vrot.slane %v4388, %v4395
      %v4398 = vunpack.c.l.s4 1983009808
      %v4399 = vunpack.c.0.s8 %v4398
      %v4400 = vlaneseq
      %v4401 = vshrl.u32 %v4400, 7
      %v4402 = vsub.s32 %v4399, %v4401
      %v4403 = vrot.slane %v4389, %v4402
      %v4404 = vcombine.low %v4396, %v4403
      %v4406 = vadd.f32 %v3889, %v4404
      %4407 = vst.msk [vmem:[#allocation2] sm:$0xff] %vm773, %v4406
      %v4408 = vld [vmem:[#allocation2] sm:$0xff]
      %s4409 = scalar_lea.vmem %s230, 16
      %v4410 = vld [vmem:[%s4409] sm:$0x3]
      %s4411 = scalar_lea.vmem %s237, 4096
      %v4412 = vld [vmem:[%s4411] sm:$0xff]
      %v4413 = vld [vmem:[%s4411 + $0x8] sm:$0xff]
      %v4414 = vld [vmem:[%s4411 + $0x10] sm:$0xff]
      %v4415 = vld [vmem:[%s4411 + $0x18] sm:$0xff]
      %v4416 = vld [vmem:[%s4411 + $0x20] sm:$0xff]
      %v4417 = vld [vmem:[%s4411 + $0x28] sm:$0xff]
      %v4418 = vld [vmem:[%s4411 + $0x30] sm:$0xff]
      %v4419 = vld [vmem:[%s4411 + $0x38] sm:$0xff]
      %v4420 = vld [vmem:[%s4411 + $0x40] sm:$0xff]
      %v4421 = vld [vmem:[%s4411 + $0x48] sm:$0xff]
      %v4422 = vld [vmem:[%s4411 + $0x50] sm:$0xff]
      %v4423 = vld [vmem:[%s4411 + $0x58] sm:$0xff]
      %v4424 = vld [vmem:[%s4411 + $0x60] sm:$0xff]
      %v4425 = vld [vmem:[%s4411 + $0x68] sm:$0xff]
      %v4426 = vld [vmem:[%s4411 + $0x70] sm:$0xff]
      %v4427 = vld [vmem:[%s4411 + $0x78] sm:$0xff]
      %v4428 = vld [vmem:[%s4411 + $0x80] sm:$0xff]
      %v4429 = vld [vmem:[%s4411 + $0x88] sm:$0xff]
      %v4430 = vld [vmem:[%s4411 + $0x90] sm:$0xff]
      %v4431 = vld [vmem:[%s4411 + $0x98] sm:$0xff]
      %v4432 = vld [vmem:[%s4411 + $0xa0] sm:$0xff]
      %v4433 = vld [vmem:[%s4411 + $0xa8] sm:$0xff]
      %v4434 = vld [vmem:[%s4411 + $0xb0] sm:$0xff]
      %v4435 = vld [vmem:[%s4411 + $0xb8] sm:$0xff]
      %v4436 = vld [vmem:[%s4411 + $0xc0] sm:$0xff]
      %v4437 = vld [vmem:[%s4411 + $0xc8] sm:$0xff]
      %v4438 = vld [vmem:[%s4411 + $0xd0] sm:$0xff]
      %v4439 = vld [vmem:[%s4411 + $0xd8] sm:$0xff]
      %v4440 = vld [vmem:[%s4411 + $0xe0] sm:$0xff]
      %v4441 = vld [vmem:[%s4411 + $0xe8] sm:$0xff]
      %v4442 = vld [vmem:[%s4411 + $0xf0] sm:$0xff]
      %v4443 = vld [vmem:[%s4411 + $0xf8] sm:$0xff]
      %v4444 = vld [vmem:[%s4411 + $0x100] sm:$0xff]
      %v4445 = vld [vmem:[%s4411 + $0x108] sm:$0xff]
      %v4446 = vld [vmem:[%s4411 + $0x110] sm:$0xff]
      %v4447 = vld [vmem:[%s4411 + $0x118] sm:$0xff]
      %v4448 = vld [vmem:[%s4411 + $0x120] sm:$0xff]
      %v4449 = vld [vmem:[%s4411 + $0x128] sm:$0xff]
      %v4450 = vld [vmem:[%s4411 + $0x130] sm:$0xff]
      %v4451 = vld [vmem:[%s4411 + $0x138] sm:$0xff]
      %v4452 = vld [vmem:[%s4411 + $0x140] sm:$0xff]
      %v4453 = vld [vmem:[%s4411 + $0x148] sm:$0xff]
      %v4454 = vld [vmem:[%s4411 + $0x150] sm:$0xff]
      %v4455 = vld [vmem:[%s4411 + $0x158] sm:$0xff]
      %v4456 = vld [vmem:[%s4411 + $0x160] sm:$0xff]
      %v4457 = vld [vmem:[%s4411 + $0x168] sm:$0xff]
      %v4458 = vld [vmem:[%s4411 + $0x170] sm:$0xff]
      %v4459 = vld [vmem:[%s4411 + $0x178] sm:$0xff]
      %v4460 = vld [vmem:[%s4411 + $0x180] sm:$0xff]
      %v4461 = vld [vmem:[%s4411 + $0x188] sm:$0xff]
      %v4462 = vld [vmem:[%s4411 + $0x190] sm:$0xff]
      %v4463 = vld [vmem:[%s4411 + $0x198] sm:$0xff]
      %v4464 = vld [vmem:[%s4411 + $0x1a0] sm:$0xff]
      %v4465 = vld [vmem:[%s4411 + $0x1a8] sm:$0xff]
      %v4466 = vld [vmem:[%s4411 + $0x1b0] sm:$0xff]
      %v4467 = vld [vmem:[%s4411 + $0x1b8] sm:$0xff]
      %v4468 = vld [vmem:[%s4411 + $0x1c0] sm:$0xff]
      %v4469 = vld [vmem:[%s4411 + $0x1c8] sm:$0xff]
      %v4470 = vld [vmem:[%s4411 + $0x1d0] sm:$0xff]
      %v4471 = vld [vmem:[%s4411 + $0x1d8] sm:$0xff]
      %v4472 = vld [vmem:[%s4411 + $0x1e0] sm:$0xff]
      %v4473 = vld [vmem:[%s4411 + $0x1e8] sm:$0xff]
      %v4474 = vld [vmem:[%s4411 + $0x1f0] sm:$0xff]
      %v4475 = vld [vmem:[%s4411 + $0x1f8] sm:$0xff]
      %v4478 = vunpack.c.l.s4 1966171168
      %v4479 = vunpack.c.0.s8 %v4478
      %v4480 = vlaneseq
      %v4481 = vshrl.u32 %v4480, 7
      %v4482 = vsub.s32 %v4479, %v4481
      %v4483 = vrot.slane %v4410, %v4482
      %v4484 = vcombine.high %v4483, %v4483
      %v4486 = vunpack.c.l.s4 1966171168
      %v4487 = vunpack.c.0.s8 %v4486
      %v4488 = vlaneseq
      %v4489 = vshrl.u32 %v4488, 7
      %v4490 = vsub.s32 %v4487, %v4489
      %v4491 = vrot.slane %v4483, %v4490
      %v4493 = vunpack.c.l.s4 1966171168
      %v4494 = vunpack.c.0.s8 %v4493
      %v4495 = vlaneseq
      %v4496 = vshrl.u32 %v4495, 7
      %v4497 = vsub.s32 %v4494, %v4496
      %v4498 = vrot.slane %v4484, %v4497
      %v4565 = vunpack.c.l.b16 %v4412
      %v4566 = vunpack.c.h.b16 %v4412
      %v4567 = vunpack.c.l.b16 %v4413
      %v4568 = vunpack.c.h.b16 %v4413
      %v4569 = vunpack.c.l.b16 %v4414
      %v4570 = vunpack.c.h.b16 %v4414
      %v4571 = vunpack.c.l.b16 %v4415
      %v4572 = vunpack.c.h.b16 %v4415
      %v4573 = vunpack.c.l.b16 %v4416
      %v4574 = vunpack.c.h.b16 %v4416
      %v4575 = vunpack.c.l.b16 %v4417
      %v4576 = vunpack.c.h.b16 %v4417
      %v4577 = vunpack.c.l.b16 %v4418
      %v4578 = vunpack.c.h.b16 %v4418
      %v4579 = vunpack.c.l.b16 %v4419
      %v4580 = vunpack.c.h.b16 %v4419
      %v4581 = vunpack.c.l.b16 %v4420
      %v4582 = vunpack.c.h.b16 %v4420
      %v4583 = vunpack.c.l.b16 %v4421
      %v4584 = vunpack.c.h.b16 %v4421
      %v4585 = vunpack.c.l.b16 %v4422
      %v4586 = vunpack.c.h.b16 %v4422
      %v4587 = vunpack.c.l.b16 %v4423
      %v4588 = vunpack.c.h.b16 %v4423
      %v4589 = vunpack.c.l.b16 %v4424
      %v4590 = vunpack.c.h.b16 %v4424
      %v4591 = vunpack.c.l.b16 %v4425
      %v4592 = vunpack.c.h.b16 %v4425
      %v4593 = vunpack.c.l.b16 %v4426
      %v4594 = vunpack.c.h.b16 %v4426
      %v4595 = vunpack.c.l.b16 %v4427
      %v4596 = vunpack.c.h.b16 %v4427
      %v4597 = vunpack.c.l.b16 %v4428
      %v4598 = vunpack.c.h.b16 %v4428
      %v4599 = vunpack.c.l.b16 %v4429
      %v4600 = vunpack.c.h.b16 %v4429
      %v4601 = vunpack.c.l.b16 %v4430
      %v4602 = vunpack.c.h.b16 %v4430
      %v4603 = vunpack.c.l.b16 %v4431
      %v4604 = vunpack.c.h.b16 %v4431
      %v4605 = vunpack.c.l.b16 %v4432
      %v4606 = vunpack.c.h.b16 %v4432
      %v4607 = vunpack.c.l.b16 %v4433
      %v4608 = vunpack.c.h.b16 %v4433
      %v4609 = vunpack.c.l.b16 %v4434
      %v4610 = vunpack.c.h.b16 %v4434
      %v4611 = vunpack.c.l.b16 %v4435
      %v4612 = vunpack.c.h.b16 %v4435
      %v4613 = vunpack.c.l.b16 %v4436
      %v4614 = vunpack.c.h.b16 %v4436
      %v4615 = vunpack.c.l.b16 %v4437
      %v4616 = vunpack.c.h.b16 %v4437
      %v4617 = vunpack.c.l.b16 %v4438
      %v4618 = vunpack.c.h.b16 %v4438
      %v4619 = vunpack.c.l.b16 %v4439
      %v4620 = vunpack.c.h.b16 %v4439
      %v4621 = vunpack.c.l.b16 %v4440
      %v4622 = vunpack.c.h.b16 %v4440
      %v4623 = vunpack.c.l.b16 %v4441
      %v4624 = vunpack.c.h.b16 %v4441
      %v4625 = vunpack.c.l.b16 %v4442
      %v4626 = vunpack.c.h.b16 %v4442
      %v4627 = vunpack.c.l.b16 %v4443
      %v4628 = vunpack.c.h.b16 %v4443
      %v4629 = vunpack.c.l.b16 %v4444
      %v4630 = vunpack.c.h.b16 %v4444
      %v4631 = vunpack.c.l.b16 %v4445
      %v4632 = vunpack.c.h.b16 %v4445
      %v4633 = vunpack.c.l.b16 %v4446
      %v4634 = vunpack.c.h.b16 %v4446
      %v4635 = vunpack.c.l.b16 %v4447
      %v4636 = vunpack.c.h.b16 %v4447
      %v4637 = vunpack.c.l.b16 %v4448
      %v4638 = vunpack.c.h.b16 %v4448
      %v4639 = vunpack.c.l.b16 %v4449
      %v4640 = vunpack.c.h.b16 %v4449
      %v4641 = vunpack.c.l.b16 %v4450
      %v4642 = vunpack.c.h.b16 %v4450
      %v4643 = vunpack.c.l.b16 %v4451
      %v4644 = vunpack.c.h.b16 %v4451
      %v4645 = vunpack.c.l.b16 %v4452
      %v4646 = vunpack.c.h.b16 %v4452
      %v4647 = vunpack.c.l.b16 %v4453
      %v4648 = vunpack.c.h.b16 %v4453
      %v4649 = vunpack.c.l.b16 %v4454
      %v4650 = vunpack.c.h.b16 %v4454
      %v4651 = vunpack.c.l.b16 %v4455
      %v4652 = vunpack.c.h.b16 %v4455
      %v4653 = vunpack.c.l.b16 %v4456
      %v4654 = vunpack.c.h.b16 %v4456
      %v4655 = vunpack.c.l.b16 %v4457
      %v4656 = vunpack.c.h.b16 %v4457
      %v4657 = vunpack.c.l.b16 %v4458
      %v4658 = vunpack.c.h.b16 %v4458
      %v4659 = vunpack.c.l.b16 %v4459
      %v4660 = vunpack.c.h.b16 %v4459
      %v4661 = vunpack.c.l.b16 %v4460
      %v4662 = vunpack.c.h.b16 %v4460
      %v4663 = vunpack.c.l.b16 %v4461
      %v4664 = vunpack.c.h.b16 %v4461
      %v4665 = vunpack.c.l.b16 %v4462
      %v4666 = vunpack.c.h.b16 %v4462
      %v4667 = vunpack.c.l.b16 %v4463
      %v4668 = vunpack.c.h.b16 %v4463
      %v4669 = vunpack.c.l.b16 %v4464
      %v4670 = vunpack.c.h.b16 %v4464
      %v4671 = vunpack.c.l.b16 %v4465
      %v4672 = vunpack.c.h.b16 %v4465
      %v4673 = vunpack.c.l.b16 %v4466
      %v4674 = vunpack.c.h.b16 %v4466
      %v4675 = vunpack.c.l.b16 %v4467
      %v4676 = vunpack.c.h.b16 %v4467
      %v4677 = vunpack.c.l.b16 %v4468
      %v4678 = vunpack.c.h.b16 %v4468
      %v4679 = vunpack.c.l.b16 %v4469
      %v4680 = vunpack.c.h.b16 %v4469
      %v4681 = vunpack.c.l.b16 %v4470
      %v4682 = vunpack.c.h.b16 %v4470
      %v4683 = vunpack.c.l.b16 %v4471
      %v4684 = vunpack.c.h.b16 %v4471
      %v4685 = vunpack.c.l.b16 %v4472
      %v4686 = vunpack.c.h.b16 %v4472
      %v4687 = vunpack.c.l.b16 %v4473
      %v4688 = vunpack.c.h.b16 %v4473
      %v4689 = vunpack.c.l.b16 %v4474
      %v4690 = vunpack.c.h.b16 %v4474
      %v4691 = vunpack.c.l.b16 %v4475
      %v4692 = vunpack.c.h.b16 %v4475
      %v4693 = vpack.c.b16 %v4569, %v4565
      %v4694 = vpack.c.b16 %v4570, %v4566
      %v4695 = vpack.c.b16 %v4571, %v4567
      %v4696 = vpack.c.b16 %v4572, %v4568
      %v4697 = vpack.c.b16 %v4577, %v4573
      %v4698 = vpack.c.b16 %v4578, %v4574
      %v4699 = vpack.c.b16 %v4579, %v4575
      %v4700 = vpack.c.b16 %v4580, %v4576
      %v4701 = vpack.c.b16 %v4585, %v4581
      %v4702 = vpack.c.b16 %v4586, %v4582
      %v4703 = vpack.c.b16 %v4587, %v4583
      %v4704 = vpack.c.b16 %v4588, %v4584
      %v4705 = vpack.c.b16 %v4593, %v4589
      %v4706 = vpack.c.b16 %v4594, %v4590
      %v4707 = vpack.c.b16 %v4595, %v4591
      %v4708 = vpack.c.b16 %v4596, %v4592
      %v4709 = vpack.c.b16 %v4601, %v4597
      %v4710 = vpack.c.b16 %v4602, %v4598
      %v4711 = vpack.c.b16 %v4603, %v4599
      %v4712 = vpack.c.b16 %v4604, %v4600
      %v4713 = vpack.c.b16 %v4609, %v4605
      %v4714 = vpack.c.b16 %v4610, %v4606
      %v4715 = vpack.c.b16 %v4611, %v4607
      %v4716 = vpack.c.b16 %v4612, %v4608
      %v4717 = vpack.c.b16 %v4617, %v4613
      %v4718 = vpack.c.b16 %v4618, %v4614
      %v4719 = vpack.c.b16 %v4619, %v4615
      %v4720 = vpack.c.b16 %v4620, %v4616
      %v4721 = vpack.c.b16 %v4625, %v4621
      %v4722 = vpack.c.b16 %v4626, %v4622
      %v4723 = vpack.c.b16 %v4627, %v4623
      %v4724 = vpack.c.b16 %v4628, %v4624
      %v4725 = vpack.c.b16 %v4633, %v4629
      %v4726 = vpack.c.b16 %v4634, %v4630
      %v4727 = vpack.c.b16 %v4635, %v4631
      %v4728 = vpack.c.b16 %v4636, %v4632
      %v4729 = vpack.c.b16 %v4641, %v4637
      %v4730 = vpack.c.b16 %v4642, %v4638
      %v4731 = vpack.c.b16 %v4643, %v4639
      %v4732 = vpack.c.b16 %v4644, %v4640
      %v4733 = vpack.c.b16 %v4649, %v4645
      %v4734 = vpack.c.b16 %v4650, %v4646
      %v4735 = vpack.c.b16 %v4651, %v4647
      %v4736 = vpack.c.b16 %v4652, %v4648
      %v4737 = vpack.c.b16 %v4657, %v4653
      %v4738 = vpack.c.b16 %v4658, %v4654
      %v4739 = vpack.c.b16 %v4659, %v4655
      %v4740 = vpack.c.b16 %v4660, %v4656
      %v4741 = vpack.c.b16 %v4665, %v4661
      %v4742 = vpack.c.b16 %v4666, %v4662
      %v4743 = vpack.c.b16 %v4667, %v4663
      %v4744 = vpack.c.b16 %v4668, %v4664
      %v4745 = vpack.c.b16 %v4673, %v4669
      %v4746 = vpack.c.b16 %v4674, %v4670
      %v4747 = vpack.c.b16 %v4675, %v4671
      %v4748 = vpack.c.b16 %v4676, %v4672
      %v4749 = vpack.c.b16 %v4681, %v4677
      %v4750 = vpack.c.b16 %v4682, %v4678
      %v4751 = vpack.c.b16 %v4683, %v4679
      %v4752 = vpack.c.b16 %v4684, %v4680
      %v4753 = vpack.c.b16 %v4689, %v4685
      %v4754 = vpack.c.b16 %v4690, %v4686
      %v4755 = vpack.c.b16 %v4691, %v4687
      %v4756 = vpack.c.b16 %v4692, %v4688
      %4821 = vmatprep.subr.bf16.mxu0 %v4722
      %4822 = vmatpush1.bf16.msra.mxu0 %v4721
      %4823 = vmatprep.subr.bf16.mxu0 %v4718
      %4824 = vmatpush1.bf16.msra.mxu0 %v4717
      %4825 = vmatprep.subr.bf16.mxu0 %v4714
      %4826 = vmatpush1.bf16.msra.mxu0 %v4713
      %4827 = vmatprep.subr.bf16.mxu0 %v4710
      %4828 = vmatpush1.bf16.msra.mxu0 %v4709
      %4829 = vmatprep.subr.bf16.mxu0 %v4706
      %4830 = vmatpush1.bf16.msra.mxu0 %v4705
      %4831 = vmatprep.subr.bf16.mxu0 %v4702
      %4832 = vmatpush1.bf16.msra.mxu0 %v4701
      %4833 = vmatprep.subr.bf16.mxu0 %v4698
      %4834 = vmatpush1.bf16.msra.mxu0 %v4697
      %4835 = vmatprep.subr.bf16.mxu0 %v4694
      %4836 = vmatpush1.bf16.msra.mxu0 %v4693
      %4837 = vmatprep.subr.bf16.mxu0 %v4754
      %4838 = vmatpush2.bf16.msra.mxu0 %v4753
      %4839 = vmatprep.subr.bf16.mxu0 %v4750
      %4840 = vmatpush2.bf16.msra.mxu0 %v4749
      %4841 = vmatprep.subr.bf16.mxu0 %v4746
      %4842 = vmatpush2.bf16.msra.mxu0 %v4745
      %4843 = vmatprep.subr.bf16.mxu0 %v4742
      %4844 = vmatpush2.bf16.msra.mxu0 %v4741
      %4845 = vmatprep.subr.bf16.mxu0 %v4738
      %4846 = vmatpush2.bf16.msra.mxu0 %v4737
      %4847 = vmatprep.subr.bf16.mxu0 %v4734
      %4848 = vmatpush2.bf16.msra.mxu0 %v4733
      %4849 = vmatprep.subr.bf16.mxu0 %v4730
      %4850 = vmatpush2.bf16.msra.mxu0 %v4729
      %4851 = vmatprep.subr.bf16.mxu0 %v4726
      %4852 = vmatpush2.bf16.msra.mxu0 %v4725
      %4853 = vmatprep.mubr.bf16.mxu0 %v4498
      %4854 = vmatmul.mubr.bf16.gmra.mxu0 %v4491
      %v4855 = vpop.f32.mrf.mxu0
      %v4856 = vadd.f32 0.0, %v4855
      %v4857 = vpop.f32.mrf.mxu0
      %v4858 = vadd.f32 0.0, %v4857
      %v4859 = vpop.f32.mrf.mxu0
      %v4860 = vpop.f32.mrf.mxu0
      %4861 = vdwg.mxu0
      %4862 = vmatprep.subr.bf16.mxu0 %v4724
      %4863 = vmatpush1.bf16.msra.mxu0 %v4723
      %4864 = vmatprep.subr.bf16.mxu0 %v4720
      %4865 = vmatpush1.bf16.msra.mxu0 %v4719
      %4866 = vmatprep.subr.bf16.mxu0 %v4716
      %4867 = vmatpush1.bf16.msra.mxu0 %v4715
      %4868 = vmatprep.subr.bf16.mxu0 %v4712
      %4869 = vmatpush1.bf16.msra.mxu0 %v4711
      %4870 = vmatprep.subr.bf16.mxu0 %v4708
      %4871 = vmatpush1.bf16.msra.mxu0 %v4707
      %4872 = vmatprep.subr.bf16.mxu0 %v4704
      %4873 = vmatpush1.bf16.msra.mxu0 %v4703
      %4874 = vmatprep.subr.bf16.mxu0 %v4700
      %4875 = vmatpush1.bf16.msra.mxu0 %v4699
      %4876 = vmatprep.subr.bf16.mxu0 %v4696
      %4877 = vmatpush1.bf16.msra.mxu0 %v4695
      %4878 = vmatprep.subr.bf16.mxu0 %v4756
      %4879 = vmatpush2.bf16.msra.mxu0 %v4755
      %4880 = vmatprep.subr.bf16.mxu0 %v4752
      %4881 = vmatpush2.bf16.msra.mxu0 %v4751
      %4882 = vmatprep.subr.bf16.mxu0 %v4748
      %4883 = vmatpush2.bf16.msra.mxu0 %v4747
      %4884 = vmatprep.subr.bf16.mxu0 %v4744
      %4885 = vmatpush2.bf16.msra.mxu0 %v4743
      %4886 = vmatprep.subr.bf16.mxu0 %v4740
      %4887 = vmatpush2.bf16.msra.mxu0 %v4739
      %4888 = vmatprep.subr.bf16.mxu0 %v4736
      %4889 = vmatpush2.bf16.msra.mxu0 %v4735
      %4890 = vmatprep.subr.bf16.mxu0 %v4732
      %4891 = vmatpush2.bf16.msra.mxu0 %v4731
      %4892 = vmatprep.subr.bf16.mxu0 %v4728
      %4893 = vmatpush2.bf16.msra.mxu0 %v4727
      %4894 = vmatprep.mubr.bf16.mxu0 %v4498
      %4895 = vmatmul.mubr.bf16.gmra.mxu0 %v4491
      %v4896 = vpop.f32.mrf.mxu0
      %v4897 = vadd.f32 0.0, %v4896
      %v4898 = vpop.f32.mrf.mxu0
      %v4899 = vadd.f32 0.0, %v4898
      %v4900 = vpop.f32.mrf.mxu0
      %v4901 = vpop.f32.mrf.mxu0
      %4902 = vdwg.mxu0
      %v4907 = vcombine.low %v4856, %v4858
      %v4908 = vcombine.low %v4897, %v4899
      %v4910 = vunpack.c.l.s4 1983009808
      %v4911 = vunpack.c.0.s8 %v4910
      %v4912 = vlaneseq
      %v4913 = vshrl.u32 %v4912, 7
      %v4914 = vsub.s32 %v4911, %v4913
      %v4915 = vrot.slane %v4907, %v4914
      %v4917 = vunpack.c.l.s4 1983009808
      %v4918 = vunpack.c.0.s8 %v4917
      %v4919 = vlaneseq
      %v4920 = vshrl.u32 %v4919, 7
      %v4921 = vsub.s32 %v4918, %v4920
      %v4922 = vrot.slane %v4908, %v4921
      %v4923 = vcombine.low %v4915, %v4922
      %v4925 = vadd.f32 %v4408, %v4923
      %4926 = vst.msk [vmem:[#allocation2] sm:$0xff] %vm773, %v4925
      %v4927 = vld [vmem:[#allocation2] sm:$0xff]
      %s4928 = scalar_lea.vmem %s230, 18
      %v4929 = vld [vmem:[%s4928] sm:$0x3]
      %s4930 = scalar_lea.vmem %s237, 4608
      %v4931 = vld [vmem:[%s4930] sm:$0xff]
      %v4932 = vld [vmem:[%s4930 + $0x8] sm:$0xff]
      %v4933 = vld [vmem:[%s4930 + $0x10] sm:$0xff]
      %v4934 = vld [vmem:[%s4930 + $0x18] sm:$0xff]
      %v4935 = vld [vmem:[%s4930 + $0x20] sm:$0xff]
      %v4936 = vld [vmem:[%s4930 + $0x28] sm:$0xff]
      %v4937 = vld [vmem:[%s4930 + $0x30] sm:$0xff]
      %v4938 = vld [vmem:[%s4930 + $0x38] sm:$0xff]
      %v4939 = vld [vmem:[%s4930 + $0x40] sm:$0xff]
      %v4940 = vld [vmem:[%s4930 + $0x48] sm:$0xff]
      %v4941 = vld [vmem:[%s4930 + $0x50] sm:$0xff]
      %v4942 = vld [vmem:[%s4930 + $0x58] sm:$0xff]
      %v4943 = vld [vmem:[%s4930 + $0x60] sm:$0xff]
      %v4944 = vld [vmem:[%s4930 + $0x68] sm:$0xff]
      %v4945 = vld [vmem:[%s4930 + $0x70] sm:$0xff]
      %v4946 = vld [vmem:[%s4930 + $0x78] sm:$0xff]
      %v4947 = vld [vmem:[%s4930 + $0x80] sm:$0xff]
      %v4948 = vld [vmem:[%s4930 + $0x88] sm:$0xff]
      %v4949 = vld [vmem:[%s4930 + $0x90] sm:$0xff]
      %v4950 = vld [vmem:[%s4930 + $0x98] sm:$0xff]
      %v4951 = vld [vmem:[%s4930 + $0xa0] sm:$0xff]
      %v4952 = vld [vmem:[%s4930 + $0xa8] sm:$0xff]
      %v4953 = vld [vmem:[%s4930 + $0xb0] sm:$0xff]
      %v4954 = vld [vmem:[%s4930 + $0xb8] sm:$0xff]
      %v4955 = vld [vmem:[%s4930 + $0xc0] sm:$0xff]
      %v4956 = vld [vmem:[%s4930 + $0xc8] sm:$0xff]
      %v4957 = vld [vmem:[%s4930 + $0xd0] sm:$0xff]
      %v4958 = vld [vmem:[%s4930 + $0xd8] sm:$0xff]
      %v4959 = vld [vmem:[%s4930 + $0xe0] sm:$0xff]
      %v4960 = vld [vmem:[%s4930 + $0xe8] sm:$0xff]
      %v4961 = vld [vmem:[%s4930 + $0xf0] sm:$0xff]
      %v4962 = vld [vmem:[%s4930 + $0xf8] sm:$0xff]
      %v4963 = vld [vmem:[%s4930 + $0x100] sm:$0xff]
      %v4964 = vld [vmem:[%s4930 + $0x108] sm:$0xff]
      %v4965 = vld [vmem:[%s4930 + $0x110] sm:$0xff]
      %v4966 = vld [vmem:[%s4930 + $0x118] sm:$0xff]
      %v4967 = vld [vmem:[%s4930 + $0x120] sm:$0xff]
      %v4968 = vld [vmem:[%s4930 + $0x128] sm:$0xff]
      %v4969 = vld [vmem:[%s4930 + $0x130] sm:$0xff]
      %v4970 = vld [vmem:[%s4930 + $0x138] sm:$0xff]
      %v4971 = vld [vmem:[%s4930 + $0x140] sm:$0xff]
      %v4972 = vld [vmem:[%s4930 + $0x148] sm:$0xff]
      %v4973 = vld [vmem:[%s4930 + $0x150] sm:$0xff]
      %v4974 = vld [vmem:[%s4930 + $0x158] sm:$0xff]
      %v4975 = vld [vmem:[%s4930 + $0x160] sm:$0xff]
      %v4976 = vld [vmem:[%s4930 + $0x168] sm:$0xff]
      %v4977 = vld [vmem:[%s4930 + $0x170] sm:$0xff]
      %v4978 = vld [vmem:[%s4930 + $0x178] sm:$0xff]
      %v4979 = vld [vmem:[%s4930 + $0x180] sm:$0xff]
      %v4980 = vld [vmem:[%s4930 + $0x188] sm:$0xff]
      %v4981 = vld [vmem:[%s4930 + $0x190] sm:$0xff]
      %v4982 = vld [vmem:[%s4930 + $0x198] sm:$0xff]
      %v4983 = vld [vmem:[%s4930 + $0x1a0] sm:$0xff]
      %v4984 = vld [vmem:[%s4930 + $0x1a8] sm:$0xff]
      %v4985 = vld [vmem:[%s4930 + $0x1b0] sm:$0xff]
      %v4986 = vld [vmem:[%s4930 + $0x1b8] sm:$0xff]
      %v4987 = vld [vmem:[%s4930 + $0x1c0] sm:$0xff]
      %v4988 = vld [vmem:[%s4930 + $0x1c8] sm:$0xff]
      %v4989 = vld [vmem:[%s4930 + $0x1d0] sm:$0xff]
      %v4990 = vld [vmem:[%s4930 + $0x1d8] sm:$0xff]
      %v4991 = vld [vmem:[%s4930 + $0x1e0] sm:$0xff]
      %v4992 = vld [vmem:[%s4930 + $0x1e8] sm:$0xff]
      %v4993 = vld [vmem:[%s4930 + $0x1f0] sm:$0xff]
      %v4994 = vld [vmem:[%s4930 + $0x1f8] sm:$0xff]
      %v4997 = vunpack.c.l.s4 1966171168
      %v4998 = vunpack.c.0.s8 %v4997
      %v4999 = vlaneseq
      %v5000 = vshrl.u32 %v4999, 7
      %v5001 = vsub.s32 %v4998, %v5000
      %v5002 = vrot.slane %v4929, %v5001
      %v5003 = vcombine.high %v5002, %v5002
      %v5005 = vunpack.c.l.s4 1966171168
      %v5006 = vunpack.c.0.s8 %v5005
      %v5007 = vlaneseq
      %v5008 = vshrl.u32 %v5007, 7
      %v5009 = vsub.s32 %v5006, %v5008
      %v5010 = vrot.slane %v5002, %v5009
      %v5012 = vunpack.c.l.s4 1966171168
      %v5013 = vunpack.c.0.s8 %v5012
      %v5014 = vlaneseq
      %v5015 = vshrl.u32 %v5014, 7
      %v5016 = vsub.s32 %v5013, %v5015
      %v5017 = vrot.slane %v5003, %v5016
      %v5084 = vunpack.c.l.b16 %v4931
      %v5085 = vunpack.c.h.b16 %v4931
      %v5086 = vunpack.c.l.b16 %v4932
      %v5087 = vunpack.c.h.b16 %v4932
      %v5088 = vunpack.c.l.b16 %v4933
      %v5089 = vunpack.c.h.b16 %v4933
      %v5090 = vunpack.c.l.b16 %v4934
      %v5091 = vunpack.c.h.b16 %v4934
      %v5092 = vunpack.c.l.b16 %v4935
      %v5093 = vunpack.c.h.b16 %v4935
      %v5094 = vunpack.c.l.b16 %v4936
      %v5095 = vunpack.c.h.b16 %v4936
      %v5096 = vunpack.c.l.b16 %v4937
      %v5097 = vunpack.c.h.b16 %v4937
      %v5098 = vunpack.c.l.b16 %v4938
      %v5099 = vunpack.c.h.b16 %v4938
      %v5100 = vunpack.c.l.b16 %v4939
      %v5101 = vunpack.c.h.b16 %v4939
      %v5102 = vunpack.c.l.b16 %v4940
      %v5103 = vunpack.c.h.b16 %v4940
      %v5104 = vunpack.c.l.b16 %v4941
      %v5105 = vunpack.c.h.b16 %v4941
      %v5106 = vunpack.c.l.b16 %v4942
      %v5107 = vunpack.c.h.b16 %v4942
      %v5108 = vunpack.c.l.b16 %v4943
      %v5109 = vunpack.c.h.b16 %v4943
      %v5110 = vunpack.c.l.b16 %v4944
      %v5111 = vunpack.c.h.b16 %v4944
      %v5112 = vunpack.c.l.b16 %v4945
      %v5113 = vunpack.c.h.b16 %v4945
      %v5114 = vunpack.c.l.b16 %v4946
      %v5115 = vunpack.c.h.b16 %v4946
      %v5116 = vunpack.c.l.b16 %v4947
      %v5117 = vunpack.c.h.b16 %v4947
      %v5118 = vunpack.c.l.b16 %v4948
      %v5119 = vunpack.c.h.b16 %v4948
      %v5120 = vunpack.c.l.b16 %v4949
      %v5121 = vunpack.c.h.b16 %v4949
      %v5122 = vunpack.c.l.b16 %v4950
      %v5123 = vunpack.c.h.b16 %v4950
      %v5124 = vunpack.c.l.b16 %v4951
      %v5125 = vunpack.c.h.b16 %v4951
      %v5126 = vunpack.c.l.b16 %v4952
      %v5127 = vunpack.c.h.b16 %v4952
      %v5128 = vunpack.c.l.b16 %v4953
      %v5129 = vunpack.c.h.b16 %v4953
      %v5130 = vunpack.c.l.b16 %v4954
      %v5131 = vunpack.c.h.b16 %v4954
      %v5132 = vunpack.c.l.b16 %v4955
      %v5133 = vunpack.c.h.b16 %v4955
      %v5134 = vunpack.c.l.b16 %v4956
      %v5135 = vunpack.c.h.b16 %v4956
      %v5136 = vunpack.c.l.b16 %v4957
      %v5137 = vunpack.c.h.b16 %v4957
      %v5138 = vunpack.c.l.b16 %v4958
      %v5139 = vunpack.c.h.b16 %v4958
      %v5140 = vunpack.c.l.b16 %v4959
      %v5141 = vunpack.c.h.b16 %v4959
      %v5142 = vunpack.c.l.b16 %v4960
      %v5143 = vunpack.c.h.b16 %v4960
      %v5144 = vunpack.c.l.b16 %v4961
      %v5145 = vunpack.c.h.b16 %v4961
      %v5146 = vunpack.c.l.b16 %v4962
      %v5147 = vunpack.c.h.b16 %v4962
      %v5148 = vunpack.c.l.b16 %v4963
      %v5149 = vunpack.c.h.b16 %v4963
      %v5150 = vunpack.c.l.b16 %v4964
      %v5151 = vunpack.c.h.b16 %v4964
      %v5152 = vunpack.c.l.b16 %v4965
      %v5153 = vunpack.c.h.b16 %v4965
      %v5154 = vunpack.c.l.b16 %v4966
      %v5155 = vunpack.c.h.b16 %v4966
      %v5156 = vunpack.c.l.b16 %v4967
      %v5157 = vunpack.c.h.b16 %v4967
      %v5158 = vunpack.c.l.b16 %v4968
      %v5159 = vunpack.c.h.b16 %v4968
      %v5160 = vunpack.c.l.b16 %v4969
      %v5161 = vunpack.c.h.b16 %v4969
      %v5162 = vunpack.c.l.b16 %v4970
      %v5163 = vunpack.c.h.b16 %v4970
      %v5164 = vunpack.c.l.b16 %v4971
      %v5165 = vunpack.c.h.b16 %v4971
      %v5166 = vunpack.c.l.b16 %v4972
      %v5167 = vunpack.c.h.b16 %v4972
      %v5168 = vunpack.c.l.b16 %v4973
      %v5169 = vunpack.c.h.b16 %v4973
      %v5170 = vunpack.c.l.b16 %v4974
      %v5171 = vunpack.c.h.b16 %v4974
      %v5172 = vunpack.c.l.b16 %v4975
      %v5173 = vunpack.c.h.b16 %v4975
      %v5174 = vunpack.c.l.b16 %v4976
      %v5175 = vunpack.c.h.b16 %v4976
      %v5176 = vunpack.c.l.b16 %v4977
      %v5177 = vunpack.c.h.b16 %v4977
      %v5178 = vunpack.c.l.b16 %v4978
      %v5179 = vunpack.c.h.b16 %v4978
      %v5180 = vunpack.c.l.b16 %v4979
      %v5181 = vunpack.c.h.b16 %v4979
      %v5182 = vunpack.c.l.b16 %v4980
      %v5183 = vunpack.c.h.b16 %v4980
      %v5184 = vunpack.c.l.b16 %v4981
      %v5185 = vunpack.c.h.b16 %v4981
      %v5186 = vunpack.c.l.b16 %v4982
      %v5187 = vunpack.c.h.b16 %v4982
      %v5188 = vunpack.c.l.b16 %v4983
      %v5189 = vunpack.c.h.b16 %v4983
      %v5190 = vunpack.c.l.b16 %v4984
      %v5191 = vunpack.c.h.b16 %v4984
      %v5192 = vunpack.c.l.b16 %v4985
      %v5193 = vunpack.c.h.b16 %v4985
      %v5194 = vunpack.c.l.b16 %v4986
      %v5195 = vunpack.c.h.b16 %v4986
      %v5196 = vunpack.c.l.b16 %v4987
      %v5197 = vunpack.c.h.b16 %v4987
      %v5198 = vunpack.c.l.b16 %v4988
      %v5199 = vunpack.c.h.b16 %v4988
      %v5200 = vunpack.c.l.b16 %v4989
      %v5201 = vunpack.c.h.b16 %v4989
      %v5202 = vunpack.c.l.b16 %v4990
      %v5203 = vunpack.c.h.b16 %v4990
      %v5204 = vunpack.c.l.b16 %v4991
      %v5205 = vunpack.c.h.b16 %v4991
      %v5206 = vunpack.c.l.b16 %v4992
      %v5207 = vunpack.c.h.b16 %v4992
      %v5208 = vunpack.c.l.b16 %v4993
      %v5209 = vunpack.c.h.b16 %v4993
      %v5210 = vunpack.c.l.b16 %v4994
      %v5211 = vunpack.c.h.b16 %v4994
      %v5212 = vpack.c.b16 %v5088, %v5084
      %v5213 = vpack.c.b16 %v5089, %v5085
      %v5214 = vpack.c.b16 %v5090, %v5086
      %v5215 = vpack.c.b16 %v5091, %v5087
      %v5216 = vpack.c.b16 %v5096, %v5092
      %v5217 = vpack.c.b16 %v5097, %v5093
      %v5218 = vpack.c.b16 %v5098, %v5094
      %v5219 = vpack.c.b16 %v5099, %v5095
      %v5220 = vpack.c.b16 %v5104, %v5100
      %v5221 = vpack.c.b16 %v5105, %v5101
      %v5222 = vpack.c.b16 %v5106, %v5102
      %v5223 = vpack.c.b16 %v5107, %v5103
      %v5224 = vpack.c.b16 %v5112, %v5108
      %v5225 = vpack.c.b16 %v5113, %v5109
      %v5226 = vpack.c.b16 %v5114, %v5110
      %v5227 = vpack.c.b16 %v5115, %v5111
      %v5228 = vpack.c.b16 %v5120, %v5116
      %v5229 = vpack.c.b16 %v5121, %v5117
      %v5230 = vpack.c.b16 %v5122, %v5118
      %v5231 = vpack.c.b16 %v5123, %v5119
      %v5232 = vpack.c.b16 %v5128, %v5124
      %v5233 = vpack.c.b16 %v5129, %v5125
      %v5234 = vpack.c.b16 %v5130, %v5126
      %v5235 = vpack.c.b16 %v5131, %v5127
      %v5236 = vpack.c.b16 %v5136, %v5132
      %v5237 = vpack.c.b16 %v5137, %v5133
      %v5238 = vpack.c.b16 %v5138, %v5134
      %v5239 = vpack.c.b16 %v5139, %v5135
      %v5240 = vpack.c.b16 %v5144, %v5140
      %v5241 = vpack.c.b16 %v5145, %v5141
      %v5242 = vpack.c.b16 %v5146, %v5142
      %v5243 = vpack.c.b16 %v5147, %v5143
      %v5244 = vpack.c.b16 %v5152, %v5148
      %v5245 = vpack.c.b16 %v5153, %v5149
      %v5246 = vpack.c.b16 %v5154, %v5150
      %v5247 = vpack.c.b16 %v5155, %v5151
      %v5248 = vpack.c.b16 %v5160, %v5156
      %v5249 = vpack.c.b16 %v5161, %v5157
      %v5250 = vpack.c.b16 %v5162, %v5158
      %v5251 = vpack.c.b16 %v5163, %v5159
      %v5252 = vpack.c.b16 %v5168, %v5164
      %v5253 = vpack.c.b16 %v5169, %v5165
      %v5254 = vpack.c.b16 %v5170, %v5166
      %v5255 = vpack.c.b16 %v5171, %v5167
      %v5256 = vpack.c.b16 %v5176, %v5172
      %v5257 = vpack.c.b16 %v5177, %v5173
      %v5258 = vpack.c.b16 %v5178, %v5174
      %v5259 = vpack.c.b16 %v5179, %v5175
      %v5260 = vpack.c.b16 %v5184, %v5180
      %v5261 = vpack.c.b16 %v5185, %v5181
      %v5262 = vpack.c.b16 %v5186, %v5182
      %v5263 = vpack.c.b16 %v5187, %v5183
      %v5264 = vpack.c.b16 %v5192, %v5188
      %v5265 = vpack.c.b16 %v5193, %v5189
      %v5266 = vpack.c.b16 %v5194, %v5190
      %v5267 = vpack.c.b16 %v5195, %v5191
      %v5268 = vpack.c.b16 %v5200, %v5196
      %v5269 = vpack.c.b16 %v5201, %v5197
      %v5270 = vpack.c.b16 %v5202, %v5198
      %v5271 = vpack.c.b16 %v5203, %v5199
      %v5272 = vpack.c.b16 %v5208, %v5204
      %v5273 = vpack.c.b16 %v5209, %v5205
      %v5274 = vpack.c.b16 %v5210, %v5206
      %v5275 = vpack.c.b16 %v5211, %v5207
      %5340 = vmatprep.subr.bf16.mxu0 %v5241
      %5341 = vmatpush1.bf16.msra.mxu0 %v5240
      %5342 = vmatprep.subr.bf16.mxu0 %v5237
      %5343 = vmatpush1.bf16.msra.mxu0 %v5236
      %5344 = vmatprep.subr.bf16.mxu0 %v5233
      %5345 = vmatpush1.bf16.msra.mxu0 %v5232
      %5346 = vmatprep.subr.bf16.mxu0 %v5229
      %5347 = vmatpush1.bf16.msra.mxu0 %v5228
      %5348 = vmatprep.subr.bf16.mxu0 %v5225
      %5349 = vmatpush1.bf16.msra.mxu0 %v5224
      %5350 = vmatprep.subr.bf16.mxu0 %v5221
      %5351 = vmatpush1.bf16.msra.mxu0 %v5220
      %5352 = vmatprep.subr.bf16.mxu0 %v5217
      %5353 = vmatpush1.bf16.msra.mxu0 %v5216
      %5354 = vmatprep.subr.bf16.mxu0 %v5213
      %5355 = vmatpush1.bf16.msra.mxu0 %v5212
      %5356 = vmatprep.subr.bf16.mxu0 %v5273
      %5357 = vmatpush2.bf16.msra.mxu0 %v5272
      %5358 = vmatprep.subr.bf16.mxu0 %v5269
      %5359 = vmatpush2.bf16.msra.mxu0 %v5268
      %5360 = vmatprep.subr.bf16.mxu0 %v5265
      %5361 = vmatpush2.bf16.msra.mxu0 %v5264
      %5362 = vmatprep.subr.bf16.mxu0 %v5261
      %5363 = vmatpush2.bf16.msra.mxu0 %v5260
      %5364 = vmatprep.subr.bf16.mxu0 %v5257
      %5365 = vmatpush2.bf16.msra.mxu0 %v5256
      %5366 = vmatprep.subr.bf16.mxu0 %v5253
      %5367 = vmatpush2.bf16.msra.mxu0 %v5252
      %5368 = vmatprep.subr.bf16.mxu0 %v5249
      %5369 = vmatpush2.bf16.msra.mxu0 %v5248
      %5370 = vmatprep.subr.bf16.mxu0 %v5245
      %5371 = vmatpush2.bf16.msra.mxu0 %v5244
      %5372 = vmatprep.mubr.bf16.mxu0 %v5017
      %5373 = vmatmul.mubr.bf16.gmra.mxu0 %v5010
      %v5374 = vpop.f32.mrf.mxu0
      %v5375 = vadd.f32 0.0, %v5374
      %v5376 = vpop.f32.mrf.mxu0
      %v5377 = vadd.f32 0.0, %v5376
      %v5378 = vpop.f32.mrf.mxu0
      %v5379 = vpop.f32.mrf.mxu0
      %5380 = vdwg.mxu0
      %5381 = vmatprep.subr.bf16.mxu0 %v5243
      %5382 = vmatpush1.bf16.msra.mxu0 %v5242
      %5383 = vmatprep.subr.bf16.mxu0 %v5239
      %5384 = vmatpush1.bf16.msra.mxu0 %v5238
      %5385 = vmatprep.subr.bf16.mxu0 %v5235
      %5386 = vmatpush1.bf16.msra.mxu0 %v5234
      %5387 = vmatprep.subr.bf16.mxu0 %v5231
      %5388 = vmatpush1.bf16.msra.mxu0 %v5230
      %5389 = vmatprep.subr.bf16.mxu0 %v5227
      %5390 = vmatpush1.bf16.msra.mxu0 %v5226
      %5391 = vmatprep.subr.bf16.mxu0 %v5223
      %5392 = vmatpush1.bf16.msra.mxu0 %v5222
      %5393 = vmatprep.subr.bf16.mxu0 %v5219
      %5394 = vmatpush1.bf16.msra.mxu0 %v5218
      %5395 = vmatprep.subr.bf16.mxu0 %v5215
      %5396 = vmatpush1.bf16.msra.mxu0 %v5214
      %5397 = vmatprep.subr.bf16.mxu0 %v5275
      %5398 = vmatpush2.bf16.msra.mxu0 %v5274
      %5399 = vmatprep.subr.bf16.mxu0 %v5271
      %5400 = vmatpush2.bf16.msra.mxu0 %v5270
      %5401 = vmatprep.subr.bf16.mxu0 %v5267
      %5402 = vmatpush2.bf16.msra.mxu0 %v5266
      %5403 = vmatprep.subr.bf16.mxu0 %v5263
      %5404 = vmatpush2.bf16.msra.mxu0 %v5262
      %5405 = vmatprep.subr.bf16.mxu0 %v5259
      %5406 = vmatpush2.bf16.msra.mxu0 %v5258
      %5407 = vmatprep.subr.bf16.mxu0 %v5255
      %5408 = vmatpush2.bf16.msra.mxu0 %v5254
      %5409 = vmatprep.subr.bf16.mxu0 %v5251
      %5410 = vmatpush2.bf16.msra.mxu0 %v5250
      %5411 = vmatprep.subr.bf16.mxu0 %v5247
      %5412 = vmatpush2.bf16.msra.mxu0 %v5246
      %5413 = vmatprep.mubr.bf16.mxu0 %v5017
      %5414 = vmatmul.mubr.bf16.gmra.mxu0 %v5010
      %v5415 = vpop.f32.mrf.mxu0
      %v5416 = vadd.f32 0.0, %v5415
      %v5417 = vpop.f32.mrf.mxu0
      %v5418 = vadd.f32 0.0, %v5417
      %v5419 = vpop.f32.mrf.mxu0
      %v5420 = vpop.f32.mrf.mxu0
      %5421 = vdwg.mxu0
      %v5426 = vcombine.low %v5375, %v5377
      %v5427 = vcombine.low %v5416, %v5418
      %v5429 = vunpack.c.l.s4 1983009808
      %v5430 = vunpack.c.0.s8 %v5429
      %v5431 = vlaneseq
      %v5432 = vshrl.u32 %v5431, 7
      %v5433 = vsub.s32 %v5430, %v5432
      %v5434 = vrot.slane %v5426, %v5433
      %v5436 = vunpack.c.l.s4 1983009808
      %v5437 = vunpack.c.0.s8 %v5436
      %v5438 = vlaneseq
      %v5439 = vshrl.u32 %v5438, 7
      %v5440 = vsub.s32 %v5437, %v5439
      %v5441 = vrot.slane %v5427, %v5440
      %v5442 = vcombine.low %v5434, %v5441
      %v5444 = vadd.f32 %v4927, %v5442
      %5445 = vst.msk [vmem:[#allocation2] sm:$0xff] %vm773, %v5444
      %p5446 = scmp.eq.s32.totalorder %s18, 4
      // Predicated region
      $region45: #{filter_classifier_forward.5} parent=39 // pred_check
        %p5447 = pneg %p5446
      $region46: #{filter_classifier_forward.5} parent=39 // pred_check_branch
        %5449 = sbr.rel (%p5447) target = $region48
      $region47: #{filter_classifier_forward.5} parent=39 // pred_region
        %v5450 = vld [vmem:[#allocation2] sm:$0xff]
        %v5451 = vld [vmem:[%s2] sm:$0xf]
        %v5453 = vlaneseq
        %v5454 = vshrl.u32 %v5453, 7
        %v5455 = vsub.s32 0, %v5454
        %v5456 = vrot.slane %v5451, %v5455
        %v5457 = vlaneseq
        %v5458 = vshrl.u32 %v5457, 7
        %v5459 = vsub.s32 1, %v5458
        %v5460 = vrot.slane %v5451, %v5459
        %v5461 = vlaneseq
        %v5462 = vshrl.u32 %v5461, 7
        %v5463 = vsub.s32 2, %v5462
        %v5464 = vrot.slane %v5451, %v5463
        %v5465 = vlaneseq
        %v5466 = vshrl.u32 %v5465, 7
        %v5467 = vsub.s32 3, %v5466
        %v5468 = vrot.slane %v5451, %v5467
        %v5469 = vcombine.low %v5456, %v5460
        %v5470 = vcombine.low %v5464, %v5468
        %v5472 = vunpack.c.l.s4 1983009808
        %v5473 = vunpack.c.0.s8 %v5472
        %v5474 = vlaneseq
        %v5475 = vshrl.u32 %v5474, 7
        %v5476 = vsub.s32 %v5473, %v5475
        %v5477 = vrot.slane %v5469, %v5476
        %v5479 = vunpack.c.l.s4 1983009808
        %v5480 = vunpack.c.0.s8 %v5479
        %v5481 = vlaneseq
        %v5482 = vshrl.u32 %v5481, 7
        %v5483 = vsub.s32 %v5480, %v5482
        %v5484 = vrot.slane %v5470, %v5483
        %v5485 = vcombine.low %v5477, %v5484
        %v5487 = vadd.f32 %v5450, %v5485
        %v5488 = vmax.f32 %v5487, 0.0
        %v5489 = vld [vmem:[%s3] sm:$0xff]
        %v5490 = vld [vmem:[%s3 + $0x8] sm:$0xff]
        %v5491 = vld [vmem:[%s3 + $0x10] sm:$0xff]
        %v5492 = vld [vmem:[%s3 + $0x18] sm:$0xff]
        %v5493 = vld [vmem:[%s3 + $0x20] sm:$0xff]
        %v5494 = vld [vmem:[%s3 + $0x28] sm:$0xff]
        %v5495 = vld [vmem:[%s3 + $0x30] sm:$0xff]
        %v5496 = vld [vmem:[%s3 + $0x38] sm:$0xff]
        %v5497 = vld [vmem:[%s3 + $0x40] sm:$0xff]
        %v5498 = vld [vmem:[%s3 + $0x48] sm:$0xff]
        %v5499 = vld [vmem:[%s3 + $0x50] sm:$0xff]
        %v5500 = vld [vmem:[%s3 + $0x58] sm:$0xff]
        %v5501 = vld [vmem:[%s3 + $0x60] sm:$0xff]
        %v5502 = vld [vmem:[%s3 + $0x68] sm:$0xff]
        %v5503 = vld [vmem:[%s3 + $0x70] sm:$0xff]
        %v5504 = vld [vmem:[%s3 + $0x78] sm:$0xff]
        %v5505 = vld [vmem:[%s3 + $0x80] sm:$0xff]
        %v5506 = vld [vmem:[%s3 + $0x88] sm:$0xff]
        %v5507 = vld [vmem:[%s3 + $0x90] sm:$0xff]
        %v5508 = vld [vmem:[%s3 + $0x98] sm:$0xff]
        %v5509 = vld [vmem:[%s3 + $0xa0] sm:$0xff]
        %v5510 = vld [vmem:[%s3 + $0xa8] sm:$0xff]
        %v5511 = vld [vmem:[%s3 + $0xb0] sm:$0xff]
        %v5512 = vld [vmem:[%s3 + $0xb8] sm:$0xff]
        %v5513 = vld [vmem:[%s3 + $0xc0] sm:$0xff]
        %v5514 = vld [vmem:[%s3 + $0xc8] sm:$0xff]
        %v5515 = vld [vmem:[%s3 + $0xd0] sm:$0xff]
        %v5516 = vld [vmem:[%s3 + $0xd8] sm:$0xff]
        %v5517 = vld [vmem:[%s3 + $0xe0] sm:$0xff]
        %v5518 = vld [vmem:[%s3 + $0xe8] sm:$0xff]
        %v5519 = vld [vmem:[%s3 + $0xf0] sm:$0xff]
        %v5520 = vld [vmem:[%s3 + $0xf8] sm:$0xff]
        %v5521 = vld [vmem:[%s3 + $0x100] sm:$0xff]
        %v5522 = vld [vmem:[%s3 + $0x108] sm:$0xff]
        %v5523 = vld [vmem:[%s3 + $0x110] sm:$0xff]
        %v5524 = vld [vmem:[%s3 + $0x118] sm:$0xff]
        %v5525 = vld [vmem:[%s3 + $0x120] sm:$0xff]
        %v5526 = vld [vmem:[%s3 + $0x128] sm:$0xff]
        %v5527 = vld [vmem:[%s3 + $0x130] sm:$0xff]
        %v5528 = vld [vmem:[%s3 + $0x138] sm:$0xff]
        %v5529 = vld [vmem:[%s3 + $0x140] sm:$0xff]
        %v5530 = vld [vmem:[%s3 + $0x148] sm:$0xff]
        %v5531 = vld [vmem:[%s3 + $0x150] sm:$0xff]
        %v5532 = vld [vmem:[%s3 + $0x158] sm:$0xff]
        %v5533 = vld [vmem:[%s3 + $0x160] sm:$0xff]
        %v5534 = vld [vmem:[%s3 + $0x168] sm:$0xff]
        %v5535 = vld [vmem:[%s3 + $0x170] sm:$0xff]
        %v5536 = vld [vmem:[%s3 + $0x178] sm:$0xff]
        %v5537 = vld [vmem:[%s3 + $0x180] sm:$0xff]
        %v5538 = vld [vmem:[%s3 + $0x188] sm:$0xff]
        %v5539 = vld [vmem:[%s3 + $0x190] sm:$0xff]
        %v5540 = vld [vmem:[%s3 + $0x198] sm:$0xff]
        %v5541 = vld [vmem:[%s3 + $0x1a0] sm:$0xff]
        %v5542 = vld [vmem:[%s3 + $0x1a8] sm:$0xff]
        %v5543 = vld [vmem:[%s3 + $0x1b0] sm:$0xff]
        %v5544 = vld [vmem:[%s3 + $0x1b8] sm:$0xff]
        %v5545 = vld [vmem:[%s3 + $0x1c0] sm:$0xff]
        %v5546 = vld [vmem:[%s3 + $0x1c8] sm:$0xff]
        %v5547 = vld [vmem:[%s3 + $0x1d0] sm:$0xff]
        %v5548 = vld [vmem:[%s3 + $0x1d8] sm:$0xff]
        %v5549 = vld [vmem:[%s3 + $0x1e0] sm:$0xff]
        %v5550 = vld [vmem:[%s3 + $0x1e8] sm:$0xff]
        %v5551 = vld [vmem:[%s3 + $0x1f0] sm:$0xf]
        %v5552 = vld [vmem:[#allocation3] sm:$0x1]
        %v5554 = vlaneseq
        %v5555 = vshrl.u32 %v5554, 7
        %v5556 = vsub.s32 0, %v5555
        %v5557 = vrot.slane %v5552, %v5556
        %v5560 = vcombine.high %v5488, %v5488
        %v5562 = vunpack.c.l.s4 1983009808
        %v5563 = vunpack.c.0.s8 %v5562
        %v5564 = vlaneseq
        %v5565 = vshrl.u32 %v5564, 7
        %v5566 = vsub.s32 %v5563, %v5565
        %v5567 = vrot.slane %v5488, %v5566
        %v5569 = vunpack.c.l.s4 1983009808
        %v5570 = vunpack.c.0.s8 %v5569
        %v5571 = vlaneseq
        %v5572 = vshrl.u32 %v5571, 7
        %v5573 = vsub.s32 %v5570, %v5572
        %v5574 = vrot.slane %v5560, %v5573
        %v5575 = vcombine.high %v5567, %v5567
        %v5576 = vcombine.high %v5574, %v5574
        %vm5580 = vcmask 949248
        %v5581 = vsel %vm5580, %v5576, 0
        %vm5583 = vcmask 1043456
        %v5585 = vsel %vm5583, %v5551, 0
        %5587 = vmatprep.subr.mxu0 0.0
        %5588 = vmatpush1.msra.mxu0 %v5504
        %5589 = vmatprep.subr.mxu0 0.0
        %5590 = vmatpush1.msra.mxu0 %v5503
        %5591 = vmatprep.subr.mxu0 0.0
        %5592 = vmatpush1.msra.mxu0 %v5502
        %5593 = vmatprep.subr.mxu0 0.0
        %5594 = vmatpush1.msra.mxu0 %v5501
        %5595 = vmatprep.subr.mxu0 0.0
        %5596 = vmatpush1.msra.mxu0 %v5500
        %5597 = vmatprep.subr.mxu0 0.0
        %5598 = vmatpush1.msra.mxu0 %v5499
        %5599 = vmatprep.subr.mxu0 0.0
        %5600 = vmatpush1.msra.mxu0 %v5498
        %5601 = vmatprep.subr.mxu0 0.0
        %5602 = vmatpush1.msra.mxu0 %v5497
        %5603 = vmatprep.subr.mxu0 0.0
        %5604 = vmatpush1.msra.mxu0 %v5496
        %5605 = vmatprep.subr.mxu0 0.0
        %5606 = vmatpush1.msra.mxu0 %v5495
        %5607 = vmatprep.subr.mxu0 0.0
        %5608 = vmatpush1.msra.mxu0 %v5494
        %5609 = vmatprep.subr.mxu0 0.0
        %5610 = vmatpush1.msra.mxu0 %v5493
        %5611 = vmatprep.subr.mxu0 0.0
        %5612 = vmatpush1.msra.mxu0 %v5492
        %5613 = vmatprep.subr.mxu0 0.0
        %5614 = vmatpush1.msra.mxu0 %v5491
        %5615 = vmatprep.subr.mxu0 0.0
        %5616 = vmatpush1.msra.mxu0 %v5490
        %5617 = vmatprep.subr.mxu0 0.0
        %5618 = vmatpush1.msra.mxu0 %v5489
        %5619 = vmatprep.subr.mxu0 0.0
        %5620 = vmatpush2.msra.mxu0 %v5520
        %5621 = vmatprep.subr.mxu0 0.0
        %5622 = vmatpush2.msra.mxu0 %v5519
        %5623 = vmatprep.subr.mxu0 0.0
        %5624 = vmatpush2.msra.mxu0 %v5518
        %5625 = vmatprep.subr.mxu0 0.0
        %5626 = vmatpush2.msra.mxu0 %v5517
        %5627 = vmatprep.subr.mxu0 0.0
        %5628 = vmatpush2.msra.mxu0 %v5516
        %5629 = vmatprep.subr.mxu0 0.0
        %5630 = vmatpush2.msra.mxu0 %v5515
        %5631 = vmatprep.subr.mxu0 0.0
        %5632 = vmatpush2.msra.mxu0 %v5514
        %5633 = vmatprep.subr.mxu0 0.0
        %5634 = vmatpush2.msra.mxu0 %v5513
        %5635 = vmatprep.subr.mxu0 0.0
        %5636 = vmatpush2.msra.mxu0 %v5512
        %5637 = vmatprep.subr.mxu0 0.0
        %5638 = vmatpush2.msra.mxu0 %v5511
        %5639 = vmatprep.subr.mxu0 0.0
        %5640 = vmatpush2.msra.mxu0 %v5510
        %5641 = vmatprep.subr.mxu0 0.0
        %5642 = vmatpush2.msra.mxu0 %v5509
        %5643 = vmatprep.subr.mxu0 0.0
        %5644 = vmatpush2.msra.mxu0 %v5508
        %5645 = vmatprep.subr.mxu0 0.0
        %5646 = vmatpush2.msra.mxu0 %v5507
        %5647 = vmatprep.subr.mxu0 0.0
        %5648 = vmatpush2.msra.mxu0 %v5506
        %5649 = vmatprep.subr.mxu0 0.0
        %5650 = vmatpush2.msra.mxu0 %v5505
        %5651 = vmatprep.mubr.f32.mxu0 %v5575
        %5652 = vmatmul.mubr.f32.gmra.mxu0 %v5567
        %v5653 = vpop.f32.mrf.mxu0
        %v5654 = vadd.f32 %v5557, %v5653
        %v5655 = vpop.f32.mrf.mxu0
        %5656 = vdwg.mxu0
        %5657 = vmatprep.subr.mxu0 0.0
        %5658 = vmatpush1.msra.mxu0 %v5536
        %5659 = vmatprep.subr.mxu0 0.0
        %5660 = vmatpush1.msra.mxu0 %v5535
        %5661 = vmatprep.subr.mxu0 0.0
        %5662 = vmatpush1.msra.mxu0 %v5534
        %5663 = vmatprep.subr.mxu0 0.0
        %5664 = vmatpush1.msra.mxu0 %v5533
        %5665 = vmatprep.subr.mxu0 0.0
        %5666 = vmatpush1.msra.mxu0 %v5532
        %5667 = vmatprep.subr.mxu0 0.0
        %5668 = vmatpush1.msra.mxu0 %v5531
        %5669 = vmatprep.subr.mxu0 0.0
        %5670 = vmatpush1.msra.mxu0 %v5530
        %5671 = vmatprep.subr.mxu0 0.0
        %5672 = vmatpush1.msra.mxu0 %v5529
        %5673 = vmatprep.subr.mxu0 0.0
        %5674 = vmatpush1.msra.mxu0 %v5528
        %5675 = vmatprep.subr.mxu0 0.0
        %5676 = vmatpush1.msra.mxu0 %v5527
        %5677 = vmatprep.subr.mxu0 0.0
        %5678 = vmatpush1.msra.mxu0 %v5526
        %5679 = vmatprep.subr.mxu0 0.0
        %5680 = vmatpush1.msra.mxu0 %v5525
        %5681 = vmatprep.subr.mxu0 0.0
        %5682 = vmatpush1.msra.mxu0 %v5524
        %5683 = vmatprep.subr.mxu0 0.0
        %5684 = vmatpush1.msra.mxu0 %v5523
        %5685 = vmatprep.subr.mxu0 0.0
        %5686 = vmatpush1.msra.mxu0 %v5522
        %5687 = vmatprep.subr.mxu0 0.0
        %5688 = vmatpush1.msra.mxu0 %v5521
        %5689 = vmatprep.subr.mxu0 0.0
        %5690 = vmatpush2.msra.mxu0 0.0
        %5691 = vmatprep.subr.mxu0 0.0
        %5692 = vmatpush2.msra.mxu0 %v5585
        %5693 = vmatprep.subr.mxu0 0.0
        %5694 = vmatpush2.msra.mxu0 %v5550
        %5695 = vmatprep.subr.mxu0 0.0
        %5696 = vmatpush2.msra.mxu0 %v5549
        %5697 = vmatprep.subr.mxu0 0.0
        %5698 = vmatpush2.msra.mxu0 %v5548
        %5699 = vmatprep.subr.mxu0 0.0
        %5700 = vmatpush2.msra.mxu0 %v5547
        %5701 = vmatprep.subr.mxu0 0.0
        %5702 = vmatpush2.msra.mxu0 %v5546
        %5703 = vmatprep.subr.mxu0 0.0
        %5704 = vmatpush2.msra.mxu0 %v5545
        %5705 = vmatprep.subr.mxu0 0.0
        %5706 = vmatpush2.msra.mxu0 %v5544
        %5707 = vmatprep.subr.mxu0 0.0
        %5708 = vmatpush2.msra.mxu0 %v5543
        %5709 = vmatprep.subr.mxu0 0.0
        %5710 = vmatpush2.msra.mxu0 %v5542
        %5711 = vmatprep.subr.mxu0 0.0
        %5712 = vmatpush2.msra.mxu0 %v5541
        %5713 = vmatprep.subr.mxu0 0.0
        %5714 = vmatpush2.msra.mxu0 %v5540
        %5715 = vmatprep.subr.mxu0 0.0
        %5716 = vmatpush2.msra.mxu0 %v5539
        %5717 = vmatprep.subr.mxu0 0.0
        %5718 = vmatpush2.msra.mxu0 %v5538
        %5719 = vmatprep.subr.mxu0 0.0
        %5720 = vmatpush2.msra.mxu0 %v5537
        %5721 = vmatprep.mubr.f32.mxu0 %v5581
        %5722 = vmatmul.mubr.f32.gmra.mxu0 %v5574
        %v5723 = vpop.f32.mrf.mxu0
        %v5724 = vadd.f32 %v5654, %v5723
        %v5725 = vpop.f32.mrf.mxu0
        %5726 = vdwg.mxu0
        %vm5727 = vcmask 1024
        %5728 = vst.msk [vmem:[%s5] sm:$0x3] %vm5727, %v5724
      $region48: #{filter_classifier_forward.5} parent=39 // pred_fallthru
        _
      // Predicated region
      $region49: #{filter_classifier_forward.5} parent=39 // pred_check
        %p5729 = pneg %p146
      $region50: #{filter_classifier_forward.5} parent=39 // pred_check_branch
        %5731 = sbr.rel (%p5729) target = $region52
      $region51: #{filter_classifier_forward.5} parent=39 // pred_region
        _
      $region52: #{filter_classifier_forward.5} parent=39 // pred_fallthru
        _
      // Predicated region
      $region53: #{filter_classifier_forward.5} parent=39 // pred_check
        %p5732 = pneg %p146
      $region54: #{filter_classifier_forward.5} parent=39 // pred_check_branch
        %5734 = sbr.rel (%p5732) target = $region56
      $region55: #{filter_classifier_forward.5} parent=39 // pred_region
        _
      $region56: #{filter_classifier_forward.5} parent=39 // pred_fallthru
        _
    $region40: #{filter_classifier_forward.5} parent=5 // pred_fallthru
      _
    %p5735 = scmp.le.s32.totalorder 2, %s13
    // Predicated region
    $region57: #{filter_classifier_forward.5} parent=5 // pred_check
      %p5736 = pneg %p5735
    $region58: #{filter_classifier_forward.5} parent=5 // pred_check_branch
      %5738 = sbr.rel (%p5736) target = $region60
    $region59: #{filter_classifier_forward.5} parent=5 // pred_region
      %s5739 = ssub.s32 %s13, 2
    $region60: #{filter_classifier_forward.5} parent=5 // pred_fallthru
      _
  $region6: #{filter_classifier_forward.5} parent=0 // loop_footer
    %s17 = sadd.s32 1, %s13
  $region7: #{filter_classifier_forward.5} parent=0 // loop_footer_branch
    %12 = sbr.rel target = $region3
  $region8: #{filter_classifier_forward.5} parent=0 // loop_exit
    _

</llo_original>
